<compile_context>
chip_gen: v6e
topology: v6e:2x2x1
jax: 0.10.0
libtpu: 0.0.40
codegen_flags: <defaults>
</compile_context>

<pallas_src>
import math

import jax
import jax.numpy as jnp
from jax.experimental import pallas as pl
from jax.experimental.pallas import tpu as pltpu

# Scaled-down OpenPose channel plan (real: 128 feat / 38 PAF / 19 heatmap).
C_IN = 4
C_FEAT = 8
C_PAF = 6
C_HEAT = 3
C_CAT = C_PAF + C_HEAT + C_FEAT          # 17, fed to stages 2..6

CPAD = 8                                  # per-tensor channel padding (sublane align)
CAT_PAD = 3 * CPAD                        # padded channels of cat([paf, heat, feat])

ROWS_ID = tuple(range(CPAD))
ROWS_IN = tuple(range(C_IN))
ROWS_CAT = (tuple(range(C_PAF))
            + tuple(CPAD + i for i in range(C_HEAT))
            + tuple(2 * CPAD + i for i in range(C_FEAT)))

TAPS = tuple((dh, dw) for dh in (-1, 0, 1) for dw in (-1, 0, 1))   # center at idx 4


# ----------------------------------------------------------------------------
# Synthetic deterministic parameters for the model_dict blocks (HWIO weights).
# ----------------------------------------------------------------------------
def _make_conv(key, cin, cout, k):
    kw_key, kb_key = jax.random.split(key)
    w = jax.random.normal(kw_key, (k, k, cin, cout), jnp.float32)
    w = w * (1.0 / math.sqrt(k * k * cin))
    b = jax.random.normal(kb_key, (cout,), jnp.float32) * 0.01
    return {"w": w, "b": b}


def build_model(key):
    keys = iter(jax.random.split(key, 128))

    def conv(cin, cout, k):
        return _make_conv(next(keys), cin, cout, k)

    blocks = {}
    blocks["block_0"] = [(conv(C_IN, 8, 3), True), (conv(8, C_FEAT, 3), True)]

    def stage1(cout):
        return [(conv(C_FEAT, 8, 3), True), (conv(8, 8, 1), True),
                (conv(8, cout, 1), False)]

    blocks["block1_1"] = stage1(C_PAF)
    blocks["block1_2"] = stage1(C_HEAT)

    def stage_n(cout):
        return [(conv(C_CAT, 8, 3), True), (conv(8, 8, 1), True),
                (conv(8, cout, 1), False)]

    for s in range(2, 7):
        blocks[f"block{s}_1"] = stage_n(C_PAF)
        blocks[f"block{s}_2"] = stage_n(C_HEAT)
    return blocks


# ----------------------------------------------------------------------------
# Parameter packing into lane-dense weight slabs.
# ----------------------------------------------------------------------------
def _w3x3_lhs(w, in_rows, cin_pad):
    """(3,3,cin,cout) HWIO -> (CPAD, 9*cin_pad) MXU LHS (tap-major, channel-minor)."""
    K, _, cin, cout = w.shape
    wp = jnp.zeros((K, K, cin_pad, CPAD), jnp.float32)
    wp = wp.at[:, :, jnp.asarray(in_rows), :cout].set(w)
    return jnp.transpose(wp, (3, 0, 1, 2)).reshape(CPAD, K * K * cin_pad)


def _w1x1_blockdiag(p1, p2):
    """Two branch 1x1 convs -> one block-diagonal (16, 16) LHS."""
    w1 = p1["w"][0, 0]            # (cin=8, cout1)
    w2 = p2["w"][0, 0]            # (cin=8, cout2)
    out = jnp.zeros((2 * CPAD, 2 * CPAD), jnp.float32)
    out = out.at[0:w1.shape[1], 0:CPAD].set(w1.T)
    out = out.at[CPAD:CPAD + w2.shape[1], CPAD:2 * CPAD].set(w2.T)
    return out


def _bias_pad(b):
    return jnp.zeros((CPAD,), jnp.float32).at[:b.shape[0]].set(b)


def pack_model(blocks):
    b0 = blocks["block_0"]

    # Slab A: 3x3 convs with cin_pad=8 (block_0 x2, stage-1 fused first conv).
    wA = jnp.concatenate([
        _w3x3_lhs(b0[0][0]["w"], ROWS_IN, CPAD),
        _w3x3_lhs(b0[1][0]["w"], ROWS_ID, CPAD),
        _w3x3_lhs(blocks["block1_1"][0][0]["w"], ROWS_ID, CPAD),
        _w3x3_lhs(blocks["block1_2"][0][0]["w"], ROWS_ID, CPAD),
    ], axis=0)                                             # (32, 72)

    # Slab B: 3x3 convs with cin_pad=24 (stage 2..6 fused first convs).
    wB = jnp.concatenate(
        [_w3x3_lhs(blocks[f"block{s}_{br}"][0][0]["w"], ROWS_CAT, CAT_PAD)
         for s in range(2, 7) for br in (1, 2)], axis=0)   # (80, 216)

    # Slab C: 1x1 convs, branch-pair block-diagonal (stages 1..6, layers 1 and 2).
    wC = jnp.concatenate(
        [_w1x1_blockdiag(blocks[f"block{s}_1"][li][0], blocks[f"block{s}_2"][li][0])
         for s in range(1, 7) for li in (1, 2)], axis=0)   # (192, 16)

    # Bias slab (rows match the output rows of every fused conv, in kernel order).
    bias_parts = [_bias_pad(b0[0][0]["b"]), _bias_pad(b0[1][0]["b"])]
    for s in range(1, 7):
        for li in (0, 1, 2):
            bias_parts.append(_bias_pad(blocks[f"block{s}_1"][li][0]["b"]))
            bias_parts.append(_bias_pad(blocks[f"block{s}_2"][li][0]["b"]))
    bias = jnp.concatenate(bias_parts).reshape(-1, 1)      # (304, 1)
    return wA, wB, wC, bias


def build_masks(N, H, W):
    """Dense (8, N*H*W) border-mask tile for the 8 non-center 3x3 taps."""
    HW = H * W
    lane = jnp.arange(N * HW, dtype=jnp.int32)
    p = lane % HW                 # per-image pixel index -> no cross-batch leakage
    hh = p // W
    ww = p % W
    rows = []
    for dh, dw in TAPS:
        if dh == 0 and dw == 0:
            continue
        ok = (hh + dh >= 0) & (hh + dh < H) & (ww + dw >= 0) & (ww + dw < W)
        rows.append(ok.astype(jnp.float32))
    return jnp.stack(rows, axis=0)                         # (8, N*H*W)


# ----------------------------------------------------------------------------
# Fused whole-network kernel (single grid step, batch folded onto lanes).
# ----------------------------------------------------------------------------
def _make_pose_kernel(H, W, NHW, relu_b0, relu_stage):
    def kernel(x_ref, mask_ref, wA_ref, wB_ref, wC_ref, b_ref,
               out_ref, col_ref, cat_ref):

        def bias_relu(acc, b_off, m, relu):
            acc = acc + b_ref[b_off:b_off + m, :]          # (m,1) lane-broadcast
            return jnp.maximum(acc, 0.0) if relu else acc

        def conv3x3(a, cin_pad, w_ref, w_row, m, b_off, relu):
            # In-VMEM im2col: 8 masked lane-rotations + center, tap-major rows.
            for t, (dh, dw) in enumerate(TAPS):
                s = dh * W + dw
                if s == 0:
                    tile = a
                else:
                    mrow = t if t < 4 else t - 1
                    tile = (pltpu.roll(a, shift=(-s) % NHW, axis=1)
                            * mask_ref[mrow:mrow + 1, :])
                col_ref[t * cin_pad:(t + 1) * cin_pad, :] = tile
            kk = 9 * cin_pad
            acc = jnp.dot(w_ref[w_row:w_row + m, :], col_ref[0:kk, :],
                          preferred_element_type=jnp.float32)
            return bias_relu(acc, b_off, m, relu)

        def conv1x1(a, w_row, m, b_off, relu):
            acc = jnp.dot(wC_ref[w_row:w_row + m, :], a,
                          preferred_element_type=jnp.float32)
            return bias_relu(acc, b_off, m, relu)

        # ---- block_0 (single path, cin_pad = 8) ----
        f = conv3x3(x_ref[...], CPAD, wA_ref, 0, CPAD, 0, relu_b0[0])
        f = conv3x3(f, CPAD, wA_ref, CPAD, CPAD, CPAD, relu_b0[1])
        cat_ref[2 * CPAD:3 * CPAD, :] = f          # feat reused by every stage

        # ---- stage 1: both branches fused, one shared im2col of feat ----
        y = conv3x3(f, CPAD, wA_ref, 16, 2 * CPAD, 16, relu_stage[0])
        y = conv1x1(y, 0, 2 * CPAD, 32, relu_stage[1])
        pair = conv1x1(y, 16, 2 * CPAD, 48, relu_stage[2])   # rows 0..7 PAF / 8..15 heat

        # ---- stages 2..6: shared im2col of cat, fused branch-pair matmuls ----
        wB_row, wC_row, b_off = 0, 32, 64
        for _s in range(2, 7):
            cat_ref[0:2 * CPAD, :] = pair           # cat = [b1|b2|feat] as a ref view
            y = conv3x3(cat_ref[...], CAT_PAD, wB_ref, wB_row, 2 * CPAD, b_off,
                        relu_stage[0])
            y = conv1x1(y, wC_row, 2 * CPAD, b_off + 16, relu_stage[1])
            pair = conv1x1(y, wC_row + 16, 2 * CPAD, b_off + 32, relu_stage[2])
            wB_row += 16
            wC_row += 32
            b_off += 48

        out_ref[...] = pair

    return kernel


def pose_estimation_forward(x_nchw, blocks):
    N, C, H, W = x_nchw.shape
    NHW = N * H * W

    wA, wB, wC, bias = pack_model(blocks)
    masks = build_masks(N, H, W)

    # NCHW -> (C_pad, N*H*W): channels on sublanes, batch folded onto lanes.
    xf = jnp.transpose(x_nchw, (1, 0, 2, 3)).reshape(C, NHW)
    xf = jnp.pad(xf, ((0, CPAD - C), (0, 0)))

    relu_b0 = tuple(bool(r) for _, r in blocks["block_0"])
    relu_stage = tuple(bool(r) for _, r in blocks["block1_1"])
    for s in range(1, 7):
        assert relu_stage == tuple(bool(r) for _, r in blocks[f"block{s}_1"])
        assert relu_stage == tuple(bool(r) for _, r in blocks[f"block{s}_2"])

    kernel = _make_pose_kernel(H, W, NHW, relu_b0, relu_stage)

    def full(shape):
        return pl.BlockSpec(shape, lambda i: (0, 0))

    pair = pl.pallas_call(
        kernel,
        grid=(1,),
        in_specs=[full(xf.shape), full(masks.shape), full(wA.shape),
                  full(wB.shape), full(wC.shape), full(bias.shape)],
        out_specs=full((2 * CPAD, NHW)),
        out_shape=jax.ShapeDtypeStruct((2 * CPAD, NHW), jnp.float32),
        scratch_shapes=[pltpu.VMEM((9 * CAT_PAD, NHW), jnp.float32),   # im2col
                        pltpu.VMEM((CAT_PAD, NHW), jnp.float32)],      # cat
        compiler_params=pltpu.CompilerParams(
            dimension_semantics=("arbitrary",)),
    )(xf, masks, wA, wB, wC, bias)

    out = pair.reshape(2 * CPAD, N, H, W).transpose(1, 0, 2, 3)   # (N, 16, H, W)
    out6_1 = out[:, :C_PAF]                                       # PAF branch
    out6_2 = out[:, CPAD:CPAD + C_HEAT]                           # heatmap branch
    return out6_1, out6_2


# ----------------------------------------------------------------------------
# Pure-XLA reference (NCHW / HWIO convs) mirroring PoseEstimation.forward.
# ----------------------------------------------------------------------------
def _conv_ref(x, w, b, relu):
    y = jax.lax.conv_general_dilated(
        x, w, window_strides=(1, 1), padding="SAME",
        dimension_numbers=("NCHW", "HWIO", "NCHW"))
    y = y + b[None, :, None, None]
    return jnp.maximum(y, 0.0) if relu else y


def _run_block_ref(x, block):
    for p, relu in block:
        x = _conv_ref(x, p["w"], p["b"], relu)
    return x


def reference_forward(x, blocks):
    out1 = _run_block_ref(x, blocks["block_0"])
    b1 = _run_block_ref(out1, blocks["block1_1"])
    b2 = _run_block_ref(out1, blocks["block1_2"])
    for s in range(2, 7):
        cat = jnp.concatenate([b1, b2, out1], axis=1)
        b1 = _run_block_ref(cat, blocks[f"block{s}_1"])
        b2 = _run_block_ref(cat, blocks[f"block{s}_2"])
    return b1, b2


if __name__ == "__main__":
    key = jax.random.PRNGKey(0)
    k_params, k_input = jax.random.split(key)
    blocks = build_model(k_params)

    N, H, W = 2, 16, 16
    x = jax.random.normal(k_input, (N, C_IN, H, W), jnp.float32)   # NCHW like PyTorch

    out6_1, out6_2 = pose_estimation_forward(x, blocks)
    jax.block_until_ready((out6_1, out6_2))

    assert out6_1.shape == (N, C_PAF, H, W), out6_1.shape
    assert out6_2.shape == (N, C_HEAT, H, W), out6_2.shape
    assert out6_1.dtype == jnp.float32 and out6_2.dtype == jnp.float32
    assert bool(jnp.all(jnp.isfinite(out6_1))) and bool(jnp.all(jnp.isfinite(out6_2)))

    # Numerical check against the pure-XLA reference (loose tolerance: the two paths
    # use different MXU precision / summation order across ~20 conv layers).
    ref1, ref2 = reference_forward(x, blocks)

    def _rel(a, b):
        return float(jnp.linalg.norm((a - b).ravel())
                     / (jnp.linalg.norm(b.ravel()) + 1e-6))

    assert _rel(out6_1, ref1) < 0.1, _rel(out6_1, ref1)
    assert _rel(out6_2, ref2) < 0.1, _rel(out6_2, ref2)

    print("KERNEL_OK")
</pallas_src>

<mosaic_0001>
module attributes {stable_mosaic.version = 11 : i64} {
  func.func @kernel(%arg0: i32, %arg1: memref<8x512xf32, #tpu.memory_space<vmem>>, %arg2: memref<8x512xf32, #tpu.memory_space<vmem>>, %arg3: memref<32x72xf32, #tpu.memory_space<vmem>>, %arg4: memref<80x216xf32, #tpu.memory_space<vmem>>, %arg5: memref<192x16xf32, #tpu.memory_space<vmem>>, %arg6: memref<304x1xf32, #tpu.memory_space<vmem>>, %arg7: memref<16x512xf32, #tpu.memory_space<vmem>>, %arg8: memref<216x512xf32, #tpu.memory_space<vmem>>, %arg9: memref<24x512xf32, #tpu.memory_space<vmem>>) attributes {dimension_semantics = [#tpu.dimension_semantics<arbitrary>], iteration_bounds = array<i64: 1>, scalar_prefetch = 0 : i64, scratch_operands = 2 : i64, tpu.core_type = #tpu.core_type<tc>, window_params = [{pipeline_mode = #tpu.pipeline_mode<synchronous>, transform_indices = @transform_0, window_bounds = array<i64: 8, 512>}, {pipeline_mode = #tpu.pipeline_mode<synchronous>, transform_indices = @transform_1, window_bounds = array<i64: 8, 512>}, {pipeline_mode = #tpu.pipeline_mode<synchronous>, transform_indices = @transform_2, window_bounds = array<i64: 32, 72>}, {pipeline_mode = #tpu.pipeline_mode<synchronous>, transform_indices = @transform_3, window_bounds = array<i64: 80, 216>}, {pipeline_mode = #tpu.pipeline_mode<synchronous>, transform_indices = @transform_4, window_bounds = array<i64: 192, 16>}, {pipeline_mode = #tpu.pipeline_mode<synchronous>, transform_indices = @transform_5, window_bounds = array<i64: 304, 1>}, {pipeline_mode = #tpu.pipeline_mode<synchronous>, transform_indices = @transform_6, window_bounds = array<i64: 16, 512>}]} {
    %c0 = arith.constant 0 : index
    %c0_0 = arith.constant 0 : index
    %0 = vector.load %arg1[%c0, %c0_0] : memref<8x512xf32, #tpu.memory_space<vmem>>, vector<8x512xf32>
    %c17_i32 = arith.constant 17 : i32
    %1 = tpu.dynamic_rotate %0 by %c17_i32 dim 1 : vector<8x512xf32>, i32 -> vector<8x512xf32>
    %c0_1 = arith.constant 0 : index
    %c0_2 = arith.constant 0 : index
    %2 = vector.load %arg2[%c0_1, %c0_2] : memref<8x512xf32, #tpu.memory_space<vmem>>, vector<1x512xf32>
    %3 = vector.broadcast %2 : vector<1x512xf32> to vector<8x512xf32>
    %4 = arith.mulf %1, %3 : vector<8x512xf32>
    %c0_3 = arith.constant 0 : index
    %c0_4 = arith.constant 0 : index
    %5 = vector.load %arg8[%c0_3, %c0_4] : memref<216x512xf32, #tpu.memory_space<vmem>>, vector<8x512xf32>
    tpu.vector_store %arg8[%c0_3, %c0_4], %4 {strides = array<i32>} : memref<216x512xf32, #tpu.memory_space<vmem>>, vector<8x512xf32>,
    %c16_i32 = arith.constant 16 : i32
    %6 = tpu.dynamic_rotate %0 by %c16_i32 dim 1 : vector<8x512xf32>, i32 -> vector<8x512xf32>
    %c1 = arith.constant 1 : index
    %c0_5 = arith.constant 0 : index
    %7 = vector.load %arg2[%c1, %c0_5] : memref<8x512xf32, #tpu.memory_space<vmem>>, vector<1x512xf32>
    %8 = vector.broadcast %7 : vector<1x512xf32> to vector<8x512xf32>
    %9 = arith.mulf %6, %8 : vector<8x512xf32>
    %c8 = arith.constant 8 : index
    %c0_6 = arith.constant 0 : index
    %10 = vector.load %arg8[%c8, %c0_6] : memref<216x512xf32, #tpu.memory_space<vmem>>, vector<8x512xf32>
    tpu.vector_store %arg8[%c8, %c0_6], %9 {strides = array<i32>} : memref<216x512xf32, #tpu.memory_space<vmem>>, vector<8x512xf32>,
    %c15_i32 = arith.constant 15 : i32
    %11 = tpu.dynamic_rotate %0 by %c15_i32 dim 1 : vector<8x512xf32>, i32 -> vector<8x512xf32>
    %c2 = arith.constant 2 : index
    %c0_7 = arith.constant 0 : index
    %12 = vector.load %arg2[%c2, %c0_7] : memref<8x512xf32, #tpu.memory_space<vmem>>, vector<1x512xf32>
    %13 = vector.broadcast %12 : vector<1x512xf32> to vector<8x512xf32>
    %14 = arith.mulf %11, %13 : vector<8x512xf32>
    %c16 = arith.constant 16 : index
    %c0_8 = arith.constant 0 : index
    %15 = vector.load %arg8[%c16, %c0_8] : memref<216x512xf32, #tpu.memory_space<vmem>>, vector<8x512xf32>
    tpu.vector_store %arg8[%c16, %c0_8], %14 {strides = array<i32>} : memref<216x512xf32, #tpu.memory_space<vmem>>, vector<8x512xf32>,
    %c1_i32 = arith.constant 1 : i32
    %16 = tpu.dynamic_rotate %0 by %c1_i32 dim 1 : vector<8x512xf32>, i32 -> vector<8x512xf32>
    %c3 = arith.constant 3 : index
    %c0_9 = arith.constant 0 : index
    %17 = vector.load %arg2[%c3, %c0_9] : memref<8x512xf32, #tpu.memory_space<vmem>>, vector<1x512xf32>
    %18 = vector.broadcast %17 : vector<1x512xf32> to vector<8x512xf32>
    %19 = arith.mulf %16, %18 : vector<8x512xf32>
    %c24 = arith.constant 24 : index
    %c0_10 = arith.constant 0 : index
    %20 = vector.load %arg8[%c24, %c0_10] : memref<216x512xf32, #tpu.memory_space<vmem>>, vector<8x512xf32>
    tpu.vector_store %arg8[%c24, %c0_10], %19 {strides = array<i32>} : memref<216x512xf32, #tpu.memory_space<vmem>>, vector<8x512xf32>,
    %c32 = arith.constant 32 : index
    %c0_11 = arith.constant 0 : index
    %21 = vector.load %arg8[%c32, %c0_11] : memref<216x512xf32, #tpu.memory_space<vmem>>, vector<8x512xf32>
    tpu.vector_store %arg8[%c32, %c0_11], %0 {strides = array<i32>} : memref<216x512xf32, #tpu.memory_space<vmem>>, vector<8x512xf32>,
    %c511_i32 = arith.constant 511 : i32
    %22 = tpu.dynamic_rotate %0 by %c511_i32 dim 1 : vector<8x512xf32>, i32 -> vector<8x512xf32>
    %c4 = arith.constant 4 : index
    %c0_12 = arith.constant 0 : index
    %23 = vector.load %arg2[%c4, %c0_12] : memref<8x512xf32, #tpu.memory_space<vmem>>, vector<1x512xf32>
    %24 = vector.broadcast %23 : vector<1x512xf32> to vector<8x512xf32>
    %25 = arith.mulf %22, %24 : vector<8x512xf32>
    %c40 = arith.constant 40 : index
    %c0_13 = arith.constant 0 : index
    %26 = vector.load %arg8[%c40, %c0_13] : memref<216x512xf32, #tpu.memory_space<vmem>>, vector<8x512xf32>
    tpu.vector_store %arg8[%c40, %c0_13], %25 {strides = array<i32>} : memref<216x512xf32, #tpu.memory_space<vmem>>, vector<8x512xf32>,
    %c497_i32 = arith.constant 497 : i32
    %27 = tpu.dynamic_rotate %0 by %c497_i32 dim 1 : vector<8x512xf32>, i32 -> vector<8x512xf32>
    %c5 = arith.constant 5 : index
    %c0_14 = arith.constant 0 : index
    %28 = vector.load %arg2[%c5, %c0_14] : memref<8x512xf32, #tpu.memory_space<vmem>>, vector<1x512xf32>
    %29 = vector.broadcast %28 : vector<1x512xf32> to vector<8x512xf32>
    %30 = arith.mulf %27, %29 : vector<8x512xf32>
    %c48 = arith.constant 48 : index
    %c0_15 = arith.constant 0 : index
    %31 = vector.load %arg8[%c48, %c0_15] : memref<216x512xf32, #tpu.memory_space<vmem>>, vector<8x512xf32>
    tpu.vector_store %arg8[%c48, %c0_15], %30 {strides = array<i32>} : memref<216x512xf32, #tpu.memory_space<vmem>>, vector<8x512xf32>,
    %c496_i32 = arith.constant 496 : i32
    %32 = tpu.dynamic_rotate %0 by %c496_i32 dim 1 : vector<8x512xf32>, i32 -> vector<8x512xf32>
    %c6 = arith.constant 6 : index
    %c0_16 = arith.constant 0 : index
    %33 = vector.load %arg2[%c6, %c0_16] : memref<8x512xf32, #tpu.memory_space<vmem>>, vector<1x512xf32>
    %34 = vector.broadcast %33 : vector<1x512xf32> to vector<8x512xf32>
    %35 = arith.mulf %32, %34 : vector<8x512xf32>
    %c56 = arith.constant 56 : index
    %c0_17 = arith.constant 0 : index
    %36 = vector.load %arg8[%c56, %c0_17] : memref<216x512xf32, #tpu.memory_space<vmem>>, vector<8x512xf32>
    tpu.vector_store %arg8[%c56, %c0_17], %35 {strides = array<i32>} : memref<216x512xf32, #tpu.memory_space<vmem>>, vector<8x512xf32>,
    %c495_i32 = arith.constant 495 : i32
    %37 = tpu.dynamic_rotate %0 by %c495_i32 dim 1 : vector<8x512xf32>, i32 -> vector<8x512xf32>
    %c7 = arith.constant 7 : index
    %c0_18 = arith.constant 0 : index
    %38 = vector.load %arg2[%c7, %c0_18] : memref<8x512xf32, #tpu.memory_space<vmem>>, vector<1x512xf32>
    %39 = vector.broadcast %38 : vector<1x512xf32> to vector<8x512xf32>
    %40 = arith.mulf %37, %39 : vector<8x512xf32>
    %c64 = arith.constant 64 : index
    %c0_19 = arith.constant 0 : index
    %41 = vector.load %arg8[%c64, %c0_19] : memref<216x512xf32, #tpu.memory_space<vmem>>, vector<8x512xf32>
    tpu.vector_store %arg8[%c64, %c0_19], %40 {strides = array<i32>} : memref<216x512xf32, #tpu.memory_space<vmem>>, vector<8x512xf32>,
    %c0_20 = arith.constant 0 : index
    %c0_21 = arith.constant 0 : index
    %42 = vector.load %arg3[%c0_20, %c0_21] : memref<32x72xf32, #tpu.memory_space<vmem>>, vector<8x72xf32>
    %c0_22 = arith.constant 0 : index
    %c0_23 = arith.constant 0 : index
    %43 = vector.load %arg8[%c0_22, %c0_23] : memref<216x512xf32, #tpu.memory_space<vmem>>, vector<72x512xf32>
    %cst = arith.constant dense<0.000000e+00> : vector<8x512xf32>
    %44 = tpu.matmul %42, %43, %cst {dimension_numbers = #tpu.dot_dimension_numbers<[1], [0], [0], [1], [0, 0, 1, 1], [], []>} : vector<8x72xf32>, vector<72x512xf32>, vector<8x512xf32> -> vector<8x512xf32>
    %c0_24 = arith.constant 0 : index
    %c0_25 = arith.constant 0 : index
    %45 = vector.load %arg6[%c0_24, %c0_25] : memref<304x1xf32, #tpu.memory_space<vmem>>, vector<8x1xf32>
    %46 = vector.broadcast %45 : vector<8x1xf32> to vector<8x512xf32>
    %47 = arith.addf %44, %46 : vector<8x512xf32>
    %cst_26 = arith.constant 0.000000e+00 : f32
    %48 = vector.broadcast %cst_26 : f32 to vector<8x512xf32>
    %49 = arith.maximumf %47, %48 : vector<8x512xf32>
    %c17_i32_27 = arith.constant 17 : i32
    %50 = tpu.dynamic_rotate %49 by %c17_i32_27 dim 1 : vector<8x512xf32>, i32 -> vector<8x512xf32>
    %c0_28 = arith.constant 0 : index
    %c0_29 = arith.constant 0 : index
    %51 = vector.load %arg2[%c0_28, %c0_29] : memref<8x512xf32, #tpu.memory_space<vmem>>, vector<1x512xf32>
    %52 = vector.broadcast %51 : vector<1x512xf32> to vector<8x512xf32>
    %53 = arith.mulf %50, %52 : vector<8x512xf32>
    %c0_30 = arith.constant 0 : index
    %c0_31 = arith.constant 0 : index
    %54 = vector.load %arg8[%c0_30, %c0_31] : memref<216x512xf32, #tpu.memory_space<vmem>>, vector<8x512xf32>
    tpu.vector_store %arg8[%c0_30, %c0_31], %53 {strides = array<i32>} : memref<216x512xf32, #tpu.memory_space<vmem>>, vector<8x512xf32>,
    %c16_i32_32 = arith.constant 16 : i32
    %55 = tpu.dynamic_rotate %49 by %c16_i32_32 dim 1 : vector<8x512xf32>, i32 -> vector<8x512xf32>
    %c1_33 = arith.constant 1 : index
    %c0_34 = arith.constant 0 : index
    %56 = vector.load %arg2[%c1_33, %c0_34] : memref<8x512xf32, #tpu.memory_space<vmem>>, vector<1x512xf32>
    %57 = vector.broadcast %56 : vector<1x512xf32> to vector<8x512xf32>
    %58 = arith.mulf %55, %57 : vector<8x512xf32>
    %c8_35 = arith.constant 8 : index
    %c0_36 = arith.constant 0 : index
    %59 = vector.load %arg8[%c8_35, %c0_36] : memref<216x512xf32, #tpu.memory_space<vmem>>, vector<8x512xf32>
    tpu.vector_store %arg8[%c8_35, %c0_36], %58 {strides = array<i32>} : memref<216x512xf32, #tpu.memory_space<vmem>>, vector<8x512xf32>,
    %c15_i32_37 = arith.constant 15 : i32
    %60 = tpu.dynamic_rotate %49 by %c15_i32_37 dim 1 : vector<8x512xf32>, i32 -> vector<8x512xf32>
    %c2_38 = arith.constant 2 : index
    %c0_39 = arith.constant 0 : index
    %61 = vector.load %arg2[%c2_38, %c0_39] : memref<8x512xf32, #tpu.memory_space<vmem>>, vector<1x512xf32>
    %62 = vector.broadcast %61 : vector<1x512xf32> to vector<8x512xf32>
    %63 = arith.mulf %60, %62 : vector<8x512xf32>
    %c16_40 = arith.constant 16 : index
    %c0_41 = arith.constant 0 : index
    %64 = vector.load %arg8[%c16_40, %c0_41] : memref<216x512xf32, #tpu.memory_space<vmem>>, vector<8x512xf32>
    tpu.vector_store %arg8[%c16_40, %c0_41], %63 {strides = array<i32>} : memref<216x512xf32, #tpu.memory_space<vmem>>, vector<8x512xf32>,
    %c1_i32_42 = arith.constant 1 : i32
    %65 = tpu.dynamic_rotate %49 by %c1_i32_42 dim 1 : vector<8x512xf32>, i32 -> vector<8x512xf32>
    %c3_43 = arith.constant 3 : index
    %c0_44 = arith.constant 0 : index
    %66 = vector.load %arg2[%c3_43, %c0_44] : memref<8x512xf32, #tpu.memory_space<vmem>>, vector<1x512xf32>
    %67 = vector.broadcast %66 : vector<1x512xf32> to vector<8x512xf32>
    %68 = arith.mulf %65, %67 : vector<8x512xf32>
    %c24_45 = arith.constant 24 : index
    %c0_46 = arith.constant 0 : index
    %69 = vector.load %arg8[%c24_45, %c0_46] : memref<216x512xf32, #tpu.memory_space<vmem>>, vector<8x512xf32>
    tpu.vector_store %arg8[%c24_45, %c0_46], %68 {strides = array<i32>} : memref<216x512xf32, #tpu.memory_space<vmem>>, vector<8x512xf32>,
    %c32_47 = arith.constant 32 : index
    %c0_48 = arith.constant 0 : index
    %70 = vector.load %arg8[%c32_47, %c0_48] : memref<216x512xf32, #tpu.memory_space<vmem>>, vector<8x512xf32>
    tpu.vector_store %arg8[%c32_47, %c0_48], %49 {strides = array<i32>} : memref<216x512xf32, #tpu.memory_space<vmem>>, vector<8x512xf32>,
    %c511_i32_49 = arith.constant 511 : i32
    %71 = tpu.dynamic_rotate %49 by %c511_i32_49 dim 1 : vector<8x512xf32>, i32 -> vector<8x512xf32>
    %c4_50 = arith.constant 4 : index
    %c0_51 = arith.constant 0 : index
    %72 = vector.load %arg2[%c4_50, %c0_51] : memref<8x512xf32, #tpu.memory_space<vmem>>, vector<1x512xf32>
    %73 = vector.broadcast %72 : vector<1x512xf32> to vector<8x512xf32>
    %74 = arith.mulf %71, %73 : vector<8x512xf32>
    %c40_52 = arith.constant 40 : index
    %c0_53 = arith.constant 0 : index
    %75 = vector.load %arg8[%c40_52, %c0_53] : memref<216x512xf32, #tpu.memory_space<vmem>>, vector<8x512xf32>
    tpu.vector_store %arg8[%c40_52, %c0_53], %74 {strides = array<i32>} : memref<216x512xf32, #tpu.memory_space<vmem>>, vector<8x512xf32>,
    %c497_i32_54 = arith.constant 497 : i32
    %76 = tpu.dynamic_rotate %49 by %c497_i32_54 dim 1 : vector<8x512xf32>, i32 -> vector<8x512xf32>
    %c5_55 = arith.constant 5 : index
    %c0_56 = arith.constant 0 : index
    %77 = vector.load %arg2[%c5_55, %c0_56] : memref<8x512xf32, #tpu.memory_space<vmem>>, vector<1x512xf32>
    %78 = vector.broadcast %77 : vector<1x512xf32> to vector<8x512xf32>
    %79 = arith.mulf %76, %78 : vector<8x512xf32>
    %c48_57 = arith.constant 48 : index
    %c0_58 = arith.constant 0 : index
    %80 = vector.load %arg8[%c48_57, %c0_58] : memref<216x512xf32, #tpu.memory_space<vmem>>, vector<8x512xf32>
    tpu.vector_store %arg8[%c48_57, %c0_58], %79 {strides = array<i32>} : memref<216x512xf32, #tpu.memory_space<vmem>>, vector<8x512xf32>,
    %c496_i32_59 = arith.constant 496 : i32
    %81 = tpu.dynamic_rotate %49 by %c496_i32_59 dim 1 : vector<8x512xf32>, i32 -> vector<8x512xf32>
    %c6_60 = arith.constant 6 : index
    %c0_61 = arith.constant 0 : index
    %82 = vector.load %arg2[%c6_60, %c0_61] : memref<8x512xf32, #tpu.memory_space<vmem>>, vector<1x512xf32>
    %83 = vector.broadcast %82 : vector<1x512xf32> to vector<8x512xf32>
    %84 = arith.mulf %81, %83 : vector<8x512xf32>
    %c56_62 = arith.constant 56 : index
    %c0_63 = arith.constant 0 : index
    %85 = vector.load %arg8[%c56_62, %c0_63] : memref<216x512xf32, #tpu.memory_space<vmem>>, vector<8x512xf32>
    tpu.vector_store %arg8[%c56_62, %c0_63], %84 {strides = array<i32>} : memref<216x512xf32, #tpu.memory_space<vmem>>, vector<8x512xf32>,
    %c495_i32_64 = arith.constant 495 : i32
    %86 = tpu.dynamic_rotate %49 by %c495_i32_64 dim 1 : vector<8x512xf32>, i32 -> vector<8x512xf32>
    %c7_65 = arith.constant 7 : index
    %c0_66 = arith.constant 0 : index
    %87 = vector.load %arg2[%c7_65, %c0_66] : memref<8x512xf32, #tpu.memory_space<vmem>>, vector<1x512xf32>
    %88 = vector.broadcast %87 : vector<1x512xf32> to vector<8x512xf32>
    %89 = arith.mulf %86, %88 : vector<8x512xf32>
    %c64_67 = arith.constant 64 : index
    %c0_68 = arith.constant 0 : index
    %90 = vector.load %arg8[%c64_67, %c0_68] : memref<216x512xf32, #tpu.memory_space<vmem>>, vector<8x512xf32>
    tpu.vector_store %arg8[%c64_67, %c0_68], %89 {strides = array<i32>} : memref<216x512xf32, #tpu.memory_space<vmem>>, vector<8x512xf32>,
    %c8_69 = arith.constant 8 : index
    %c0_70 = arith.constant 0 : index
    %91 = vector.load %arg3[%c8_69, %c0_70] : memref<32x72xf32, #tpu.memory_space<vmem>>, vector<8x72xf32>
    %c0_71 = arith.constant 0 : index
    %c0_72 = arith.constant 0 : index
    %92 = vector.load %arg8[%c0_71, %c0_72] : memref<216x512xf32, #tpu.memory_space<vmem>>, vector<72x512xf32>
    %cst_73 = arith.constant dense<0.000000e+00> : vector<8x512xf32>
    %93 = tpu.matmul %91, %92, %cst_73 {dimension_numbers = #tpu.dot_dimension_numbers<[1], [0], [0], [1], [0, 0, 1, 1], [], []>} : vector<8x72xf32>, vector<72x512xf32>, vector<8x512xf32> -> vector<8x512xf32>
    %c8_74 = arith.constant 8 : index
    %c0_75 = arith.constant 0 : index
    %94 = vector.load %arg6[%c8_74, %c0_75] : memref<304x1xf32, #tpu.memory_space<vmem>>, vector<8x1xf32>
    %95 = vector.broadcast %94 : vector<8x1xf32> to vector<8x512xf32>
    %96 = arith.addf %93, %95 : vector<8x512xf32>
    %cst_76 = arith.constant 0.000000e+00 : f32
    %97 = vector.broadcast %cst_76 : f32 to vector<8x512xf32>
    %98 = arith.maximumf %96, %97 : vector<8x512xf32>
    %c16_77 = arith.constant 16 : index
    %c0_78 = arith.constant 0 : index
    %99 = vector.load %arg9[%c16_77, %c0_78] : memref<24x512xf32, #tpu.memory_space<vmem>>, vector<8x512xf32>
    tpu.vector_store %arg9[%c16_77, %c0_78], %98 {strides = array<i32>} : memref<24x512xf32, #tpu.memory_space<vmem>>, vector<8x512xf32>,
    %c17_i32_79 = arith.constant 17 : i32
    %100 = tpu.dynamic_rotate %98 by %c17_i32_79 dim 1 : vector<8x512xf32>, i32 -> vector<8x512xf32>
    %c0_80 = arith.constant 0 : index
    %c0_81 = arith.constant 0 : index
    %101 = vector.load %arg2[%c0_80, %c0_81] : memref<8x512xf32, #tpu.memory_space<vmem>>, vector<1x512xf32>
    %102 = vector.broadcast %101 : vector<1x512xf32> to vector<8x512xf32>
    %103 = arith.mulf %100, %102 : vector<8x512xf32>
    %c0_82 = arith.constant 0 : index
    %c0_83 = arith.constant 0 : index
    %104 = vector.load %arg8[%c0_82, %c0_83] : memref<216x512xf32, #tpu.memory_space<vmem>>, vector<8x512xf32>
    tpu.vector_store %arg8[%c0_82, %c0_83], %103 {strides = array<i32>} : memref<216x512xf32, #tpu.memory_space<vmem>>, vector<8x512xf32>,
    %c16_i32_84 = arith.constant 16 : i32
    %105 = tpu.dynamic_rotate %98 by %c16_i32_84 dim 1 : vector<8x512xf32>, i32 -> vector<8x512xf32>
    %c1_85 = arith.constant 1 : index
    %c0_86 = arith.constant 0 : index
    %106 = vector.load %arg2[%c1_85, %c0_86] : memref<8x512xf32, #tpu.memory_space<vmem>>, vector<1x512xf32>
    %107 = vector.broadcast %106 : vector<1x512xf32> to vector<8x512xf32>
    %108 = arith.mulf %105, %107 : vector<8x512xf32>
    %c8_87 = arith.constant 8 : index
    %c0_88 = arith.constant 0 : index
    %109 = vector.load %arg8[%c8_87, %c0_88] : memref<216x512xf32, #tpu.memory_space<vmem>>, vector<8x512xf32>
    tpu.vector_store %arg8[%c8_87, %c0_88], %108 {strides = array<i32>} : memref<216x512xf32, #tpu.memory_space<vmem>>, vector<8x512xf32>,
    %c15_i32_89 = arith.constant 15 : i32
    %110 = tpu.dynamic_rotate %98 by %c15_i32_89 dim 1 : vector<8x512xf32>, i32 -> vector<8x512xf32>
    %c2_90 = arith.constant 2 : index
    %c0_91 = arith.constant 0 : index
    %111 = vector.load %arg2[%c2_90, %c0_91] : memref<8x512xf32, #tpu.memory_space<vmem>>, vector<1x512xf32>
    %112 = vector.broadcast %111 : vector<1x512xf32> to vector<8x512xf32>
    %113 = arith.mulf %110, %112 : vector<8x512xf32>
    %c16_92 = arith.constant 16 : index
    %c0_93 = arith.constant 0 : index
    %114 = vector.load %arg8[%c16_92, %c0_93] : memref<216x512xf32, #tpu.memory_space<vmem>>, vector<8x512xf32>
    tpu.vector_store %arg8[%c16_92, %c0_93], %113 {strides = array<i32>} : memref<216x512xf32, #tpu.memory_space<vmem>>, vector<8x512xf32>,
    %c1_i32_94 = arith.constant 1 : i32
    %115 = tpu.dynamic_rotate %98 by %c1_i32_94 dim 1 : vector<8x512xf32>, i32 -> vector<8x512xf32>
    %c3_95 = arith.constant 3 : index
    %c0_96 = arith.constant 0 : index
    %116 = vector.load %arg2[%c3_95, %c0_96] : memref<8x512xf32, #tpu.memory_space<vmem>>, vector<1x512xf32>
    %117 = vector.broadcast %116 : vector<1x512xf32> to vector<8x512xf32>
    %118 = arith.mulf %115, %117 : vector<8x512xf32>
    %c24_97 = arith.constant 24 : index
    %c0_98 = arith.constant 0 : index
    %119 = vector.load %arg8[%c24_97, %c0_98] : memref<216x512xf32, #tpu.memory_space<vmem>>, vector<8x512xf32>
    tpu.vector_store %arg8[%c24_97, %c0_98], %118 {strides = array<i32>} : memref<216x512xf32, #tpu.memory_space<vmem>>, vector<8x512xf32>,
    %c32_99 = arith.constant 32 : index
    %c0_100 = arith.constant 0 : index
    %120 = vector.load %arg8[%c32_99, %c0_100] : memref<216x512xf32, #tpu.memory_space<vmem>>, vector<8x512xf32>
    tpu.vector_store %arg8[%c32_99, %c0_100], %98 {strides = array<i32>} : memref<216x512xf32, #tpu.memory_space<vmem>>, vector<8x512xf32>,
    %c511_i32_101 = arith.constant 511 : i32
    %121 = tpu.dynamic_rotate %98 by %c511_i32_101 dim 1 : vector<8x512xf32>, i32 -> vector<8x512xf32>
    %c4_102 = arith.constant 4 : index
    %c0_103 = arith.constant 0 : index
    %122 = vector.load %arg2[%c4_102, %c0_103] : memref<8x512xf32, #tpu.memory_space<vmem>>, vector<1x512xf32>
    %123 = vector.broadcast %122 : vector<1x512xf32> to vector<8x512xf32>
    %124 = arith.mulf %121, %123 : vector<8x512xf32>
    %c40_104 = arith.constant 40 : index
    %c0_105 = arith.constant 0 : index
    %125 = vector.load %arg8[%c40_104, %c0_105] : memref<216x512xf32, #tpu.memory_space<vmem>>, vector<8x512xf32>
    tpu.vector_store %arg8[%c40_104, %c0_105], %124 {strides = array<i32>} : memref<216x512xf32, #tpu.memory_space<vmem>>, vector<8x512xf32>,
    %c497_i32_106 = arith.constant 497 : i32
    %126 = tpu.dynamic_rotate %98 by %c497_i32_106 dim 1 : vector<8x512xf32>, i32 -> vector<8x512xf32>
    %c5_107 = arith.constant 5 : index
    %c0_108 = arith.constant 0 : index
    %127 = vector.load %arg2[%c5_107, %c0_108] : memref<8x512xf32, #tpu.memory_space<vmem>>, vector<1x512xf32>
    %128 = vector.broadcast %127 : vector<1x512xf32> to vector<8x512xf32>
    %129 = arith.mulf %126, %128 : vector<8x512xf32>
    %c48_109 = arith.constant 48 : index
    %c0_110 = arith.constant 0 : index
    %130 = vector.load %arg8[%c48_109, %c0_110] : memref<216x512xf32, #tpu.memory_space<vmem>>, vector<8x512xf32>
    tpu.vector_store %arg8[%c48_109, %c0_110], %129 {strides = array<i32>} : memref<216x512xf32, #tpu.memory_space<vmem>>, vector<8x512xf32>,
    %c496_i32_111 = arith.constant 496 : i32
    %131 = tpu.dynamic_rotate %98 by %c496_i32_111 dim 1 : vector<8x512xf32>, i32 -> vector<8x512xf32>
    %c6_112 = arith.constant 6 : index
    %c0_113 = arith.constant 0 : index
    %132 = vector.load %arg2[%c6_112, %c0_113] : memref<8x512xf32, #tpu.memory_space<vmem>>, vector<1x512xf32>
    %133 = vector.broadcast %132 : vector<1x512xf32> to vector<8x512xf32>
    %134 = arith.mulf %131, %133 : vector<8x512xf32>
    %c56_114 = arith.constant 56 : index
    %c0_115 = arith.constant 0 : index
    %135 = vector.load %arg8[%c56_114, %c0_115] : memref<216x512xf32, #tpu.memory_space<vmem>>, vector<8x512xf32>
    tpu.vector_store %arg8[%c56_114, %c0_115], %134 {strides = array<i32>} : memref<216x512xf32, #tpu.memory_space<vmem>>, vector<8x512xf32>,
    %c495_i32_116 = arith.constant 495 : i32
    %136 = tpu.dynamic_rotate %98 by %c495_i32_116 dim 1 : vector<8x512xf32>, i32 -> vector<8x512xf32>
    %c7_117 = arith.constant 7 : index
    %c0_118 = arith.constant 0 : index
    %137 = vector.load %arg2[%c7_117, %c0_118] : memref<8x512xf32, #tpu.memory_space<vmem>>, vector<1x512xf32>
    %138 = vector.broadcast %137 : vector<1x512xf32> to vector<8x512xf32>
    %139 = arith.mulf %136, %138 : vector<8x512xf32>
    %c64_119 = arith.constant 64 : index
    %c0_120 = arith.constant 0 : index
    %140 = vector.load %arg8[%c64_119, %c0_120] : memref<216x512xf32, #tpu.memory_space<vmem>>, vector<8x512xf32>
    tpu.vector_store %arg8[%c64_119, %c0_120], %139 {strides = array<i32>} : memref<216x512xf32, #tpu.memory_space<vmem>>, vector<8x512xf32>,
    %c16_121 = arith.constant 16 : index
    %c0_122 = arith.constant 0 : index
    %141 = vector.load %arg3[%c16_121, %c0_122] : memref<32x72xf32, #tpu.memory_space<vmem>>, vector<16x72xf32>
    %c0_123 = arith.constant 0 : index
    %c0_124 = arith.constant 0 : index
    %142 = vector.load %arg8[%c0_123, %c0_124] : memref<216x512xf32, #tpu.memory_space<vmem>>, vector<72x512xf32>
    %cst_125 = arith.constant dense<0.000000e+00> : vector<16x512xf32>
    %143 = tpu.matmul %141, %142, %cst_125 {dimension_numbers = #tpu.dot_dimension_numbers<[1], [0], [0], [1], [0, 0, 1, 1], [], []>} : vector<16x72xf32>, vector<72x512xf32>, vector<16x512xf32> -> vector<16x512xf32>
    %c16_126 = arith.constant 16 : index
    %c0_127 = arith.constant 0 : index
    %144 = vector.load %arg6[%c16_126, %c0_127] : memref<304x1xf32, #tpu.memory_space<vmem>>, vector<16x1xf32>
    %145 = vector.broadcast %144 : vector<16x1xf32> to vector<16x512xf32>
    %146 = arith.addf %143, %145 : vector<16x512xf32>
    %cst_128 = arith.constant 0.000000e+00 : f32
    %147 = vector.broadcast %cst_128 : f32 to vector<16x512xf32>
    %148 = arith.maximumf %146, %147 : vector<16x512xf32>
    %c0_129 = arith.constant 0 : index
    %c0_130 = arith.constant 0 : index
    %149 = vector.load %arg5[%c0_129, %c0_130] : memref<192x16xf32, #tpu.memory_space<vmem>>, vector<16x16xf32>
    %cst_131 = arith.constant dense<0.000000e+00> : vector<16x512xf32>
    %150 = tpu.matmul %149, %148, %cst_131 {dimension_numbers = #tpu.dot_dimension_numbers<[1], [0], [0], [1], [0, 0, 1, 1], [], []>} : vector<16x16xf32>, vector<16x512xf32>, vector<16x512xf32> -> vector<16x512xf32>
    %c32_132 = arith.constant 32 : index
    %c0_133 = arith.constant 0 : index
    %151 = vector.load %arg6[%c32_132, %c0_133] : memref<304x1xf32, #tpu.memory_space<vmem>>, vector<16x1xf32>
    %152 = vector.broadcast %151 : vector<16x1xf32> to vector<16x512xf32>
    %153 = arith.addf %150, %152 : vector<16x512xf32>
    %cst_134 = arith.constant 0.000000e+00 : f32
    %154 = vector.broadcast %cst_134 : f32 to vector<16x512xf32>
    %155 = arith.maximumf %153, %154 : vector<16x512xf32>
    %c16_135 = arith.constant 16 : index
    %c0_136 = arith.constant 0 : index
    %156 = vector.load %arg5[%c16_135, %c0_136] : memref<192x16xf32, #tpu.memory_space<vmem>>, vector<16x16xf32>
    %cst_137 = arith.constant dense<0.000000e+00> : vector<16x512xf32>
    %157 = tpu.matmul %156, %155, %cst_137 {dimension_numbers = #tpu.dot_dimension_numbers<[1], [0], [0], [1], [0, 0, 1, 1], [], []>} : vector<16x16xf32>, vector<16x512xf32>, vector<16x512xf32> -> vector<16x512xf32>
    %c48_138 = arith.constant 48 : index
    %c0_139 = arith.constant 0 : index
    %158 = vector.load %arg6[%c48_138, %c0_139] : memref<304x1xf32, #tpu.memory_space<vmem>>, vector<16x1xf32>
    %159 = vector.broadcast %158 : vector<16x1xf32> to vector<16x512xf32>
    %160 = arith.addf %157, %159 : vector<16x512xf32>
    %c0_140 = arith.constant 0 : index
    %c0_141 = arith.constant 0 : index
    %161 = vector.load %arg9[%c0_140, %c0_141] : memref<24x512xf32, #tpu.memory_space<vmem>>, vector<16x512xf32>
    tpu.vector_store %arg9[%c0_140, %c0_141], %160 {strides = array<i32>} : memref<24x512xf32, #tpu.memory_space<vmem>>, vector<16x512xf32>,
    %c0_142 = arith.constant 0 : index
    %c0_143 = arith.constant 0 : index
    %162 = vector.load %arg9[%c0_142, %c0_143] : memref<24x512xf32, #tpu.memory_space<vmem>>, vector<24x512xf32>
    %c17_i32_144 = arith.constant 17 : i32
    %163 = tpu.dynamic_rotate %162 by %c17_i32_144 dim 1 : vector<24x512xf32>, i32 -> vector<24x512xf32>
    %c0_145 = arith.constant 0 : index
    %c0_146 = arith.constant 0 : index
    %164 = vector.load %arg2[%c0_145, %c0_146] : memref<8x512xf32, #tpu.memory_space<vmem>>, vector<1x512xf32>
    %165 = vector.broadcast %164 : vector<1x512xf32> to vector<24x512xf32>
    %166 = arith.mulf %163, %165 : vector<24x512xf32>
    %c0_147 = arith.constant 0 : index
    %c0_148 = arith.constant 0 : index
    %167 = vector.load %arg8[%c0_147, %c0_148] : memref<216x512xf32, #tpu.memory_space<vmem>>, vector<24x512xf32>
    tpu.vector_store %arg8[%c0_147, %c0_148], %166 {strides = array<i32>} : memref<216x512xf32, #tpu.memory_space<vmem>>, vector<24x512xf32>,
    %c16_i32_149 = arith.constant 16 : i32
    %168 = tpu.dynamic_rotate %162 by %c16_i32_149 dim 1 : vector<24x512xf32>, i32 -> vector<24x512xf32>
    %c1_150 = arith.constant 1 : index
    %c0_151 = arith.constant 0 : index
    %169 = vector.load %arg2[%c1_150, %c0_151] : memref<8x512xf32, #tpu.memory_space<vmem>>, vector<1x512xf32>
    %170 = vector.broadcast %169 : vector<1x512xf32> to vector<24x512xf32>
    %171 = arith.mulf %168, %170 : vector<24x512xf32>
    %c24_152 = arith.constant 24 : index
    %c0_153 = arith.constant 0 : index
    %172 = vector.load %arg8[%c24_152, %c0_153] : memref<216x512xf32, #tpu.memory_space<vmem>>, vector<24x512xf32>
    tpu.vector_store %arg8[%c24_152, %c0_153], %171 {strides = array<i32>} : memref<216x512xf32, #tpu.memory_space<vmem>>, vector<24x512xf32>,
    %c15_i32_154 = arith.constant 15 : i32
    %173 = tpu.dynamic_rotate %162 by %c15_i32_154 dim 1 : vector<24x512xf32>, i32 -> vector<24x512xf32>
    %c2_155 = arith.constant 2 : index
    %c0_156 = arith.constant 0 : index
    %174 = vector.load %arg2[%c2_155, %c0_156] : memref<8x512xf32, #tpu.memory_space<vmem>>, vector<1x512xf32>
    %175 = vector.broadcast %174 : vector<1x512xf32> to vector<24x512xf32>
    %176 = arith.mulf %173, %175 : vector<24x512xf32>
    %c48_157 = arith.constant 48 : index
    %c0_158 = arith.constant 0 : index
    %177 = vector.load %arg8[%c48_157, %c0_158] : memref<216x512xf32, #tpu.memory_space<vmem>>, vector<24x512xf32>
    tpu.vector_store %arg8[%c48_157, %c0_158], %176 {strides = array<i32>} : memref<216x512xf32, #tpu.memory_space<vmem>>, vector<24x512xf32>,
    %c1_i32_159 = arith.constant 1 : i32
    %178 = tpu.dynamic_rotate %162 by %c1_i32_159 dim 1 : vector<24x512xf32>, i32 -> vector<24x512xf32>
    %c3_160 = arith.constant 3 : index
    %c0_161 = arith.constant 0 : index
    %179 = vector.load %arg2[%c3_160, %c0_161] : memref<8x512xf32, #tpu.memory_space<vmem>>, vector<1x512xf32>
    %180 = vector.broadcast %179 : vector<1x512xf32> to vector<24x512xf32>
    %181 = arith.mulf %178, %180 : vector<24x512xf32>
    %c72 = arith.constant 72 : index
    %c0_162 = arith.constant 0 : index
    %182 = vector.load %arg8[%c72, %c0_162] : memref<216x512xf32, #tpu.memory_space<vmem>>, vector<24x512xf32>
    tpu.vector_store %arg8[%c72, %c0_162], %181 {strides = array<i32>} : memref<216x512xf32, #tpu.memory_space<vmem>>, vector<24x512xf32>,
    %c96 = arith.constant 96 : index
    %c0_163 = arith.constant 0 : index
    %183 = vector.load %arg8[%c96, %c0_163] : memref<216x512xf32, #tpu.memory_space<vmem>>, vector<24x512xf32>
    tpu.vector_store %arg8[%c96, %c0_163], %162 {strides = array<i32>} : memref<216x512xf32, #tpu.memory_space<vmem>>, vector<24x512xf32>,
    %c511_i32_164 = arith.constant 511 : i32
    %184 = tpu.dynamic_rotate %162 by %c511_i32_164 dim 1 : vector<24x512xf32>, i32 -> vector<24x512xf32>
    %c4_165 = arith.constant 4 : index
    %c0_166 = arith.constant 0 : index
    %185 = vector.load %arg2[%c4_165, %c0_166] : memref<8x512xf32, #tpu.memory_space<vmem>>, vector<1x512xf32>
    %186 = vector.broadcast %185 : vector<1x512xf32> to vector<24x512xf32>
    %187 = arith.mulf %184, %186 : vector<24x512xf32>
    %c120 = arith.constant 120 : index
    %c0_167 = arith.constant 0 : index
    %188 = vector.load %arg8[%c120, %c0_167] : memref<216x512xf32, #tpu.memory_space<vmem>>, vector<24x512xf32>
    tpu.vector_store %arg8[%c120, %c0_167], %187 {strides = array<i32>} : memref<216x512xf32, #tpu.memory_space<vmem>>, vector<24x512xf32>,
    %c497_i32_168 = arith.constant 497 : i32
    %189 = tpu.dynamic_rotate %162 by %c497_i32_168 dim 1 : vector<24x512xf32>, i32 -> vector<24x512xf32>
    %c5_169 = arith.constant 5 : index
    %c0_170 = arith.constant 0 : index
    %190 = vector.load %arg2[%c5_169, %c0_170] : memref<8x512xf32, #tpu.memory_space<vmem>>, vector<1x512xf32>
    %191 = vector.broadcast %190 : vector<1x512xf32> to vector<24x512xf32>
    %192 = arith.mulf %189, %191 : vector<24x512xf32>
    %c144 = arith.constant 144 : index
    %c0_171 = arith.constant 0 : index
    %193 = vector.load %arg8[%c144, %c0_171] : memref<216x512xf32, #tpu.memory_space<vmem>>, vector<24x512xf32>
    tpu.vector_store %arg8[%c144, %c0_171], %192 {strides = array<i32>} : memref<216x512xf32, #tpu.memory_space<vmem>>, vector<24x512xf32>,
    %c496_i32_172 = arith.constant 496 : i32
    %194 = tpu.dynamic_rotate %162 by %c496_i32_172 dim 1 : vector<24x512xf32>, i32 -> vector<24x512xf32>
    %c6_173 = arith.constant 6 : index
    %c0_174 = arith.constant 0 : index
    %195 = vector.load %arg2[%c6_173, %c0_174] : memref<8x512xf32, #tpu.memory_space<vmem>>, vector<1x512xf32>
    %196 = vector.broadcast %195 : vector<1x512xf32> to vector<24x512xf32>
    %197 = arith.mulf %194, %196 : vector<24x512xf32>
    %c168 = arith.constant 168 : index
    %c0_175 = arith.constant 0 : index
    %198 = vector.load %arg8[%c168, %c0_175] : memref<216x512xf32, #tpu.memory_space<vmem>>, vector<24x512xf32>
    tpu.vector_store %arg8[%c168, %c0_175], %197 {strides = array<i32>} : memref<216x512xf32, #tpu.memory_space<vmem>>, vector<24x512xf32>,
    %c495_i32_176 = arith.constant 495 : i32
    %199 = tpu.dynamic_rotate %162 by %c495_i32_176 dim 1 : vector<24x512xf32>, i32 -> vector<24x512xf32>
    %c7_177 = arith.constant 7 : index
    %c0_178 = arith.constant 0 : index
    %200 = vector.load %arg2[%c7_177, %c0_178] : memref<8x512xf32, #tpu.memory_space<vmem>>, vector<1x512xf32>
    %201 = vector.broadcast %200 : vector<1x512xf32> to vector<24x512xf32>
    %202 = arith.mulf %199, %201 : vector<24x512xf32>
    %c192 = arith.constant 192 : index
    %c0_179 = arith.constant 0 : index
    %203 = vector.load %arg8[%c192, %c0_179] : memref<216x512xf32, #tpu.memory_space<vmem>>, vector<24x512xf32>
    tpu.vector_store %arg8[%c192, %c0_179], %202 {strides = array<i32>} : memref<216x512xf32, #tpu.memory_space<vmem>>, vector<24x512xf32>,
    %c0_180 = arith.constant 0 : index
    %c0_181 = arith.constant 0 : index
    %204 = vector.load %arg4[%c0_180, %c0_181] : memref<80x216xf32, #tpu.memory_space<vmem>>, vector<16x216xf32>
    %c0_182 = arith.constant 0 : index
    %c0_183 = arith.constant 0 : index
    %205 = vector.load %arg8[%c0_182, %c0_183] : memref<216x512xf32, #tpu.memory_space<vmem>>, vector<216x512xf32>
    %cst_184 = arith.constant dense<0.000000e+00> : vector<16x512xf32>
    %206 = tpu.matmul %204, %205, %cst_184 {dimension_numbers = #tpu.dot_dimension_numbers<[1], [0], [0], [1], [0, 0, 1, 1], [], []>} : vector<16x216xf32>, vector<216x512xf32>, vector<16x512xf32> -> vector<16x512xf32>
    %c64_185 = arith.constant 64 : index
    %c0_186 = arith.constant 0 : index
    %207 = vector.load %arg6[%c64_185, %c0_186] : memref<304x1xf32, #tpu.memory_space<vmem>>, vector<16x1xf32>
    %208 = vector.broadcast %207 : vector<16x1xf32> to vector<16x512xf32>
    %209 = arith.addf %206, %208 : vector<16x512xf32>
    %cst_187 = arith.constant 0.000000e+00 : f32
    %210 = vector.broadcast %cst_187 : f32 to vector<16x512xf32>
    %211 = arith.maximumf %209, %210 : vector<16x512xf32>
    %c32_188 = arith.constant 32 : index
    %c0_189 = arith.constant 0 : index
    %212 = vector.load %arg5[%c32_188, %c0_189] : memref<192x16xf32, #tpu.memory_space<vmem>>, vector<16x16xf32>
    %cst_190 = arith.constant dense<0.000000e+00> : vector<16x512xf32>
    %213 = tpu.matmul %212, %211, %cst_190 {dimension_numbers = #tpu.dot_dimension_numbers<[1], [0], [0], [1], [0, 0, 1, 1], [], []>} : vector<16x16xf32>, vector<16x512xf32>, vector<16x512xf32> -> vector<16x512xf32>
    %c80 = arith.constant 80 : index
    %c0_191 = arith.constant 0 : index
    %214 = vector.load %arg6[%c80, %c0_191] : memref<304x1xf32, #tpu.memory_space<vmem>>, vector<16x1xf32>
    %215 = vector.broadcast %214 : vector<16x1xf32> to vector<16x512xf32>
    %216 = arith.addf %213, %215 : vector<16x512xf32>
    %cst_192 = arith.constant 0.000000e+00 : f32
    %217 = vector.broadcast %cst_192 : f32 to vector<16x512xf32>
    %218 = arith.maximumf %216, %217 : vector<16x512xf32>
    %c48_193 = arith.constant 48 : index
    %c0_194 = arith.constant 0 : index
    %219 = vector.load %arg5[%c48_193, %c0_194] : memref<192x16xf32, #tpu.memory_space<vmem>>, vector<16x16xf32>
    %cst_195 = arith.constant dense<0.000000e+00> : vector<16x512xf32>
    %220 = tpu.matmul %219, %218, %cst_195 {dimension_numbers = #tpu.dot_dimension_numbers<[1], [0], [0], [1], [0, 0, 1, 1], [], []>} : vector<16x16xf32>, vector<16x512xf32>, vector<16x512xf32> -> vector<16x512xf32>
    %c96_196 = arith.constant 96 : index
    %c0_197 = arith.constant 0 : index
    %221 = vector.load %arg6[%c96_196, %c0_197] : memref<304x1xf32, #tpu.memory_space<vmem>>, vector<16x1xf32>
    %222 = vector.broadcast %221 : vector<16x1xf32> to vector<16x512xf32>
    %223 = arith.addf %220, %222 : vector<16x512xf32>
    %c0_198 = arith.constant 0 : index
    %c0_199 = arith.constant 0 : index
    %224 = vector.load %arg9[%c0_198, %c0_199] : memref<24x512xf32, #tpu.memory_space<vmem>>, vector<16x512xf32>
    tpu.vector_store %arg9[%c0_198, %c0_199], %223 {strides = array<i32>} : memref<24x512xf32, #tpu.memory_space<vmem>>, vector<16x512xf32>,
    %c0_200 = arith.constant 0 : index
    %c0_201 = arith.constant 0 : index
    %225 = vector.load %arg9[%c0_200, %c0_201] : memref<24x512xf32, #tpu.memory_space<vmem>>, vector<24x512xf32>
    %c17_i32_202 = arith.constant 17 : i32
    %226 = tpu.dynamic_rotate %225 by %c17_i32_202 dim 1 : vector<24x512xf32>, i32 -> vector<24x512xf32>
    %c0_203 = arith.constant 0 : index
    %c0_204 = arith.constant 0 : index
    %227 = vector.load %arg2[%c0_203, %c0_204] : memref<8x512xf32, #tpu.memory_space<vmem>>, vector<1x512xf32>
    %228 = vector.broadcast %227 : vector<1x512xf32> to vector<24x512xf32>
    %229 = arith.mulf %226, %228 : vector<24x512xf32>
    %c0_205 = arith.constant 0 : index
    %c0_206 = arith.constant 0 : index
    %230 = vector.load %arg8[%c0_205, %c0_206] : memref<216x512xf32, #tpu.memory_space<vmem>>, vector<24x512xf32>
    tpu.vector_store %arg8[%c0_205, %c0_206], %229 {strides = array<i32>} : memref<216x512xf32, #tpu.memory_space<vmem>>, vector<24x512xf32>,
    %c16_i32_207 = arith.constant 16 : i32
    %231 = tpu.dynamic_rotate %225 by %c16_i32_207 dim 1 : vector<24x512xf32>, i32 -> vector<24x512xf32>
    %c1_208 = arith.constant 1 : index
    %c0_209 = arith.constant 0 : index
    %232 = vector.load %arg2[%c1_208, %c0_209] : memref<8x512xf32, #tpu.memory_space<vmem>>, vector<1x512xf32>
    %233 = vector.broadcast %232 : vector<1x512xf32> to vector<24x512xf32>
    %234 = arith.mulf %231, %233 : vector<24x512xf32>
    %c24_210 = arith.constant 24 : index
    %c0_211 = arith.constant 0 : index
    %235 = vector.load %arg8[%c24_210, %c0_211] : memref<216x512xf32, #tpu.memory_space<vmem>>, vector<24x512xf32>
    tpu.vector_store %arg8[%c24_210, %c0_211], %234 {strides = array<i32>} : memref<216x512xf32, #tpu.memory_space<vmem>>, vector<24x512xf32>,
    %c15_i32_212 = arith.constant 15 : i32
    %236 = tpu.dynamic_rotate %225 by %c15_i32_212 dim 1 : vector<24x512xf32>, i32 -> vector<24x512xf32>
    %c2_213 = arith.constant 2 : index
    %c0_214 = arith.constant 0 : index
    %237 = vector.load %arg2[%c2_213, %c0_214] : memref<8x512xf32, #tpu.memory_space<vmem>>, vector<1x512xf32>
    %238 = vector.broadcast %237 : vector<1x512xf32> to vector<24x512xf32>
    %239 = arith.mulf %236, %238 : vector<24x512xf32>
    %c48_215 = arith.constant 48 : index
    %c0_216 = arith.constant 0 : index
    %240 = vector.load %arg8[%c48_215, %c0_216] : memref<216x512xf32, #tpu.memory_space<vmem>>, vector<24x512xf32>
    tpu.vector_store %arg8[%c48_215, %c0_216], %239 {strides = array<i32>} : memref<216x512xf32, #tpu.memory_space<vmem>>, vector<24x512xf32>,
    %c1_i32_217 = arith.constant 1 : i32
    %241 = tpu.dynamic_rotate %225 by %c1_i32_217 dim 1 : vector<24x512xf32>, i32 -> vector<24x512xf32>
    %c3_218 = arith.constant 3 : index
    %c0_219 = arith.constant 0 : index
    %242 = vector.load %arg2[%c3_218, %c0_219] : memref<8x512xf32, #tpu.memory_space<vmem>>, vector<1x512xf32>
    %243 = vector.broadcast %242 : vector<1x512xf32> to vector<24x512xf32>
    %244 = arith.mulf %241, %243 : vector<24x512xf32>
    %c72_220 = arith.constant 72 : index
    %c0_221 = arith.constant 0 : index
    %245 = vector.load %arg8[%c72_220, %c0_221] : memref<216x512xf32, #tpu.memory_space<vmem>>, vector<24x512xf32>
    tpu.vector_store %arg8[%c72_220, %c0_221], %244 {strides = array<i32>} : memref<216x512xf32, #tpu.memory_space<vmem>>, vector<24x512xf32>,
    %c96_222 = arith.constant 96 : index
    %c0_223 = arith.constant 0 : index
    %246 = vector.load %arg8[%c96_222, %c0_223] : memref<216x512xf32, #tpu.memory_space<vmem>>, vector<24x512xf32>
    tpu.vector_store %arg8[%c96_222, %c0_223], %225 {strides = array<i32>} : memref<216x512xf32, #tpu.memory_space<vmem>>, vector<24x512xf32>,
    %c511_i32_224 = arith.constant 511 : i32
    %247 = tpu.dynamic_rotate %225 by %c511_i32_224 dim 1 : vector<24x512xf32>, i32 -> vector<24x512xf32>
    %c4_225 = arith.constant 4 : index
    %c0_226 = arith.constant 0 : index
    %248 = vector.load %arg2[%c4_225, %c0_226] : memref<8x512xf32, #tpu.memory_space<vmem>>, vector<1x512xf32>
    %249 = vector.broadcast %248 : vector<1x512xf32> to vector<24x512xf32>
    %250 = arith.mulf %247, %249 : vector<24x512xf32>
    %c120_227 = arith.constant 120 : index
    %c0_228 = arith.constant 0 : index
    %251 = vector.load %arg8[%c120_227, %c0_228] : memref<216x512xf32, #tpu.memory_space<vmem>>, vector<24x512xf32>
    tpu.vector_store %arg8[%c120_227, %c0_228], %250 {strides = array<i32>} : memref<216x512xf32, #tpu.memory_space<vmem>>, vector<24x512xf32>,
    %c497_i32_229 = arith.constant 497 : i32
    %252 = tpu.dynamic_rotate %225 by %c497_i32_229 dim 1 : vector<24x512xf32>, i32 -> vector<24x512xf32>
    %c5_230 = arith.constant 5 : index
    %c0_231 = arith.constant 0 : index
    %253 = vector.load %arg2[%c5_230, %c0_231] : memref<8x512xf32, #tpu.memory_space<vmem>>, vector<1x512xf32>
    %254 = vector.broadcast %253 : vector<1x512xf32> to vector<24x512xf32>
    %255 = arith.mulf %252, %254 : vector<24x512xf32>
    %c144_232 = arith.constant 144 : index
    %c0_233 = arith.constant 0 : index
    %256 = vector.load %arg8[%c144_232, %c0_233] : memref<216x512xf32, #tpu.memory_space<vmem>>, vector<24x512xf32>
    tpu.vector_store %arg8[%c144_232, %c0_233], %255 {strides = array<i32>} : memref<216x512xf32, #tpu.memory_space<vmem>>, vector<24x512xf32>,
    %c496_i32_234 = arith.constant 496 : i32
    %257 = tpu.dynamic_rotate %225 by %c496_i32_234 dim 1 : vector<24x512xf32>, i32 -> vector<24x512xf32>
    %c6_235 = arith.constant 6 : index
    %c0_236 = arith.constant 0 : index
    %258 = vector.load %arg2[%c6_235, %c0_236] : memref<8x512xf32, #tpu.memory_space<vmem>>, vector<1x512xf32>
    %259 = vector.broadcast %258 : vector<1x512xf32> to vector<24x512xf32>
    %260 = arith.mulf %257, %259 : vector<24x512xf32>
    %c168_237 = arith.constant 168 : index
    %c0_238 = arith.constant 0 : index
    %261 = vector.load %arg8[%c168_237, %c0_238] : memref<216x512xf32, #tpu.memory_space<vmem>>, vector<24x512xf32>
    tpu.vector_store %arg8[%c168_237, %c0_238], %260 {strides = array<i32>} : memref<216x512xf32, #tpu.memory_space<vmem>>, vector<24x512xf32>,
    %c495_i32_239 = arith.constant 495 : i32
    %262 = tpu.dynamic_rotate %225 by %c495_i32_239 dim 1 : vector<24x512xf32>, i32 -> vector<24x512xf32>
    %c7_240 = arith.constant 7 : index
    %c0_241 = arith.constant 0 : index
    %263 = vector.load %arg2[%c7_240, %c0_241] : memref<8x512xf32, #tpu.memory_space<vmem>>, vector<1x512xf32>
    %264 = vector.broadcast %263 : vector<1x512xf32> to vector<24x512xf32>
    %265 = arith.mulf %262, %264 : vector<24x512xf32>
    %c192_242 = arith.constant 192 : index
    %c0_243 = arith.constant 0 : index
    %266 = vector.load %arg8[%c192_242, %c0_243] : memref<216x512xf32, #tpu.memory_space<vmem>>, vector<24x512xf32>
    tpu.vector_store %arg8[%c192_242, %c0_243], %265 {strides = array<i32>} : memref<216x512xf32, #tpu.memory_space<vmem>>, vector<24x512xf32>,
    %c16_244 = arith.constant 16 : index
    %c0_245 = arith.constant 0 : index
    %267 = vector.load %arg4[%c16_244, %c0_245] : memref<80x216xf32, #tpu.memory_space<vmem>>, vector<16x216xf32>
    %c0_246 = arith.constant 0 : index
    %c0_247 = arith.constant 0 : index
    %268 = vector.load %arg8[%c0_246, %c0_247] : memref<216x512xf32, #tpu.memory_space<vmem>>, vector<216x512xf32>
    %cst_248 = arith.constant dense<0.000000e+00> : vector<16x512xf32>
    %269 = tpu.matmul %267, %268, %cst_248 {dimension_numbers = #tpu.dot_dimension_numbers<[1], [0], [0], [1], [0, 0, 1, 1], [], []>} : vector<16x216xf32>, vector<216x512xf32>, vector<16x512xf32> -> vector<16x512xf32>
    %c112 = arith.constant 112 : index
    %c0_249 = arith.constant 0 : index
    %270 = vector.load %arg6[%c112, %c0_249] : memref<304x1xf32, #tpu.memory_space<vmem>>, vector<16x1xf32>
    %271 = vector.broadcast %270 : vector<16x1xf32> to vector<16x512xf32>
    %272 = arith.addf %269, %271 : vector<16x512xf32>
    %cst_250 = arith.constant 0.000000e+00 : f32
    %273 = vector.broadcast %cst_250 : f32 to vector<16x512xf32>
    %274 = arith.maximumf %272, %273 : vector<16x512xf32>
    %c64_251 = arith.constant 64 : index
    %c0_252 = arith.constant 0 : index
    %275 = vector.load %arg5[%c64_251, %c0_252] : memref<192x16xf32, #tpu.memory_space<vmem>>, vector<16x16xf32>
    %cst_253 = arith.constant dense<0.000000e+00> : vector<16x512xf32>
    %276 = tpu.matmul %275, %274, %cst_253 {dimension_numbers = #tpu.dot_dimension_numbers<[1], [0], [0], [1], [0, 0, 1, 1], [], []>} : vector<16x16xf32>, vector<16x512xf32>, vector<16x512xf32> -> vector<16x512xf32>
    %c128 = arith.constant 128 : index
    %c0_254 = arith.constant 0 : index
    %277 = vector.load %arg6[%c128, %c0_254] : memref<304x1xf32, #tpu.memory_space<vmem>>, vector<16x1xf32>
    %278 = vector.broadcast %277 : vector<16x1xf32> to vector<16x512xf32>
    %279 = arith.addf %276, %278 : vector<16x512xf32>
    %cst_255 = arith.constant 0.000000e+00 : f32
    %280 = vector.broadcast %cst_255 : f32 to vector<16x512xf32>
    %281 = arith.maximumf %279, %280 : vector<16x512xf32>
    %c80_256 = arith.constant 80 : index
    %c0_257 = arith.constant 0 : index
    %282 = vector.load %arg5[%c80_256, %c0_257] : memref<192x16xf32, #tpu.memory_space<vmem>>, vector<16x16xf32>
    %cst_258 = arith.constant dense<0.000000e+00> : vector<16x512xf32>
    %283 = tpu.matmul %282, %281, %cst_258 {dimension_numbers = #tpu.dot_dimension_numbers<[1], [0], [0], [1], [0, 0, 1, 1], [], []>} : vector<16x16xf32>, vector<16x512xf32>, vector<16x512xf32> -> vector<16x512xf32>
    %c144_259 = arith.constant 144 : index
    %c0_260 = arith.constant 0 : index
    %284 = vector.load %arg6[%c144_259, %c0_260] : memref<304x1xf32, #tpu.memory_space<vmem>>, vector<16x1xf32>
    %285 = vector.broadcast %284 : vector<16x1xf32> to vector<16x512xf32>
    %286 = arith.addf %283, %285 : vector<16x512xf32>
    %c0_261 = arith.constant 0 : index
    %c0_262 = arith.constant 0 : index
    %287 = vector.load %arg9[%c0_261, %c0_262] : memref<24x512xf32, #tpu.memory_space<vmem>>, vector<16x512xf32>
    tpu.vector_store %arg9[%c0_261, %c0_262], %286 {strides = array<i32>} : memref<24x512xf32, #tpu.memory_space<vmem>>, vector<16x512xf32>,
    %c0_263 = arith.constant 0 : index
    %c0_264 = arith.constant 0 : index
    %288 = vector.load %arg9[%c0_263, %c0_264] : memref<24x512xf32, #tpu.memory_space<vmem>>, vector<24x512xf32>
    %c17_i32_265 = arith.constant 17 : i32
    %289 = tpu.dynamic_rotate %288 by %c17_i32_265 dim 1 : vector<24x512xf32>, i32 -> vector<24x512xf32>
    %c0_266 = arith.constant 0 : index
    %c0_267 = arith.constant 0 : index
    %290 = vector.load %arg2[%c0_266, %c0_267] : memref<8x512xf32, #tpu.memory_space<vmem>>, vector<1x512xf32>
    %291 = vector.broadcast %290 : vector<1x512xf32> to vector<24x512xf32>
    %292 = arith.mulf %289, %291 : vector<24x512xf32>
    %c0_268 = arith.constant 0 : index
    %c0_269 = arith.constant 0 : index
    %293 = vector.load %arg8[%c0_268, %c0_269] : memref<216x512xf32, #tpu.memory_space<vmem>>, vector<24x512xf32>
    tpu.vector_store %arg8[%c0_268, %c0_269], %292 {strides = array<i32>} : memref<216x512xf32, #tpu.memory_space<vmem>>, vector<24x512xf32>,
    %c16_i32_270 = arith.constant 16 : i32
    %294 = tpu.dynamic_rotate %288 by %c16_i32_270 dim 1 : vector<24x512xf32>, i32 -> vector<24x512xf32>
    %c1_271 = arith.constant 1 : index
    %c0_272 = arith.constant 0 : index
    %295 = vector.load %arg2[%c1_271, %c0_272] : memref<8x512xf32, #tpu.memory_space<vmem>>, vector<1x512xf32>
    %296 = vector.broadcast %295 : vector<1x512xf32> to vector<24x512xf32>
    %297 = arith.mulf %294, %296 : vector<24x512xf32>
    %c24_273 = arith.constant 24 : index
    %c0_274 = arith.constant 0 : index
    %298 = vector.load %arg8[%c24_273, %c0_274] : memref<216x512xf32, #tpu.memory_space<vmem>>, vector<24x512xf32>
    tpu.vector_store %arg8[%c24_273, %c0_274], %297 {strides = array<i32>} : memref<216x512xf32, #tpu.memory_space<vmem>>, vector<24x512xf32>,
    %c15_i32_275 = arith.constant 15 : i32
    %299 = tpu.dynamic_rotate %288 by %c15_i32_275 dim 1 : vector<24x512xf32>, i32 -> vector<24x512xf32>
    %c2_276 = arith.constant 2 : index
    %c0_277 = arith.constant 0 : index
    %300 = vector.load %arg2[%c2_276, %c0_277] : memref<8x512xf32, #tpu.memory_space<vmem>>, vector<1x512xf32>
    %301 = vector.broadcast %300 : vector<1x512xf32> to vector<24x512xf32>
    %302 = arith.mulf %299, %301 : vector<24x512xf32>
    %c48_278 = arith.constant 48 : index
    %c0_279 = arith.constant 0 : index
    %303 = vector.load %arg8[%c48_278, %c0_279] : memref<216x512xf32, #tpu.memory_space<vmem>>, vector<24x512xf32>
    tpu.vector_store %arg8[%c48_278, %c0_279], %302 {strides = array<i32>} : memref<216x512xf32, #tpu.memory_space<vmem>>, vector<24x512xf32>,
    %c1_i32_280 = arith.constant 1 : i32
    %304 = tpu.dynamic_rotate %288 by %c1_i32_280 dim 1 : vector<24x512xf32>, i32 -> vector<24x512xf32>
    %c3_281 = arith.constant 3 : index
    %c0_282 = arith.constant 0 : index
    %305 = vector.load %arg2[%c3_281, %c0_282] : memref<8x512xf32, #tpu.memory_space<vmem>>, vector<1x512xf32>
    %306 = vector.broadcast %305 : vector<1x512xf32> to vector<24x512xf32>
    %307 = arith.mulf %304, %306 : vector<24x512xf32>
    %c72_283 = arith.constant 72 : index
    %c0_284 = arith.constant 0 : index
    %308 = vector.load %arg8[%c72_283, %c0_284] : memref<216x512xf32, #tpu.memory_space<vmem>>, vector<24x512xf32>
    tpu.vector_store %arg8[%c72_283, %c0_284], %307 {strides = array<i32>} : memref<216x512xf32, #tpu.memory_space<vmem>>, vector<24x512xf32>,
    %c96_285 = arith.constant 96 : index
    %c0_286 = arith.constant 0 : index
    %309 = vector.load %arg8[%c96_285, %c0_286] : memref<216x512xf32, #tpu.memory_space<vmem>>, vector<24x512xf32>
    tpu.vector_store %arg8[%c96_285, %c0_286], %288 {strides = array<i32>} : memref<216x512xf32, #tpu.memory_space<vmem>>, vector<24x512xf32>,
    %c511_i32_287 = arith.constant 511 : i32
    %310 = tpu.dynamic_rotate %288 by %c511_i32_287 dim 1 : vector<24x512xf32>, i32 -> vector<24x512xf32>
    %c4_288 = arith.constant 4 : index
    %c0_289 = arith.constant 0 : index
    %311 = vector.load %arg2[%c4_288, %c0_289] : memref<8x512xf32, #tpu.memory_space<vmem>>, vector<1x512xf32>
    %312 = vector.broadcast %311 : vector<1x512xf32> to vector<24x512xf32>
    %313 = arith.mulf %310, %312 : vector<24x512xf32>
    %c120_290 = arith.constant 120 : index
    %c0_291 = arith.constant 0 : index
    %314 = vector.load %arg8[%c120_290, %c0_291] : memref<216x512xf32, #tpu.memory_space<vmem>>, vector<24x512xf32>
    tpu.vector_store %arg8[%c120_290, %c0_291], %313 {strides = array<i32>} : memref<216x512xf32, #tpu.memory_space<vmem>>, vector<24x512xf32>,
    %c497_i32_292 = arith.constant 497 : i32
    %315 = tpu.dynamic_rotate %288 by %c497_i32_292 dim 1 : vector<24x512xf32>, i32 -> vector<24x512xf32>
    %c5_293 = arith.constant 5 : index
    %c0_294 = arith.constant 0 : index
    %316 = vector.load %arg2[%c5_293, %c0_294] : memref<8x512xf32, #tpu.memory_space<vmem>>, vector<1x512xf32>
    %317 = vector.broadcast %316 : vector<1x512xf32> to vector<24x512xf32>
    %318 = arith.mulf %315, %317 : vector<24x512xf32>
    %c144_295 = arith.constant 144 : index
    %c0_296 = arith.constant 0 : index
    %319 = vector.load %arg8[%c144_295, %c0_296] : memref<216x512xf32, #tpu.memory_space<vmem>>, vector<24x512xf32>
    tpu.vector_store %arg8[%c144_295, %c0_296], %318 {strides = array<i32>} : memref<216x512xf32, #tpu.memory_space<vmem>>, vector<24x512xf32>,
    %c496_i32_297 = arith.constant 496 : i32
    %320 = tpu.dynamic_rotate %288 by %c496_i32_297 dim 1 : vector<24x512xf32>, i32 -> vector<24x512xf32>
    %c6_298 = arith.constant 6 : index
    %c0_299 = arith.constant 0 : index
    %321 = vector.load %arg2[%c6_298, %c0_299] : memref<8x512xf32, #tpu.memory_space<vmem>>, vector<1x512xf32>
    %322 = vector.broadcast %321 : vector<1x512xf32> to vector<24x512xf32>
    %323 = arith.mulf %320, %322 : vector<24x512xf32>
    %c168_300 = arith.constant 168 : index
    %c0_301 = arith.constant 0 : index
    %324 = vector.load %arg8[%c168_300, %c0_301] : memref<216x512xf32, #tpu.memory_space<vmem>>, vector<24x512xf32>
    tpu.vector_store %arg8[%c168_300, %c0_301], %323 {strides = array<i32>} : memref<216x512xf32, #tpu.memory_space<vmem>>, vector<24x512xf32>,
    %c495_i32_302 = arith.constant 495 : i32
    %325 = tpu.dynamic_rotate %288 by %c495_i32_302 dim 1 : vector<24x512xf32>, i32 -> vector<24x512xf32>
    %c7_303 = arith.constant 7 : index
    %c0_304 = arith.constant 0 : index
    %326 = vector.load %arg2[%c7_303, %c0_304] : memref<8x512xf32, #tpu.memory_space<vmem>>, vector<1x512xf32>
    %327 = vector.broadcast %326 : vector<1x512xf32> to vector<24x512xf32>
    %328 = arith.mulf %325, %327 : vector<24x512xf32>
    %c192_305 = arith.constant 192 : index
    %c0_306 = arith.constant 0 : index
    %329 = vector.load %arg8[%c192_305, %c0_306] : memref<216x512xf32, #tpu.memory_space<vmem>>, vector<24x512xf32>
    tpu.vector_store %arg8[%c192_305, %c0_306], %328 {strides = array<i32>} : memref<216x512xf32, #tpu.memory_space<vmem>>, vector<24x512xf32>,
    %c32_307 = arith.constant 32 : index
    %c0_308 = arith.constant 0 : index
    %330 = vector.load %arg4[%c32_307, %c0_308] : memref<80x216xf32, #tpu.memory_space<vmem>>, vector<16x216xf32>
    %c0_309 = arith.constant 0 : index
    %c0_310 = arith.constant 0 : index
    %331 = vector.load %arg8[%c0_309, %c0_310] : memref<216x512xf32, #tpu.memory_space<vmem>>, vector<216x512xf32>
    %cst_311 = arith.constant dense<0.000000e+00> : vector<16x512xf32>
    %332 = tpu.matmul %330, %331, %cst_311 {dimension_numbers = #tpu.dot_dimension_numbers<[1], [0], [0], [1], [0, 0, 1, 1], [], []>} : vector<16x216xf32>, vector<216x512xf32>, vector<16x512xf32> -> vector<16x512xf32>
    %c160 = arith.constant 160 : index
    %c0_312 = arith.constant 0 : index
    %333 = vector.load %arg6[%c160, %c0_312] : memref<304x1xf32, #tpu.memory_space<vmem>>, vector<16x1xf32>
    %334 = vector.broadcast %333 : vector<16x1xf32> to vector<16x512xf32>
    %335 = arith.addf %332, %334 : vector<16x512xf32>
    %cst_313 = arith.constant 0.000000e+00 : f32
    %336 = vector.broadcast %cst_313 : f32 to vector<16x512xf32>
    %337 = arith.maximumf %335, %336 : vector<16x512xf32>
    %c96_314 = arith.constant 96 : index
    %c0_315 = arith.constant 0 : index
    %338 = vector.load %arg5[%c96_314, %c0_315] : memref<192x16xf32, #tpu.memory_space<vmem>>, vector<16x16xf32>
    %cst_316 = arith.constant dense<0.000000e+00> : vector<16x512xf32>
    %339 = tpu.matmul %338, %337, %cst_316 {dimension_numbers = #tpu.dot_dimension_numbers<[1], [0], [0], [1], [0, 0, 1, 1], [], []>} : vector<16x16xf32>, vector<16x512xf32>, vector<16x512xf32> -> vector<16x512xf32>
    %c176 = arith.constant 176 : index
    %c0_317 = arith.constant 0 : index
    %340 = vector.load %arg6[%c176, %c0_317] : memref<304x1xf32, #tpu.memory_space<vmem>>, vector<16x1xf32>
    %341 = vector.broadcast %340 : vector<16x1xf32> to vector<16x512xf32>
    %342 = arith.addf %339, %341 : vector<16x512xf32>
    %cst_318 = arith.constant 0.000000e+00 : f32
    %343 = vector.broadcast %cst_318 : f32 to vector<16x512xf32>
    %344 = arith.maximumf %342, %343 : vector<16x512xf32>
    %c112_319 = arith.constant 112 : index
    %c0_320 = arith.constant 0 : index
    %345 = vector.load %arg5[%c112_319, %c0_320] : memref<192x16xf32, #tpu.memory_space<vmem>>, vector<16x16xf32>
    %cst_321 = arith.constant dense<0.000000e+00> : vector<16x512xf32>
    %346 = tpu.matmul %345, %344, %cst_321 {dimension_numbers = #tpu.dot_dimension_numbers<[1], [0], [0], [1], [0, 0, 1, 1], [], []>} : vector<16x16xf32>, vector<16x512xf32>, vector<16x512xf32> -> vector<16x512xf32>
    %c192_322 = arith.constant 192 : index
    %c0_323 = arith.constant 0 : index
    %347 = vector.load %arg6[%c192_322, %c0_323] : memref<304x1xf32, #tpu.memory_space<vmem>>, vector<16x1xf32>
    %348 = vector.broadcast %347 : vector<16x1xf32> to vector<16x512xf32>
    %349 = arith.addf %346, %348 : vector<16x512xf32>
    %c0_324 = arith.constant 0 : index
    %c0_325 = arith.constant 0 : index
    %350 = vector.load %arg9[%c0_324, %c0_325] : memref<24x512xf32, #tpu.memory_space<vmem>>, vector<16x512xf32>
    tpu.vector_store %arg9[%c0_324, %c0_325], %349 {strides = array<i32>} : memref<24x512xf32, #tpu.memory_space<vmem>>, vector<16x512xf32>,
    %c0_326 = arith.constant 0 : index
    %c0_327 = arith.constant 0 : index
    %351 = vector.load %arg9[%c0_326, %c0_327] : memref<24x512xf32, #tpu.memory_space<vmem>>, vector<24x512xf32>
    %c17_i32_328 = arith.constant 17 : i32
    %352 = tpu.dynamic_rotate %351 by %c17_i32_328 dim 1 : vector<24x512xf32>, i32 -> vector<24x512xf32>
    %c0_329 = arith.constant 0 : index
    %c0_330 = arith.constant 0 : index
    %353 = vector.load %arg2[%c0_329, %c0_330] : memref<8x512xf32, #tpu.memory_space<vmem>>, vector<1x512xf32>
    %354 = vector.broadcast %353 : vector<1x512xf32> to vector<24x512xf32>
    %355 = arith.mulf %352, %354 : vector<24x512xf32>
    %c0_331 = arith.constant 0 : index
    %c0_332 = arith.constant 0 : index
    %356 = vector.load %arg8[%c0_331, %c0_332] : memref<216x512xf32, #tpu.memory_space<vmem>>, vector<24x512xf32>
    tpu.vector_store %arg8[%c0_331, %c0_332], %355 {strides = array<i32>} : memref<216x512xf32, #tpu.memory_space<vmem>>, vector<24x512xf32>,
    %c16_i32_333 = arith.constant 16 : i32
    %357 = tpu.dynamic_rotate %351 by %c16_i32_333 dim 1 : vector<24x512xf32>, i32 -> vector<24x512xf32>
    %c1_334 = arith.constant 1 : index
    %c0_335 = arith.constant 0 : index
    %358 = vector.load %arg2[%c1_334, %c0_335] : memref<8x512xf32, #tpu.memory_space<vmem>>, vector<1x512xf32>
    %359 = vector.broadcast %358 : vector<1x512xf32> to vector<24x512xf32>
    %360 = arith.mulf %357, %359 : vector<24x512xf32>
    %c24_336 = arith.constant 24 : index
    %c0_337 = arith.constant 0 : index
    %361 = vector.load %arg8[%c24_336, %c0_337] : memref<216x512xf32, #tpu.memory_space<vmem>>, vector<24x512xf32>
    tpu.vector_store %arg8[%c24_336, %c0_337], %360 {strides = array<i32>} : memref<216x512xf32, #tpu.memory_space<vmem>>, vector<24x512xf32>,
    %c15_i32_338 = arith.constant 15 : i32
    %362 = tpu.dynamic_rotate %351 by %c15_i32_338 dim 1 : vector<24x512xf32>, i32 -> vector<24x512xf32>
    %c2_339 = arith.constant 2 : index
    %c0_340 = arith.constant 0 : index
    %363 = vector.load %arg2[%c2_339, %c0_340] : memref<8x512xf32, #tpu.memory_space<vmem>>, vector<1x512xf32>
    %364 = vector.broadcast %363 : vector<1x512xf32> to vector<24x512xf32>
    %365 = arith.mulf %362, %364 : vector<24x512xf32>
    %c48_341 = arith.constant 48 : index
    %c0_342 = arith.constant 0 : index
    %366 = vector.load %arg8[%c48_341, %c0_342] : memref<216x512xf32, #tpu.memory_space<vmem>>, vector<24x512xf32>
    tpu.vector_store %arg8[%c48_341, %c0_342], %365 {strides = array<i32>} : memref<216x512xf32, #tpu.memory_space<vmem>>, vector<24x512xf32>,
    %c1_i32_343 = arith.constant 1 : i32
    %367 = tpu.dynamic_rotate %351 by %c1_i32_343 dim 1 : vector<24x512xf32>, i32 -> vector<24x512xf32>
    %c3_344 = arith.constant 3 : index
    %c0_345 = arith.constant 0 : index
    %368 = vector.load %arg2[%c3_344, %c0_345] : memref<8x512xf32, #tpu.memory_space<vmem>>, vector<1x512xf32>
    %369 = vector.broadcast %368 : vector<1x512xf32> to vector<24x512xf32>
    %370 = arith.mulf %367, %369 : vector<24x512xf32>
    %c72_346 = arith.constant 72 : index
    %c0_347 = arith.constant 0 : index
    %371 = vector.load %arg8[%c72_346, %c0_347] : memref<216x512xf32, #tpu.memory_space<vmem>>, vector<24x512xf32>
    tpu.vector_store %arg8[%c72_346, %c0_347], %370 {strides = array<i32>} : memref<216x512xf32, #tpu.memory_space<vmem>>, vector<24x512xf32>,
    %c96_348 = arith.constant 96 : index
    %c0_349 = arith.constant 0 : index
    %372 = vector.load %arg8[%c96_348, %c0_349] : memref<216x512xf32, #tpu.memory_space<vmem>>, vector<24x512xf32>
    tpu.vector_store %arg8[%c96_348, %c0_349], %351 {strides = array<i32>} : memref<216x512xf32, #tpu.memory_space<vmem>>, vector<24x512xf32>,
    %c511_i32_350 = arith.constant 511 : i32
    %373 = tpu.dynamic_rotate %351 by %c511_i32_350 dim 1 : vector<24x512xf32>, i32 -> vector<24x512xf32>
    %c4_351 = arith.constant 4 : index
    %c0_352 = arith.constant 0 : index
    %374 = vector.load %arg2[%c4_351, %c0_352] : memref<8x512xf32, #tpu.memory_space<vmem>>, vector<1x512xf32>
    %375 = vector.broadcast %374 : vector<1x512xf32> to vector<24x512xf32>
    %376 = arith.mulf %373, %375 : vector<24x512xf32>
    %c120_353 = arith.constant 120 : index
    %c0_354 = arith.constant 0 : index
    %377 = vector.load %arg8[%c120_353, %c0_354] : memref<216x512xf32, #tpu.memory_space<vmem>>, vector<24x512xf32>
    tpu.vector_store %arg8[%c120_353, %c0_354], %376 {strides = array<i32>} : memref<216x512xf32, #tpu.memory_space<vmem>>, vector<24x512xf32>,
    %c497_i32_355 = arith.constant 497 : i32
    %378 = tpu.dynamic_rotate %351 by %c497_i32_355 dim 1 : vector<24x512xf32>, i32 -> vector<24x512xf32>
    %c5_356 = arith.constant 5 : index
    %c0_357 = arith.constant 0 : index
    %379 = vector.load %arg2[%c5_356, %c0_357] : memref<8x512xf32, #tpu.memory_space<vmem>>, vector<1x512xf32>
    %380 = vector.broadcast %379 : vector<1x512xf32> to vector<24x512xf32>
    %381 = arith.mulf %378, %380 : vector<24x512xf32>
    %c144_358 = arith.constant 144 : index
    %c0_359 = arith.constant 0 : index
    %382 = vector.load %arg8[%c144_358, %c0_359] : memref<216x512xf32, #tpu.memory_space<vmem>>, vector<24x512xf32>
    tpu.vector_store %arg8[%c144_358, %c0_359], %381 {strides = array<i32>} : memref<216x512xf32, #tpu.memory_space<vmem>>, vector<24x512xf32>,
    %c496_i32_360 = arith.constant 496 : i32
    %383 = tpu.dynamic_rotate %351 by %c496_i32_360 dim 1 : vector<24x512xf32>, i32 -> vector<24x512xf32>
    %c6_361 = arith.constant 6 : index
    %c0_362 = arith.constant 0 : index
    %384 = vector.load %arg2[%c6_361, %c0_362] : memref<8x512xf32, #tpu.memory_space<vmem>>, vector<1x512xf32>
    %385 = vector.broadcast %384 : vector<1x512xf32> to vector<24x512xf32>
    %386 = arith.mulf %383, %385 : vector<24x512xf32>
    %c168_363 = arith.constant 168 : index
    %c0_364 = arith.constant 0 : index
    %387 = vector.load %arg8[%c168_363, %c0_364] : memref<216x512xf32, #tpu.memory_space<vmem>>, vector<24x512xf32>
    tpu.vector_store %arg8[%c168_363, %c0_364], %386 {strides = array<i32>} : memref<216x512xf32, #tpu.memory_space<vmem>>, vector<24x512xf32>,
    %c495_i32_365 = arith.constant 495 : i32
    %388 = tpu.dynamic_rotate %351 by %c495_i32_365 dim 1 : vector<24x512xf32>, i32 -> vector<24x512xf32>
    %c7_366 = arith.constant 7 : index
    %c0_367 = arith.constant 0 : index
    %389 = vector.load %arg2[%c7_366, %c0_367] : memref<8x512xf32, #tpu.memory_space<vmem>>, vector<1x512xf32>
    %390 = vector.broadcast %389 : vector<1x512xf32> to vector<24x512xf32>
    %391 = arith.mulf %388, %390 : vector<24x512xf32>
    %c192_368 = arith.constant 192 : index
    %c0_369 = arith.constant 0 : index
    %392 = vector.load %arg8[%c192_368, %c0_369] : memref<216x512xf32, #tpu.memory_space<vmem>>, vector<24x512xf32>
    tpu.vector_store %arg8[%c192_368, %c0_369], %391 {strides = array<i32>} : memref<216x512xf32, #tpu.memory_space<vmem>>, vector<24x512xf32>,
    %c48_370 = arith.constant 48 : index
    %c0_371 = arith.constant 0 : index
    %393 = vector.load %arg4[%c48_370, %c0_371] : memref<80x216xf32, #tpu.memory_space<vmem>>, vector<16x216xf32>
    %c0_372 = arith.constant 0 : index
    %c0_373 = arith.constant 0 : index
    %394 = vector.load %arg8[%c0_372, %c0_373] : memref<216x512xf32, #tpu.memory_space<vmem>>, vector<216x512xf32>
    %cst_374 = arith.constant dense<0.000000e+00> : vector<16x512xf32>
    %395 = tpu.matmul %393, %394, %cst_374 {dimension_numbers = #tpu.dot_dimension_numbers<[1], [0], [0], [1], [0, 0, 1, 1], [], []>} : vector<16x216xf32>, vector<216x512xf32>, vector<16x512xf32> -> vector<16x512xf32>
    %c208 = arith.constant 208 : index
    %c0_375 = arith.constant 0 : index
    %396 = vector.load %arg6[%c208, %c0_375] : memref<304x1xf32, #tpu.memory_space<vmem>>, vector<16x1xf32>
    %397 = vector.broadcast %396 : vector<16x1xf32> to vector<16x512xf32>
    %398 = arith.addf %395, %397 : vector<16x512xf32>
    %cst_376 = arith.constant 0.000000e+00 : f32
    %399 = vector.broadcast %cst_376 : f32 to vector<16x512xf32>
    %400 = arith.maximumf %398, %399 : vector<16x512xf32>
    %c128_377 = arith.constant 128 : index
    %c0_378 = arith.constant 0 : index
    %401 = vector.load %arg5[%c128_377, %c0_378] : memref<192x16xf32, #tpu.memory_space<vmem>>, vector<16x16xf32>
    %cst_379 = arith.constant dense<0.000000e+00> : vector<16x512xf32>
    %402 = tpu.matmul %401, %400, %cst_379 {dimension_numbers = #tpu.dot_dimension_numbers<[1], [0], [0], [1], [0, 0, 1, 1], [], []>} : vector<16x16xf32>, vector<16x512xf32>, vector<16x512xf32> -> vector<16x512xf32>
    %c224 = arith.constant 224 : index
    %c0_380 = arith.constant 0 : index
    %403 = vector.load %arg6[%c224, %c0_380] : memref<304x1xf32, #tpu.memory_space<vmem>>, vector<16x1xf32>
    %404 = vector.broadcast %403 : vector<16x1xf32> to vector<16x512xf32>
    %405 = arith.addf %402, %404 : vector<16x512xf32>
    %cst_381 = arith.constant 0.000000e+00 : f32
    %406 = vector.broadcast %cst_381 : f32 to vector<16x512xf32>
    %407 = arith.maximumf %405, %406 : vector<16x512xf32>
    %c144_382 = arith.constant 144 : index
    %c0_383 = arith.constant 0 : index
    %408 = vector.load %arg5[%c144_382, %c0_383] : memref<192x16xf32, #tpu.memory_space<vmem>>, vector<16x16xf32>
    %cst_384 = arith.constant dense<0.000000e+00> : vector<16x512xf32>
    %409 = tpu.matmul %408, %407, %cst_384 {dimension_numbers = #tpu.dot_dimension_numbers<[1], [0], [0], [1], [0, 0, 1, 1], [], []>} : vector<16x16xf32>, vector<16x512xf32>, vector<16x512xf32> -> vector<16x512xf32>
    %c240 = arith.constant 240 : index
    %c0_385 = arith.constant 0 : index
    %410 = vector.load %arg6[%c240, %c0_385] : memref<304x1xf32, #tpu.memory_space<vmem>>, vector<16x1xf32>
    %411 = vector.broadcast %410 : vector<16x1xf32> to vector<16x512xf32>
    %412 = arith.addf %409, %411 : vector<16x512xf32>
    %c0_386 = arith.constant 0 : index
    %c0_387 = arith.constant 0 : index
    %413 = vector.load %arg9[%c0_386, %c0_387] : memref<24x512xf32, #tpu.memory_space<vmem>>, vector<16x512xf32>
    tpu.vector_store %arg9[%c0_386, %c0_387], %412 {strides = array<i32>} : memref<24x512xf32, #tpu.memory_space<vmem>>, vector<16x512xf32>,
    %c0_388 = arith.constant 0 : index
    %c0_389 = arith.constant 0 : index
    %414 = vector.load %arg9[%c0_388, %c0_389] : memref<24x512xf32, #tpu.memory_space<vmem>>, vector<24x512xf32>
    %c17_i32_390 = arith.constant 17 : i32
    %415 = tpu.dynamic_rotate %414 by %c17_i32_390 dim 1 : vector<24x512xf32>, i32 -> vector<24x512xf32>
    %c0_391 = arith.constant 0 : index
    %c0_392 = arith.constant 0 : index
    %416 = vector.load %arg2[%c0_391, %c0_392] : memref<8x512xf32, #tpu.memory_space<vmem>>, vector<1x512xf32>
    %417 = vector.broadcast %416 : vector<1x512xf32> to vector<24x512xf32>
    %418 = arith.mulf %415, %417 : vector<24x512xf32>
    %c0_393 = arith.constant 0 : index
    %c0_394 = arith.constant 0 : index
    %419 = vector.load %arg8[%c0_393, %c0_394] : memref<216x512xf32, #tpu.memory_space<vmem>>, vector<24x512xf32>
    tpu.vector_store %arg8[%c0_393, %c0_394], %418 {strides = array<i32>} : memref<216x512xf32, #tpu.memory_space<vmem>>, vector<24x512xf32>,
    %c16_i32_395 = arith.constant 16 : i32
    %420 = tpu.dynamic_rotate %414 by %c16_i32_395 dim 1 : vector<24x512xf32>, i32 -> vector<24x512xf32>
    %c1_396 = arith.constant 1 : index
    %c0_397 = arith.constant 0 : index
    %421 = vector.load %arg2[%c1_396, %c0_397] : memref<8x512xf32, #tpu.memory_space<vmem>>, vector<1x512xf32>
    %422 = vector.broadcast %421 : vector<1x512xf32> to vector<24x512xf32>
    %423 = arith.mulf %420, %422 : vector<24x512xf32>
    %c24_398 = arith.constant 24 : index
    %c0_399 = arith.constant 0 : index
    %424 = vector.load %arg8[%c24_398, %c0_399] : memref<216x512xf32, #tpu.memory_space<vmem>>, vector<24x512xf32>
    tpu.vector_store %arg8[%c24_398, %c0_399], %423 {strides = array<i32>} : memref<216x512xf32, #tpu.memory_space<vmem>>, vector<24x512xf32>,
    %c15_i32_400 = arith.constant 15 : i32
    %425 = tpu.dynamic_rotate %414 by %c15_i32_400 dim 1 : vector<24x512xf32>, i32 -> vector<24x512xf32>
    %c2_401 = arith.constant 2 : index
    %c0_402 = arith.constant 0 : index
    %426 = vector.load %arg2[%c2_401, %c0_402] : memref<8x512xf32, #tpu.memory_space<vmem>>, vector<1x512xf32>
    %427 = vector.broadcast %426 : vector<1x512xf32> to vector<24x512xf32>
    %428 = arith.mulf %425, %427 : vector<24x512xf32>
    %c48_403 = arith.constant 48 : index
    %c0_404 = arith.constant 0 : index
    %429 = vector.load %arg8[%c48_403, %c0_404] : memref<216x512xf32, #tpu.memory_space<vmem>>, vector<24x512xf32>
    tpu.vector_store %arg8[%c48_403, %c0_404], %428 {strides = array<i32>} : memref<216x512xf32, #tpu.memory_space<vmem>>, vector<24x512xf32>,
    %c1_i32_405 = arith.constant 1 : i32
    %430 = tpu.dynamic_rotate %414 by %c1_i32_405 dim 1 : vector<24x512xf32>, i32 -> vector<24x512xf32>
    %c3_406 = arith.constant 3 : index
    %c0_407 = arith.constant 0 : index
    %431 = vector.load %arg2[%c3_406, %c0_407] : memref<8x512xf32, #tpu.memory_space<vmem>>, vector<1x512xf32>
    %432 = vector.broadcast %431 : vector<1x512xf32> to vector<24x512xf32>
    %433 = arith.mulf %430, %432 : vector<24x512xf32>
    %c72_408 = arith.constant 72 : index
    %c0_409 = arith.constant 0 : index
    %434 = vector.load %arg8[%c72_408, %c0_409] : memref<216x512xf32, #tpu.memory_space<vmem>>, vector<24x512xf32>
    tpu.vector_store %arg8[%c72_408, %c0_409], %433 {strides = array<i32>} : memref<216x512xf32, #tpu.memory_space<vmem>>, vector<24x512xf32>,
    %c96_410 = arith.constant 96 : index
    %c0_411 = arith.constant 0 : index
    %435 = vector.load %arg8[%c96_410, %c0_411] : memref<216x512xf32, #tpu.memory_space<vmem>>, vector<24x512xf32>
    tpu.vector_store %arg8[%c96_410, %c0_411], %414 {strides = array<i32>} : memref<216x512xf32, #tpu.memory_space<vmem>>, vector<24x512xf32>,
    %c511_i32_412 = arith.constant 511 : i32
    %436 = tpu.dynamic_rotate %414 by %c511_i32_412 dim 1 : vector<24x512xf32>, i32 -> vector<24x512xf32>
    %c4_413 = arith.constant 4 : index
    %c0_414 = arith.constant 0 : index
    %437 = vector.load %arg2[%c4_413, %c0_414] : memref<8x512xf32, #tpu.memory_space<vmem>>, vector<1x512xf32>
    %438 = vector.broadcast %437 : vector<1x512xf32> to vector<24x512xf32>
    %439 = arith.mulf %436, %438 : vector<24x512xf32>
    %c120_415 = arith.constant 120 : index
    %c0_416 = arith.constant 0 : index
    %440 = vector.load %arg8[%c120_415, %c0_416] : memref<216x512xf32, #tpu.memory_space<vmem>>, vector<24x512xf32>
    tpu.vector_store %arg8[%c120_415, %c0_416], %439 {strides = array<i32>} : memref<216x512xf32, #tpu.memory_space<vmem>>, vector<24x512xf32>,
    %c497_i32_417 = arith.constant 497 : i32
    %441 = tpu.dynamic_rotate %414 by %c497_i32_417 dim 1 : vector<24x512xf32>, i32 -> vector<24x512xf32>
    %c5_418 = arith.constant 5 : index
    %c0_419 = arith.constant 0 : index
    %442 = vector.load %arg2[%c5_418, %c0_419] : memref<8x512xf32, #tpu.memory_space<vmem>>, vector<1x512xf32>
    %443 = vector.broadcast %442 : vector<1x512xf32> to vector<24x512xf32>
    %444 = arith.mulf %441, %443 : vector<24x512xf32>
    %c144_420 = arith.constant 144 : index
    %c0_421 = arith.constant 0 : index
    %445 = vector.load %arg8[%c144_420, %c0_421] : memref<216x512xf32, #tpu.memory_space<vmem>>, vector<24x512xf32>
    tpu.vector_store %arg8[%c144_420, %c0_421], %444 {strides = array<i32>} : memref<216x512xf32, #tpu.memory_space<vmem>>, vector<24x512xf32>,
    %c496_i32_422 = arith.constant 496 : i32
    %446 = tpu.dynamic_rotate %414 by %c496_i32_422 dim 1 : vector<24x512xf32>, i32 -> vector<24x512xf32>
    %c6_423 = arith.constant 6 : index
    %c0_424 = arith.constant 0 : index
    %447 = vector.load %arg2[%c6_423, %c0_424] : memref<8x512xf32, #tpu.memory_space<vmem>>, vector<1x512xf32>
    %448 = vector.broadcast %447 : vector<1x512xf32> to vector<24x512xf32>
    %449 = arith.mulf %446, %448 : vector<24x512xf32>
    %c168_425 = arith.constant 168 : index
    %c0_426 = arith.constant 0 : index
    %450 = vector.load %arg8[%c168_425, %c0_426] : memref<216x512xf32, #tpu.memory_space<vmem>>, vector<24x512xf32>
    tpu.vector_store %arg8[%c168_425, %c0_426], %449 {strides = array<i32>} : memref<216x512xf32, #tpu.memory_space<vmem>>, vector<24x512xf32>,
    %c495_i32_427 = arith.constant 495 : i32
    %451 = tpu.dynamic_rotate %414 by %c495_i32_427 dim 1 : vector<24x512xf32>, i32 -> vector<24x512xf32>
    %c7_428 = arith.constant 7 : index
    %c0_429 = arith.constant 0 : index
    %452 = vector.load %arg2[%c7_428, %c0_429] : memref<8x512xf32, #tpu.memory_space<vmem>>, vector<1x512xf32>
    %453 = vector.broadcast %452 : vector<1x512xf32> to vector<24x512xf32>
    %454 = arith.mulf %451, %453 : vector<24x512xf32>
    %c192_430 = arith.constant 192 : index
    %c0_431 = arith.constant 0 : index
    %455 = vector.load %arg8[%c192_430, %c0_431] : memref<216x512xf32, #tpu.memory_space<vmem>>, vector<24x512xf32>
    tpu.vector_store %arg8[%c192_430, %c0_431], %454 {strides = array<i32>} : memref<216x512xf32, #tpu.memory_space<vmem>>, vector<24x512xf32>,
    %c64_432 = arith.constant 64 : index
    %c0_433 = arith.constant 0 : index
    %456 = vector.load %arg4[%c64_432, %c0_433] : memref<80x216xf32, #tpu.memory_space<vmem>>, vector<16x216xf32>
    %c0_434 = arith.constant 0 : index
    %c0_435 = arith.constant 0 : index
    %457 = vector.load %arg8[%c0_434, %c0_435] : memref<216x512xf32, #tpu.memory_space<vmem>>, vector<216x512xf32>
    %cst_436 = arith.constant dense<0.000000e+00> : vector<16x512xf32>
    %458 = tpu.matmul %456, %457, %cst_436 {dimension_numbers = #tpu.dot_dimension_numbers<[1], [0], [0], [1], [0, 0, 1, 1], [], []>} : vector<16x216xf32>, vector<216x512xf32>, vector<16x512xf32> -> vector<16x512xf32>
    %c256 = arith.constant 256 : index
    %c0_437 = arith.constant 0 : index
    %459 = vector.load %arg6[%c256, %c0_437] : memref<304x1xf32, #tpu.memory_space<vmem>>, vector<16x1xf32>
    %460 = vector.broadcast %459 : vector<16x1xf32> to vector<16x512xf32>
    %461 = arith.addf %458, %460 : vector<16x512xf32>
    %cst_438 = arith.constant 0.000000e+00 : f32
    %462 = vector.broadcast %cst_438 : f32 to vector<16x512xf32>
    %463 = arith.maximumf %461, %462 : vector<16x512xf32>
    %c160_439 = arith.constant 160 : index
    %c0_440 = arith.constant 0 : index
    %464 = vector.load %arg5[%c160_439, %c0_440] : memref<192x16xf32, #tpu.memory_space<vmem>>, vector<16x16xf32>
    %cst_441 = arith.constant dense<0.000000e+00> : vector<16x512xf32>
    %465 = tpu.matmul %464, %463, %cst_441 {dimension_numbers = #tpu.dot_dimension_numbers<[1], [0], [0], [1], [0, 0, 1, 1], [], []>} : vector<16x16xf32>, vector<16x512xf32>, vector<16x512xf32> -> vector<16x512xf32>
    %c272 = arith.constant 272 : index
    %c0_442 = arith.constant 0 : index
    %466 = vector.load %arg6[%c272, %c0_442] : memref<304x1xf32, #tpu.memory_space<vmem>>, vector<16x1xf32>
    %467 = vector.broadcast %466 : vector<16x1xf32> to vector<16x512xf32>
    %468 = arith.addf %465, %467 : vector<16x512xf32>
    %cst_443 = arith.constant 0.000000e+00 : f32
    %469 = vector.broadcast %cst_443 : f32 to vector<16x512xf32>
    %470 = arith.maximumf %468, %469 : vector<16x512xf32>
    %c176_444 = arith.constant 176 : index
    %c0_445 = arith.constant 0 : index
    %471 = vector.load %arg5[%c176_444, %c0_445] : memref<192x16xf32, #tpu.memory_space<vmem>>, vector<16x16xf32>
    %cst_446 = arith.constant dense<0.000000e+00> : vector<16x512xf32>
    %472 = tpu.matmul %471, %470, %cst_446 {dimension_numbers = #tpu.dot_dimension_numbers<[1], [0], [0], [1], [0, 0, 1, 1], [], []>} : vector<16x16xf32>, vector<16x512xf32>, vector<16x512xf32> -> vector<16x512xf32>
    %c288 = arith.constant 288 : index
    %c0_447 = arith.constant 0 : index
    %473 = vector.load %arg6[%c288, %c0_447] : memref<304x1xf32, #tpu.memory_space<vmem>>, vector<16x1xf32>
    %474 = vector.broadcast %473 : vector<16x1xf32> to vector<16x512xf32>
    %475 = arith.addf %472, %474 : vector<16x512xf32>
    %c0_448 = arith.constant 0 : index
    %c0_449 = arith.constant 0 : index
    %476 = vector.load %arg7[%c0_448, %c0_449] : memref<16x512xf32, #tpu.memory_space<vmem>>, vector<16x512xf32>
    tpu.vector_store %arg7[%c0_448, %c0_449], %475 {strides = array<i32>} : memref<16x512xf32, #tpu.memory_space<vmem>>, vector<16x512xf32>,
    return
  }
  func.func @transform_0(%arg0: i32) -> (i32, i32) {
    %c0_i32 = arith.constant 0 : i32
    %c0_i32_0 = arith.constant 0 : i32
    %c0_i32_1 = arith.constant 0 : i32
    return %c0_i32, %c0_i32_0 : i32, i32
  }
  func.func @transform_1(%arg0: i32) -> (i32, i32) {
    %c0_i32 = arith.constant 0 : i32
    %c0_i32_0 = arith.constant 0 : i32
    %c0_i32_1 = arith.constant 0 : i32
    return %c0_i32, %c0_i32_0 : i32, i32
  }
  func.func @transform_2(%arg0: i32) -> (i32, i32) {
    %c0_i32 = arith.constant 0 : i32
    %c0_i32_0 = arith.constant 0 : i32
    %c0_i32_1 = arith.constant 0 : i32
    return %c0_i32, %c0_i32_0 : i32, i32
  }
  func.func @transform_3(%arg0: i32) -> (i32, i32) {
    %c0_i32 = arith.constant 0 : i32
    %c0_i32_0 = arith.constant 0 : i32
    %c0_i32_1 = arith.constant 0 : i32
    return %c0_i32, %c0_i32_0 : i32, i32
  }
  func.func @transform_4(%arg0: i32) -> (i32, i32) {
    %c0_i32 = arith.constant 0 : i32
    %c0_i32_0 = arith.constant 0 : i32
    %c0_i32_1 = arith.constant 0 : i32
    return %c0_i32, %c0_i32_0 : i32, i32
  }
  func.func @transform_5(%arg0: i32) -> (i32, i32) {
    %c0_i32 = arith.constant 0 : i32
    %c0_i32_0 = arith.constant 0 : i32
    %c0_i32_1 = arith.constant 0 : i32
    return %c0_i32, %c0_i32_0 : i32, i32
  }
  func.func @transform_6(%arg0: i32) -> (i32, i32) {
    %c0_i32 = arith.constant 0 : i32
    %c0_i32_0 = arith.constant 0 : i32
    %c0_i32_1 = arith.constant 0 : i32
    return %c0_i32, %c0_i32_0 : i32, i32
  }
}

</mosaic_0001>

<llo_original>
// kernel: tpu_custom_call.1
$region0: #{tpu_custom_call.1}
  #allocation0 [shape = 'u32[]', space=smem, size = 0x4, offset = 0x4, fixed_abs, tag = 'smem constant byte address 0x4 - core index']
  #allocation1 [shape = 'u32[144,128]{1,0:T(1,128)}', space=vmem, size = 0x12000, scoped, tag = 'internal scratch']
  #allocation2 [shape = 'f32[216,512]{1,0:T(8,128)}', space=vmem, size = 0x6c000, scoped, tag = 'scratch operand']
  #allocation3 [shape = 'f32[24,512]{1,0:T(8,128)}', space=vmem, size = 0xc000, scoped, tag = 'scratch operand']
  %s0 = inlined_call_operand.vmem [shape: f32[8,512], index: 0, kind: input, shape index: {}]
  %s1 = inlined_call_operand.vmem [shape: f32[8,512], index: 1, kind: input, shape index: {}]
  %s2 = inlined_call_operand.vmem [shape: f32[32,72], index: 2, kind: input, shape index: {}]
  %s3 = inlined_call_operand.vmem [shape: f32[80,216], index: 3, kind: input, shape index: {}]
  %s4 = inlined_call_operand.vmem [shape: f32[192,16], index: 4, kind: input, shape index: {}]
  %s5 = inlined_call_operand.vmem [shape: f32[304,1], index: 5, kind: input, shape index: {}]
  %s6 = inlined_call_operand.hbm [shape: f32[16,512], index: 6, kind: output, shape index: {}]
  %s7 = sld [smem:[#allocation0]]
  $region34: #{tpu_custom_call.1} parent=0
    _
  %s9 = ssub.s32 1, %s7
  %s10 = scalar_select 0, %s9, %s7
  $region1: #{tpu_custom_call.1} parent=0
    #allocation4 [shape = 'u8[32768]{0}', space=vmem, size = 0x8000, scoped, tag = 'output window, operand 0, single buffered']
    #allocation5 [shape = 's32[1]{0}', space=sflag, size = 0x4, scoped, tag = 'scoped memory for tpu_custom_call.1']
    %11 = vsyncpa [#allocation5], 0
    // Predicated region
    $region2: #{tpu_custom_call.1} parent=1 // pred_check
      _
    $region3: #{tpu_custom_call.1} parent=1 // pred_check_branch
      %13 = sbr.rel (0) target = $region5
    $region4: #{tpu_custom_call.1} parent=1 // pred_region
      _
    $region5: #{tpu_custom_call.1} parent=1 // pred_fallthru
      _
    // Predicated region
    $region6: #{tpu_custom_call.1} parent=1 // pred_check
      _
    $region7: #{tpu_custom_call.1} parent=1 // pred_check_branch
      %15 = sbr.rel (0) target = $region9
    $region8: #{tpu_custom_call.1} parent=1 // pred_region
      _
    $region9: #{tpu_custom_call.1} parent=1 // pred_fallthru
      _
    // Predicated region
    $region10: #{tpu_custom_call.1} parent=1 // pred_check
      _
    $region11: #{tpu_custom_call.1} parent=1 // pred_check_branch
      %17 = sbr.rel (0) target = $region13
    $region12: #{tpu_custom_call.1} parent=1 // pred_region
      _
    $region13: #{tpu_custom_call.1} parent=1 // pred_fallthru
      _
    // Predicated region
    $region14: #{tpu_custom_call.1} parent=1 // pred_check
      _
    $region15: #{tpu_custom_call.1} parent=1 // pred_check_branch
      %19 = sbr.rel (0) target = $region17
    $region16: #{tpu_custom_call.1} parent=1 // pred_region
      _
    $region17: #{tpu_custom_call.1} parent=1 // pred_fallthru
      _
    // Predicated region
    $region18: #{tpu_custom_call.1} parent=1 // pred_check
      _
    $region19: #{tpu_custom_call.1} parent=1 // pred_check_branch
      %21 = sbr.rel (0) target = $region21
    $region20: #{tpu_custom_call.1} parent=1 // pred_region
      _
    $region21: #{tpu_custom_call.1} parent=1 // pred_fallthru
      _
    // Predicated region
    $region22: #{tpu_custom_call.1} parent=1 // pred_check
      _
    $region23: #{tpu_custom_call.1} parent=1 // pred_check_branch
      %23 = sbr.rel (0) target = $region25
    $region24: #{tpu_custom_call.1} parent=1 // pred_region
      _
    $region25: #{tpu_custom_call.1} parent=1 // pred_fallthru
      _
    %v24 = vld [vmem:[%s0] sm:$0xff]
    %v25 = vld [vmem:[%s0 + $0x8] sm:$0xff]
    %v26 = vld [vmem:[%s0 + $0x10] sm:$0xff]
    %v27 = vld [vmem:[%s0 + $0x18] sm:$0xff]
    %28 = vrot.lane.b32.xlu0 %v24, 17
    %v29 = vpop.permute.xlu0 %28
    %30 = vrot.lane.b32.xlu0 %v25, 17
    %v31 = vpop.permute.xlu0 %30
    %32 = vrot.lane.b32.xlu0 %v26, 17
    %v33 = vpop.permute.xlu0 %32
    %34 = vrot.lane.b32.xlu0 %v27, 17
    %v35 = vpop.permute.xlu0 %34
    %v36 = vlaneseq
    %v37 = vand.u32 %v36, 127
    %vm38 = vcmp.lt.s32.totalorder %v37, 17
    %v39 = vsel %vm38, %v33, %v35
    %v40 = vsel %vm38, %v31, %v33
    %v41 = vsel %vm38, %v29, %v31
    %v42 = vsel %vm38, %v35, %v29
    %v43 = vld [vmem:[%s1] ss:$8 sm:$0xf]
    %v45 = vlaneseq
    %v46 = vshrl.u32 %v45, 7
    %v47 = vsub.s32 0, %v46
    %v48 = vrot.slane %v43, %v47
    %v49 = vlaneseq
    %v50 = vshrl.u32 %v49, 7
    %v51 = vsub.s32 1, %v50
    %v52 = vrot.slane %v43, %v51
    %v53 = vlaneseq
    %v54 = vshrl.u32 %v53, 7
    %v55 = vsub.s32 2, %v54
    %v56 = vrot.slane %v43, %v55
    %v57 = vlaneseq
    %v58 = vshrl.u32 %v57, 7
    %v59 = vsub.s32 3, %v58
    %v60 = vrot.slane %v43, %v59
    %v65 = vmul.f32 %v42, %v48
    %v66 = vmul.f32 %v41, %v52
    %v67 = vmul.f32 %v40, %v56
    %v68 = vmul.f32 %v39, %v60
    %69 = vst [vmem:[#allocation2] sm:$0xff] %v65
    %70 = vst [vmem:[#allocation2 + $0x8] sm:$0xff] %v66
    %71 = vst [vmem:[#allocation2 + $0x10] sm:$0xff] %v67
    %72 = vst [vmem:[#allocation2 + $0x18] sm:$0xff] %v68
    %73 = vrot.lane.b32.xlu0 %v24, 16
    %v74 = vpop.permute.xlu0 %73
    %75 = vrot.lane.b32.xlu0 %v25, 16
    %v76 = vpop.permute.xlu0 %75
    %77 = vrot.lane.b32.xlu0 %v26, 16
    %v78 = vpop.permute.xlu0 %77
    %79 = vrot.lane.b32.xlu0 %v27, 16
    %v80 = vpop.permute.xlu0 %79
    %vm81 = vcmp.lt.s32.totalorder %v37, 16
    %v82 = vsel %vm81, %v78, %v80
    %v83 = vsel %vm81, %v76, %v78
    %v84 = vsel %vm81, %v74, %v76
    %v85 = vsel %vm81, %v80, %v74
    %s86 = scalar_lea.vmem %s1, 1
    %v87 = vld [vmem:[%s86] ss:$8 sm:$0xf]
    %v89 = vlaneseq
    %v90 = vshrl.u32 %v89, 7
    %v91 = vsub.s32 0, %v90
    %v92 = vrot.slane %v87, %v91
    %v93 = vlaneseq
    %v94 = vshrl.u32 %v93, 7
    %v95 = vsub.s32 1, %v94
    %v96 = vrot.slane %v87, %v95
    %v97 = vlaneseq
    %v98 = vshrl.u32 %v97, 7
    %v99 = vsub.s32 2, %v98
    %v100 = vrot.slane %v87, %v99
    %v101 = vlaneseq
    %v102 = vshrl.u32 %v101, 7
    %v103 = vsub.s32 3, %v102
    %v104 = vrot.slane %v87, %v103
    %v109 = vmul.f32 %v85, %v92
    %v110 = vmul.f32 %v84, %v96
    %v111 = vmul.f32 %v83, %v100
    %v112 = vmul.f32 %v82, %v104
    %113 = vst [vmem:[#allocation2 + $0x20] sm:$0xff] %v109
    %114 = vst [vmem:[#allocation2 + $0x28] sm:$0xff] %v110
    %115 = vst [vmem:[#allocation2 + $0x30] sm:$0xff] %v111
    %116 = vst [vmem:[#allocation2 + $0x38] sm:$0xff] %v112
    %117 = vrot.lane.b32.xlu0 %v24, 15
    %v118 = vpop.permute.xlu0 %117
    %119 = vrot.lane.b32.xlu0 %v25, 15
    %v120 = vpop.permute.xlu0 %119
    %121 = vrot.lane.b32.xlu0 %v26, 15
    %v122 = vpop.permute.xlu0 %121
    %123 = vrot.lane.b32.xlu0 %v27, 15
    %v124 = vpop.permute.xlu0 %123
    %vm125 = vcmp.lt.s32.totalorder %v37, 15
    %v126 = vsel %vm125, %v122, %v124
    %v127 = vsel %vm125, %v120, %v122
    %v128 = vsel %vm125, %v118, %v120
    %v129 = vsel %vm125, %v124, %v118
    %s130 = scalar_lea.vmem %s1, 2
    %v131 = vld [vmem:[%s130] ss:$8 sm:$0xf]
    %v133 = vlaneseq
    %v134 = vshrl.u32 %v133, 7
    %v135 = vsub.s32 0, %v134
    %v136 = vrot.slane %v131, %v135
    %v137 = vlaneseq
    %v138 = vshrl.u32 %v137, 7
    %v139 = vsub.s32 1, %v138
    %v140 = vrot.slane %v131, %v139
    %v141 = vlaneseq
    %v142 = vshrl.u32 %v141, 7
    %v143 = vsub.s32 2, %v142
    %v144 = vrot.slane %v131, %v143
    %v145 = vlaneseq
    %v146 = vshrl.u32 %v145, 7
    %v147 = vsub.s32 3, %v146
    %v148 = vrot.slane %v131, %v147
    %v153 = vmul.f32 %v129, %v136
    %v154 = vmul.f32 %v128, %v140
    %v155 = vmul.f32 %v127, %v144
    %v156 = vmul.f32 %v126, %v148
    %157 = vst [vmem:[#allocation2 + $0x40] sm:$0xff] %v153
    %158 = vst [vmem:[#allocation2 + $0x48] sm:$0xff] %v154
    %159 = vst [vmem:[#allocation2 + $0x50] sm:$0xff] %v155
    %160 = vst [vmem:[#allocation2 + $0x58] sm:$0xff] %v156
    %161 = vrot.lane.b32.xlu0 %v24, 1
    %v162 = vpop.permute.xlu0 %161
    %163 = vrot.lane.b32.xlu0 %v25, 1
    %v164 = vpop.permute.xlu0 %163
    %165 = vrot.lane.b32.xlu0 %v26, 1
    %v166 = vpop.permute.xlu0 %165
    %167 = vrot.lane.b32.xlu0 %v27, 1
    %v168 = vpop.permute.xlu0 %167
    %vm169 = vcmp.lt.s32.totalorder %v37, 1
    %v170 = vsel %vm169, %v166, %v168
    %v171 = vsel %vm169, %v164, %v166
    %v172 = vsel %vm169, %v162, %v164
    %v173 = vsel %vm169, %v168, %v162
    %s174 = scalar_lea.vmem %s1, 3
    %v175 = vld [vmem:[%s174] ss:$8 sm:$0xf]
    %v177 = vlaneseq
    %v178 = vshrl.u32 %v177, 7
    %v179 = vsub.s32 0, %v178
    %v180 = vrot.slane %v175, %v179
    %v181 = vlaneseq
    %v182 = vshrl.u32 %v181, 7
    %v183 = vsub.s32 1, %v182
    %v184 = vrot.slane %v175, %v183
    %v185 = vlaneseq
    %v186 = vshrl.u32 %v185, 7
    %v187 = vsub.s32 2, %v186
    %v188 = vrot.slane %v175, %v187
    %v189 = vlaneseq
    %v190 = vshrl.u32 %v189, 7
    %v191 = vsub.s32 3, %v190
    %v192 = vrot.slane %v175, %v191
    %v197 = vmul.f32 %v173, %v180
    %v198 = vmul.f32 %v172, %v184
    %v199 = vmul.f32 %v171, %v188
    %v200 = vmul.f32 %v170, %v192
    %201 = vst [vmem:[#allocation2 + $0x60] sm:$0xff] %v197
    %202 = vst [vmem:[#allocation2 + $0x68] sm:$0xff] %v198
    %203 = vst [vmem:[#allocation2 + $0x70] sm:$0xff] %v199
    %204 = vst [vmem:[#allocation2 + $0x78] sm:$0xff] %v200
    %205 = vst [vmem:[#allocation2 + $0x80] sm:$0xff] %v24
    %206 = vst [vmem:[#allocation2 + $0x88] sm:$0xff] %v25
    %207 = vst [vmem:[#allocation2 + $0x90] sm:$0xff] %v26
    %208 = vst [vmem:[#allocation2 + $0x98] sm:$0xff] %v27
    %209 = vrot.lane.b32.xlu0 %v24, 127
    %v210 = vpop.permute.xlu0 %209
    %211 = vrot.lane.b32.xlu0 %v25, 127
    %v212 = vpop.permute.xlu0 %211
    %213 = vrot.lane.b32.xlu0 %v26, 127
    %v214 = vpop.permute.xlu0 %213
    %215 = vrot.lane.b32.xlu0 %v27, 127
    %v216 = vpop.permute.xlu0 %215
    %vm217 = vcmp.lt.s32.totalorder %v37, 127
    %v218 = vsel %vm217, %v214, %v216
    %v219 = vsel %vm217, %v212, %v214
    %v220 = vsel %vm217, %v210, %v212
    %v221 = vsel %vm217, %v216, %v210
    %s222 = scalar_lea.vmem %s1, 4
    %v223 = vld [vmem:[%s222] ss:$8 sm:$0xf]
    %v225 = vlaneseq
    %v226 = vshrl.u32 %v225, 7
    %v227 = vsub.s32 0, %v226
    %v228 = vrot.slane %v223, %v227
    %v229 = vlaneseq
    %v230 = vshrl.u32 %v229, 7
    %v231 = vsub.s32 1, %v230
    %v232 = vrot.slane %v223, %v231
    %v233 = vlaneseq
    %v234 = vshrl.u32 %v233, 7
    %v235 = vsub.s32 2, %v234
    %v236 = vrot.slane %v223, %v235
    %v237 = vlaneseq
    %v238 = vshrl.u32 %v237, 7
    %v239 = vsub.s32 3, %v238
    %v240 = vrot.slane %v223, %v239
    %v245 = vmul.f32 %v220, %v228
    %v246 = vmul.f32 %v219, %v232
    %v247 = vmul.f32 %v218, %v236
    %v248 = vmul.f32 %v221, %v240
    %249 = vst [vmem:[#allocation2 + $0xa0] sm:$0xff] %v245
    %250 = vst [vmem:[#allocation2 + $0xa8] sm:$0xff] %v246
    %251 = vst [vmem:[#allocation2 + $0xb0] sm:$0xff] %v247
    %252 = vst [vmem:[#allocation2 + $0xb8] sm:$0xff] %v248
    %253 = vrot.lane.b32.xlu0 %v24, 113
    %v254 = vpop.permute.xlu0 %253
    %255 = vrot.lane.b32.xlu0 %v25, 113
    %v256 = vpop.permute.xlu0 %255
    %257 = vrot.lane.b32.xlu0 %v26, 113
    %v258 = vpop.permute.xlu0 %257
    %259 = vrot.lane.b32.xlu0 %v27, 113
    %v260 = vpop.permute.xlu0 %259
    %vm261 = vcmp.lt.s32.totalorder %v37, 113
    %v262 = vsel %vm261, %v258, %v260
    %v263 = vsel %vm261, %v256, %v258
    %v264 = vsel %vm261, %v254, %v256
    %v265 = vsel %vm261, %v260, %v254
    %s266 = scalar_lea.vmem %s1, 5
    %v267 = vld [vmem:[%s266] ss:$8 sm:$0xf]
    %v269 = vlaneseq
    %v270 = vshrl.u32 %v269, 7
    %v271 = vsub.s32 0, %v270
    %v272 = vrot.slane %v267, %v271
    %v273 = vlaneseq
    %v274 = vshrl.u32 %v273, 7
    %v275 = vsub.s32 1, %v274
    %v276 = vrot.slane %v267, %v275
    %v277 = vlaneseq
    %v278 = vshrl.u32 %v277, 7
    %v279 = vsub.s32 2, %v278
    %v280 = vrot.slane %v267, %v279
    %v281 = vlaneseq
    %v282 = vshrl.u32 %v281, 7
    %v283 = vsub.s32 3, %v282
    %v284 = vrot.slane %v267, %v283
    %v289 = vmul.f32 %v264, %v272
    %v290 = vmul.f32 %v263, %v276
    %v291 = vmul.f32 %v262, %v280
    %v292 = vmul.f32 %v265, %v284
    %293 = vst [vmem:[#allocation2 + $0xc0] sm:$0xff] %v289
    %294 = vst [vmem:[#allocation2 + $0xc8] sm:$0xff] %v290
    %295 = vst [vmem:[#allocation2 + $0xd0] sm:$0xff] %v291
    %296 = vst [vmem:[#allocation2 + $0xd8] sm:$0xff] %v292
    %297 = vrot.lane.b32.xlu0 %v24, 112
    %v298 = vpop.permute.xlu0 %297
    %299 = vrot.lane.b32.xlu0 %v25, 112
    %v300 = vpop.permute.xlu0 %299
    %301 = vrot.lane.b32.xlu0 %v26, 112
    %v302 = vpop.permute.xlu0 %301
    %303 = vrot.lane.b32.xlu0 %v27, 112
    %v304 = vpop.permute.xlu0 %303
    %vm305 = vcmp.lt.s32.totalorder %v37, 112
    %v306 = vsel %vm305, %v302, %v304
    %v307 = vsel %vm305, %v300, %v302
    %v308 = vsel %vm305, %v298, %v300
    %v309 = vsel %vm305, %v304, %v298
    %s310 = scalar_lea.vmem %s1, 6
    %v311 = vld [vmem:[%s310] ss:$8 sm:$0xf]
    %v313 = vlaneseq
    %v314 = vshrl.u32 %v313, 7
    %v315 = vsub.s32 0, %v314
    %v316 = vrot.slane %v311, %v315
    %v317 = vlaneseq
    %v318 = vshrl.u32 %v317, 7
    %v319 = vsub.s32 1, %v318
    %v320 = vrot.slane %v311, %v319
    %v321 = vlaneseq
    %v322 = vshrl.u32 %v321, 7
    %v323 = vsub.s32 2, %v322
    %v324 = vrot.slane %v311, %v323
    %v325 = vlaneseq
    %v326 = vshrl.u32 %v325, 7
    %v327 = vsub.s32 3, %v326
    %v328 = vrot.slane %v311, %v327
    %v333 = vmul.f32 %v308, %v316
    %v334 = vmul.f32 %v307, %v320
    %v335 = vmul.f32 %v306, %v324
    %v336 = vmul.f32 %v309, %v328
    %337 = vst [vmem:[#allocation2 + $0xe0] sm:$0xff] %v333
    %338 = vst [vmem:[#allocation2 + $0xe8] sm:$0xff] %v334
    %339 = vst [vmem:[#allocation2 + $0xf0] sm:$0xff] %v335
    %340 = vst [vmem:[#allocation2 + $0xf8] sm:$0xff] %v336
    %341 = vrot.lane.b32.xlu0 %v24, 111
    %v342 = vpop.permute.xlu0 %341
    %343 = vrot.lane.b32.xlu0 %v25, 111
    %v344 = vpop.permute.xlu0 %343
    %345 = vrot.lane.b32.xlu0 %v26, 111
    %v346 = vpop.permute.xlu0 %345
    %347 = vrot.lane.b32.xlu0 %v27, 111
    %v348 = vpop.permute.xlu0 %347
    %vm349 = vcmp.lt.s32.totalorder %v37, 111
    %v350 = vsel %vm349, %v346, %v348
    %v351 = vsel %vm349, %v344, %v346
    %v352 = vsel %vm349, %v342, %v344
    %v353 = vsel %vm349, %v348, %v342
    %s354 = scalar_lea.vmem %s1, 7
    %v355 = vld [vmem:[%s354] ss:$8 sm:$0xf]
    %v357 = vlaneseq
    %v358 = vshrl.u32 %v357, 7
    %v359 = vsub.s32 0, %v358
    %v360 = vrot.slane %v355, %v359
    %v361 = vlaneseq
    %v362 = vshrl.u32 %v361, 7
    %v363 = vsub.s32 1, %v362
    %v364 = vrot.slane %v355, %v363
    %v365 = vlaneseq
    %v366 = vshrl.u32 %v365, 7
    %v367 = vsub.s32 2, %v366
    %v368 = vrot.slane %v355, %v367
    %v369 = vlaneseq
    %v370 = vshrl.u32 %v369, 7
    %v371 = vsub.s32 3, %v370
    %v372 = vrot.slane %v355, %v371
    %v377 = vmul.f32 %v352, %v360
    %v378 = vmul.f32 %v351, %v364
    %v379 = vmul.f32 %v350, %v368
    %v380 = vmul.f32 %v353, %v372
    %381 = vst [vmem:[#allocation2 + $0x100] sm:$0xff] %v377
    %382 = vst [vmem:[#allocation2 + $0x108] sm:$0xff] %v378
    %383 = vst [vmem:[#allocation2 + $0x110] sm:$0xff] %v379
    %384 = vst [vmem:[#allocation2 + $0x118] sm:$0xff] %v380
    %v385 = vld [vmem:[%s2] sm:$0xff]
    %v386 = vld [vmem:[#allocation2] sm:$0xff]
    %v387 = vld [vmem:[#allocation2 + $0x8] sm:$0xff]
    %v388 = vld [vmem:[#allocation2 + $0x10] sm:$0xff]
    %v389 = vld [vmem:[#allocation2 + $0x18] sm:$0xff]
    %v390 = vld [vmem:[#allocation2 + $0x20] sm:$0xff]
    %v391 = vld [vmem:[#allocation2 + $0x28] sm:$0xff]
    %v392 = vld [vmem:[#allocation2 + $0x30] sm:$0xff]
    %v393 = vld [vmem:[#allocation2 + $0x38] sm:$0xff]
    %v394 = vld [vmem:[#allocation2 + $0x40] sm:$0xff]
    %v395 = vld [vmem:[#allocation2 + $0x48] sm:$0xff]
    %v396 = vld [vmem:[#allocation2 + $0x50] sm:$0xff]
    %v397 = vld [vmem:[#allocation2 + $0x58] sm:$0xff]
    %v398 = vld [vmem:[#allocation2 + $0x60] sm:$0xff]
    %v399 = vld [vmem:[#allocation2 + $0x68] sm:$0xff]
    %v400 = vld [vmem:[#allocation2 + $0x70] sm:$0xff]
    %v401 = vld [vmem:[#allocation2 + $0x78] sm:$0xff]
    %v402 = vld [vmem:[#allocation2 + $0x80] sm:$0xff]
    %v403 = vld [vmem:[#allocation2 + $0x88] sm:$0xff]
    %v404 = vld [vmem:[#allocation2 + $0x90] sm:$0xff]
    %v405 = vld [vmem:[#allocation2 + $0x98] sm:$0xff]
    %v406 = vld [vmem:[#allocation2 + $0xa0] sm:$0xff]
    %v407 = vld [vmem:[#allocation2 + $0xa8] sm:$0xff]
    %v408 = vld [vmem:[#allocation2 + $0xb0] sm:$0xff]
    %v409 = vld [vmem:[#allocation2 + $0xb8] sm:$0xff]
    %v410 = vld [vmem:[#allocation2 + $0xc0] sm:$0xff]
    %v411 = vld [vmem:[#allocation2 + $0xc8] sm:$0xff]
    %v412 = vld [vmem:[#allocation2 + $0xd0] sm:$0xff]
    %v413 = vld [vmem:[#allocation2 + $0xd8] sm:$0xff]
    %v414 = vld [vmem:[#allocation2 + $0xe0] sm:$0xff]
    %v415 = vld [vmem:[#allocation2 + $0xe8] sm:$0xff]
    %v416 = vld [vmem:[#allocation2 + $0xf0] sm:$0xff]
    %v417 = vld [vmem:[#allocation2 + $0xf8] sm:$0xff]
    %v418 = vld [vmem:[#allocation2 + $0x100] sm:$0xff]
    %v419 = vld [vmem:[#allocation2 + $0x108] sm:$0xff]
    %v420 = vld [vmem:[#allocation2 + $0x110] sm:$0xff]
    %v421 = vld [vmem:[#allocation2 + $0x118] sm:$0xff]
    %v422 = vld [vmem:[%s5] sm:$0xff]
    %424 = vset.pattern.permute.xlu0 0
    %425 = vperm.xlu0 %424, %v422
    %v426 = vpop.permute.xlu0 %425
    %vm428 = vcmask 588800
    %v430 = vsel %vm428, %v385, 0
    %432 = vmatprep.subr.mxu0 0.0
    %433 = vmatpush1.msra.mxu0 0.0
    %434 = vmatprep.subr.mxu0 0.0
    %435 = vmatpush1.msra.mxu0 0.0
    %436 = vmatprep.subr.mxu0 0.0
    %437 = vmatpush1.msra.mxu0 0.0
    %438 = vmatprep.subr.mxu0 0.0
    %439 = vmatpush1.msra.mxu0 0.0
    %440 = vmatprep.subr.mxu0 0.0
    %441 = vmatpush1.msra.mxu0 0.0
    %442 = vmatprep.subr.mxu0 0.0
    %443 = vmatpush1.msra.mxu0 0.0
    %444 = vmatprep.subr.mxu0 0.0
    %445 = vmatpush1.msra.mxu0 0.0
    %446 = vmatprep.subr.mxu0 %v419
    %447 = vmatpush1.msra.mxu0 %v418
    %448 = vmatprep.subr.mxu0 %v415
    %449 = vmatpush1.msra.mxu0 %v414
    %450 = vmatprep.subr.mxu0 %v411
    %451 = vmatpush1.msra.mxu0 %v410
    %452 = vmatprep.subr.mxu0 %v407
    %453 = vmatpush1.msra.mxu0 %v406
    %454 = vmatprep.subr.mxu0 %v403
    %455 = vmatpush1.msra.mxu0 %v402
    %456 = vmatprep.subr.mxu0 %v399
    %457 = vmatpush1.msra.mxu0 %v398
    %458 = vmatprep.subr.mxu0 %v395
    %459 = vmatpush1.msra.mxu0 %v394
    %460 = vmatprep.subr.mxu0 %v391
    %461 = vmatpush1.msra.mxu0 %v390
    %462 = vmatprep.subr.mxu0 %v387
    %463 = vmatpush1.msra.mxu0 %v386
    %464 = vmatprep.subr.mxu0 0.0
    %465 = vmatpush2.msra.mxu0 0.0
    %466 = vmatprep.subr.mxu0 0.0
    %467 = vmatpush2.msra.mxu0 0.0
    %468 = vmatprep.subr.mxu0 0.0
    %469 = vmatpush2.msra.mxu0 0.0
    %470 = vmatprep.subr.mxu0 0.0
    %471 = vmatpush2.msra.mxu0 0.0
    %472 = vmatprep.subr.mxu0 0.0
    %473 = vmatpush2.msra.mxu0 0.0
    %474 = vmatprep.subr.mxu0 0.0
    %475 = vmatpush2.msra.mxu0 0.0
    %476 = vmatprep.subr.mxu0 0.0
    %477 = vmatpush2.msra.mxu0 0.0
    %478 = vmatprep.subr.mxu0 0.0
    %479 = vmatpush2.msra.mxu0 0.0
    %480 = vmatprep.subr.mxu0 0.0
    %481 = vmatpush2.msra.mxu0 0.0
    %482 = vmatprep.subr.mxu0 0.0
    %483 = vmatpush2.msra.mxu0 0.0
    %484 = vmatprep.subr.mxu0 0.0
    %485 = vmatpush2.msra.mxu0 0.0
    %486 = vmatprep.subr.mxu0 0.0
    %487 = vmatpush2.msra.mxu0 0.0
    %488 = vmatprep.subr.mxu0 0.0
    %489 = vmatpush2.msra.mxu0 0.0
    %490 = vmatprep.subr.mxu0 0.0
    %491 = vmatpush2.msra.mxu0 0.0
    %492 = vmatprep.subr.mxu0 0.0
    %493 = vmatpush2.msra.mxu0 0.0
    %494 = vmatprep.subr.mxu0 0.0
    %495 = vmatpush2.msra.mxu0 0.0
    %496 = vmatprep.mubr.f32.mxu0 0.0
    %497 = vmatmul.mubr.f32.gmra.mxu0 %v430
    %v498 = vpop.f32.mrf.mxu0
    %v499 = vadd.f32 %v426, %v498
    %v500 = vpop.f32.mrf.mxu0
    %v501 = vadd.f32 %v426, %v500
    %502 = vdwg.mxu0
    %503 = vmatprep.subr.mxu0 0.0
    %504 = vmatpush1.msra.mxu0 0.0
    %505 = vmatprep.subr.mxu0 0.0
    %506 = vmatpush1.msra.mxu0 0.0
    %507 = vmatprep.subr.mxu0 0.0
    %508 = vmatpush1.msra.mxu0 0.0
    %509 = vmatprep.subr.mxu0 0.0
    %510 = vmatpush1.msra.mxu0 0.0
    %511 = vmatprep.subr.mxu0 0.0
    %512 = vmatpush1.msra.mxu0 0.0
    %513 = vmatprep.subr.mxu0 0.0
    %514 = vmatpush1.msra.mxu0 0.0
    %515 = vmatprep.subr.mxu0 0.0
    %516 = vmatpush1.msra.mxu0 0.0
    %517 = vmatprep.subr.mxu0 %v421
    %518 = vmatpush1.msra.mxu0 %v420
    %519 = vmatprep.subr.mxu0 %v417
    %520 = vmatpush1.msra.mxu0 %v416
    %521 = vmatprep.subr.mxu0 %v413
    %522 = vmatpush1.msra.mxu0 %v412
    %523 = vmatprep.subr.mxu0 %v409
    %524 = vmatpush1.msra.mxu0 %v408
    %525 = vmatprep.subr.mxu0 %v405
    %526 = vmatpush1.msra.mxu0 %v404
    %527 = vmatprep.subr.mxu0 %v401
    %528 = vmatpush1.msra.mxu0 %v400
    %529 = vmatprep.subr.mxu0 %v397
    %530 = vmatpush1.msra.mxu0 %v396
    %531 = vmatprep.subr.mxu0 %v393
    %532 = vmatpush1.msra.mxu0 %v392
    %533 = vmatprep.subr.mxu0 %v389
    %534 = vmatpush1.msra.mxu0 %v388
    %535 = vmatprep.subr.mxu0 0.0
    %536 = vmatpush2.msra.mxu0 0.0
    %537 = vmatprep.subr.mxu0 0.0
    %538 = vmatpush2.msra.mxu0 0.0
    %539 = vmatprep.subr.mxu0 0.0
    %540 = vmatpush2.msra.mxu0 0.0
    %541 = vmatprep.subr.mxu0 0.0
    %542 = vmatpush2.msra.mxu0 0.0
    %543 = vmatprep.subr.mxu0 0.0
    %544 = vmatpush2.msra.mxu0 0.0
    %545 = vmatprep.subr.mxu0 0.0
    %546 = vmatpush2.msra.mxu0 0.0
    %547 = vmatprep.subr.mxu0 0.0
    %548 = vmatpush2.msra.mxu0 0.0
    %549 = vmatprep.subr.mxu0 0.0
    %550 = vmatpush2.msra.mxu0 0.0
    %551 = vmatprep.subr.mxu0 0.0
    %552 = vmatpush2.msra.mxu0 0.0
    %553 = vmatprep.subr.mxu0 0.0
    %554 = vmatpush2.msra.mxu0 0.0
    %555 = vmatprep.subr.mxu0 0.0
    %556 = vmatpush2.msra.mxu0 0.0
    %557 = vmatprep.subr.mxu0 0.0
    %558 = vmatpush2.msra.mxu0 0.0
    %559 = vmatprep.subr.mxu0 0.0
    %560 = vmatpush2.msra.mxu0 0.0
    %561 = vmatprep.subr.mxu0 0.0
    %562 = vmatpush2.msra.mxu0 0.0
    %563 = vmatprep.subr.mxu0 0.0
    %564 = vmatpush2.msra.mxu0 0.0
    %565 = vmatprep.subr.mxu0 0.0
    %566 = vmatpush2.msra.mxu0 0.0
    %567 = vmatprep.mubr.f32.mxu0 0.0
    %568 = vmatmul.mubr.f32.gmra.mxu0 %v430
    %v569 = vpop.f32.mrf.mxu0
    %v570 = vadd.f32 %v426, %v569
    %v571 = vpop.f32.mrf.mxu0
    %v572 = vadd.f32 %v426, %v571
    %573 = vdwg.mxu0
    %v574 = vmax.f32 %v499, 0.0
    %v575 = vmax.f32 %v501, 0.0
    %v576 = vmax.f32 %v570, 0.0
    %v577 = vmax.f32 %v572, 0.0
    %578 = vrot.lane.b32.xlu0 %v574, 17
    %v579 = vpop.permute.xlu0 %578
    %580 = vrot.lane.b32.xlu0 %v575, 17
    %v581 = vpop.permute.xlu0 %580
    %582 = vrot.lane.b32.xlu0 %v576, 17
    %v583 = vpop.permute.xlu0 %582
    %584 = vrot.lane.b32.xlu0 %v577, 17
    %v585 = vpop.permute.xlu0 %584
    %v586 = vsel %vm38, %v583, %v585
    %v587 = vsel %vm38, %v581, %v583
    %v588 = vsel %vm38, %v579, %v581
    %v589 = vsel %vm38, %v585, %v579
    %v590 = vld [vmem:[%s1] ss:$8 sm:$0xf]
    %v592 = vlaneseq
    %v593 = vshrl.u32 %v592, 7
    %v594 = vsub.s32 0, %v593
    %v595 = vrot.slane %v590, %v594
    %v596 = vlaneseq
    %v597 = vshrl.u32 %v596, 7
    %v598 = vsub.s32 1, %v597
    %v599 = vrot.slane %v590, %v598
    %v600 = vlaneseq
    %v601 = vshrl.u32 %v600, 7
    %v602 = vsub.s32 2, %v601
    %v603 = vrot.slane %v590, %v602
    %v604 = vlaneseq
    %v605 = vshrl.u32 %v604, 7
    %v606 = vsub.s32 3, %v605
    %v607 = vrot.slane %v590, %v606
    %v612 = vmul.f32 %v589, %v595
    %v613 = vmul.f32 %v588, %v599
    %v614 = vmul.f32 %v587, %v603
    %v615 = vmul.f32 %v586, %v607
    %616 = vst [vmem:[#allocation2] sm:$0xff] %v612
    %617 = vst [vmem:[#allocation2 + $0x8] sm:$0xff] %v613
    %618 = vst [vmem:[#allocation2 + $0x10] sm:$0xff] %v614
    %619 = vst [vmem:[#allocation2 + $0x18] sm:$0xff] %v615
    %620 = vrot.lane.b32.xlu0 %v574, 16
    %v621 = vpop.permute.xlu0 %620
    %622 = vrot.lane.b32.xlu0 %v575, 16
    %v623 = vpop.permute.xlu0 %622
    %624 = vrot.lane.b32.xlu0 %v576, 16
    %v625 = vpop.permute.xlu0 %624
    %626 = vrot.lane.b32.xlu0 %v577, 16
    %v627 = vpop.permute.xlu0 %626
    %v628 = vsel %vm81, %v625, %v627
    %v629 = vsel %vm81, %v623, %v625
    %v630 = vsel %vm81, %v621, %v623
    %v631 = vsel %vm81, %v627, %v621
    %v632 = vld [vmem:[%s86] ss:$8 sm:$0xf]
    %v634 = vlaneseq
    %v635 = vshrl.u32 %v634, 7
    %v636 = vsub.s32 0, %v635
    %v637 = vrot.slane %v632, %v636
    %v638 = vlaneseq
    %v639 = vshrl.u32 %v638, 7
    %v640 = vsub.s32 1, %v639
    %v641 = vrot.slane %v632, %v640
    %v642 = vlaneseq
    %v643 = vshrl.u32 %v642, 7
    %v644 = vsub.s32 2, %v643
    %v645 = vrot.slane %v632, %v644
    %v646 = vlaneseq
    %v647 = vshrl.u32 %v646, 7
    %v648 = vsub.s32 3, %v647
    %v649 = vrot.slane %v632, %v648
    %v654 = vmul.f32 %v631, %v637
    %v655 = vmul.f32 %v630, %v641
    %v656 = vmul.f32 %v629, %v645
    %v657 = vmul.f32 %v628, %v649
    %658 = vst [vmem:[#allocation2 + $0x20] sm:$0xff] %v654
    %659 = vst [vmem:[#allocation2 + $0x28] sm:$0xff] %v655
    %660 = vst [vmem:[#allocation2 + $0x30] sm:$0xff] %v656
    %661 = vst [vmem:[#allocation2 + $0x38] sm:$0xff] %v657
    %662 = vrot.lane.b32.xlu0 %v574, 15
    %v663 = vpop.permute.xlu0 %662
    %664 = vrot.lane.b32.xlu0 %v575, 15
    %v665 = vpop.permute.xlu0 %664
    %666 = vrot.lane.b32.xlu0 %v576, 15
    %v667 = vpop.permute.xlu0 %666
    %668 = vrot.lane.b32.xlu0 %v577, 15
    %v669 = vpop.permute.xlu0 %668
    %v670 = vsel %vm125, %v667, %v669
    %v671 = vsel %vm125, %v665, %v667
    %v672 = vsel %vm125, %v663, %v665
    %v673 = vsel %vm125, %v669, %v663
    %v674 = vld [vmem:[%s130] ss:$8 sm:$0xf]
    %v676 = vlaneseq
    %v677 = vshrl.u32 %v676, 7
    %v678 = vsub.s32 0, %v677
    %v679 = vrot.slane %v674, %v678
    %v680 = vlaneseq
    %v681 = vshrl.u32 %v680, 7
    %v682 = vsub.s32 1, %v681
    %v683 = vrot.slane %v674, %v682
    %v684 = vlaneseq
    %v685 = vshrl.u32 %v684, 7
    %v686 = vsub.s32 2, %v685
    %v687 = vrot.slane %v674, %v686
    %v688 = vlaneseq
    %v689 = vshrl.u32 %v688, 7
    %v690 = vsub.s32 3, %v689
    %v691 = vrot.slane %v674, %v690
    %v696 = vmul.f32 %v673, %v679
    %v697 = vmul.f32 %v672, %v683
    %v698 = vmul.f32 %v671, %v687
    %v699 = vmul.f32 %v670, %v691
    %700 = vst [vmem:[#allocation2 + $0x40] sm:$0xff] %v696
    %701 = vst [vmem:[#allocation2 + $0x48] sm:$0xff] %v697
    %702 = vst [vmem:[#allocation2 + $0x50] sm:$0xff] %v698
    %703 = vst [vmem:[#allocation2 + $0x58] sm:$0xff] %v699
    %704 = vrot.lane.b32.xlu0 %v574, 1
    %v705 = vpop.permute.xlu0 %704
    %706 = vrot.lane.b32.xlu0 %v575, 1
    %v707 = vpop.permute.xlu0 %706
    %708 = vrot.lane.b32.xlu0 %v576, 1
    %v709 = vpop.permute.xlu0 %708
    %710 = vrot.lane.b32.xlu0 %v577, 1
    %v711 = vpop.permute.xlu0 %710
    %v712 = vsel %vm169, %v709, %v711
    %v713 = vsel %vm169, %v707, %v709
    %v714 = vsel %vm169, %v705, %v707
    %v715 = vsel %vm169, %v711, %v705
    %v716 = vld [vmem:[%s174] ss:$8 sm:$0xf]
    %v718 = vlaneseq
    %v719 = vshrl.u32 %v718, 7
    %v720 = vsub.s32 0, %v719
    %v721 = vrot.slane %v716, %v720
    %v722 = vlaneseq
    %v723 = vshrl.u32 %v722, 7
    %v724 = vsub.s32 1, %v723
    %v725 = vrot.slane %v716, %v724
    %v726 = vlaneseq
    %v727 = vshrl.u32 %v726, 7
    %v728 = vsub.s32 2, %v727
    %v729 = vrot.slane %v716, %v728
    %v730 = vlaneseq
    %v731 = vshrl.u32 %v730, 7
    %v732 = vsub.s32 3, %v731
    %v733 = vrot.slane %v716, %v732
    %v738 = vmul.f32 %v715, %v721
    %v739 = vmul.f32 %v714, %v725
    %v740 = vmul.f32 %v713, %v729
    %v741 = vmul.f32 %v712, %v733
    %742 = vst [vmem:[#allocation2 + $0x60] sm:$0xff] %v738
    %743 = vst [vmem:[#allocation2 + $0x68] sm:$0xff] %v739
    %744 = vst [vmem:[#allocation2 + $0x70] sm:$0xff] %v740
    %745 = vst [vmem:[#allocation2 + $0x78] sm:$0xff] %v741
    %746 = vst [vmem:[#allocation2 + $0x80] sm:$0xff] %v574
    %747 = vst [vmem:[#allocation2 + $0x88] sm:$0xff] %v575
    %748 = vst [vmem:[#allocation2 + $0x90] sm:$0xff] %v576
    %749 = vst [vmem:[#allocation2 + $0x98] sm:$0xff] %v577
    %750 = vrot.lane.b32.xlu0 %v574, 127
    %v751 = vpop.permute.xlu0 %750
    %752 = vrot.lane.b32.xlu0 %v575, 127
    %v753 = vpop.permute.xlu0 %752
    %754 = vrot.lane.b32.xlu0 %v576, 127
    %v755 = vpop.permute.xlu0 %754
    %756 = vrot.lane.b32.xlu0 %v577, 127
    %v757 = vpop.permute.xlu0 %756
    %v758 = vsel %vm217, %v755, %v757
    %v759 = vsel %vm217, %v753, %v755
    %v760 = vsel %vm217, %v751, %v753
    %v761 = vsel %vm217, %v757, %v751
    %v762 = vld [vmem:[%s222] ss:$8 sm:$0xf]
    %v764 = vlaneseq
    %v765 = vshrl.u32 %v764, 7
    %v766 = vsub.s32 0, %v765
    %v767 = vrot.slane %v762, %v766
    %v768 = vlaneseq
    %v769 = vshrl.u32 %v768, 7
    %v770 = vsub.s32 1, %v769
    %v771 = vrot.slane %v762, %v770
    %v772 = vlaneseq
    %v773 = vshrl.u32 %v772, 7
    %v774 = vsub.s32 2, %v773
    %v775 = vrot.slane %v762, %v774
    %v776 = vlaneseq
    %v777 = vshrl.u32 %v776, 7
    %v778 = vsub.s32 3, %v777
    %v779 = vrot.slane %v762, %v778
    %v784 = vmul.f32 %v760, %v767
    %v785 = vmul.f32 %v759, %v771
    %v786 = vmul.f32 %v758, %v775
    %v787 = vmul.f32 %v761, %v779
    %788 = vst [vmem:[#allocation2 + $0xa0] sm:$0xff] %v784
    %789 = vst [vmem:[#allocation2 + $0xa8] sm:$0xff] %v785
    %790 = vst [vmem:[#allocation2 + $0xb0] sm:$0xff] %v786
    %791 = vst [vmem:[#allocation2 + $0xb8] sm:$0xff] %v787
    %792 = vrot.lane.b32.xlu0 %v574, 113
    %v793 = vpop.permute.xlu0 %792
    %794 = vrot.lane.b32.xlu0 %v575, 113
    %v795 = vpop.permute.xlu0 %794
    %796 = vrot.lane.b32.xlu0 %v576, 113
    %v797 = vpop.permute.xlu0 %796
    %798 = vrot.lane.b32.xlu0 %v577, 113
    %v799 = vpop.permute.xlu0 %798
    %v800 = vsel %vm261, %v797, %v799
    %v801 = vsel %vm261, %v795, %v797
    %v802 = vsel %vm261, %v793, %v795
    %v803 = vsel %vm261, %v799, %v793
    %v804 = vld [vmem:[%s266] ss:$8 sm:$0xf]
    %v806 = vlaneseq
    %v807 = vshrl.u32 %v806, 7
    %v808 = vsub.s32 0, %v807
    %v809 = vrot.slane %v804, %v808
    %v810 = vlaneseq
    %v811 = vshrl.u32 %v810, 7
    %v812 = vsub.s32 1, %v811
    %v813 = vrot.slane %v804, %v812
    %v814 = vlaneseq
    %v815 = vshrl.u32 %v814, 7
    %v816 = vsub.s32 2, %v815
    %v817 = vrot.slane %v804, %v816
    %v818 = vlaneseq
    %v819 = vshrl.u32 %v818, 7
    %v820 = vsub.s32 3, %v819
    %v821 = vrot.slane %v804, %v820
    %v826 = vmul.f32 %v802, %v809
    %v827 = vmul.f32 %v801, %v813
    %v828 = vmul.f32 %v800, %v817
    %v829 = vmul.f32 %v803, %v821
    %830 = vst [vmem:[#allocation2 + $0xc0] sm:$0xff] %v826
    %831 = vst [vmem:[#allocation2 + $0xc8] sm:$0xff] %v827
    %832 = vst [vmem:[#allocation2 + $0xd0] sm:$0xff] %v828
    %833 = vst [vmem:[#allocation2 + $0xd8] sm:$0xff] %v829
    %834 = vrot.lane.b32.xlu0 %v574, 112
    %v835 = vpop.permute.xlu0 %834
    %836 = vrot.lane.b32.xlu0 %v575, 112
    %v837 = vpop.permute.xlu0 %836
    %838 = vrot.lane.b32.xlu0 %v576, 112
    %v839 = vpop.permute.xlu0 %838
    %840 = vrot.lane.b32.xlu0 %v577, 112
    %v841 = vpop.permute.xlu0 %840
    %v842 = vsel %vm305, %v839, %v841
    %v843 = vsel %vm305, %v837, %v839
    %v844 = vsel %vm305, %v835, %v837
    %v845 = vsel %vm305, %v841, %v835
    %v846 = vld [vmem:[%s310] ss:$8 sm:$0xf]
    %v848 = vlaneseq
    %v849 = vshrl.u32 %v848, 7
    %v850 = vsub.s32 0, %v849
    %v851 = vrot.slane %v846, %v850
    %v852 = vlaneseq
    %v853 = vshrl.u32 %v852, 7
    %v854 = vsub.s32 1, %v853
    %v855 = vrot.slane %v846, %v854
    %v856 = vlaneseq
    %v857 = vshrl.u32 %v856, 7
    %v858 = vsub.s32 2, %v857
    %v859 = vrot.slane %v846, %v858
    %v860 = vlaneseq
    %v861 = vshrl.u32 %v860, 7
    %v862 = vsub.s32 3, %v861
    %v863 = vrot.slane %v846, %v862
    %v868 = vmul.f32 %v844, %v851
    %v869 = vmul.f32 %v843, %v855
    %v870 = vmul.f32 %v842, %v859
    %v871 = vmul.f32 %v845, %v863
    %872 = vst [vmem:[#allocation2 + $0xe0] sm:$0xff] %v868
    %873 = vst [vmem:[#allocation2 + $0xe8] sm:$0xff] %v869
    %874 = vst [vmem:[#allocation2 + $0xf0] sm:$0xff] %v870
    %875 = vst [vmem:[#allocation2 + $0xf8] sm:$0xff] %v871
    %876 = vrot.lane.b32.xlu0 %v574, 111
    %v877 = vpop.permute.xlu0 %876
    %878 = vrot.lane.b32.xlu0 %v575, 111
    %v879 = vpop.permute.xlu0 %878
    %880 = vrot.lane.b32.xlu0 %v576, 111
    %v881 = vpop.permute.xlu0 %880
    %882 = vrot.lane.b32.xlu0 %v577, 111
    %v883 = vpop.permute.xlu0 %882
    %v884 = vsel %vm349, %v881, %v883
    %v885 = vsel %vm349, %v879, %v881
    %v886 = vsel %vm349, %v877, %v879
    %v887 = vsel %vm349, %v883, %v877
    %v888 = vld [vmem:[%s354] ss:$8 sm:$0xf]
    %v890 = vlaneseq
    %v891 = vshrl.u32 %v890, 7
    %v892 = vsub.s32 0, %v891
    %v893 = vrot.slane %v888, %v892
    %v894 = vlaneseq
    %v895 = vshrl.u32 %v894, 7
    %v896 = vsub.s32 1, %v895
    %v897 = vrot.slane %v888, %v896
    %v898 = vlaneseq
    %v899 = vshrl.u32 %v898, 7
    %v900 = vsub.s32 2, %v899
    %v901 = vrot.slane %v888, %v900
    %v902 = vlaneseq
    %v903 = vshrl.u32 %v902, 7
    %v904 = vsub.s32 3, %v903
    %v905 = vrot.slane %v888, %v904
    %v910 = vmul.f32 %v886, %v893
    %v911 = vmul.f32 %v885, %v897
    %v912 = vmul.f32 %v884, %v901
    %v913 = vmul.f32 %v887, %v905
    %914 = vst [vmem:[#allocation2 + $0x100] sm:$0xff] %v910
    %915 = vst [vmem:[#allocation2 + $0x108] sm:$0xff] %v911
    %916 = vst [vmem:[#allocation2 + $0x110] sm:$0xff] %v912
    %917 = vst [vmem:[#allocation2 + $0x118] sm:$0xff] %v913
    %v918 = vld [vmem:[%s2 + $0x8] sm:$0xff]
    %v919 = vld [vmem:[#allocation2] sm:$0xff]
    %v920 = vld [vmem:[#allocation2 + $0x8] sm:$0xff]
    %v921 = vld [vmem:[#allocation2 + $0x10] sm:$0xff]
    %v922 = vld [vmem:[#allocation2 + $0x18] sm:$0xff]
    %v923 = vld [vmem:[#allocation2 + $0x20] sm:$0xff]
    %v924 = vld [vmem:[#allocation2 + $0x28] sm:$0xff]
    %v925 = vld [vmem:[#allocation2 + $0x30] sm:$0xff]
    %v926 = vld [vmem:[#allocation2 + $0x38] sm:$0xff]
    %v927 = vld [vmem:[#allocation2 + $0x40] sm:$0xff]
    %v928 = vld [vmem:[#allocation2 + $0x48] sm:$0xff]
    %v929 = vld [vmem:[#allocation2 + $0x50] sm:$0xff]
    %v930 = vld [vmem:[#allocation2 + $0x58] sm:$0xff]
    %v931 = vld [vmem:[#allocation2 + $0x60] sm:$0xff]
    %v932 = vld [vmem:[#allocation2 + $0x68] sm:$0xff]
    %v933 = vld [vmem:[#allocation2 + $0x70] sm:$0xff]
    %v934 = vld [vmem:[#allocation2 + $0x78] sm:$0xff]
    %v935 = vld [vmem:[#allocation2 + $0x80] sm:$0xff]
    %v936 = vld [vmem:[#allocation2 + $0x88] sm:$0xff]
    %v937 = vld [vmem:[#allocation2 + $0x90] sm:$0xff]
    %v938 = vld [vmem:[#allocation2 + $0x98] sm:$0xff]
    %v939 = vld [vmem:[#allocation2 + $0xa0] sm:$0xff]
    %v940 = vld [vmem:[#allocation2 + $0xa8] sm:$0xff]
    %v941 = vld [vmem:[#allocation2 + $0xb0] sm:$0xff]
    %v942 = vld [vmem:[#allocation2 + $0xb8] sm:$0xff]
    %v943 = vld [vmem:[#allocation2 + $0xc0] sm:$0xff]
    %v944 = vld [vmem:[#allocation2 + $0xc8] sm:$0xff]
    %v945 = vld [vmem:[#allocation2 + $0xd0] sm:$0xff]
    %v946 = vld [vmem:[#allocation2 + $0xd8] sm:$0xff]
    %v947 = vld [vmem:[#allocation2 + $0xe0] sm:$0xff]
    %v948 = vld [vmem:[#allocation2 + $0xe8] sm:$0xff]
    %v949 = vld [vmem:[#allocation2 + $0xf0] sm:$0xff]
    %v950 = vld [vmem:[#allocation2 + $0xf8] sm:$0xff]
    %v951 = vld [vmem:[#allocation2 + $0x100] sm:$0xff]
    %v952 = vld [vmem:[#allocation2 + $0x108] sm:$0xff]
    %v953 = vld [vmem:[#allocation2 + $0x110] sm:$0xff]
    %v954 = vld [vmem:[#allocation2 + $0x118] sm:$0xff]
    %v955 = vld [vmem:[%s5 + $0x8] sm:$0xff]
    %957 = vset.pattern.permute.xlu0 0
    %958 = vperm.xlu0 %957, %v955
    %v959 = vpop.permute.xlu0 %958
    %v962 = vsel %vm428, %v918, 0
    %964 = vmatprep.subr.mxu0 0.0
    %965 = vmatpush1.msra.mxu0 0.0
    %966 = vmatprep.subr.mxu0 0.0
    %967 = vmatpush1.msra.mxu0 0.0
    %968 = vmatprep.subr.mxu0 0.0
    %969 = vmatpush1.msra.mxu0 0.0
    %970 = vmatprep.subr.mxu0 0.0
    %971 = vmatpush1.msra.mxu0 0.0
    %972 = vmatprep.subr.mxu0 0.0
    %973 = vmatpush1.msra.mxu0 0.0
    %974 = vmatprep.subr.mxu0 0.0
    %975 = vmatpush1.msra.mxu0 0.0
    %976 = vmatprep.subr.mxu0 0.0
    %977 = vmatpush1.msra.mxu0 0.0
    %978 = vmatprep.subr.mxu0 %v952
    %979 = vmatpush1.msra.mxu0 %v951
    %980 = vmatprep.subr.mxu0 %v948
    %981 = vmatpush1.msra.mxu0 %v947
    %982 = vmatprep.subr.mxu0 %v944
    %983 = vmatpush1.msra.mxu0 %v943
    %984 = vmatprep.subr.mxu0 %v940
    %985 = vmatpush1.msra.mxu0 %v939
    %986 = vmatprep.subr.mxu0 %v936
    %987 = vmatpush1.msra.mxu0 %v935
    %988 = vmatprep.subr.mxu0 %v932
    %989 = vmatpush1.msra.mxu0 %v931
    %990 = vmatprep.subr.mxu0 %v928
    %991 = vmatpush1.msra.mxu0 %v927
    %992 = vmatprep.subr.mxu0 %v924
    %993 = vmatpush1.msra.mxu0 %v923
    %994 = vmatprep.subr.mxu0 %v920
    %995 = vmatpush1.msra.mxu0 %v919
    %996 = vmatprep.subr.mxu0 0.0
    %997 = vmatpush2.msra.mxu0 0.0
    %998 = vmatprep.subr.mxu0 0.0
    %999 = vmatpush2.msra.mxu0 0.0
    %1000 = vmatprep.subr.mxu0 0.0
    %1001 = vmatpush2.msra.mxu0 0.0
    %1002 = vmatprep.subr.mxu0 0.0
    %1003 = vmatpush2.msra.mxu0 0.0
    %1004 = vmatprep.subr.mxu0 0.0
    %1005 = vmatpush2.msra.mxu0 0.0
    %1006 = vmatprep.subr.mxu0 0.0
    %1007 = vmatpush2.msra.mxu0 0.0
    %1008 = vmatprep.subr.mxu0 0.0
    %1009 = vmatpush2.msra.mxu0 0.0
    %1010 = vmatprep.subr.mxu0 0.0
    %1011 = vmatpush2.msra.mxu0 0.0
    %1012 = vmatprep.subr.mxu0 0.0
    %1013 = vmatpush2.msra.mxu0 0.0
    %1014 = vmatprep.subr.mxu0 0.0
    %1015 = vmatpush2.msra.mxu0 0.0
    %1016 = vmatprep.subr.mxu0 0.0
    %1017 = vmatpush2.msra.mxu0 0.0
    %1018 = vmatprep.subr.mxu0 0.0
    %1019 = vmatpush2.msra.mxu0 0.0
    %1020 = vmatprep.subr.mxu0 0.0
    %1021 = vmatpush2.msra.mxu0 0.0
    %1022 = vmatprep.subr.mxu0 0.0
    %1023 = vmatpush2.msra.mxu0 0.0
    %1024 = vmatprep.subr.mxu0 0.0
    %1025 = vmatpush2.msra.mxu0 0.0
    %1026 = vmatprep.subr.mxu0 0.0
    %1027 = vmatpush2.msra.mxu0 0.0
    %1028 = vmatprep.mubr.f32.mxu0 0.0
    %1029 = vmatmul.mubr.f32.gmra.mxu0 %v962
    %v1030 = vpop.f32.mrf.mxu0
    %v1031 = vadd.f32 %v959, %v1030
    %v1032 = vpop.f32.mrf.mxu0
    %v1033 = vadd.f32 %v959, %v1032
    %1034 = vdwg.mxu0
    %1035 = vmatprep.subr.mxu0 0.0
    %1036 = vmatpush1.msra.mxu0 0.0
    %1037 = vmatprep.subr.mxu0 0.0
    %1038 = vmatpush1.msra.mxu0 0.0
    %1039 = vmatprep.subr.mxu0 0.0
    %1040 = vmatpush1.msra.mxu0 0.0
    %1041 = vmatprep.subr.mxu0 0.0
    %1042 = vmatpush1.msra.mxu0 0.0
    %1043 = vmatprep.subr.mxu0 0.0
    %1044 = vmatpush1.msra.mxu0 0.0
    %1045 = vmatprep.subr.mxu0 0.0
    %1046 = vmatpush1.msra.mxu0 0.0
    %1047 = vmatprep.subr.mxu0 0.0
    %1048 = vmatpush1.msra.mxu0 0.0
    %1049 = vmatprep.subr.mxu0 %v954
    %1050 = vmatpush1.msra.mxu0 %v953
    %1051 = vmatprep.subr.mxu0 %v950
    %1052 = vmatpush1.msra.mxu0 %v949
    %1053 = vmatprep.subr.mxu0 %v946
    %1054 = vmatpush1.msra.mxu0 %v945
    %1055 = vmatprep.subr.mxu0 %v942
    %1056 = vmatpush1.msra.mxu0 %v941
    %1057 = vmatprep.subr.mxu0 %v938
    %1058 = vmatpush1.msra.mxu0 %v937
    %1059 = vmatprep.subr.mxu0 %v934
    %1060 = vmatpush1.msra.mxu0 %v933
    %1061 = vmatprep.subr.mxu0 %v930
    %1062 = vmatpush1.msra.mxu0 %v929
    %1063 = vmatprep.subr.mxu0 %v926
    %1064 = vmatpush1.msra.mxu0 %v925
    %1065 = vmatprep.subr.mxu0 %v922
    %1066 = vmatpush1.msra.mxu0 %v921
    %1067 = vmatprep.subr.mxu0 0.0
    %1068 = vmatpush2.msra.mxu0 0.0
    %1069 = vmatprep.subr.mxu0 0.0
    %1070 = vmatpush2.msra.mxu0 0.0
    %1071 = vmatprep.subr.mxu0 0.0
    %1072 = vmatpush2.msra.mxu0 0.0
    %1073 = vmatprep.subr.mxu0 0.0
    %1074 = vmatpush2.msra.mxu0 0.0
    %1075 = vmatprep.subr.mxu0 0.0
    %1076 = vmatpush2.msra.mxu0 0.0
    %1077 = vmatprep.subr.mxu0 0.0
    %1078 = vmatpush2.msra.mxu0 0.0
    %1079 = vmatprep.subr.mxu0 0.0
    %1080 = vmatpush2.msra.mxu0 0.0
    %1081 = vmatprep.subr.mxu0 0.0
    %1082 = vmatpush2.msra.mxu0 0.0
    %1083 = vmatprep.subr.mxu0 0.0
    %1084 = vmatpush2.msra.mxu0 0.0
    %1085 = vmatprep.subr.mxu0 0.0
    %1086 = vmatpush2.msra.mxu0 0.0
    %1087 = vmatprep.subr.mxu0 0.0
    %1088 = vmatpush2.msra.mxu0 0.0
    %1089 = vmatprep.subr.mxu0 0.0
    %1090 = vmatpush2.msra.mxu0 0.0
    %1091 = vmatprep.subr.mxu0 0.0
    %1092 = vmatpush2.msra.mxu0 0.0
    %1093 = vmatprep.subr.mxu0 0.0
    %1094 = vmatpush2.msra.mxu0 0.0
    %1095 = vmatprep.subr.mxu0 0.0
    %1096 = vmatpush2.msra.mxu0 0.0
    %1097 = vmatprep.subr.mxu0 0.0
    %1098 = vmatpush2.msra.mxu0 0.0
    %1099 = vmatprep.mubr.f32.mxu0 0.0
    %1100 = vmatmul.mubr.f32.gmra.mxu0 %v962
    %v1101 = vpop.f32.mrf.mxu0
    %v1102 = vadd.f32 %v959, %v1101
    %v1103 = vpop.f32.mrf.mxu0
    %v1104 = vadd.f32 %v959, %v1103
    %1105 = vdwg.mxu0
    %v1106 = vmax.f32 %v1031, 0.0
    %v1107 = vmax.f32 %v1033, 0.0
    %v1108 = vmax.f32 %v1102, 0.0
    %v1109 = vmax.f32 %v1104, 0.0
    %1110 = vst [vmem:[#allocation3 + $0x40] sm:$0xff] %v1106
    %1111 = vst [vmem:[#allocation3 + $0x48] sm:$0xff] %v1107
    %1112 = vst [vmem:[#allocation3 + $0x50] sm:$0xff] %v1108
    %1113 = vst [vmem:[#allocation3 + $0x58] sm:$0xff] %v1109
    %1114 = vrot.lane.b32.xlu0 %v1106, 17
    %v1115 = vpop.permute.xlu0 %1114
    %1116 = vrot.lane.b32.xlu0 %v1107, 17
    %v1117 = vpop.permute.xlu0 %1116
    %1118 = vrot.lane.b32.xlu0 %v1108, 17
    %v1119 = vpop.permute.xlu0 %1118
    %1120 = vrot.lane.b32.xlu0 %v1109, 17
    %v1121 = vpop.permute.xlu0 %1120
    %v1122 = vsel %vm38, %v1119, %v1121
    %v1123 = vsel %vm38, %v1117, %v1119
    %v1124 = vsel %vm38, %v1115, %v1117
    %v1125 = vsel %vm38, %v1121, %v1115
    %v1126 = vld [vmem:[%s1] ss:$8 sm:$0xf]
    %v1128 = vlaneseq
    %v1129 = vshrl.u32 %v1128, 7
    %v1130 = vsub.s32 0, %v1129
    %v1131 = vrot.slane %v1126, %v1130
    %v1132 = vlaneseq
    %v1133 = vshrl.u32 %v1132, 7
    %v1134 = vsub.s32 1, %v1133
    %v1135 = vrot.slane %v1126, %v1134
    %v1136 = vlaneseq
    %v1137 = vshrl.u32 %v1136, 7
    %v1138 = vsub.s32 2, %v1137
    %v1139 = vrot.slane %v1126, %v1138
    %v1140 = vlaneseq
    %v1141 = vshrl.u32 %v1140, 7
    %v1142 = vsub.s32 3, %v1141
    %v1143 = vrot.slane %v1126, %v1142
    %v1148 = vmul.f32 %v1125, %v1131
    %v1149 = vmul.f32 %v1124, %v1135
    %v1150 = vmul.f32 %v1123, %v1139
    %v1151 = vmul.f32 %v1122, %v1143
    %1152 = vst [vmem:[#allocation2] sm:$0xff] %v1148
    %1153 = vst [vmem:[#allocation2 + $0x8] sm:$0xff] %v1149
    %1154 = vst [vmem:[#allocation2 + $0x10] sm:$0xff] %v1150
    %1155 = vst [vmem:[#allocation2 + $0x18] sm:$0xff] %v1151
    %1156 = vrot.lane.b32.xlu0 %v1106, 16
    %v1157 = vpop.permute.xlu0 %1156
    %1158 = vrot.lane.b32.xlu0 %v1107, 16
    %v1159 = vpop.permute.xlu0 %1158
    %1160 = vrot.lane.b32.xlu0 %v1108, 16
    %v1161 = vpop.permute.xlu0 %1160
    %1162 = vrot.lane.b32.xlu0 %v1109, 16
    %v1163 = vpop.permute.xlu0 %1162
    %v1164 = vsel %vm81, %v1161, %v1163
    %v1165 = vsel %vm81, %v1159, %v1161
    %v1166 = vsel %vm81, %v1157, %v1159
    %v1167 = vsel %vm81, %v1163, %v1157
    %v1168 = vld [vmem:[%s86] ss:$8 sm:$0xf]
    %v1170 = vlaneseq
    %v1171 = vshrl.u32 %v1170, 7
    %v1172 = vsub.s32 0, %v1171
    %v1173 = vrot.slane %v1168, %v1172
    %v1174 = vlaneseq
    %v1175 = vshrl.u32 %v1174, 7
    %v1176 = vsub.s32 1, %v1175
    %v1177 = vrot.slane %v1168, %v1176
    %v1178 = vlaneseq
    %v1179 = vshrl.u32 %v1178, 7
    %v1180 = vsub.s32 2, %v1179
    %v1181 = vrot.slane %v1168, %v1180
    %v1182 = vlaneseq
    %v1183 = vshrl.u32 %v1182, 7
    %v1184 = vsub.s32 3, %v1183
    %v1185 = vrot.slane %v1168, %v1184
    %v1190 = vmul.f32 %v1167, %v1173
    %v1191 = vmul.f32 %v1166, %v1177
    %v1192 = vmul.f32 %v1165, %v1181
    %v1193 = vmul.f32 %v1164, %v1185
    %1194 = vst [vmem:[#allocation2 + $0x20] sm:$0xff] %v1190
    %1195 = vst [vmem:[#allocation2 + $0x28] sm:$0xff] %v1191
    %1196 = vst [vmem:[#allocation2 + $0x30] sm:$0xff] %v1192
    %1197 = vst [vmem:[#allocation2 + $0x38] sm:$0xff] %v1193
    %1198 = vrot.lane.b32.xlu0 %v1106, 15
    %v1199 = vpop.permute.xlu0 %1198
    %1200 = vrot.lane.b32.xlu0 %v1107, 15
    %v1201 = vpop.permute.xlu0 %1200
    %1202 = vrot.lane.b32.xlu0 %v1108, 15
    %v1203 = vpop.permute.xlu0 %1202
    %1204 = vrot.lane.b32.xlu0 %v1109, 15
    %v1205 = vpop.permute.xlu0 %1204
    %v1206 = vsel %vm125, %v1203, %v1205
    %v1207 = vsel %vm125, %v1201, %v1203
    %v1208 = vsel %vm125, %v1199, %v1201
    %v1209 = vsel %vm125, %v1205, %v1199
    %v1210 = vld [vmem:[%s130] ss:$8 sm:$0xf]
    %v1212 = vlaneseq
    %v1213 = vshrl.u32 %v1212, 7
    %v1214 = vsub.s32 0, %v1213
    %v1215 = vrot.slane %v1210, %v1214
    %v1216 = vlaneseq
    %v1217 = vshrl.u32 %v1216, 7
    %v1218 = vsub.s32 1, %v1217
    %v1219 = vrot.slane %v1210, %v1218
    %v1220 = vlaneseq
    %v1221 = vshrl.u32 %v1220, 7
    %v1222 = vsub.s32 2, %v1221
    %v1223 = vrot.slane %v1210, %v1222
    %v1224 = vlaneseq
    %v1225 = vshrl.u32 %v1224, 7
    %v1226 = vsub.s32 3, %v1225
    %v1227 = vrot.slane %v1210, %v1226
    %v1232 = vmul.f32 %v1209, %v1215
    %v1233 = vmul.f32 %v1208, %v1219
    %v1234 = vmul.f32 %v1207, %v1223
    %v1235 = vmul.f32 %v1206, %v1227
    %1236 = vst [vmem:[#allocation2 + $0x40] sm:$0xff] %v1232
    %1237 = vst [vmem:[#allocation2 + $0x48] sm:$0xff] %v1233
    %1238 = vst [vmem:[#allocation2 + $0x50] sm:$0xff] %v1234
    %1239 = vst [vmem:[#allocation2 + $0x58] sm:$0xff] %v1235
    %1240 = vrot.lane.b32.xlu0 %v1106, 1
    %v1241 = vpop.permute.xlu0 %1240
    %1242 = vrot.lane.b32.xlu0 %v1107, 1
    %v1243 = vpop.permute.xlu0 %1242
    %1244 = vrot.lane.b32.xlu0 %v1108, 1
    %v1245 = vpop.permute.xlu0 %1244
    %1246 = vrot.lane.b32.xlu0 %v1109, 1
    %v1247 = vpop.permute.xlu0 %1246
    %v1248 = vsel %vm169, %v1245, %v1247
    %v1249 = vsel %vm169, %v1243, %v1245
    %v1250 = vsel %vm169, %v1241, %v1243
    %v1251 = vsel %vm169, %v1247, %v1241
    %v1252 = vld [vmem:[%s174] ss:$8 sm:$0xf]
    %v1254 = vlaneseq
    %v1255 = vshrl.u32 %v1254, 7
    %v1256 = vsub.s32 0, %v1255
    %v1257 = vrot.slane %v1252, %v1256
    %v1258 = vlaneseq
    %v1259 = vshrl.u32 %v1258, 7
    %v1260 = vsub.s32 1, %v1259
    %v1261 = vrot.slane %v1252, %v1260
    %v1262 = vlaneseq
    %v1263 = vshrl.u32 %v1262, 7
    %v1264 = vsub.s32 2, %v1263
    %v1265 = vrot.slane %v1252, %v1264
    %v1266 = vlaneseq
    %v1267 = vshrl.u32 %v1266, 7
    %v1268 = vsub.s32 3, %v1267
    %v1269 = vrot.slane %v1252, %v1268
    %v1274 = vmul.f32 %v1251, %v1257
    %v1275 = vmul.f32 %v1250, %v1261
    %v1276 = vmul.f32 %v1249, %v1265
    %v1277 = vmul.f32 %v1248, %v1269
    %1278 = vst [vmem:[#allocation2 + $0x60] sm:$0xff] %v1274
    %1279 = vst [vmem:[#allocation2 + $0x68] sm:$0xff] %v1275
    %1280 = vst [vmem:[#allocation2 + $0x70] sm:$0xff] %v1276
    %1281 = vst [vmem:[#allocation2 + $0x78] sm:$0xff] %v1277
    %1282 = vst [vmem:[#allocation2 + $0x80] sm:$0xff] %v1106
    %1283 = vst [vmem:[#allocation2 + $0x88] sm:$0xff] %v1107
    %1284 = vst [vmem:[#allocation2 + $0x90] sm:$0xff] %v1108
    %1285 = vst [vmem:[#allocation2 + $0x98] sm:$0xff] %v1109
    %1286 = vrot.lane.b32.xlu0 %v1106, 127
    %v1287 = vpop.permute.xlu0 %1286
    %1288 = vrot.lane.b32.xlu0 %v1107, 127
    %v1289 = vpop.permute.xlu0 %1288
    %1290 = vrot.lane.b32.xlu0 %v1108, 127
    %v1291 = vpop.permute.xlu0 %1290
    %1292 = vrot.lane.b32.xlu0 %v1109, 127
    %v1293 = vpop.permute.xlu0 %1292
    %v1294 = vsel %vm217, %v1291, %v1293
    %v1295 = vsel %vm217, %v1289, %v1291
    %v1296 = vsel %vm217, %v1287, %v1289
    %v1297 = vsel %vm217, %v1293, %v1287
    %v1298 = vld [vmem:[%s222] ss:$8 sm:$0xf]
    %v1300 = vlaneseq
    %v1301 = vshrl.u32 %v1300, 7
    %v1302 = vsub.s32 0, %v1301
    %v1303 = vrot.slane %v1298, %v1302
    %v1304 = vlaneseq
    %v1305 = vshrl.u32 %v1304, 7
    %v1306 = vsub.s32 1, %v1305
    %v1307 = vrot.slane %v1298, %v1306
    %v1308 = vlaneseq
    %v1309 = vshrl.u32 %v1308, 7
    %v1310 = vsub.s32 2, %v1309
    %v1311 = vrot.slane %v1298, %v1310
    %v1312 = vlaneseq
    %v1313 = vshrl.u32 %v1312, 7
    %v1314 = vsub.s32 3, %v1313
    %v1315 = vrot.slane %v1298, %v1314
    %v1320 = vmul.f32 %v1296, %v1303
    %v1321 = vmul.f32 %v1295, %v1307
    %v1322 = vmul.f32 %v1294, %v1311
    %v1323 = vmul.f32 %v1297, %v1315
    %1324 = vst [vmem:[#allocation2 + $0xa0] sm:$0xff] %v1320
    %1325 = vst [vmem:[#allocation2 + $0xa8] sm:$0xff] %v1321
    %1326 = vst [vmem:[#allocation2 + $0xb0] sm:$0xff] %v1322
    %1327 = vst [vmem:[#allocation2 + $0xb8] sm:$0xff] %v1323
    %1328 = vrot.lane.b32.xlu0 %v1106, 113
    %v1329 = vpop.permute.xlu0 %1328
    %1330 = vrot.lane.b32.xlu0 %v1107, 113
    %v1331 = vpop.permute.xlu0 %1330
    %1332 = vrot.lane.b32.xlu0 %v1108, 113
    %v1333 = vpop.permute.xlu0 %1332
    %1334 = vrot.lane.b32.xlu0 %v1109, 113
    %v1335 = vpop.permute.xlu0 %1334
    %v1336 = vsel %vm261, %v1333, %v1335
    %v1337 = vsel %vm261, %v1331, %v1333
    %v1338 = vsel %vm261, %v1329, %v1331
    %v1339 = vsel %vm261, %v1335, %v1329
    %v1340 = vld [vmem:[%s266] ss:$8 sm:$0xf]
    %v1342 = vlaneseq
    %v1343 = vshrl.u32 %v1342, 7
    %v1344 = vsub.s32 0, %v1343
    %v1345 = vrot.slane %v1340, %v1344
    %v1346 = vlaneseq
    %v1347 = vshrl.u32 %v1346, 7
    %v1348 = vsub.s32 1, %v1347
    %v1349 = vrot.slane %v1340, %v1348
    %v1350 = vlaneseq
    %v1351 = vshrl.u32 %v1350, 7
    %v1352 = vsub.s32 2, %v1351
    %v1353 = vrot.slane %v1340, %v1352
    %v1354 = vlaneseq
    %v1355 = vshrl.u32 %v1354, 7
    %v1356 = vsub.s32 3, %v1355
    %v1357 = vrot.slane %v1340, %v1356
    %v1362 = vmul.f32 %v1338, %v1345
    %v1363 = vmul.f32 %v1337, %v1349
    %v1364 = vmul.f32 %v1336, %v1353
    %v1365 = vmul.f32 %v1339, %v1357
    %1366 = vst [vmem:[#allocation2 + $0xc0] sm:$0xff] %v1362
    %1367 = vst [vmem:[#allocation2 + $0xc8] sm:$0xff] %v1363
    %1368 = vst [vmem:[#allocation2 + $0xd0] sm:$0xff] %v1364
    %1369 = vst [vmem:[#allocation2 + $0xd8] sm:$0xff] %v1365
    %1370 = vrot.lane.b32.xlu0 %v1106, 112
    %v1371 = vpop.permute.xlu0 %1370
    %1372 = vrot.lane.b32.xlu0 %v1107, 112
    %v1373 = vpop.permute.xlu0 %1372
    %1374 = vrot.lane.b32.xlu0 %v1108, 112
    %v1375 = vpop.permute.xlu0 %1374
    %1376 = vrot.lane.b32.xlu0 %v1109, 112
    %v1377 = vpop.permute.xlu0 %1376
    %v1378 = vsel %vm305, %v1375, %v1377
    %v1379 = vsel %vm305, %v1373, %v1375
    %v1380 = vsel %vm305, %v1371, %v1373
    %v1381 = vsel %vm305, %v1377, %v1371
    %v1382 = vld [vmem:[%s310] ss:$8 sm:$0xf]
    %v1384 = vlaneseq
    %v1385 = vshrl.u32 %v1384, 7
    %v1386 = vsub.s32 0, %v1385
    %v1387 = vrot.slane %v1382, %v1386
    %v1388 = vlaneseq
    %v1389 = vshrl.u32 %v1388, 7
    %v1390 = vsub.s32 1, %v1389
    %v1391 = vrot.slane %v1382, %v1390
    %v1392 = vlaneseq
    %v1393 = vshrl.u32 %v1392, 7
    %v1394 = vsub.s32 2, %v1393
    %v1395 = vrot.slane %v1382, %v1394
    %v1396 = vlaneseq
    %v1397 = vshrl.u32 %v1396, 7
    %v1398 = vsub.s32 3, %v1397
    %v1399 = vrot.slane %v1382, %v1398
    %v1404 = vmul.f32 %v1380, %v1387
    %v1405 = vmul.f32 %v1379, %v1391
    %v1406 = vmul.f32 %v1378, %v1395
    %v1407 = vmul.f32 %v1381, %v1399
    %1408 = vst [vmem:[#allocation2 + $0xe0] sm:$0xff] %v1404
    %1409 = vst [vmem:[#allocation2 + $0xe8] sm:$0xff] %v1405
    %1410 = vst [vmem:[#allocation2 + $0xf0] sm:$0xff] %v1406
    %1411 = vst [vmem:[#allocation2 + $0xf8] sm:$0xff] %v1407
    %1412 = vrot.lane.b32.xlu0 %v1106, 111
    %v1413 = vpop.permute.xlu0 %1412
    %1414 = vrot.lane.b32.xlu0 %v1107, 111
    %v1415 = vpop.permute.xlu0 %1414
    %1416 = vrot.lane.b32.xlu0 %v1108, 111
    %v1417 = vpop.permute.xlu0 %1416
    %1418 = vrot.lane.b32.xlu0 %v1109, 111
    %v1419 = vpop.permute.xlu0 %1418
    %v1420 = vsel %vm349, %v1417, %v1419
    %v1421 = vsel %vm349, %v1415, %v1417
    %v1422 = vsel %vm349, %v1413, %v1415
    %v1423 = vsel %vm349, %v1419, %v1413
    %v1424 = vld [vmem:[%s354] ss:$8 sm:$0xf]
    %v1426 = vlaneseq
    %v1427 = vshrl.u32 %v1426, 7
    %v1428 = vsub.s32 0, %v1427
    %v1429 = vrot.slane %v1424, %v1428
    %v1430 = vlaneseq
    %v1431 = vshrl.u32 %v1430, 7
    %v1432 = vsub.s32 1, %v1431
    %v1433 = vrot.slane %v1424, %v1432
    %v1434 = vlaneseq
    %v1435 = vshrl.u32 %v1434, 7
    %v1436 = vsub.s32 2, %v1435
    %v1437 = vrot.slane %v1424, %v1436
    %v1438 = vlaneseq
    %v1439 = vshrl.u32 %v1438, 7
    %v1440 = vsub.s32 3, %v1439
    %v1441 = vrot.slane %v1424, %v1440
    %v1446 = vmul.f32 %v1422, %v1429
    %v1447 = vmul.f32 %v1421, %v1433
    %v1448 = vmul.f32 %v1420, %v1437
    %v1449 = vmul.f32 %v1423, %v1441
    %1450 = vst [vmem:[#allocation2 + $0x100] sm:$0xff] %v1446
    %1451 = vst [vmem:[#allocation2 + $0x108] sm:$0xff] %v1447
    %1452 = vst [vmem:[#allocation2 + $0x110] sm:$0xff] %v1448
    %1453 = vst [vmem:[#allocation2 + $0x118] sm:$0xff] %v1449
    %v1454 = vld [vmem:[%s2 + $0x10] sm:$0xff]
    %v1455 = vld [vmem:[%s2 + $0x18] sm:$0xff]
    %v1456 = vld [vmem:[#allocation2] sm:$0xff]
    %v1457 = vld [vmem:[#allocation2 + $0x8] sm:$0xff]
    %v1458 = vld [vmem:[#allocation2 + $0x10] sm:$0xff]
    %v1459 = vld [vmem:[#allocation2 + $0x18] sm:$0xff]
    %v1460 = vld [vmem:[#allocation2 + $0x20] sm:$0xff]
    %v1461 = vld [vmem:[#allocation2 + $0x28] sm:$0xff]
    %v1462 = vld [vmem:[#allocation2 + $0x30] sm:$0xff]
    %v1463 = vld [vmem:[#allocation2 + $0x38] sm:$0xff]
    %v1464 = vld [vmem:[#allocation2 + $0x40] sm:$0xff]
    %v1465 = vld [vmem:[#allocation2 + $0x48] sm:$0xff]
    %v1466 = vld [vmem:[#allocation2 + $0x50] sm:$0xff]
    %v1467 = vld [vmem:[#allocation2 + $0x58] sm:$0xff]
    %v1468 = vld [vmem:[#allocation2 + $0x60] sm:$0xff]
    %v1469 = vld [vmem:[#allocation2 + $0x68] sm:$0xff]
    %v1470 = vld [vmem:[#allocation2 + $0x70] sm:$0xff]
    %v1471 = vld [vmem:[#allocation2 + $0x78] sm:$0xff]
    %v1472 = vld [vmem:[#allocation2 + $0x80] sm:$0xff]
    %v1473 = vld [vmem:[#allocation2 + $0x88] sm:$0xff]
    %v1474 = vld [vmem:[#allocation2 + $0x90] sm:$0xff]
    %v1475 = vld [vmem:[#allocation2 + $0x98] sm:$0xff]
    %v1476 = vld [vmem:[#allocation2 + $0xa0] sm:$0xff]
    %v1477 = vld [vmem:[#allocation2 + $0xa8] sm:$0xff]
    %v1478 = vld [vmem:[#allocation2 + $0xb0] sm:$0xff]
    %v1479 = vld [vmem:[#allocation2 + $0xb8] sm:$0xff]
    %v1480 = vld [vmem:[#allocation2 + $0xc0] sm:$0xff]
    %v1481 = vld [vmem:[#allocation2 + $0xc8] sm:$0xff]
    %v1482 = vld [vmem:[#allocation2 + $0xd0] sm:$0xff]
    %v1483 = vld [vmem:[#allocation2 + $0xd8] sm:$0xff]
    %v1484 = vld [vmem:[#allocation2 + $0xe0] sm:$0xff]
    %v1485 = vld [vmem:[#allocation2 + $0xe8] sm:$0xff]
    %v1486 = vld [vmem:[#allocation2 + $0xf0] sm:$0xff]
    %v1487 = vld [vmem:[#allocation2 + $0xf8] sm:$0xff]
    %v1488 = vld [vmem:[#allocation2 + $0x100] sm:$0xff]
    %v1489 = vld [vmem:[#allocation2 + $0x108] sm:$0xff]
    %v1490 = vld [vmem:[#allocation2 + $0x110] sm:$0xff]
    %v1491 = vld [vmem:[#allocation2 + $0x118] sm:$0xff]
    %v1492 = vld [vmem:[%s5 + $0x10] sm:$0xff]
    %v1493 = vld [vmem:[%s5 + $0x18] sm:$0xff]
    %1495 = vset.pattern.permute.xlu0 0
    %1496 = vperm.xlu0 %1495, %v1492
    %v1497 = vpop.permute.xlu0 %1496
    %1500 = vset.pattern.permute.xlu0 0
    %1501 = vperm.xlu0 %1500, %v1493
    %v1502 = vpop.permute.xlu0 %1501
    %v1505 = vsel %vm428, %v1454, 0
    %v1508 = vsel %vm428, %v1455, 0
    %1510 = vmatprep.subr.mxu0 0.0
    %1511 = vmatpush1.msra.mxu0 0.0
    %1512 = vmatprep.subr.mxu0 0.0
    %1513 = vmatpush1.msra.mxu0 0.0
    %1514 = vmatprep.subr.mxu0 0.0
    %1515 = vmatpush1.msra.mxu0 0.0
    %1516 = vmatprep.subr.mxu0 0.0
    %1517 = vmatpush1.msra.mxu0 0.0
    %1518 = vmatprep.subr.mxu0 0.0
    %1519 = vmatpush1.msra.mxu0 0.0
    %1520 = vmatprep.subr.mxu0 0.0
    %1521 = vmatpush1.msra.mxu0 0.0
    %1522 = vmatprep.subr.mxu0 0.0
    %1523 = vmatpush1.msra.mxu0 0.0
    %1524 = vmatprep.subr.mxu0 %v1489
    %1525 = vmatpush1.msra.mxu0 %v1488
    %1526 = vmatprep.subr.mxu0 %v1485
    %1527 = vmatpush1.msra.mxu0 %v1484
    %1528 = vmatprep.subr.mxu0 %v1481
    %1529 = vmatpush1.msra.mxu0 %v1480
    %1530 = vmatprep.subr.mxu0 %v1477
    %1531 = vmatpush1.msra.mxu0 %v1476
    %1532 = vmatprep.subr.mxu0 %v1473
    %1533 = vmatpush1.msra.mxu0 %v1472
    %1534 = vmatprep.subr.mxu0 %v1469
    %1535 = vmatpush1.msra.mxu0 %v1468
    %1536 = vmatprep.subr.mxu0 %v1465
    %1537 = vmatpush1.msra.mxu0 %v1464
    %1538 = vmatprep.subr.mxu0 %v1461
    %1539 = vmatpush1.msra.mxu0 %v1460
    %1540 = vmatprep.subr.mxu0 %v1457
    %1541 = vmatpush1.msra.mxu0 %v1456
    %1542 = vmatprep.subr.mxu0 0.0
    %1543 = vmatpush2.msra.mxu0 0.0
    %1544 = vmatprep.subr.mxu0 0.0
    %1545 = vmatpush2.msra.mxu0 0.0
    %1546 = vmatprep.subr.mxu0 0.0
    %1547 = vmatpush2.msra.mxu0 0.0
    %1548 = vmatprep.subr.mxu0 0.0
    %1549 = vmatpush2.msra.mxu0 0.0
    %1550 = vmatprep.subr.mxu0 0.0
    %1551 = vmatpush2.msra.mxu0 0.0
    %1552 = vmatprep.subr.mxu0 0.0
    %1553 = vmatpush2.msra.mxu0 0.0
    %1554 = vmatprep.subr.mxu0 0.0
    %1555 = vmatpush2.msra.mxu0 0.0
    %1556 = vmatprep.subr.mxu0 0.0
    %1557 = vmatpush2.msra.mxu0 0.0
    %1558 = vmatprep.subr.mxu0 0.0
    %1559 = vmatpush2.msra.mxu0 0.0
    %1560 = vmatprep.subr.mxu0 0.0
    %1561 = vmatpush2.msra.mxu0 0.0
    %1562 = vmatprep.subr.mxu0 0.0
    %1563 = vmatpush2.msra.mxu0 0.0
    %1564 = vmatprep.subr.mxu0 0.0
    %1565 = vmatpush2.msra.mxu0 0.0
    %1566 = vmatprep.subr.mxu0 0.0
    %1567 = vmatpush2.msra.mxu0 0.0
    %1568 = vmatprep.subr.mxu0 0.0
    %1569 = vmatpush2.msra.mxu0 0.0
    %1570 = vmatprep.subr.mxu0 0.0
    %1571 = vmatpush2.msra.mxu0 0.0
    %1572 = vmatprep.subr.mxu0 0.0
    %1573 = vmatpush2.msra.mxu0 0.0
    %1574 = vmatprep.mubr.f32.mxu0 0.0
    %1575 = vmatmul.mubr.f32.gmra.mxu0 %v1505
    %v1576 = vpop.f32.mrf.mxu0
    %v1577 = vadd.f32 %v1497, %v1576
    %v1578 = vpop.f32.mrf.mxu0
    %v1579 = vadd.f32 %v1497, %v1578
    %1580 = vmatprep.mubr.f32.mxu0 0.0
    %1581 = vmatmul.mubr.f32.gmra.mxu0 %v1508
    %v1582 = vpop.f32.mrf.mxu0
    %v1583 = vadd.f32 %v1502, %v1582
    %v1584 = vpop.f32.mrf.mxu0
    %v1585 = vadd.f32 %v1502, %v1584
    %1586 = vdwg.mxu0
    %1587 = vmatprep.subr.mxu0 0.0
    %1588 = vmatpush1.msra.mxu0 0.0
    %1589 = vmatprep.subr.mxu0 0.0
    %1590 = vmatpush1.msra.mxu0 0.0
    %1591 = vmatprep.subr.mxu0 0.0
    %1592 = vmatpush1.msra.mxu0 0.0
    %1593 = vmatprep.subr.mxu0 0.0
    %1594 = vmatpush1.msra.mxu0 0.0
    %1595 = vmatprep.subr.mxu0 0.0
    %1596 = vmatpush1.msra.mxu0 0.0
    %1597 = vmatprep.subr.mxu0 0.0
    %1598 = vmatpush1.msra.mxu0 0.0
    %1599 = vmatprep.subr.mxu0 0.0
    %1600 = vmatpush1.msra.mxu0 0.0
    %1601 = vmatprep.subr.mxu0 %v1491
    %1602 = vmatpush1.msra.mxu0 %v1490
    %1603 = vmatprep.subr.mxu0 %v1487
    %1604 = vmatpush1.msra.mxu0 %v1486
    %1605 = vmatprep.subr.mxu0 %v1483
    %1606 = vmatpush1.msra.mxu0 %v1482
    %1607 = vmatprep.subr.mxu0 %v1479
    %1608 = vmatpush1.msra.mxu0 %v1478
    %1609 = vmatprep.subr.mxu0 %v1475
    %1610 = vmatpush1.msra.mxu0 %v1474
    %1611 = vmatprep.subr.mxu0 %v1471
    %1612 = vmatpush1.msra.mxu0 %v1470
    %1613 = vmatprep.subr.mxu0 %v1467
    %1614 = vmatpush1.msra.mxu0 %v1466
    %1615 = vmatprep.subr.mxu0 %v1463
    %1616 = vmatpush1.msra.mxu0 %v1462
    %1617 = vmatprep.subr.mxu0 %v1459
    %1618 = vmatpush1.msra.mxu0 %v1458
    %1619 = vmatprep.subr.mxu0 0.0
    %1620 = vmatpush2.msra.mxu0 0.0
    %1621 = vmatprep.subr.mxu0 0.0
    %1622 = vmatpush2.msra.mxu0 0.0
    %1623 = vmatprep.subr.mxu0 0.0
    %1624 = vmatpush2.msra.mxu0 0.0
    %1625 = vmatprep.subr.mxu0 0.0
    %1626 = vmatpush2.msra.mxu0 0.0
    %1627 = vmatprep.subr.mxu0 0.0
    %1628 = vmatpush2.msra.mxu0 0.0
    %1629 = vmatprep.subr.mxu0 0.0
    %1630 = vmatpush2.msra.mxu0 0.0
    %1631 = vmatprep.subr.mxu0 0.0
    %1632 = vmatpush2.msra.mxu0 0.0
    %1633 = vmatprep.subr.mxu0 0.0
    %1634 = vmatpush2.msra.mxu0 0.0
    %1635 = vmatprep.subr.mxu0 0.0
    %1636 = vmatpush2.msra.mxu0 0.0
    %1637 = vmatprep.subr.mxu0 0.0
    %1638 = vmatpush2.msra.mxu0 0.0
    %1639 = vmatprep.subr.mxu0 0.0
    %1640 = vmatpush2.msra.mxu0 0.0
    %1641 = vmatprep.subr.mxu0 0.0
    %1642 = vmatpush2.msra.mxu0 0.0
    %1643 = vmatprep.subr.mxu0 0.0
    %1644 = vmatpush2.msra.mxu0 0.0
    %1645 = vmatprep.subr.mxu0 0.0
    %1646 = vmatpush2.msra.mxu0 0.0
    %1647 = vmatprep.subr.mxu0 0.0
    %1648 = vmatpush2.msra.mxu0 0.0
    %1649 = vmatprep.subr.mxu0 0.0
    %1650 = vmatpush2.msra.mxu0 0.0
    %1651 = vmatprep.mubr.f32.mxu0 0.0
    %1652 = vmatmul.mubr.f32.gmra.mxu0 %v1505
    %v1653 = vpop.f32.mrf.mxu0
    %v1654 = vadd.f32 %v1497, %v1653
    %v1655 = vpop.f32.mrf.mxu0
    %v1656 = vadd.f32 %v1497, %v1655
    %1657 = vmatprep.mubr.f32.mxu0 0.0
    %1658 = vmatmul.mubr.f32.gmra.mxu0 %v1508
    %v1659 = vpop.f32.mrf.mxu0
    %v1660 = vadd.f32 %v1502, %v1659
    %v1661 = vpop.f32.mrf.mxu0
    %v1662 = vadd.f32 %v1502, %v1661
    %1663 = vdwg.mxu0
    %v1664 = vmax.f32 %v1577, 0.0
    %v1665 = vmax.f32 %v1579, 0.0
    %v1666 = vmax.f32 %v1654, 0.0
    %v1667 = vmax.f32 %v1656, 0.0
    %v1668 = vmax.f32 %v1583, 0.0
    %v1669 = vmax.f32 %v1585, 0.0
    %v1670 = vmax.f32 %v1660, 0.0
    %v1671 = vmax.f32 %v1662, 0.0
    %v1672 = vld [vmem:[%s4] sm:$0xff]
    %v1673 = vld [vmem:[%s4 + $0x8] sm:$0xff]
    %v1674 = vld [vmem:[%s5 + $0x20] sm:$0xff]
    %v1675 = vld [vmem:[%s5 + $0x28] sm:$0xff]
    %1677 = vset.pattern.permute.xlu0 0
    %1678 = vperm.xlu0 %1677, %v1674
    %v1679 = vpop.permute.xlu0 %1678
    %1682 = vset.pattern.permute.xlu0 0
    %1683 = vperm.xlu0 %1682, %v1675
    %v1684 = vpop.permute.xlu0 %1683
    %vm1686 = vcmask 130048
    %v1688 = vsel %vm1686, %v1672, 0
    %v1691 = vsel %vm1686, %v1673, 0
    %1693 = vmatprep.subr.mxu0 0.0
    %1694 = vmatpush1.msra.mxu0 0.0
    %1695 = vmatprep.subr.mxu0 0.0
    %1696 = vmatpush1.msra.mxu0 0.0
    %1697 = vmatprep.subr.mxu0 0.0
    %1698 = vmatpush1.msra.mxu0 0.0
    %1699 = vmatprep.subr.mxu0 0.0
    %1700 = vmatpush1.msra.mxu0 0.0
    %1701 = vmatprep.subr.mxu0 0.0
    %1702 = vmatpush1.msra.mxu0 0.0
    %1703 = vmatprep.subr.mxu0 0.0
    %1704 = vmatpush1.msra.mxu0 0.0
    %1705 = vmatprep.subr.mxu0 0.0
    %1706 = vmatpush1.msra.mxu0 0.0
    %1707 = vmatprep.subr.mxu0 0.0
    %1708 = vmatpush1.msra.mxu0 0.0
    %1709 = vmatprep.subr.mxu0 0.0
    %1710 = vmatpush1.msra.mxu0 0.0
    %1711 = vmatprep.subr.mxu0 0.0
    %1712 = vmatpush1.msra.mxu0 0.0
    %1713 = vmatprep.subr.mxu0 0.0
    %1714 = vmatpush1.msra.mxu0 0.0
    %1715 = vmatprep.subr.mxu0 0.0
    %1716 = vmatpush1.msra.mxu0 0.0
    %1717 = vmatprep.subr.mxu0 0.0
    %1718 = vmatpush1.msra.mxu0 0.0
    %1719 = vmatprep.subr.mxu0 0.0
    %1720 = vmatpush1.msra.mxu0 0.0
    %1721 = vmatprep.subr.mxu0 %v1669
    %1722 = vmatpush1.msra.mxu0 %v1668
    %1723 = vmatprep.subr.mxu0 %v1665
    %1724 = vmatpush1.msra.mxu0 %v1664
    %1725 = vmatprep.subr.mxu0 0.0
    %1726 = vmatpush2.msra.mxu0 0.0
    %1727 = vmatprep.subr.mxu0 0.0
    %1728 = vmatpush2.msra.mxu0 0.0
    %1729 = vmatprep.subr.mxu0 0.0
    %1730 = vmatpush2.msra.mxu0 0.0
    %1731 = vmatprep.subr.mxu0 0.0
    %1732 = vmatpush2.msra.mxu0 0.0
    %1733 = vmatprep.subr.mxu0 0.0
    %1734 = vmatpush2.msra.mxu0 0.0
    %1735 = vmatprep.subr.mxu0 0.0
    %1736 = vmatpush2.msra.mxu0 0.0
    %1737 = vmatprep.subr.mxu0 0.0
    %1738 = vmatpush2.msra.mxu0 0.0
    %1739 = vmatprep.subr.mxu0 0.0
    %1740 = vmatpush2.msra.mxu0 0.0
    %1741 = vmatprep.subr.mxu0 0.0
    %1742 = vmatpush2.msra.mxu0 0.0
    %1743 = vmatprep.subr.mxu0 0.0
    %1744 = vmatpush2.msra.mxu0 0.0
    %1745 = vmatprep.subr.mxu0 0.0
    %1746 = vmatpush2.msra.mxu0 0.0
    %1747 = vmatprep.subr.mxu0 0.0
    %1748 = vmatpush2.msra.mxu0 0.0
    %1749 = vmatprep.subr.mxu0 0.0
    %1750 = vmatpush2.msra.mxu0 0.0
    %1751 = vmatprep.subr.mxu0 0.0
    %1752 = vmatpush2.msra.mxu0 0.0
    %1753 = vmatprep.subr.mxu0 0.0
    %1754 = vmatpush2.msra.mxu0 0.0
    %1755 = vmatprep.subr.mxu0 0.0
    %1756 = vmatpush2.msra.mxu0 0.0
    %1757 = vmatprep.mubr.f32.mxu0 0.0
    %1758 = vmatmul.mubr.f32.gmra.mxu0 %v1688
    %v1759 = vpop.f32.mrf.mxu0
    %v1760 = vadd.f32 %v1679, %v1759
    %v1761 = vpop.f32.mrf.mxu0
    %v1762 = vadd.f32 %v1679, %v1761
    %1763 = vmatprep.mubr.f32.mxu0 0.0
    %1764 = vmatmul.mubr.f32.gmra.mxu0 %v1691
    %v1765 = vpop.f32.mrf.mxu0
    %v1766 = vadd.f32 %v1684, %v1765
    %v1767 = vpop.f32.mrf.mxu0
    %v1768 = vadd.f32 %v1684, %v1767
    %1769 = vdwg.mxu0
    %1770 = vmatprep.subr.mxu0 0.0
    %1771 = vmatpush1.msra.mxu0 0.0
    %1772 = vmatprep.subr.mxu0 0.0
    %1773 = vmatpush1.msra.mxu0 0.0
    %1774 = vmatprep.subr.mxu0 0.0
    %1775 = vmatpush1.msra.mxu0 0.0
    %1776 = vmatprep.subr.mxu0 0.0
    %1777 = vmatpush1.msra.mxu0 0.0
    %1778 = vmatprep.subr.mxu0 0.0
    %1779 = vmatpush1.msra.mxu0 0.0
    %1780 = vmatprep.subr.mxu0 0.0
    %1781 = vmatpush1.msra.mxu0 0.0
    %1782 = vmatprep.subr.mxu0 0.0
    %1783 = vmatpush1.msra.mxu0 0.0
    %1784 = vmatprep.subr.mxu0 0.0
    %1785 = vmatpush1.msra.mxu0 0.0
    %1786 = vmatprep.subr.mxu0 0.0
    %1787 = vmatpush1.msra.mxu0 0.0
    %1788 = vmatprep.subr.mxu0 0.0
    %1789 = vmatpush1.msra.mxu0 0.0
    %1790 = vmatprep.subr.mxu0 0.0
    %1791 = vmatpush1.msra.mxu0 0.0
    %1792 = vmatprep.subr.mxu0 0.0
    %1793 = vmatpush1.msra.mxu0 0.0
    %1794 = vmatprep.subr.mxu0 0.0
    %1795 = vmatpush1.msra.mxu0 0.0
    %1796 = vmatprep.subr.mxu0 0.0
    %1797 = vmatpush1.msra.mxu0 0.0
    %1798 = vmatprep.subr.mxu0 %v1671
    %1799 = vmatpush1.msra.mxu0 %v1670
    %1800 = vmatprep.subr.mxu0 %v1667
    %1801 = vmatpush1.msra.mxu0 %v1666
    %1802 = vmatprep.subr.mxu0 0.0
    %1803 = vmatpush2.msra.mxu0 0.0
    %1804 = vmatprep.subr.mxu0 0.0
    %1805 = vmatpush2.msra.mxu0 0.0
    %1806 = vmatprep.subr.mxu0 0.0
    %1807 = vmatpush2.msra.mxu0 0.0
    %1808 = vmatprep.subr.mxu0 0.0
    %1809 = vmatpush2.msra.mxu0 0.0
    %1810 = vmatprep.subr.mxu0 0.0
    %1811 = vmatpush2.msra.mxu0 0.0
    %1812 = vmatprep.subr.mxu0 0.0
    %1813 = vmatpush2.msra.mxu0 0.0
    %1814 = vmatprep.subr.mxu0 0.0
    %1815 = vmatpush2.msra.mxu0 0.0
    %1816 = vmatprep.subr.mxu0 0.0
    %1817 = vmatpush2.msra.mxu0 0.0
    %1818 = vmatprep.subr.mxu0 0.0
    %1819 = vmatpush2.msra.mxu0 0.0
    %1820 = vmatprep.subr.mxu0 0.0
    %1821 = vmatpush2.msra.mxu0 0.0
    %1822 = vmatprep.subr.mxu0 0.0
    %1823 = vmatpush2.msra.mxu0 0.0
    %1824 = vmatprep.subr.mxu0 0.0
    %1825 = vmatpush2.msra.mxu0 0.0
    %1826 = vmatprep.subr.mxu0 0.0
    %1827 = vmatpush2.msra.mxu0 0.0
    %1828 = vmatprep.subr.mxu0 0.0
    %1829 = vmatpush2.msra.mxu0 0.0
    %1830 = vmatprep.subr.mxu0 0.0
    %1831 = vmatpush2.msra.mxu0 0.0
    %1832 = vmatprep.subr.mxu0 0.0
    %1833 = vmatpush2.msra.mxu0 0.0
    %1834 = vmatprep.mubr.f32.mxu0 0.0
    %1835 = vmatmul.mubr.f32.gmra.mxu0 %v1688
    %v1836 = vpop.f32.mrf.mxu0
    %v1837 = vadd.f32 %v1679, %v1836
    %v1838 = vpop.f32.mrf.mxu0
    %v1839 = vadd.f32 %v1679, %v1838
    %1840 = vmatprep.mubr.f32.mxu0 0.0
    %1841 = vmatmul.mubr.f32.gmra.mxu0 %v1691
    %v1842 = vpop.f32.mrf.mxu0
    %v1843 = vadd.f32 %v1684, %v1842
    %v1844 = vpop.f32.mrf.mxu0
    %v1845 = vadd.f32 %v1684, %v1844
    %1846 = vdwg.mxu0
    %v1847 = vmax.f32 %v1760, 0.0
    %v1848 = vmax.f32 %v1762, 0.0
    %v1849 = vmax.f32 %v1837, 0.0
    %v1850 = vmax.f32 %v1839, 0.0
    %v1851 = vmax.f32 %v1766, 0.0
    %v1852 = vmax.f32 %v1768, 0.0
    %v1853 = vmax.f32 %v1843, 0.0
    %v1854 = vmax.f32 %v1845, 0.0
    %v1855 = vld [vmem:[%s4 + $0x10] sm:$0xff]
    %v1856 = vld [vmem:[%s4 + $0x18] sm:$0xff]
    %v1857 = vld [vmem:[%s5 + $0x30] sm:$0xff]
    %v1858 = vld [vmem:[%s5 + $0x38] sm:$0xff]
    %1860 = vset.pattern.permute.xlu0 0
    %1861 = vperm.xlu0 %1860, %v1857
    %v1862 = vpop.permute.xlu0 %1861
    %1865 = vset.pattern.permute.xlu0 0
    %1866 = vperm.xlu0 %1865, %v1858
    %v1867 = vpop.permute.xlu0 %1866
    %v1870 = vsel %vm1686, %v1855, 0
    %v1873 = vsel %vm1686, %v1856, 0
    %1875 = vmatprep.subr.mxu0 0.0
    %1876 = vmatpush1.msra.mxu0 0.0
    %1877 = vmatprep.subr.mxu0 0.0
    %1878 = vmatpush1.msra.mxu0 0.0
    %1879 = vmatprep.subr.mxu0 0.0
    %1880 = vmatpush1.msra.mxu0 0.0
    %1881 = vmatprep.subr.mxu0 0.0
    %1882 = vmatpush1.msra.mxu0 0.0
    %1883 = vmatprep.subr.mxu0 0.0
    %1884 = vmatpush1.msra.mxu0 0.0
    %1885 = vmatprep.subr.mxu0 0.0
    %1886 = vmatpush1.msra.mxu0 0.0
    %1887 = vmatprep.subr.mxu0 0.0
    %1888 = vmatpush1.msra.mxu0 0.0
    %1889 = vmatprep.subr.mxu0 0.0
    %1890 = vmatpush1.msra.mxu0 0.0
    %1891 = vmatprep.subr.mxu0 0.0
    %1892 = vmatpush1.msra.mxu0 0.0
    %1893 = vmatprep.subr.mxu0 0.0
    %1894 = vmatpush1.msra.mxu0 0.0
    %1895 = vmatprep.subr.mxu0 0.0
    %1896 = vmatpush1.msra.mxu0 0.0
    %1897 = vmatprep.subr.mxu0 0.0
    %1898 = vmatpush1.msra.mxu0 0.0
    %1899 = vmatprep.subr.mxu0 0.0
    %1900 = vmatpush1.msra.mxu0 0.0
    %1901 = vmatprep.subr.mxu0 0.0
    %1902 = vmatpush1.msra.mxu0 0.0
    %1903 = vmatprep.subr.mxu0 %v1852
    %1904 = vmatpush1.msra.mxu0 %v1851
    %1905 = vmatprep.subr.mxu0 %v1848
    %1906 = vmatpush1.msra.mxu0 %v1847
    %1907 = vmatprep.subr.mxu0 0.0
    %1908 = vmatpush2.msra.mxu0 0.0
    %1909 = vmatprep.subr.mxu0 0.0
    %1910 = vmatpush2.msra.mxu0 0.0
    %1911 = vmatprep.subr.mxu0 0.0
    %1912 = vmatpush2.msra.mxu0 0.0
    %1913 = vmatprep.subr.mxu0 0.0
    %1914 = vmatpush2.msra.mxu0 0.0
    %1915 = vmatprep.subr.mxu0 0.0
    %1916 = vmatpush2.msra.mxu0 0.0
    %1917 = vmatprep.subr.mxu0 0.0
    %1918 = vmatpush2.msra.mxu0 0.0
    %1919 = vmatprep.subr.mxu0 0.0
    %1920 = vmatpush2.msra.mxu0 0.0
    %1921 = vmatprep.subr.mxu0 0.0
    %1922 = vmatpush2.msra.mxu0 0.0
    %1923 = vmatprep.subr.mxu0 0.0
    %1924 = vmatpush2.msra.mxu0 0.0
    %1925 = vmatprep.subr.mxu0 0.0
    %1926 = vmatpush2.msra.mxu0 0.0
    %1927 = vmatprep.subr.mxu0 0.0
    %1928 = vmatpush2.msra.mxu0 0.0
    %1929 = vmatprep.subr.mxu0 0.0
    %1930 = vmatpush2.msra.mxu0 0.0
    %1931 = vmatprep.subr.mxu0 0.0
    %1932 = vmatpush2.msra.mxu0 0.0
    %1933 = vmatprep.subr.mxu0 0.0
    %1934 = vmatpush2.msra.mxu0 0.0
    %1935 = vmatprep.subr.mxu0 0.0
    %1936 = vmatpush2.msra.mxu0 0.0
    %1937 = vmatprep.subr.mxu0 0.0
    %1938 = vmatpush2.msra.mxu0 0.0
    %1939 = vmatprep.mubr.f32.mxu0 0.0
    %1940 = vmatmul.mubr.f32.gmra.mxu0 %v1870
    %v1941 = vpop.f32.mrf.mxu0
    %v1942 = vadd.f32 %v1862, %v1941
    %v1943 = vpop.f32.mrf.mxu0
    %v1944 = vadd.f32 %v1862, %v1943
    %1945 = vmatprep.mubr.f32.mxu0 0.0
    %1946 = vmatmul.mubr.f32.gmra.mxu0 %v1873
    %v1947 = vpop.f32.mrf.mxu0
    %v1948 = vadd.f32 %v1867, %v1947
    %v1949 = vpop.f32.mrf.mxu0
    %v1950 = vadd.f32 %v1867, %v1949
    %1951 = vdwg.mxu0
    %1952 = vmatprep.subr.mxu0 0.0
    %1953 = vmatpush1.msra.mxu0 0.0
    %1954 = vmatprep.subr.mxu0 0.0
    %1955 = vmatpush1.msra.mxu0 0.0
    %1956 = vmatprep.subr.mxu0 0.0
    %1957 = vmatpush1.msra.mxu0 0.0
    %1958 = vmatprep.subr.mxu0 0.0
    %1959 = vmatpush1.msra.mxu0 0.0
    %1960 = vmatprep.subr.mxu0 0.0
    %1961 = vmatpush1.msra.mxu0 0.0
    %1962 = vmatprep.subr.mxu0 0.0
    %1963 = vmatpush1.msra.mxu0 0.0
    %1964 = vmatprep.subr.mxu0 0.0
    %1965 = vmatpush1.msra.mxu0 0.0
    %1966 = vmatprep.subr.mxu0 0.0
    %1967 = vmatpush1.msra.mxu0 0.0
    %1968 = vmatprep.subr.mxu0 0.0
    %1969 = vmatpush1.msra.mxu0 0.0
    %1970 = vmatprep.subr.mxu0 0.0
    %1971 = vmatpush1.msra.mxu0 0.0
    %1972 = vmatprep.subr.mxu0 0.0
    %1973 = vmatpush1.msra.mxu0 0.0
    %1974 = vmatprep.subr.mxu0 0.0
    %1975 = vmatpush1.msra.mxu0 0.0
    %1976 = vmatprep.subr.mxu0 0.0
    %1977 = vmatpush1.msra.mxu0 0.0
    %1978 = vmatprep.subr.mxu0 0.0
    %1979 = vmatpush1.msra.mxu0 0.0
    %1980 = vmatprep.subr.mxu0 %v1854
    %1981 = vmatpush1.msra.mxu0 %v1853
    %1982 = vmatprep.subr.mxu0 %v1850
    %1983 = vmatpush1.msra.mxu0 %v1849
    %1984 = vmatprep.subr.mxu0 0.0
    %1985 = vmatpush2.msra.mxu0 0.0
    %1986 = vmatprep.subr.mxu0 0.0
    %1987 = vmatpush2.msra.mxu0 0.0
    %1988 = vmatprep.subr.mxu0 0.0
    %1989 = vmatpush2.msra.mxu0 0.0
    %1990 = vmatprep.subr.mxu0 0.0
    %1991 = vmatpush2.msra.mxu0 0.0
    %1992 = vmatprep.subr.mxu0 0.0
    %1993 = vmatpush2.msra.mxu0 0.0
    %1994 = vmatprep.subr.mxu0 0.0
    %1995 = vmatpush2.msra.mxu0 0.0
    %1996 = vmatprep.subr.mxu0 0.0
    %1997 = vmatpush2.msra.mxu0 0.0
    %1998 = vmatprep.subr.mxu0 0.0
    %1999 = vmatpush2.msra.mxu0 0.0
    %2000 = vmatprep.subr.mxu0 0.0
    %2001 = vmatpush2.msra.mxu0 0.0
    %2002 = vmatprep.subr.mxu0 0.0
    %2003 = vmatpush2.msra.mxu0 0.0
    %2004 = vmatprep.subr.mxu0 0.0
    %2005 = vmatpush2.msra.mxu0 0.0
    %2006 = vmatprep.subr.mxu0 0.0
    %2007 = vmatpush2.msra.mxu0 0.0
    %2008 = vmatprep.subr.mxu0 0.0
    %2009 = vmatpush2.msra.mxu0 0.0
    %2010 = vmatprep.subr.mxu0 0.0
    %2011 = vmatpush2.msra.mxu0 0.0
    %2012 = vmatprep.subr.mxu0 0.0
    %2013 = vmatpush2.msra.mxu0 0.0
    %2014 = vmatprep.subr.mxu0 0.0
    %2015 = vmatpush2.msra.mxu0 0.0
    %2016 = vmatprep.mubr.f32.mxu0 0.0
    %2017 = vmatmul.mubr.f32.gmra.mxu0 %v1870
    %v2018 = vpop.f32.mrf.mxu0
    %v2019 = vadd.f32 %v1862, %v2018
    %v2020 = vpop.f32.mrf.mxu0
    %v2021 = vadd.f32 %v1862, %v2020
    %2022 = vmatprep.mubr.f32.mxu0 0.0
    %2023 = vmatmul.mubr.f32.gmra.mxu0 %v1873
    %v2024 = vpop.f32.mrf.mxu0
    %v2025 = vadd.f32 %v1867, %v2024
    %v2026 = vpop.f32.mrf.mxu0
    %v2027 = vadd.f32 %v1867, %v2026
    %2028 = vdwg.mxu0
    %2029 = vst [vmem:[#allocation3] sm:$0xff] %v1942
    %2030 = vst [vmem:[#allocation3 + $0x8] sm:$0xff] %v1944
    %2031 = vst [vmem:[#allocation3 + $0x10] sm:$0xff] %v2019
    %2032 = vst [vmem:[#allocation3 + $0x18] sm:$0xff] %v2021
    %2033 = vst [vmem:[#allocation3 + $0x20] sm:$0xff] %v1948
    %2034 = vst [vmem:[#allocation3 + $0x28] sm:$0xff] %v1950
    %2035 = vst [vmem:[#allocation3 + $0x30] sm:$0xff] %v2025
    %2036 = vst [vmem:[#allocation3 + $0x38] sm:$0xff] %v2027
    %v2037 = vld [vmem:[#allocation3] sm:$0xff]
    %v2038 = vld [vmem:[#allocation3 + $0x8] sm:$0xff]
    %v2039 = vld [vmem:[#allocation3 + $0x10] sm:$0xff]
    %v2040 = vld [vmem:[#allocation3 + $0x18] sm:$0xff]
    %v2041 = vld [vmem:[#allocation3 + $0x20] sm:$0xff]
    %v2042 = vld [vmem:[#allocation3 + $0x28] sm:$0xff]
    %v2043 = vld [vmem:[#allocation3 + $0x30] sm:$0xff]
    %v2044 = vld [vmem:[#allocation3 + $0x38] sm:$0xff]
    %v2045 = vld [vmem:[#allocation3 + $0x40] sm:$0xff]
    %v2046 = vld [vmem:[#allocation3 + $0x48] sm:$0xff]
    %v2047 = vld [vmem:[#allocation3 + $0x50] sm:$0xff]
    %v2048 = vld [vmem:[#allocation3 + $0x58] sm:$0xff]
    %2049 = vrot.lane.b32.xlu0 %v2037, 17
    %v2050 = vpop.permute.xlu0 %2049
    %2051 = vrot.lane.b32.xlu0 %v2041, 17
    %v2052 = vpop.permute.xlu0 %2051
    %2053 = vrot.lane.b32.xlu0 %v2045, 17
    %v2054 = vpop.permute.xlu0 %2053
    %2055 = vrot.lane.b32.xlu0 %v2038, 17
    %v2056 = vpop.permute.xlu0 %2055
    %2057 = vrot.lane.b32.xlu0 %v2042, 17
    %v2058 = vpop.permute.xlu0 %2057
    %2059 = vrot.lane.b32.xlu0 %v2046, 17
    %v2060 = vpop.permute.xlu0 %2059
    %2061 = vrot.lane.b32.xlu0 %v2039, 17
    %v2062 = vpop.permute.xlu0 %2061
    %2063 = vrot.lane.b32.xlu0 %v2043, 17
    %v2064 = vpop.permute.xlu0 %2063
    %2065 = vrot.lane.b32.xlu0 %v2047, 17
    %v2066 = vpop.permute.xlu0 %2065
    %2067 = vrot.lane.b32.xlu0 %v2040, 17
    %v2068 = vpop.permute.xlu0 %2067
    %2069 = vrot.lane.b32.xlu0 %v2044, 17
    %v2070 = vpop.permute.xlu0 %2069
    %2071 = vrot.lane.b32.xlu0 %v2048, 17
    %v2072 = vpop.permute.xlu0 %2071
    %v2073 = vsel %vm38, %v2062, %v2068
    %v2074 = vsel %vm38, %v2064, %v2070
    %v2075 = vsel %vm38, %v2066, %v2072
    %v2076 = vsel %vm38, %v2056, %v2062
    %v2077 = vsel %vm38, %v2058, %v2064
    %v2078 = vsel %vm38, %v2060, %v2066
    %v2079 = vsel %vm38, %v2050, %v2056
    %v2080 = vsel %vm38, %v2052, %v2058
    %v2081 = vsel %vm38, %v2054, %v2060
    %v2082 = vsel %vm38, %v2068, %v2050
    %v2083 = vsel %vm38, %v2070, %v2052
    %v2084 = vsel %vm38, %v2072, %v2054
    %v2085 = vld [vmem:[%s1] ss:$8 sm:$0xf]
    %v2087 = vlaneseq
    %v2088 = vshrl.u32 %v2087, 7
    %v2089 = vsub.s32 0, %v2088
    %v2090 = vrot.slane %v2085, %v2089
    %v2091 = vlaneseq
    %v2092 = vshrl.u32 %v2091, 7
    %v2093 = vsub.s32 1, %v2092
    %v2094 = vrot.slane %v2085, %v2093
    %v2095 = vlaneseq
    %v2096 = vshrl.u32 %v2095, 7
    %v2097 = vsub.s32 2, %v2096
    %v2098 = vrot.slane %v2085, %v2097
    %v2099 = vlaneseq
    %v2100 = vshrl.u32 %v2099, 7
    %v2101 = vsub.s32 3, %v2100
    %v2102 = vrot.slane %v2085, %v2101
    %v2107 = vmul.f32 %v2082, %v2090
    %v2108 = vmul.f32 %v2079, %v2094
    %v2109 = vmul.f32 %v2076, %v2098
    %v2110 = vmul.f32 %v2073, %v2102
    %v2111 = vmul.f32 %v2083, %v2090
    %v2112 = vmul.f32 %v2080, %v2094
    %v2113 = vmul.f32 %v2077, %v2098
    %v2114 = vmul.f32 %v2074, %v2102
    %v2115 = vmul.f32 %v2084, %v2090
    %v2116 = vmul.f32 %v2081, %v2094
    %v2117 = vmul.f32 %v2078, %v2098
    %v2118 = vmul.f32 %v2075, %v2102
    %2119 = vst [vmem:[#allocation2] sm:$0xff] %v2107
    %2120 = vst [vmem:[#allocation2 + $0x8] sm:$0xff] %v2108
    %2121 = vst [vmem:[#allocation2 + $0x10] sm:$0xff] %v2109
    %2122 = vst [vmem:[#allocation2 + $0x18] sm:$0xff] %v2110
    %2123 = vst [vmem:[#allocation2 + $0x20] sm:$0xff] %v2111
    %2124 = vst [vmem:[#allocation2 + $0x28] sm:$0xff] %v2112
    %2125 = vst [vmem:[#allocation2 + $0x30] sm:$0xff] %v2113
    %2126 = vst [vmem:[#allocation2 + $0x38] sm:$0xff] %v2114
    %2127 = vst [vmem:[#allocation2 + $0x40] sm:$0xff] %v2115
    %2128 = vst [vmem:[#allocation2 + $0x48] sm:$0xff] %v2116
    %2129 = vst [vmem:[#allocation2 + $0x50] sm:$0xff] %v2117
    %2130 = vst [vmem:[#allocation2 + $0x58] sm:$0xff] %v2118
    %2131 = vrot.lane.b32.xlu0 %v2037, 16
    %v2132 = vpop.permute.xlu0 %2131
    %2133 = vrot.lane.b32.xlu0 %v2041, 16
    %v2134 = vpop.permute.xlu0 %2133
    %2135 = vrot.lane.b32.xlu0 %v2045, 16
    %v2136 = vpop.permute.xlu0 %2135
    %2137 = vrot.lane.b32.xlu0 %v2038, 16
    %v2138 = vpop.permute.xlu0 %2137
    %2139 = vrot.lane.b32.xlu0 %v2042, 16
    %v2140 = vpop.permute.xlu0 %2139
    %2141 = vrot.lane.b32.xlu0 %v2046, 16
    %v2142 = vpop.permute.xlu0 %2141
    %2143 = vrot.lane.b32.xlu0 %v2039, 16
    %v2144 = vpop.permute.xlu0 %2143
    %2145 = vrot.lane.b32.xlu0 %v2043, 16
    %v2146 = vpop.permute.xlu0 %2145
    %2147 = vrot.lane.b32.xlu0 %v2047, 16
    %v2148 = vpop.permute.xlu0 %2147
    %2149 = vrot.lane.b32.xlu0 %v2040, 16
    %v2150 = vpop.permute.xlu0 %2149
    %2151 = vrot.lane.b32.xlu0 %v2044, 16
    %v2152 = vpop.permute.xlu0 %2151
    %2153 = vrot.lane.b32.xlu0 %v2048, 16
    %v2154 = vpop.permute.xlu0 %2153
    %v2155 = vsel %vm81, %v2144, %v2150
    %v2156 = vsel %vm81, %v2146, %v2152
    %v2157 = vsel %vm81, %v2148, %v2154
    %v2158 = vsel %vm81, %v2138, %v2144
    %v2159 = vsel %vm81, %v2140, %v2146
    %v2160 = vsel %vm81, %v2142, %v2148
    %v2161 = vsel %vm81, %v2132, %v2138
    %v2162 = vsel %vm81, %v2134, %v2140
    %v2163 = vsel %vm81, %v2136, %v2142
    %v2164 = vsel %vm81, %v2150, %v2132
    %v2165 = vsel %vm81, %v2152, %v2134
    %v2166 = vsel %vm81, %v2154, %v2136
    %v2167 = vld [vmem:[%s86] ss:$8 sm:$0xf]
    %v2169 = vlaneseq
    %v2170 = vshrl.u32 %v2169, 7
    %v2171 = vsub.s32 0, %v2170
    %v2172 = vrot.slane %v2167, %v2171
    %v2173 = vlaneseq
    %v2174 = vshrl.u32 %v2173, 7
    %v2175 = vsub.s32 1, %v2174
    %v2176 = vrot.slane %v2167, %v2175
    %v2177 = vlaneseq
    %v2178 = vshrl.u32 %v2177, 7
    %v2179 = vsub.s32 2, %v2178
    %v2180 = vrot.slane %v2167, %v2179
    %v2181 = vlaneseq
    %v2182 = vshrl.u32 %v2181, 7
    %v2183 = vsub.s32 3, %v2182
    %v2184 = vrot.slane %v2167, %v2183
    %v2189 = vmul.f32 %v2164, %v2172
    %v2190 = vmul.f32 %v2161, %v2176
    %v2191 = vmul.f32 %v2158, %v2180
    %v2192 = vmul.f32 %v2155, %v2184
    %v2193 = vmul.f32 %v2165, %v2172
    %v2194 = vmul.f32 %v2162, %v2176
    %v2195 = vmul.f32 %v2159, %v2180
    %v2196 = vmul.f32 %v2156, %v2184
    %v2197 = vmul.f32 %v2166, %v2172
    %v2198 = vmul.f32 %v2163, %v2176
    %v2199 = vmul.f32 %v2160, %v2180
    %v2200 = vmul.f32 %v2157, %v2184
    %2201 = vst [vmem:[#allocation2 + $0x60] sm:$0xff] %v2189
    %2202 = vst [vmem:[#allocation2 + $0x68] sm:$0xff] %v2190
    %2203 = vst [vmem:[#allocation2 + $0x70] sm:$0xff] %v2191
    %2204 = vst [vmem:[#allocation2 + $0x78] sm:$0xff] %v2192
    %2205 = vst [vmem:[#allocation2 + $0x80] sm:$0xff] %v2193
    %2206 = vst [vmem:[#allocation2 + $0x88] sm:$0xff] %v2194
    %2207 = vst [vmem:[#allocation2 + $0x90] sm:$0xff] %v2195
    %2208 = vst [vmem:[#allocation2 + $0x98] sm:$0xff] %v2196
    %2209 = vst [vmem:[#allocation2 + $0xa0] sm:$0xff] %v2197
    %2210 = vst [vmem:[#allocation2 + $0xa8] sm:$0xff] %v2198
    %2211 = vst [vmem:[#allocation2 + $0xb0] sm:$0xff] %v2199
    %2212 = vst [vmem:[#allocation2 + $0xb8] sm:$0xff] %v2200
    %2213 = vrot.lane.b32.xlu0 %v2037, 15
    %v2214 = vpop.permute.xlu0 %2213
    %2215 = vrot.lane.b32.xlu0 %v2041, 15
    %v2216 = vpop.permute.xlu0 %2215
    %2217 = vrot.lane.b32.xlu0 %v2045, 15
    %v2218 = vpop.permute.xlu0 %2217
    %2219 = vrot.lane.b32.xlu0 %v2038, 15
    %v2220 = vpop.permute.xlu0 %2219
    %2221 = vrot.lane.b32.xlu0 %v2042, 15
    %v2222 = vpop.permute.xlu0 %2221
    %2223 = vrot.lane.b32.xlu0 %v2046, 15
    %v2224 = vpop.permute.xlu0 %2223
    %2225 = vrot.lane.b32.xlu0 %v2039, 15
    %v2226 = vpop.permute.xlu0 %2225
    %2227 = vrot.lane.b32.xlu0 %v2043, 15
    %v2228 = vpop.permute.xlu0 %2227
    %2229 = vrot.lane.b32.xlu0 %v2047, 15
    %v2230 = vpop.permute.xlu0 %2229
    %2231 = vrot.lane.b32.xlu0 %v2040, 15
    %v2232 = vpop.permute.xlu0 %2231
    %2233 = vrot.lane.b32.xlu0 %v2044, 15
    %v2234 = vpop.permute.xlu0 %2233
    %2235 = vrot.lane.b32.xlu0 %v2048, 15
    %v2236 = vpop.permute.xlu0 %2235
    %v2237 = vsel %vm125, %v2226, %v2232
    %v2238 = vsel %vm125, %v2228, %v2234
    %v2239 = vsel %vm125, %v2230, %v2236
    %v2240 = vsel %vm125, %v2220, %v2226
    %v2241 = vsel %vm125, %v2222, %v2228
    %v2242 = vsel %vm125, %v2224, %v2230
    %v2243 = vsel %vm125, %v2214, %v2220
    %v2244 = vsel %vm125, %v2216, %v2222
    %v2245 = vsel %vm125, %v2218, %v2224
    %v2246 = vsel %vm125, %v2232, %v2214
    %v2247 = vsel %vm125, %v2234, %v2216
    %v2248 = vsel %vm125, %v2236, %v2218
    %v2249 = vld [vmem:[%s130] ss:$8 sm:$0xf]
    %v2251 = vlaneseq
    %v2252 = vshrl.u32 %v2251, 7
    %v2253 = vsub.s32 0, %v2252
    %v2254 = vrot.slane %v2249, %v2253
    %v2255 = vlaneseq
    %v2256 = vshrl.u32 %v2255, 7
    %v2257 = vsub.s32 1, %v2256
    %v2258 = vrot.slane %v2249, %v2257
    %v2259 = vlaneseq
    %v2260 = vshrl.u32 %v2259, 7
    %v2261 = vsub.s32 2, %v2260
    %v2262 = vrot.slane %v2249, %v2261
    %v2263 = vlaneseq
    %v2264 = vshrl.u32 %v2263, 7
    %v2265 = vsub.s32 3, %v2264
    %v2266 = vrot.slane %v2249, %v2265
    %v2271 = vmul.f32 %v2246, %v2254
    %v2272 = vmul.f32 %v2243, %v2258
    %v2273 = vmul.f32 %v2240, %v2262
    %v2274 = vmul.f32 %v2237, %v2266
    %v2275 = vmul.f32 %v2247, %v2254
    %v2276 = vmul.f32 %v2244, %v2258
    %v2277 = vmul.f32 %v2241, %v2262
    %v2278 = vmul.f32 %v2238, %v2266
    %v2279 = vmul.f32 %v2248, %v2254
    %v2280 = vmul.f32 %v2245, %v2258
    %v2281 = vmul.f32 %v2242, %v2262
    %v2282 = vmul.f32 %v2239, %v2266
    %2283 = vst [vmem:[#allocation2 + $0xc0] sm:$0xff] %v2271
    %2284 = vst [vmem:[#allocation2 + $0xc8] sm:$0xff] %v2272
    %2285 = vst [vmem:[#allocation2 + $0xd0] sm:$0xff] %v2273
    %2286 = vst [vmem:[#allocation2 + $0xd8] sm:$0xff] %v2274
    %2287 = vst [vmem:[#allocation2 + $0xe0] sm:$0xff] %v2275
    %2288 = vst [vmem:[#allocation2 + $0xe8] sm:$0xff] %v2276
    %2289 = vst [vmem:[#allocation2 + $0xf0] sm:$0xff] %v2277
    %2290 = vst [vmem:[#allocation2 + $0xf8] sm:$0xff] %v2278
    %2291 = vst [vmem:[#allocation2 + $0x100] sm:$0xff] %v2279
    %2292 = vst [vmem:[#allocation2 + $0x108] sm:$0xff] %v2280
    %2293 = vst [vmem:[#allocation2 + $0x110] sm:$0xff] %v2281
    %2294 = vst [vmem:[#allocation2 + $0x118] sm:$0xff] %v2282
    %2295 = vrot.lane.b32.xlu0 %v2037, 1
    %v2296 = vpop.permute.xlu0 %2295
    %2297 = vrot.lane.b32.xlu0 %v2041, 1
    %v2298 = vpop.permute.xlu0 %2297
    %2299 = vrot.lane.b32.xlu0 %v2045, 1
    %v2300 = vpop.permute.xlu0 %2299
    %2301 = vrot.lane.b32.xlu0 %v2038, 1
    %v2302 = vpop.permute.xlu0 %2301
    %2303 = vrot.lane.b32.xlu0 %v2042, 1
    %v2304 = vpop.permute.xlu0 %2303
    %2305 = vrot.lane.b32.xlu0 %v2046, 1
    %v2306 = vpop.permute.xlu0 %2305
    %2307 = vrot.lane.b32.xlu0 %v2039, 1
    %v2308 = vpop.permute.xlu0 %2307
    %2309 = vrot.lane.b32.xlu0 %v2043, 1
    %v2310 = vpop.permute.xlu0 %2309
    %2311 = vrot.lane.b32.xlu0 %v2047, 1
    %v2312 = vpop.permute.xlu0 %2311
    %2313 = vrot.lane.b32.xlu0 %v2040, 1
    %v2314 = vpop.permute.xlu0 %2313
    %2315 = vrot.lane.b32.xlu0 %v2044, 1
    %v2316 = vpop.permute.xlu0 %2315
    %2317 = vrot.lane.b32.xlu0 %v2048, 1
    %v2318 = vpop.permute.xlu0 %2317
    %v2319 = vsel %vm169, %v2308, %v2314
    %v2320 = vsel %vm169, %v2310, %v2316
    %v2321 = vsel %vm169, %v2312, %v2318
    %v2322 = vsel %vm169, %v2302, %v2308
    %v2323 = vsel %vm169, %v2304, %v2310
    %v2324 = vsel %vm169, %v2306, %v2312
    %v2325 = vsel %vm169, %v2296, %v2302
    %v2326 = vsel %vm169, %v2298, %v2304
    %v2327 = vsel %vm169, %v2300, %v2306
    %v2328 = vsel %vm169, %v2314, %v2296
    %v2329 = vsel %vm169, %v2316, %v2298
    %v2330 = vsel %vm169, %v2318, %v2300
    %v2331 = vld [vmem:[%s174] ss:$8 sm:$0xf]
    %v2333 = vlaneseq
    %v2334 = vshrl.u32 %v2333, 7
    %v2335 = vsub.s32 0, %v2334
    %v2336 = vrot.slane %v2331, %v2335
    %v2337 = vlaneseq
    %v2338 = vshrl.u32 %v2337, 7
    %v2339 = vsub.s32 1, %v2338
    %v2340 = vrot.slane %v2331, %v2339
    %v2341 = vlaneseq
    %v2342 = vshrl.u32 %v2341, 7
    %v2343 = vsub.s32 2, %v2342
    %v2344 = vrot.slane %v2331, %v2343
    %v2345 = vlaneseq
    %v2346 = vshrl.u32 %v2345, 7
    %v2347 = vsub.s32 3, %v2346
    %v2348 = vrot.slane %v2331, %v2347
    %v2353 = vmul.f32 %v2328, %v2336
    %v2354 = vmul.f32 %v2325, %v2340
    %v2355 = vmul.f32 %v2322, %v2344
    %v2356 = vmul.f32 %v2319, %v2348
    %v2357 = vmul.f32 %v2329, %v2336
    %v2358 = vmul.f32 %v2326, %v2340
    %v2359 = vmul.f32 %v2323, %v2344
    %v2360 = vmul.f32 %v2320, %v2348
    %v2361 = vmul.f32 %v2330, %v2336
    %v2362 = vmul.f32 %v2327, %v2340
    %v2363 = vmul.f32 %v2324, %v2344
    %v2364 = vmul.f32 %v2321, %v2348
    %2365 = vst [vmem:[#allocation2 + $0x120] sm:$0xff] %v2353
    %2366 = vst [vmem:[#allocation2 + $0x128] sm:$0xff] %v2354
    %2367 = vst [vmem:[#allocation2 + $0x130] sm:$0xff] %v2355
    %2368 = vst [vmem:[#allocation2 + $0x138] sm:$0xff] %v2356
    %2369 = vst [vmem:[#allocation2 + $0x140] sm:$0xff] %v2357
    %2370 = vst [vmem:[#allocation2 + $0x148] sm:$0xff] %v2358
    %2371 = vst [vmem:[#allocation2 + $0x150] sm:$0xff] %v2359
    %2372 = vst [vmem:[#allocation2 + $0x158] sm:$0xff] %v2360
    %2373 = vst [vmem:[#allocation2 + $0x160] sm:$0xff] %v2361
    %2374 = vst [vmem:[#allocation2 + $0x168] sm:$0xff] %v2362
    %2375 = vst [vmem:[#allocation2 + $0x170] sm:$0xff] %v2363
    %2376 = vst [vmem:[#allocation2 + $0x178] sm:$0xff] %v2364
    %2377 = vst [vmem:[#allocation2 + $0x180] sm:$0xff] %v2037
    %2378 = vst [vmem:[#allocation2 + $0x188] sm:$0xff] %v2038
    %2379 = vst [vmem:[#allocation2 + $0x190] sm:$0xff] %v2039
    %2380 = vst [vmem:[#allocation2 + $0x198] sm:$0xff] %v2040
    %2381 = vst [vmem:[#allocation2 + $0x1a0] sm:$0xff] %v2041
    %2382 = vst [vmem:[#allocation2 + $0x1a8] sm:$0xff] %v2042
    %2383 = vst [vmem:[#allocation2 + $0x1b0] sm:$0xff] %v2043
    %2384 = vst [vmem:[#allocation2 + $0x1b8] sm:$0xff] %v2044
    %2385 = vst [vmem:[#allocation2 + $0x1c0] sm:$0xff] %v2045
    %2386 = vst [vmem:[#allocation2 + $0x1c8] sm:$0xff] %v2046
    %2387 = vst [vmem:[#allocation2 + $0x1d0] sm:$0xff] %v2047
    %2388 = vst [vmem:[#allocation2 + $0x1d8] sm:$0xff] %v2048
    %2389 = vrot.lane.b32.xlu0 %v2037, 127
    %v2390 = vpop.permute.xlu0 %2389
    %2391 = vrot.lane.b32.xlu0 %v2041, 127
    %v2392 = vpop.permute.xlu0 %2391
    %2393 = vrot.lane.b32.xlu0 %v2045, 127
    %v2394 = vpop.permute.xlu0 %2393
    %2395 = vrot.lane.b32.xlu0 %v2038, 127
    %v2396 = vpop.permute.xlu0 %2395
    %2397 = vrot.lane.b32.xlu0 %v2042, 127
    %v2398 = vpop.permute.xlu0 %2397
    %2399 = vrot.lane.b32.xlu0 %v2046, 127
    %v2400 = vpop.permute.xlu0 %2399
    %2401 = vrot.lane.b32.xlu0 %v2039, 127
    %v2402 = vpop.permute.xlu0 %2401
    %2403 = vrot.lane.b32.xlu0 %v2043, 127
    %v2404 = vpop.permute.xlu0 %2403
    %2405 = vrot.lane.b32.xlu0 %v2047, 127
    %v2406 = vpop.permute.xlu0 %2405
    %2407 = vrot.lane.b32.xlu0 %v2040, 127
    %v2408 = vpop.permute.xlu0 %2407
    %2409 = vrot.lane.b32.xlu0 %v2044, 127
    %v2410 = vpop.permute.xlu0 %2409
    %2411 = vrot.lane.b32.xlu0 %v2048, 127
    %v2412 = vpop.permute.xlu0 %2411
    %v2413 = vsel %vm217, %v2402, %v2408
    %v2414 = vsel %vm217, %v2404, %v2410
    %v2415 = vsel %vm217, %v2406, %v2412
    %v2416 = vsel %vm217, %v2396, %v2402
    %v2417 = vsel %vm217, %v2398, %v2404
    %v2418 = vsel %vm217, %v2400, %v2406
    %v2419 = vsel %vm217, %v2390, %v2396
    %v2420 = vsel %vm217, %v2392, %v2398
    %v2421 = vsel %vm217, %v2394, %v2400
    %v2422 = vsel %vm217, %v2408, %v2390
    %v2423 = vsel %vm217, %v2410, %v2392
    %v2424 = vsel %vm217, %v2412, %v2394
    %v2425 = vld [vmem:[%s222] ss:$8 sm:$0xf]
    %v2427 = vlaneseq
    %v2428 = vshrl.u32 %v2427, 7
    %v2429 = vsub.s32 0, %v2428
    %v2430 = vrot.slane %v2425, %v2429
    %v2431 = vlaneseq
    %v2432 = vshrl.u32 %v2431, 7
    %v2433 = vsub.s32 1, %v2432
    %v2434 = vrot.slane %v2425, %v2433
    %v2435 = vlaneseq
    %v2436 = vshrl.u32 %v2435, 7
    %v2437 = vsub.s32 2, %v2436
    %v2438 = vrot.slane %v2425, %v2437
    %v2439 = vlaneseq
    %v2440 = vshrl.u32 %v2439, 7
    %v2441 = vsub.s32 3, %v2440
    %v2442 = vrot.slane %v2425, %v2441
    %v2447 = vmul.f32 %v2419, %v2430
    %v2448 = vmul.f32 %v2416, %v2434
    %v2449 = vmul.f32 %v2413, %v2438
    %v2450 = vmul.f32 %v2422, %v2442
    %v2451 = vmul.f32 %v2420, %v2430
    %v2452 = vmul.f32 %v2417, %v2434
    %v2453 = vmul.f32 %v2414, %v2438
    %v2454 = vmul.f32 %v2423, %v2442
    %v2455 = vmul.f32 %v2421, %v2430
    %v2456 = vmul.f32 %v2418, %v2434
    %v2457 = vmul.f32 %v2415, %v2438
    %v2458 = vmul.f32 %v2424, %v2442
    %2459 = vst [vmem:[#allocation2 + $0x1e0] sm:$0xff] %v2447
    %2460 = vst [vmem:[#allocation2 + $0x1e8] sm:$0xff] %v2448
    %2461 = vst [vmem:[#allocation2 + $0x1f0] sm:$0xff] %v2449
    %2462 = vst [vmem:[#allocation2 + $0x1f8] sm:$0xff] %v2450
    %2463 = vst [vmem:[#allocation2 + $0x200] sm:$0xff] %v2451
    %2464 = vst [vmem:[#allocation2 + $0x208] sm:$0xff] %v2452
    %2465 = vst [vmem:[#allocation2 + $0x210] sm:$0xff] %v2453
    %2466 = vst [vmem:[#allocation2 + $0x218] sm:$0xff] %v2454
    %2467 = vst [vmem:[#allocation2 + $0x220] sm:$0xff] %v2455
    %2468 = vst [vmem:[#allocation2 + $0x228] sm:$0xff] %v2456
    %2469 = vst [vmem:[#allocation2 + $0x230] sm:$0xff] %v2457
    %2470 = vst [vmem:[#allocation2 + $0x238] sm:$0xff] %v2458
    %2471 = vrot.lane.b32.xlu0 %v2037, 113
    %v2472 = vpop.permute.xlu0 %2471
    %2473 = vrot.lane.b32.xlu0 %v2041, 113
    %v2474 = vpop.permute.xlu0 %2473
    %2475 = vrot.lane.b32.xlu0 %v2045, 113
    %v2476 = vpop.permute.xlu0 %2475
    %2477 = vrot.lane.b32.xlu0 %v2038, 113
    %v2478 = vpop.permute.xlu0 %2477
    %2479 = vrot.lane.b32.xlu0 %v2042, 113
    %v2480 = vpop.permute.xlu0 %2479
    %2481 = vrot.lane.b32.xlu0 %v2046, 113
    %v2482 = vpop.permute.xlu0 %2481
    %2483 = vrot.lane.b32.xlu0 %v2039, 113
    %v2484 = vpop.permute.xlu0 %2483
    %2485 = vrot.lane.b32.xlu0 %v2043, 113
    %v2486 = vpop.permute.xlu0 %2485
    %2487 = vrot.lane.b32.xlu0 %v2047, 113
    %v2488 = vpop.permute.xlu0 %2487
    %2489 = vrot.lane.b32.xlu0 %v2040, 113
    %v2490 = vpop.permute.xlu0 %2489
    %2491 = vrot.lane.b32.xlu0 %v2044, 113
    %v2492 = vpop.permute.xlu0 %2491
    %2493 = vrot.lane.b32.xlu0 %v2048, 113
    %v2494 = vpop.permute.xlu0 %2493
    %v2495 = vsel %vm261, %v2484, %v2490
    %v2496 = vsel %vm261, %v2486, %v2492
    %v2497 = vsel %vm261, %v2488, %v2494
    %v2498 = vsel %vm261, %v2478, %v2484
    %v2499 = vsel %vm261, %v2480, %v2486
    %v2500 = vsel %vm261, %v2482, %v2488
    %v2501 = vsel %vm261, %v2472, %v2478
    %v2502 = vsel %vm261, %v2474, %v2480
    %v2503 = vsel %vm261, %v2476, %v2482
    %v2504 = vsel %vm261, %v2490, %v2472
    %v2505 = vsel %vm261, %v2492, %v2474
    %v2506 = vsel %vm261, %v2494, %v2476
    %v2507 = vld [vmem:[%s266] ss:$8 sm:$0xf]
    %v2509 = vlaneseq
    %v2510 = vshrl.u32 %v2509, 7
    %v2511 = vsub.s32 0, %v2510
    %v2512 = vrot.slane %v2507, %v2511
    %v2513 = vlaneseq
    %v2514 = vshrl.u32 %v2513, 7
    %v2515 = vsub.s32 1, %v2514
    %v2516 = vrot.slane %v2507, %v2515
    %v2517 = vlaneseq
    %v2518 = vshrl.u32 %v2517, 7
    %v2519 = vsub.s32 2, %v2518
    %v2520 = vrot.slane %v2507, %v2519
    %v2521 = vlaneseq
    %v2522 = vshrl.u32 %v2521, 7
    %v2523 = vsub.s32 3, %v2522
    %v2524 = vrot.slane %v2507, %v2523
    %v2529 = vmul.f32 %v2501, %v2512
    %v2530 = vmul.f32 %v2498, %v2516
    %v2531 = vmul.f32 %v2495, %v2520
    %v2532 = vmul.f32 %v2504, %v2524
    %v2533 = vmul.f32 %v2502, %v2512
    %v2534 = vmul.f32 %v2499, %v2516
    %v2535 = vmul.f32 %v2496, %v2520
    %v2536 = vmul.f32 %v2505, %v2524
    %v2537 = vmul.f32 %v2503, %v2512
    %v2538 = vmul.f32 %v2500, %v2516
    %v2539 = vmul.f32 %v2497, %v2520
    %v2540 = vmul.f32 %v2506, %v2524
    %2541 = vst [vmem:[#allocation2 + $0x240] sm:$0xff] %v2529
    %2542 = vst [vmem:[#allocation2 + $0x248] sm:$0xff] %v2530
    %2543 = vst [vmem:[#allocation2 + $0x250] sm:$0xff] %v2531
    %2544 = vst [vmem:[#allocation2 + $0x258] sm:$0xff] %v2532
    %2545 = vst [vmem:[#allocation2 + $0x260] sm:$0xff] %v2533
    %2546 = vst [vmem:[#allocation2 + $0x268] sm:$0xff] %v2534
    %2547 = vst [vmem:[#allocation2 + $0x270] sm:$0xff] %v2535
    %2548 = vst [vmem:[#allocation2 + $0x278] sm:$0xff] %v2536
    %2549 = vst [vmem:[#allocation2 + $0x280] sm:$0xff] %v2537
    %2550 = vst [vmem:[#allocation2 + $0x288] sm:$0xff] %v2538
    %2551 = vst [vmem:[#allocation2 + $0x290] sm:$0xff] %v2539
    %2552 = vst [vmem:[#allocation2 + $0x298] sm:$0xff] %v2540
    %2553 = vrot.lane.b32.xlu0 %v2037, 112
    %v2554 = vpop.permute.xlu0 %2553
    %2555 = vrot.lane.b32.xlu0 %v2041, 112
    %v2556 = vpop.permute.xlu0 %2555
    %2557 = vrot.lane.b32.xlu0 %v2045, 112
    %v2558 = vpop.permute.xlu0 %2557
    %2559 = vrot.lane.b32.xlu0 %v2038, 112
    %v2560 = vpop.permute.xlu0 %2559
    %2561 = vrot.lane.b32.xlu0 %v2042, 112
    %v2562 = vpop.permute.xlu0 %2561
    %2563 = vrot.lane.b32.xlu0 %v2046, 112
    %v2564 = vpop.permute.xlu0 %2563
    %2565 = vrot.lane.b32.xlu0 %v2039, 112
    %v2566 = vpop.permute.xlu0 %2565
    %2567 = vrot.lane.b32.xlu0 %v2043, 112
    %v2568 = vpop.permute.xlu0 %2567
    %2569 = vrot.lane.b32.xlu0 %v2047, 112
    %v2570 = vpop.permute.xlu0 %2569
    %2571 = vrot.lane.b32.xlu0 %v2040, 112
    %v2572 = vpop.permute.xlu0 %2571
    %2573 = vrot.lane.b32.xlu0 %v2044, 112
    %v2574 = vpop.permute.xlu0 %2573
    %2575 = vrot.lane.b32.xlu0 %v2048, 112
    %v2576 = vpop.permute.xlu0 %2575
    %v2577 = vsel %vm305, %v2566, %v2572
    %v2578 = vsel %vm305, %v2568, %v2574
    %v2579 = vsel %vm305, %v2570, %v2576
    %v2580 = vsel %vm305, %v2560, %v2566
    %v2581 = vsel %vm305, %v2562, %v2568
    %v2582 = vsel %vm305, %v2564, %v2570
    %v2583 = vsel %vm305, %v2554, %v2560
    %v2584 = vsel %vm305, %v2556, %v2562
    %v2585 = vsel %vm305, %v2558, %v2564
    %v2586 = vsel %vm305, %v2572, %v2554
    %v2587 = vsel %vm305, %v2574, %v2556
    %v2588 = vsel %vm305, %v2576, %v2558
    %v2589 = vld [vmem:[%s310] ss:$8 sm:$0xf]
    %v2591 = vlaneseq
    %v2592 = vshrl.u32 %v2591, 7
    %v2593 = vsub.s32 0, %v2592
    %v2594 = vrot.slane %v2589, %v2593
    %v2595 = vlaneseq
    %v2596 = vshrl.u32 %v2595, 7
    %v2597 = vsub.s32 1, %v2596
    %v2598 = vrot.slane %v2589, %v2597
    %v2599 = vlaneseq
    %v2600 = vshrl.u32 %v2599, 7
    %v2601 = vsub.s32 2, %v2600
    %v2602 = vrot.slane %v2589, %v2601
    %v2603 = vlaneseq
    %v2604 = vshrl.u32 %v2603, 7
    %v2605 = vsub.s32 3, %v2604
    %v2606 = vrot.slane %v2589, %v2605
    %v2611 = vmul.f32 %v2583, %v2594
    %v2612 = vmul.f32 %v2580, %v2598
    %v2613 = vmul.f32 %v2577, %v2602
    %v2614 = vmul.f32 %v2586, %v2606
    %v2615 = vmul.f32 %v2584, %v2594
    %v2616 = vmul.f32 %v2581, %v2598
    %v2617 = vmul.f32 %v2578, %v2602
    %v2618 = vmul.f32 %v2587, %v2606
    %v2619 = vmul.f32 %v2585, %v2594
    %v2620 = vmul.f32 %v2582, %v2598
    %v2621 = vmul.f32 %v2579, %v2602
    %v2622 = vmul.f32 %v2588, %v2606
    %2623 = vst [vmem:[#allocation2 + $0x2a0] sm:$0xff] %v2611
    %2624 = vst [vmem:[#allocation2 + $0x2a8] sm:$0xff] %v2612
    %2625 = vst [vmem:[#allocation2 + $0x2b0] sm:$0xff] %v2613
    %2626 = vst [vmem:[#allocation2 + $0x2b8] sm:$0xff] %v2614
    %2627 = vst [vmem:[#allocation2 + $0x2c0] sm:$0xff] %v2615
    %2628 = vst [vmem:[#allocation2 + $0x2c8] sm:$0xff] %v2616
    %2629 = vst [vmem:[#allocation2 + $0x2d0] sm:$0xff] %v2617
    %2630 = vst [vmem:[#allocation2 + $0x2d8] sm:$0xff] %v2618
    %2631 = vst [vmem:[#allocation2 + $0x2e0] sm:$0xff] %v2619
    %2632 = vst [vmem:[#allocation2 + $0x2e8] sm:$0xff] %v2620
    %2633 = vst [vmem:[#allocation2 + $0x2f0] sm:$0xff] %v2621
    %2634 = vst [vmem:[#allocation2 + $0x2f8] sm:$0xff] %v2622
    %2635 = vrot.lane.b32.xlu0 %v2037, 111
    %v2636 = vpop.permute.xlu0 %2635
    %2637 = vrot.lane.b32.xlu0 %v2041, 111
    %v2638 = vpop.permute.xlu0 %2637
    %2639 = vrot.lane.b32.xlu0 %v2045, 111
    %v2640 = vpop.permute.xlu0 %2639
    %2641 = vrot.lane.b32.xlu0 %v2038, 111
    %v2642 = vpop.permute.xlu0 %2641
    %2643 = vrot.lane.b32.xlu0 %v2042, 111
    %v2644 = vpop.permute.xlu0 %2643
    %2645 = vrot.lane.b32.xlu0 %v2046, 111
    %v2646 = vpop.permute.xlu0 %2645
    %2647 = vrot.lane.b32.xlu0 %v2039, 111
    %v2648 = vpop.permute.xlu0 %2647
    %2649 = vrot.lane.b32.xlu0 %v2043, 111
    %v2650 = vpop.permute.xlu0 %2649
    %2651 = vrot.lane.b32.xlu0 %v2047, 111
    %v2652 = vpop.permute.xlu0 %2651
    %2653 = vrot.lane.b32.xlu0 %v2040, 111
    %v2654 = vpop.permute.xlu0 %2653
    %2655 = vrot.lane.b32.xlu0 %v2044, 111
    %v2656 = vpop.permute.xlu0 %2655
    %2657 = vrot.lane.b32.xlu0 %v2048, 111
    %v2658 = vpop.permute.xlu0 %2657
    %v2659 = vsel %vm349, %v2648, %v2654
    %v2660 = vsel %vm349, %v2650, %v2656
    %v2661 = vsel %vm349, %v2652, %v2658
    %v2662 = vsel %vm349, %v2642, %v2648
    %v2663 = vsel %vm349, %v2644, %v2650
    %v2664 = vsel %vm349, %v2646, %v2652
    %v2665 = vsel %vm349, %v2636, %v2642
    %v2666 = vsel %vm349, %v2638, %v2644
    %v2667 = vsel %vm349, %v2640, %v2646
    %v2668 = vsel %vm349, %v2654, %v2636
    %v2669 = vsel %vm349, %v2656, %v2638
    %v2670 = vsel %vm349, %v2658, %v2640
    %v2671 = vld [vmem:[%s354] ss:$8 sm:$0xf]
    %v2673 = vlaneseq
    %v2674 = vshrl.u32 %v2673, 7
    %v2675 = vsub.s32 0, %v2674
    %v2676 = vrot.slane %v2671, %v2675
    %v2677 = vlaneseq
    %v2678 = vshrl.u32 %v2677, 7
    %v2679 = vsub.s32 1, %v2678
    %v2680 = vrot.slane %v2671, %v2679
    %v2681 = vlaneseq
    %v2682 = vshrl.u32 %v2681, 7
    %v2683 = vsub.s32 2, %v2682
    %v2684 = vrot.slane %v2671, %v2683
    %v2685 = vlaneseq
    %v2686 = vshrl.u32 %v2685, 7
    %v2687 = vsub.s32 3, %v2686
    %v2688 = vrot.slane %v2671, %v2687
    %v2693 = vmul.f32 %v2665, %v2676
    %v2694 = vmul.f32 %v2662, %v2680
    %v2695 = vmul.f32 %v2659, %v2684
    %v2696 = vmul.f32 %v2668, %v2688
    %v2697 = vmul.f32 %v2666, %v2676
    %v2698 = vmul.f32 %v2663, %v2680
    %v2699 = vmul.f32 %v2660, %v2684
    %v2700 = vmul.f32 %v2669, %v2688
    %v2701 = vmul.f32 %v2667, %v2676
    %v2702 = vmul.f32 %v2664, %v2680
    %v2703 = vmul.f32 %v2661, %v2684
    %v2704 = vmul.f32 %v2670, %v2688
    %2705 = vst [vmem:[#allocation2 + $0x300] sm:$0xff] %v2693
    %2706 = vst [vmem:[#allocation2 + $0x308] sm:$0xff] %v2694
    %2707 = vst [vmem:[#allocation2 + $0x310] sm:$0xff] %v2695
    %2708 = vst [vmem:[#allocation2 + $0x318] sm:$0xff] %v2696
    %2709 = vst [vmem:[#allocation2 + $0x320] sm:$0xff] %v2697
    %2710 = vst [vmem:[#allocation2 + $0x328] sm:$0xff] %v2698
    %2711 = vst [vmem:[#allocation2 + $0x330] sm:$0xff] %v2699
    %2712 = vst [vmem:[#allocation2 + $0x338] sm:$0xff] %v2700
    %2713 = vst [vmem:[#allocation2 + $0x340] sm:$0xff] %v2701
    %2714 = vst [vmem:[#allocation2 + $0x348] sm:$0xff] %v2702
    %2715 = vst [vmem:[#allocation2 + $0x350] sm:$0xff] %v2703
    %2716 = vst [vmem:[#allocation2 + $0x358] sm:$0xff] %v2704
    %v2717 = vld [vmem:[%s3] sm:$0xff]
    %v2718 = vld [vmem:[%s3 + $0x8] sm:$0xff]
    %v2719 = vld [vmem:[%s3 + $0x10] sm:$0xff]
    %v2720 = vld [vmem:[%s3 + $0x18] sm:$0xff]
    %v2721 = vld [vmem:[#allocation2] sm:$0xff]
    %v2722 = vld [vmem:[#allocation2 + $0x8] sm:$0xff]
    %v2723 = vld [vmem:[#allocation2 + $0x10] sm:$0xff]
    %v2724 = vld [vmem:[#allocation2 + $0x18] sm:$0xff]
    %v2725 = vld [vmem:[#allocation2 + $0x20] sm:$0xff]
    %v2726 = vld [vmem:[#allocation2 + $0x28] sm:$0xff]
    %v2727 = vld [vmem:[#allocation2 + $0x30] sm:$0xff]
    %v2728 = vld [vmem:[#allocation2 + $0x38] sm:$0xff]
    %v2729 = vld [vmem:[#allocation2 + $0x40] sm:$0xff]
    %v2730 = vld [vmem:[#allocation2 + $0x48] sm:$0xff]
    %v2731 = vld [vmem:[#allocation2 + $0x50] sm:$0xff]
    %v2732 = vld [vmem:[#allocation2 + $0x58] sm:$0xff]
    %v2733 = vld [vmem:[#allocation2 + $0x60] sm:$0xff]
    %v2734 = vld [vmem:[#allocation2 + $0x68] sm:$0xff]
    %v2735 = vld [vmem:[#allocation2 + $0x70] sm:$0xff]
    %v2736 = vld [vmem:[#allocation2 + $0x78] sm:$0xff]
    %v2737 = vld [vmem:[#allocation2 + $0x80] sm:$0xff]
    %v2738 = vld [vmem:[#allocation2 + $0x88] sm:$0xff]
    %v2739 = vld [vmem:[#allocation2 + $0x90] sm:$0xff]
    %v2740 = vld [vmem:[#allocation2 + $0x98] sm:$0xff]
    %v2741 = vld [vmem:[#allocation2 + $0xa0] sm:$0xff]
    %v2742 = vld [vmem:[#allocation2 + $0xa8] sm:$0xff]
    %v2743 = vld [vmem:[#allocation2 + $0xb0] sm:$0xff]
    %v2744 = vld [vmem:[#allocation2 + $0xb8] sm:$0xff]
    %v2745 = vld [vmem:[#allocation2 + $0xc0] sm:$0xff]
    %v2746 = vld [vmem:[#allocation2 + $0xc8] sm:$0xff]
    %v2747 = vld [vmem:[#allocation2 + $0xd0] sm:$0xff]
    %v2748 = vld [vmem:[#allocation2 + $0xd8] sm:$0xff]
    %v2749 = vld [vmem:[#allocation2 + $0xe0] sm:$0xff]
    %v2750 = vld [vmem:[#allocation2 + $0xe8] sm:$0xff]
    %v2751 = vld [vmem:[#allocation2 + $0xf0] sm:$0xff]
    %v2752 = vld [vmem:[#allocation2 + $0xf8] sm:$0xff]
    %v2753 = vld [vmem:[#allocation2 + $0x100] sm:$0xff]
    %v2754 = vld [vmem:[#allocation2 + $0x108] sm:$0xff]
    %v2755 = vld [vmem:[#allocation2 + $0x110] sm:$0xff]
    %v2756 = vld [vmem:[#allocation2 + $0x118] sm:$0xff]
    %v2757 = vld [vmem:[#allocation2 + $0x120] sm:$0xff]
    %v2758 = vld [vmem:[#allocation2 + $0x128] sm:$0xff]
    %v2759 = vld [vmem:[#allocation2 + $0x130] sm:$0xff]
    %v2760 = vld [vmem:[#allocation2 + $0x138] sm:$0xff]
    %v2761 = vld [vmem:[#allocation2 + $0x140] sm:$0xff]
    %v2762 = vld [vmem:[#allocation2 + $0x148] sm:$0xff]
    %v2763 = vld [vmem:[#allocation2 + $0x150] sm:$0xff]
    %v2764 = vld [vmem:[#allocation2 + $0x158] sm:$0xff]
    %v2765 = vld [vmem:[#allocation2 + $0x160] sm:$0xff]
    %v2766 = vld [vmem:[#allocation2 + $0x168] sm:$0xff]
    %v2767 = vld [vmem:[#allocation2 + $0x170] sm:$0xff]
    %v2768 = vld [vmem:[#allocation2 + $0x178] sm:$0xff]
    %v2769 = vld [vmem:[#allocation2 + $0x180] sm:$0xff]
    %v2770 = vld [vmem:[#allocation2 + $0x188] sm:$0xff]
    %v2771 = vld [vmem:[#allocation2 + $0x190] sm:$0xff]
    %v2772 = vld [vmem:[#allocation2 + $0x198] sm:$0xff]
    %v2773 = vld [vmem:[#allocation2 + $0x1a0] sm:$0xff]
    %v2774 = vld [vmem:[#allocation2 + $0x1a8] sm:$0xff]
    %v2775 = vld [vmem:[#allocation2 + $0x1b0] sm:$0xff]
    %v2776 = vld [vmem:[#allocation2 + $0x1b8] sm:$0xff]
    %v2777 = vld [vmem:[#allocation2 + $0x1c0] sm:$0xff]
    %v2778 = vld [vmem:[#allocation2 + $0x1c8] sm:$0xff]
    %v2779 = vld [vmem:[#allocation2 + $0x1d0] sm:$0xff]
    %v2780 = vld [vmem:[#allocation2 + $0x1d8] sm:$0xff]
    %v2781 = vld [vmem:[#allocation2 + $0x1e0] sm:$0xff]
    %v2782 = vld [vmem:[#allocation2 + $0x1e8] sm:$0xff]
    %v2783 = vld [vmem:[#allocation2 + $0x1f0] sm:$0xff]
    %v2784 = vld [vmem:[#allocation2 + $0x1f8] sm:$0xff]
    %v2785 = vld [vmem:[#allocation2 + $0x200] sm:$0xff]
    %v2786 = vld [vmem:[#allocation2 + $0x208] sm:$0xff]
    %v2787 = vld [vmem:[#allocation2 + $0x210] sm:$0xff]
    %v2788 = vld [vmem:[#allocation2 + $0x218] sm:$0xff]
    %v2789 = vld [vmem:[#allocation2 + $0x220] sm:$0xff]
    %v2790 = vld [vmem:[#allocation2 + $0x228] sm:$0xff]
    %v2791 = vld [vmem:[#allocation2 + $0x230] sm:$0xff]
    %v2792 = vld [vmem:[#allocation2 + $0x238] sm:$0xff]
    %v2793 = vld [vmem:[#allocation2 + $0x240] sm:$0xff]
    %v2794 = vld [vmem:[#allocation2 + $0x248] sm:$0xff]
    %v2795 = vld [vmem:[#allocation2 + $0x250] sm:$0xff]
    %v2796 = vld [vmem:[#allocation2 + $0x258] sm:$0xff]
    %v2797 = vld [vmem:[#allocation2 + $0x260] sm:$0xff]
    %v2798 = vld [vmem:[#allocation2 + $0x268] sm:$0xff]
    %v2799 = vld [vmem:[#allocation2 + $0x270] sm:$0xff]
    %v2800 = vld [vmem:[#allocation2 + $0x278] sm:$0xff]
    %v2801 = vld [vmem:[#allocation2 + $0x280] sm:$0xff]
    %v2802 = vld [vmem:[#allocation2 + $0x288] sm:$0xff]
    %v2803 = vld [vmem:[#allocation2 + $0x290] sm:$0xff]
    %v2804 = vld [vmem:[#allocation2 + $0x298] sm:$0xff]
    %v2805 = vld [vmem:[#allocation2 + $0x2a0] sm:$0xff]
    %v2806 = vld [vmem:[#allocation2 + $0x2a8] sm:$0xff]
    %v2807 = vld [vmem:[#allocation2 + $0x2b0] sm:$0xff]
    %v2808 = vld [vmem:[#allocation2 + $0x2b8] sm:$0xff]
    %v2809 = vld [vmem:[#allocation2 + $0x2c0] sm:$0xff]
    %v2810 = vld [vmem:[#allocation2 + $0x2c8] sm:$0xff]
    %v2811 = vld [vmem:[#allocation2 + $0x2d0] sm:$0xff]
    %v2812 = vld [vmem:[#allocation2 + $0x2d8] sm:$0xff]
    %v2813 = vld [vmem:[#allocation2 + $0x2e0] sm:$0xff]
    %v2814 = vld [vmem:[#allocation2 + $0x2e8] sm:$0xff]
    %v2815 = vld [vmem:[#allocation2 + $0x2f0] sm:$0xff]
    %v2816 = vld [vmem:[#allocation2 + $0x2f8] sm:$0xff]
    %v2817 = vld [vmem:[#allocation2 + $0x300] sm:$0xff]
    %v2818 = vld [vmem:[#allocation2 + $0x308] sm:$0xff]
    %v2819 = vld [vmem:[#allocation2 + $0x310] sm:$0xff]
    %v2820 = vld [vmem:[#allocation2 + $0x318] sm:$0xff]
    %v2821 = vld [vmem:[#allocation2 + $0x320] sm:$0xff]
    %v2822 = vld [vmem:[#allocation2 + $0x328] sm:$0xff]
    %v2823 = vld [vmem:[#allocation2 + $0x330] sm:$0xff]
    %v2824 = vld [vmem:[#allocation2 + $0x338] sm:$0xff]
    %v2825 = vld [vmem:[#allocation2 + $0x340] sm:$0xff]
    %v2826 = vld [vmem:[#allocation2 + $0x348] sm:$0xff]
    %v2827 = vld [vmem:[#allocation2 + $0x350] sm:$0xff]
    %v2828 = vld [vmem:[#allocation2 + $0x358] sm:$0xff]
    %v2829 = vld [vmem:[%s5 + $0x40] sm:$0xff]
    %v2830 = vld [vmem:[%s5 + $0x48] sm:$0xff]
    %2832 = vset.pattern.permute.xlu0 0
    %2833 = vperm.xlu0 %2832, %v2829
    %v2834 = vpop.permute.xlu0 %2833
    %2837 = vset.pattern.permute.xlu0 0
    %2838 = vperm.xlu0 %2837, %v2830
    %v2839 = vpop.permute.xlu0 %2838
    %vm2841 = vcmask 719872
    %v2843 = vsel %vm2841, %v2718, 0
    %v2846 = vsel %vm2841, %v2720, 0
    %2848 = vmatprep.subr.mxu0 %v2782
    %2849 = vmatpush1.msra.mxu0 %v2781
    %2850 = vmatprep.subr.mxu0 %v2778
    %2851 = vmatpush1.msra.mxu0 %v2777
    %2852 = vmatprep.subr.mxu0 %v2774
    %2853 = vmatpush1.msra.mxu0 %v2773
    %2854 = vmatprep.subr.mxu0 %v2770
    %2855 = vmatpush1.msra.mxu0 %v2769
    %2856 = vmatprep.subr.mxu0 %v2766
    %2857 = vmatpush1.msra.mxu0 %v2765
    %2858 = vmatprep.subr.mxu0 %v2762
    %2859 = vmatpush1.msra.mxu0 %v2761
    %2860 = vmatprep.subr.mxu0 %v2758
    %2861 = vmatpush1.msra.mxu0 %v2757
    %2862 = vmatprep.subr.mxu0 %v2754
    %2863 = vmatpush1.msra.mxu0 %v2753
    %2864 = vmatprep.subr.mxu0 %v2750
    %2865 = vmatpush1.msra.mxu0 %v2749
    %2866 = vmatprep.subr.mxu0 %v2746
    %2867 = vmatpush1.msra.mxu0 %v2745
    %2868 = vmatprep.subr.mxu0 %v2742
    %2869 = vmatpush1.msra.mxu0 %v2741
    %2870 = vmatprep.subr.mxu0 %v2738
    %2871 = vmatpush1.msra.mxu0 %v2737
    %2872 = vmatprep.subr.mxu0 %v2734
    %2873 = vmatpush1.msra.mxu0 %v2733
    %2874 = vmatprep.subr.mxu0 %v2730
    %2875 = vmatpush1.msra.mxu0 %v2729
    %2876 = vmatprep.subr.mxu0 %v2726
    %2877 = vmatpush1.msra.mxu0 %v2725
    %2878 = vmatprep.subr.mxu0 %v2722
    %2879 = vmatpush1.msra.mxu0 %v2721
    %2880 = vmatprep.subr.mxu0 0.0
    %2881 = vmatpush2.msra.mxu0 0.0
    %2882 = vmatprep.subr.mxu0 0.0
    %2883 = vmatpush2.msra.mxu0 0.0
    %2884 = vmatprep.subr.mxu0 0.0
    %2885 = vmatpush2.msra.mxu0 0.0
    %2886 = vmatprep.subr.mxu0 0.0
    %2887 = vmatpush2.msra.mxu0 0.0
    %2888 = vmatprep.subr.mxu0 0.0
    %2889 = vmatpush2.msra.mxu0 0.0
    %2890 = vmatprep.subr.mxu0 %v2826
    %2891 = vmatpush2.msra.mxu0 %v2825
    %2892 = vmatprep.subr.mxu0 %v2822
    %2893 = vmatpush2.msra.mxu0 %v2821
    %2894 = vmatprep.subr.mxu0 %v2818
    %2895 = vmatpush2.msra.mxu0 %v2817
    %2896 = vmatprep.subr.mxu0 %v2814
    %2897 = vmatpush2.msra.mxu0 %v2813
    %2898 = vmatprep.subr.mxu0 %v2810
    %2899 = vmatpush2.msra.mxu0 %v2809
    %2900 = vmatprep.subr.mxu0 %v2806
    %2901 = vmatpush2.msra.mxu0 %v2805
    %2902 = vmatprep.subr.mxu0 %v2802
    %2903 = vmatpush2.msra.mxu0 %v2801
    %2904 = vmatprep.subr.mxu0 %v2798
    %2905 = vmatpush2.msra.mxu0 %v2797
    %2906 = vmatprep.subr.mxu0 %v2794
    %2907 = vmatpush2.msra.mxu0 %v2793
    %2908 = vmatprep.subr.mxu0 %v2790
    %2909 = vmatpush2.msra.mxu0 %v2789
    %2910 = vmatprep.subr.mxu0 %v2786
    %2911 = vmatpush2.msra.mxu0 %v2785
    %2912 = vmatprep.mubr.f32.mxu0 %v2843
    %2913 = vmatmul.mubr.f32.gmra.mxu0 %v2717
    %v2914 = vpop.f32.mrf.mxu0
    %v2915 = vadd.f32 %v2834, %v2914
    %v2916 = vpop.f32.mrf.mxu0
    %v2917 = vadd.f32 %v2834, %v2916
    %2918 = vmatprep.mubr.f32.mxu0 %v2846
    %2919 = vmatmul.mubr.f32.gmra.mxu0 %v2719
    %v2920 = vpop.f32.mrf.mxu0
    %v2921 = vadd.f32 %v2839, %v2920
    %v2922 = vpop.f32.mrf.mxu0
    %v2923 = vadd.f32 %v2839, %v2922
    %2924 = vdwg.mxu0
    %2925 = vmatprep.subr.mxu0 %v2784
    %2926 = vmatpush1.msra.mxu0 %v2783
    %2927 = vmatprep.subr.mxu0 %v2780
    %2928 = vmatpush1.msra.mxu0 %v2779
    %2929 = vmatprep.subr.mxu0 %v2776
    %2930 = vmatpush1.msra.mxu0 %v2775
    %2931 = vmatprep.subr.mxu0 %v2772
    %2932 = vmatpush1.msra.mxu0 %v2771
    %2933 = vmatprep.subr.mxu0 %v2768
    %2934 = vmatpush1.msra.mxu0 %v2767
    %2935 = vmatprep.subr.mxu0 %v2764
    %2936 = vmatpush1.msra.mxu0 %v2763
    %2937 = vmatprep.subr.mxu0 %v2760
    %2938 = vmatpush1.msra.mxu0 %v2759
    %2939 = vmatprep.subr.mxu0 %v2756
    %2940 = vmatpush1.msra.mxu0 %v2755
    %2941 = vmatprep.subr.mxu0 %v2752
    %2942 = vmatpush1.msra.mxu0 %v2751
    %2943 = vmatprep.subr.mxu0 %v2748
    %2944 = vmatpush1.msra.mxu0 %v2747
    %2945 = vmatprep.subr.mxu0 %v2744
    %2946 = vmatpush1.msra.mxu0 %v2743
    %2947 = vmatprep.subr.mxu0 %v2740
    %2948 = vmatpush1.msra.mxu0 %v2739
    %2949 = vmatprep.subr.mxu0 %v2736
    %2950 = vmatpush1.msra.mxu0 %v2735
    %2951 = vmatprep.subr.mxu0 %v2732
    %2952 = vmatpush1.msra.mxu0 %v2731
    %2953 = vmatprep.subr.mxu0 %v2728
    %2954 = vmatpush1.msra.mxu0 %v2727
    %2955 = vmatprep.subr.mxu0 %v2724
    %2956 = vmatpush1.msra.mxu0 %v2723
    %2957 = vmatprep.subr.mxu0 0.0
    %2958 = vmatpush2.msra.mxu0 0.0
    %2959 = vmatprep.subr.mxu0 0.0
    %2960 = vmatpush2.msra.mxu0 0.0
    %2961 = vmatprep.subr.mxu0 0.0
    %2962 = vmatpush2.msra.mxu0 0.0
    %2963 = vmatprep.subr.mxu0 0.0
    %2964 = vmatpush2.msra.mxu0 0.0
    %2965 = vmatprep.subr.mxu0 0.0
    %2966 = vmatpush2.msra.mxu0 0.0
    %2967 = vmatprep.subr.mxu0 %v2828
    %2968 = vmatpush2.msra.mxu0 %v2827
    %2969 = vmatprep.subr.mxu0 %v2824
    %2970 = vmatpush2.msra.mxu0 %v2823
    %2971 = vmatprep.subr.mxu0 %v2820
    %2972 = vmatpush2.msra.mxu0 %v2819
    %2973 = vmatprep.subr.mxu0 %v2816
    %2974 = vmatpush2.msra.mxu0 %v2815
    %2975 = vmatprep.subr.mxu0 %v2812
    %2976 = vmatpush2.msra.mxu0 %v2811
    %2977 = vmatprep.subr.mxu0 %v2808
    %2978 = vmatpush2.msra.mxu0 %v2807
    %2979 = vmatprep.subr.mxu0 %v2804
    %2980 = vmatpush2.msra.mxu0 %v2803
    %2981 = vmatprep.subr.mxu0 %v2800
    %2982 = vmatpush2.msra.mxu0 %v2799
    %2983 = vmatprep.subr.mxu0 %v2796
    %2984 = vmatpush2.msra.mxu0 %v2795
    %2985 = vmatprep.subr.mxu0 %v2792
    %2986 = vmatpush2.msra.mxu0 %v2791
    %2987 = vmatprep.subr.mxu0 %v2788
    %2988 = vmatpush2.msra.mxu0 %v2787
    %2989 = vmatprep.mubr.f32.mxu0 %v2843
    %2990 = vmatmul.mubr.f32.gmra.mxu0 %v2717
    %v2991 = vpop.f32.mrf.mxu0
    %v2992 = vadd.f32 %v2834, %v2991
    %v2993 = vpop.f32.mrf.mxu0
    %v2994 = vadd.f32 %v2834, %v2993
    %2995 = vmatprep.mubr.f32.mxu0 %v2846
    %2996 = vmatmul.mubr.f32.gmra.mxu0 %v2719
    %v2997 = vpop.f32.mrf.mxu0
    %v2998 = vadd.f32 %v2839, %v2997
    %v2999 = vpop.f32.mrf.mxu0
    %v3000 = vadd.f32 %v2839, %v2999
    %3001 = vdwg.mxu0
    %v3002 = vmax.f32 %v2915, 0.0
    %v3003 = vmax.f32 %v2917, 0.0
    %v3004 = vmax.f32 %v2992, 0.0
    %v3005 = vmax.f32 %v2994, 0.0
    %v3006 = vmax.f32 %v2921, 0.0
    %v3007 = vmax.f32 %v2923, 0.0
    %v3008 = vmax.f32 %v2998, 0.0
    %v3009 = vmax.f32 %v3000, 0.0
    %v3010 = vld [vmem:[%s4 + $0x20] sm:$0xff]
    %v3011 = vld [vmem:[%s4 + $0x28] sm:$0xff]
    %v3012 = vld [vmem:[%s5 + $0x50] sm:$0xff]
    %v3013 = vld [vmem:[%s5 + $0x58] sm:$0xff]
    %3015 = vset.pattern.permute.xlu0 0
    %3016 = vperm.xlu0 %3015, %v3012
    %v3017 = vpop.permute.xlu0 %3016
    %3020 = vset.pattern.permute.xlu0 0
    %3021 = vperm.xlu0 %3020, %v3013
    %v3022 = vpop.permute.xlu0 %3021
    %v3025 = vsel %vm1686, %v3010, 0
    %v3028 = vsel %vm1686, %v3011, 0
    %3030 = vmatprep.subr.mxu0 0.0
    %3031 = vmatpush1.msra.mxu0 0.0
    %3032 = vmatprep.subr.mxu0 0.0
    %3033 = vmatpush1.msra.mxu0 0.0
    %3034 = vmatprep.subr.mxu0 0.0
    %3035 = vmatpush1.msra.mxu0 0.0
    %3036 = vmatprep.subr.mxu0 0.0
    %3037 = vmatpush1.msra.mxu0 0.0
    %3038 = vmatprep.subr.mxu0 0.0
    %3039 = vmatpush1.msra.mxu0 0.0
    %3040 = vmatprep.subr.mxu0 0.0
    %3041 = vmatpush1.msra.mxu0 0.0
    %3042 = vmatprep.subr.mxu0 0.0
    %3043 = vmatpush1.msra.mxu0 0.0
    %3044 = vmatprep.subr.mxu0 0.0
    %3045 = vmatpush1.msra.mxu0 0.0
    %3046 = vmatprep.subr.mxu0 0.0
    %3047 = vmatpush1.msra.mxu0 0.0
    %3048 = vmatprep.subr.mxu0 0.0
    %3049 = vmatpush1.msra.mxu0 0.0
    %3050 = vmatprep.subr.mxu0 0.0
    %3051 = vmatpush1.msra.mxu0 0.0
    %3052 = vmatprep.subr.mxu0 0.0
    %3053 = vmatpush1.msra.mxu0 0.0
    %3054 = vmatprep.subr.mxu0 0.0
    %3055 = vmatpush1.msra.mxu0 0.0
    %3056 = vmatprep.subr.mxu0 0.0
    %3057 = vmatpush1.msra.mxu0 0.0
    %3058 = vmatprep.subr.mxu0 %v3007
    %3059 = vmatpush1.msra.mxu0 %v3006
    %3060 = vmatprep.subr.mxu0 %v3003
    %3061 = vmatpush1.msra.mxu0 %v3002
    %3062 = vmatprep.subr.mxu0 0.0
    %3063 = vmatpush2.msra.mxu0 0.0
    %3064 = vmatprep.subr.mxu0 0.0
    %3065 = vmatpush2.msra.mxu0 0.0
    %3066 = vmatprep.subr.mxu0 0.0
    %3067 = vmatpush2.msra.mxu0 0.0
    %3068 = vmatprep.subr.mxu0 0.0
    %3069 = vmatpush2.msra.mxu0 0.0
    %3070 = vmatprep.subr.mxu0 0.0
    %3071 = vmatpush2.msra.mxu0 0.0
    %3072 = vmatprep.subr.mxu0 0.0
    %3073 = vmatpush2.msra.mxu0 0.0
    %3074 = vmatprep.subr.mxu0 0.0
    %3075 = vmatpush2.msra.mxu0 0.0
    %3076 = vmatprep.subr.mxu0 0.0
    %3077 = vmatpush2.msra.mxu0 0.0
    %3078 = vmatprep.subr.mxu0 0.0
    %3079 = vmatpush2.msra.mxu0 0.0
    %3080 = vmatprep.subr.mxu0 0.0
    %3081 = vmatpush2.msra.mxu0 0.0
    %3082 = vmatprep.subr.mxu0 0.0
    %3083 = vmatpush2.msra.mxu0 0.0
    %3084 = vmatprep.subr.mxu0 0.0
    %3085 = vmatpush2.msra.mxu0 0.0
    %3086 = vmatprep.subr.mxu0 0.0
    %3087 = vmatpush2.msra.mxu0 0.0
    %3088 = vmatprep.subr.mxu0 0.0
    %3089 = vmatpush2.msra.mxu0 0.0
    %3090 = vmatprep.subr.mxu0 0.0
    %3091 = vmatpush2.msra.mxu0 0.0
    %3092 = vmatprep.subr.mxu0 0.0
    %3093 = vmatpush2.msra.mxu0 0.0
    %3094 = vmatprep.mubr.f32.mxu0 0.0
    %3095 = vmatmul.mubr.f32.gmra.mxu0 %v3025
    %v3096 = vpop.f32.mrf.mxu0
    %v3097 = vadd.f32 %v3017, %v3096
    %v3098 = vpop.f32.mrf.mxu0
    %v3099 = vadd.f32 %v3017, %v3098
    %3100 = vmatprep.mubr.f32.mxu0 0.0
    %3101 = vmatmul.mubr.f32.gmra.mxu0 %v3028
    %v3102 = vpop.f32.mrf.mxu0
    %v3103 = vadd.f32 %v3022, %v3102
    %v3104 = vpop.f32.mrf.mxu0
    %v3105 = vadd.f32 %v3022, %v3104
    %3106 = vdwg.mxu0
    %3107 = vmatprep.subr.mxu0 0.0
    %3108 = vmatpush1.msra.mxu0 0.0
    %3109 = vmatprep.subr.mxu0 0.0
    %3110 = vmatpush1.msra.mxu0 0.0
    %3111 = vmatprep.subr.mxu0 0.0
    %3112 = vmatpush1.msra.mxu0 0.0
    %3113 = vmatprep.subr.mxu0 0.0
    %3114 = vmatpush1.msra.mxu0 0.0
    %3115 = vmatprep.subr.mxu0 0.0
    %3116 = vmatpush1.msra.mxu0 0.0
    %3117 = vmatprep.subr.mxu0 0.0
    %3118 = vmatpush1.msra.mxu0 0.0
    %3119 = vmatprep.subr.mxu0 0.0
    %3120 = vmatpush1.msra.mxu0 0.0
    %3121 = vmatprep.subr.mxu0 0.0
    %3122 = vmatpush1.msra.mxu0 0.0
    %3123 = vmatprep.subr.mxu0 0.0
    %3124 = vmatpush1.msra.mxu0 0.0
    %3125 = vmatprep.subr.mxu0 0.0
    %3126 = vmatpush1.msra.mxu0 0.0
    %3127 = vmatprep.subr.mxu0 0.0
    %3128 = vmatpush1.msra.mxu0 0.0
    %3129 = vmatprep.subr.mxu0 0.0
    %3130 = vmatpush1.msra.mxu0 0.0
    %3131 = vmatprep.subr.mxu0 0.0
    %3132 = vmatpush1.msra.mxu0 0.0
    %3133 = vmatprep.subr.mxu0 0.0
    %3134 = vmatpush1.msra.mxu0 0.0
    %3135 = vmatprep.subr.mxu0 %v3009
    %3136 = vmatpush1.msra.mxu0 %v3008
    %3137 = vmatprep.subr.mxu0 %v3005
    %3138 = vmatpush1.msra.mxu0 %v3004
    %3139 = vmatprep.subr.mxu0 0.0
    %3140 = vmatpush2.msra.mxu0 0.0
    %3141 = vmatprep.subr.mxu0 0.0
    %3142 = vmatpush2.msra.mxu0 0.0
    %3143 = vmatprep.subr.mxu0 0.0
    %3144 = vmatpush2.msra.mxu0 0.0
    %3145 = vmatprep.subr.mxu0 0.0
    %3146 = vmatpush2.msra.mxu0 0.0
    %3147 = vmatprep.subr.mxu0 0.0
    %3148 = vmatpush2.msra.mxu0 0.0
    %3149 = vmatprep.subr.mxu0 0.0
    %3150 = vmatpush2.msra.mxu0 0.0
    %3151 = vmatprep.subr.mxu0 0.0
    %3152 = vmatpush2.msra.mxu0 0.0
    %3153 = vmatprep.subr.mxu0 0.0
    %3154 = vmatpush2.msra.mxu0 0.0
    %3155 = vmatprep.subr.mxu0 0.0
    %3156 = vmatpush2.msra.mxu0 0.0
    %3157 = vmatprep.subr.mxu0 0.0
    %3158 = vmatpush2.msra.mxu0 0.0
    %3159 = vmatprep.subr.mxu0 0.0
    %3160 = vmatpush2.msra.mxu0 0.0
    %3161 = vmatprep.subr.mxu0 0.0
    %3162 = vmatpush2.msra.mxu0 0.0
    %3163 = vmatprep.subr.mxu0 0.0
    %3164 = vmatpush2.msra.mxu0 0.0
    %3165 = vmatprep.subr.mxu0 0.0
    %3166 = vmatpush2.msra.mxu0 0.0
    %3167 = vmatprep.subr.mxu0 0.0
    %3168 = vmatpush2.msra.mxu0 0.0
    %3169 = vmatprep.subr.mxu0 0.0
    %3170 = vmatpush2.msra.mxu0 0.0
    %3171 = vmatprep.mubr.f32.mxu0 0.0
    %3172 = vmatmul.mubr.f32.gmra.mxu0 %v3025
    %v3173 = vpop.f32.mrf.mxu0
    %v3174 = vadd.f32 %v3017, %v3173
    %v3175 = vpop.f32.mrf.mxu0
    %v3176 = vadd.f32 %v3017, %v3175
    %3177 = vmatprep.mubr.f32.mxu0 0.0
    %3178 = vmatmul.mubr.f32.gmra.mxu0 %v3028
    %v3179 = vpop.f32.mrf.mxu0
    %v3180 = vadd.f32 %v3022, %v3179
    %v3181 = vpop.f32.mrf.mxu0
    %v3182 = vadd.f32 %v3022, %v3181
    %3183 = vdwg.mxu0
    %v3184 = vmax.f32 %v3097, 0.0
    %v3185 = vmax.f32 %v3099, 0.0
    %v3186 = vmax.f32 %v3174, 0.0
    %v3187 = vmax.f32 %v3176, 0.0
    %v3188 = vmax.f32 %v3103, 0.0
    %v3189 = vmax.f32 %v3105, 0.0
    %v3190 = vmax.f32 %v3180, 0.0
    %v3191 = vmax.f32 %v3182, 0.0
    %v3192 = vld [vmem:[%s4 + $0x30] sm:$0xff]
    %v3193 = vld [vmem:[%s4 + $0x38] sm:$0xff]
    %v3194 = vld [vmem:[%s5 + $0x60] sm:$0xff]
    %v3195 = vld [vmem:[%s5 + $0x68] sm:$0xff]
    %3197 = vset.pattern.permute.xlu0 0
    %3198 = vperm.xlu0 %3197, %v3194
    %v3199 = vpop.permute.xlu0 %3198
    %3202 = vset.pattern.permute.xlu0 0
    %3203 = vperm.xlu0 %3202, %v3195
    %v3204 = vpop.permute.xlu0 %3203
    %v3207 = vsel %vm1686, %v3192, 0
    %v3210 = vsel %vm1686, %v3193, 0
    %3212 = vmatprep.subr.mxu0 0.0
    %3213 = vmatpush1.msra.mxu0 0.0
    %3214 = vmatprep.subr.mxu0 0.0
    %3215 = vmatpush1.msra.mxu0 0.0
    %3216 = vmatprep.subr.mxu0 0.0
    %3217 = vmatpush1.msra.mxu0 0.0
    %3218 = vmatprep.subr.mxu0 0.0
    %3219 = vmatpush1.msra.mxu0 0.0
    %3220 = vmatprep.subr.mxu0 0.0
    %3221 = vmatpush1.msra.mxu0 0.0
    %3222 = vmatprep.subr.mxu0 0.0
    %3223 = vmatpush1.msra.mxu0 0.0
    %3224 = vmatprep.subr.mxu0 0.0
    %3225 = vmatpush1.msra.mxu0 0.0
    %3226 = vmatprep.subr.mxu0 0.0
    %3227 = vmatpush1.msra.mxu0 0.0
    %3228 = vmatprep.subr.mxu0 0.0
    %3229 = vmatpush1.msra.mxu0 0.0
    %3230 = vmatprep.subr.mxu0 0.0
    %3231 = vmatpush1.msra.mxu0 0.0
    %3232 = vmatprep.subr.mxu0 0.0
    %3233 = vmatpush1.msra.mxu0 0.0
    %3234 = vmatprep.subr.mxu0 0.0
    %3235 = vmatpush1.msra.mxu0 0.0
    %3236 = vmatprep.subr.mxu0 0.0
    %3237 = vmatpush1.msra.mxu0 0.0
    %3238 = vmatprep.subr.mxu0 0.0
    %3239 = vmatpush1.msra.mxu0 0.0
    %3240 = vmatprep.subr.mxu0 %v3189
    %3241 = vmatpush1.msra.mxu0 %v3188
    %3242 = vmatprep.subr.mxu0 %v3185
    %3243 = vmatpush1.msra.mxu0 %v3184
    %3244 = vmatprep.subr.mxu0 0.0
    %3245 = vmatpush2.msra.mxu0 0.0
    %3246 = vmatprep.subr.mxu0 0.0
    %3247 = vmatpush2.msra.mxu0 0.0
    %3248 = vmatprep.subr.mxu0 0.0
    %3249 = vmatpush2.msra.mxu0 0.0
    %3250 = vmatprep.subr.mxu0 0.0
    %3251 = vmatpush2.msra.mxu0 0.0
    %3252 = vmatprep.subr.mxu0 0.0
    %3253 = vmatpush2.msra.mxu0 0.0
    %3254 = vmatprep.subr.mxu0 0.0
    %3255 = vmatpush2.msra.mxu0 0.0
    %3256 = vmatprep.subr.mxu0 0.0
    %3257 = vmatpush2.msra.mxu0 0.0
    %3258 = vmatprep.subr.mxu0 0.0
    %3259 = vmatpush2.msra.mxu0 0.0
    %3260 = vmatprep.subr.mxu0 0.0
    %3261 = vmatpush2.msra.mxu0 0.0
    %3262 = vmatprep.subr.mxu0 0.0
    %3263 = vmatpush2.msra.mxu0 0.0
    %3264 = vmatprep.subr.mxu0 0.0
    %3265 = vmatpush2.msra.mxu0 0.0
    %3266 = vmatprep.subr.mxu0 0.0
    %3267 = vmatpush2.msra.mxu0 0.0
    %3268 = vmatprep.subr.mxu0 0.0
    %3269 = vmatpush2.msra.mxu0 0.0
    %3270 = vmatprep.subr.mxu0 0.0
    %3271 = vmatpush2.msra.mxu0 0.0
    %3272 = vmatprep.subr.mxu0 0.0
    %3273 = vmatpush2.msra.mxu0 0.0
    %3274 = vmatprep.subr.mxu0 0.0
    %3275 = vmatpush2.msra.mxu0 0.0
    %3276 = vmatprep.mubr.f32.mxu0 0.0
    %3277 = vmatmul.mubr.f32.gmra.mxu0 %v3207
    %v3278 = vpop.f32.mrf.mxu0
    %v3279 = vadd.f32 %v3199, %v3278
    %v3280 = vpop.f32.mrf.mxu0
    %v3281 = vadd.f32 %v3199, %v3280
    %3282 = vmatprep.mubr.f32.mxu0 0.0
    %3283 = vmatmul.mubr.f32.gmra.mxu0 %v3210
    %v3284 = vpop.f32.mrf.mxu0
    %v3285 = vadd.f32 %v3204, %v3284
    %v3286 = vpop.f32.mrf.mxu0
    %v3287 = vadd.f32 %v3204, %v3286
    %3288 = vdwg.mxu0
    %3289 = vmatprep.subr.mxu0 0.0
    %3290 = vmatpush1.msra.mxu0 0.0
    %3291 = vmatprep.subr.mxu0 0.0
    %3292 = vmatpush1.msra.mxu0 0.0
    %3293 = vmatprep.subr.mxu0 0.0
    %3294 = vmatpush1.msra.mxu0 0.0
    %3295 = vmatprep.subr.mxu0 0.0
    %3296 = vmatpush1.msra.mxu0 0.0
    %3297 = vmatprep.subr.mxu0 0.0
    %3298 = vmatpush1.msra.mxu0 0.0
    %3299 = vmatprep.subr.mxu0 0.0
    %3300 = vmatpush1.msra.mxu0 0.0
    %3301 = vmatprep.subr.mxu0 0.0
    %3302 = vmatpush1.msra.mxu0 0.0
    %3303 = vmatprep.subr.mxu0 0.0
    %3304 = vmatpush1.msra.mxu0 0.0
    %3305 = vmatprep.subr.mxu0 0.0
    %3306 = vmatpush1.msra.mxu0 0.0
    %3307 = vmatprep.subr.mxu0 0.0
    %3308 = vmatpush1.msra.mxu0 0.0
    %3309 = vmatprep.subr.mxu0 0.0
    %3310 = vmatpush1.msra.mxu0 0.0
    %3311 = vmatprep.subr.mxu0 0.0
    %3312 = vmatpush1.msra.mxu0 0.0
    %3313 = vmatprep.subr.mxu0 0.0
    %3314 = vmatpush1.msra.mxu0 0.0
    %3315 = vmatprep.subr.mxu0 0.0
    %3316 = vmatpush1.msra.mxu0 0.0
    %3317 = vmatprep.subr.mxu0 %v3191
    %3318 = vmatpush1.msra.mxu0 %v3190
    %3319 = vmatprep.subr.mxu0 %v3187
    %3320 = vmatpush1.msra.mxu0 %v3186
    %3321 = vmatprep.subr.mxu0 0.0
    %3322 = vmatpush2.msra.mxu0 0.0
    %3323 = vmatprep.subr.mxu0 0.0
    %3324 = vmatpush2.msra.mxu0 0.0
    %3325 = vmatprep.subr.mxu0 0.0
    %3326 = vmatpush2.msra.mxu0 0.0
    %3327 = vmatprep.subr.mxu0 0.0
    %3328 = vmatpush2.msra.mxu0 0.0
    %3329 = vmatprep.subr.mxu0 0.0
    %3330 = vmatpush2.msra.mxu0 0.0
    %3331 = vmatprep.subr.mxu0 0.0
    %3332 = vmatpush2.msra.mxu0 0.0
    %3333 = vmatprep.subr.mxu0 0.0
    %3334 = vmatpush2.msra.mxu0 0.0
    %3335 = vmatprep.subr.mxu0 0.0
    %3336 = vmatpush2.msra.mxu0 0.0
    %3337 = vmatprep.subr.mxu0 0.0
    %3338 = vmatpush2.msra.mxu0 0.0
    %3339 = vmatprep.subr.mxu0 0.0
    %3340 = vmatpush2.msra.mxu0 0.0
    %3341 = vmatprep.subr.mxu0 0.0
    %3342 = vmatpush2.msra.mxu0 0.0
    %3343 = vmatprep.subr.mxu0 0.0
    %3344 = vmatpush2.msra.mxu0 0.0
    %3345 = vmatprep.subr.mxu0 0.0
    %3346 = vmatpush2.msra.mxu0 0.0
    %3347 = vmatprep.subr.mxu0 0.0
    %3348 = vmatpush2.msra.mxu0 0.0
    %3349 = vmatprep.subr.mxu0 0.0
    %3350 = vmatpush2.msra.mxu0 0.0
    %3351 = vmatprep.subr.mxu0 0.0
    %3352 = vmatpush2.msra.mxu0 0.0
    %3353 = vmatprep.mubr.f32.mxu0 0.0
    %3354 = vmatmul.mubr.f32.gmra.mxu0 %v3207
    %v3355 = vpop.f32.mrf.mxu0
    %v3356 = vadd.f32 %v3199, %v3355
    %v3357 = vpop.f32.mrf.mxu0
    %v3358 = vadd.f32 %v3199, %v3357
    %3359 = vmatprep.mubr.f32.mxu0 0.0
    %3360 = vmatmul.mubr.f32.gmra.mxu0 %v3210
    %v3361 = vpop.f32.mrf.mxu0
    %v3362 = vadd.f32 %v3204, %v3361
    %v3363 = vpop.f32.mrf.mxu0
    %v3364 = vadd.f32 %v3204, %v3363
    %3365 = vdwg.mxu0
    %3366 = vst [vmem:[#allocation3] sm:$0xff] %v3279
    %3367 = vst [vmem:[#allocation3 + $0x8] sm:$0xff] %v3281
    %3368 = vst [vmem:[#allocation3 + $0x10] sm:$0xff] %v3356
    %3369 = vst [vmem:[#allocation3 + $0x18] sm:$0xff] %v3358
    %3370 = vst [vmem:[#allocation3 + $0x20] sm:$0xff] %v3285
    %3371 = vst [vmem:[#allocation3 + $0x28] sm:$0xff] %v3287
    %3372 = vst [vmem:[#allocation3 + $0x30] sm:$0xff] %v3362
    %3373 = vst [vmem:[#allocation3 + $0x38] sm:$0xff] %v3364
    %v3374 = vld [vmem:[#allocation3] sm:$0xff]
    %v3375 = vld [vmem:[#allocation3 + $0x8] sm:$0xff]
    %v3376 = vld [vmem:[#allocation3 + $0x10] sm:$0xff]
    %v3377 = vld [vmem:[#allocation3 + $0x18] sm:$0xff]
    %v3378 = vld [vmem:[#allocation3 + $0x20] sm:$0xff]
    %v3379 = vld [vmem:[#allocation3 + $0x28] sm:$0xff]
    %v3380 = vld [vmem:[#allocation3 + $0x30] sm:$0xff]
    %v3381 = vld [vmem:[#allocation3 + $0x38] sm:$0xff]
    %v3382 = vld [vmem:[#allocation3 + $0x40] sm:$0xff]
    %v3383 = vld [vmem:[#allocation3 + $0x48] sm:$0xff]
    %v3384 = vld [vmem:[#allocation3 + $0x50] sm:$0xff]
    %v3385 = vld [vmem:[#allocation3 + $0x58] sm:$0xff]
    %3386 = vrot.lane.b32.xlu0 %v3374, 17
    %v3387 = vpop.permute.xlu0 %3386
    %3388 = vrot.lane.b32.xlu0 %v3378, 17
    %v3389 = vpop.permute.xlu0 %3388
    %3390 = vrot.lane.b32.xlu0 %v3382, 17
    %v3391 = vpop.permute.xlu0 %3390
    %3392 = vrot.lane.b32.xlu0 %v3375, 17
    %v3393 = vpop.permute.xlu0 %3392
    %3394 = vrot.lane.b32.xlu0 %v3379, 17
    %v3395 = vpop.permute.xlu0 %3394
    %3396 = vrot.lane.b32.xlu0 %v3383, 17
    %v3397 = vpop.permute.xlu0 %3396
    %3398 = vrot.lane.b32.xlu0 %v3376, 17
    %v3399 = vpop.permute.xlu0 %3398
    %3400 = vrot.lane.b32.xlu0 %v3380, 17
    %v3401 = vpop.permute.xlu0 %3400
    %3402 = vrot.lane.b32.xlu0 %v3384, 17
    %v3403 = vpop.permute.xlu0 %3402
    %3404 = vrot.lane.b32.xlu0 %v3377, 17
    %v3405 = vpop.permute.xlu0 %3404
    %3406 = vrot.lane.b32.xlu0 %v3381, 17
    %v3407 = vpop.permute.xlu0 %3406
    %3408 = vrot.lane.b32.xlu0 %v3385, 17
    %v3409 = vpop.permute.xlu0 %3408
    %v3410 = vsel %vm38, %v3399, %v3405
    %v3411 = vsel %vm38, %v3401, %v3407
    %v3412 = vsel %vm38, %v3403, %v3409
    %v3413 = vsel %vm38, %v3393, %v3399
    %v3414 = vsel %vm38, %v3395, %v3401
    %v3415 = vsel %vm38, %v3397, %v3403
    %v3416 = vsel %vm38, %v3387, %v3393
    %v3417 = vsel %vm38, %v3389, %v3395
    %v3418 = vsel %vm38, %v3391, %v3397
    %v3419 = vsel %vm38, %v3405, %v3387
    %v3420 = vsel %vm38, %v3407, %v3389
    %v3421 = vsel %vm38, %v3409, %v3391
    %v3422 = vld [vmem:[%s1] ss:$8 sm:$0xf]
    %v3424 = vlaneseq
    %v3425 = vshrl.u32 %v3424, 7
    %v3426 = vsub.s32 0, %v3425
    %v3427 = vrot.slane %v3422, %v3426
    %v3428 = vlaneseq
    %v3429 = vshrl.u32 %v3428, 7
    %v3430 = vsub.s32 1, %v3429
    %v3431 = vrot.slane %v3422, %v3430
    %v3432 = vlaneseq
    %v3433 = vshrl.u32 %v3432, 7
    %v3434 = vsub.s32 2, %v3433
    %v3435 = vrot.slane %v3422, %v3434
    %v3436 = vlaneseq
    %v3437 = vshrl.u32 %v3436, 7
    %v3438 = vsub.s32 3, %v3437
    %v3439 = vrot.slane %v3422, %v3438
    %v3444 = vmul.f32 %v3419, %v3427
    %v3445 = vmul.f32 %v3416, %v3431
    %v3446 = vmul.f32 %v3413, %v3435
    %v3447 = vmul.f32 %v3410, %v3439
    %v3448 = vmul.f32 %v3420, %v3427
    %v3449 = vmul.f32 %v3417, %v3431
    %v3450 = vmul.f32 %v3414, %v3435
    %v3451 = vmul.f32 %v3411, %v3439
    %v3452 = vmul.f32 %v3421, %v3427
    %v3453 = vmul.f32 %v3418, %v3431
    %v3454 = vmul.f32 %v3415, %v3435
    %v3455 = vmul.f32 %v3412, %v3439
    %3456 = vst [vmem:[#allocation2] sm:$0xff] %v3444
    %3457 = vst [vmem:[#allocation2 + $0x8] sm:$0xff] %v3445
    %3458 = vst [vmem:[#allocation2 + $0x10] sm:$0xff] %v3446
    %3459 = vst [vmem:[#allocation2 + $0x18] sm:$0xff] %v3447
    %3460 = vst [vmem:[#allocation2 + $0x20] sm:$0xff] %v3448
    %3461 = vst [vmem:[#allocation2 + $0x28] sm:$0xff] %v3449
    %3462 = vst [vmem:[#allocation2 + $0x30] sm:$0xff] %v3450
    %3463 = vst [vmem:[#allocation2 + $0x38] sm:$0xff] %v3451
    %3464 = vst [vmem:[#allocation2 + $0x40] sm:$0xff] %v3452
    %3465 = vst [vmem:[#allocation2 + $0x48] sm:$0xff] %v3453
    %3466 = vst [vmem:[#allocation2 + $0x50] sm:$0xff] %v3454
    %3467 = vst [vmem:[#allocation2 + $0x58] sm:$0xff] %v3455
    %3468 = vrot.lane.b32.xlu0 %v3374, 16
    %v3469 = vpop.permute.xlu0 %3468
    %3470 = vrot.lane.b32.xlu0 %v3378, 16
    %v3471 = vpop.permute.xlu0 %3470
    %3472 = vrot.lane.b32.xlu0 %v3382, 16
    %v3473 = vpop.permute.xlu0 %3472
    %3474 = vrot.lane.b32.xlu0 %v3375, 16
    %v3475 = vpop.permute.xlu0 %3474
    %3476 = vrot.lane.b32.xlu0 %v3379, 16
    %v3477 = vpop.permute.xlu0 %3476
    %3478 = vrot.lane.b32.xlu0 %v3383, 16
    %v3479 = vpop.permute.xlu0 %3478
    %3480 = vrot.lane.b32.xlu0 %v3376, 16
    %v3481 = vpop.permute.xlu0 %3480
    %3482 = vrot.lane.b32.xlu0 %v3380, 16
    %v3483 = vpop.permute.xlu0 %3482
    %3484 = vrot.lane.b32.xlu0 %v3384, 16
    %v3485 = vpop.permute.xlu0 %3484
    %3486 = vrot.lane.b32.xlu0 %v3377, 16
    %v3487 = vpop.permute.xlu0 %3486
    %3488 = vrot.lane.b32.xlu0 %v3381, 16
    %v3489 = vpop.permute.xlu0 %3488
    %3490 = vrot.lane.b32.xlu0 %v3385, 16
    %v3491 = vpop.permute.xlu0 %3490
    %v3492 = vsel %vm81, %v3481, %v3487
    %v3493 = vsel %vm81, %v3483, %v3489
    %v3494 = vsel %vm81, %v3485, %v3491
    %v3495 = vsel %vm81, %v3475, %v3481
    %v3496 = vsel %vm81, %v3477, %v3483
    %v3497 = vsel %vm81, %v3479, %v3485
    %v3498 = vsel %vm81, %v3469, %v3475
    %v3499 = vsel %vm81, %v3471, %v3477
    %v3500 = vsel %vm81, %v3473, %v3479
    %v3501 = vsel %vm81, %v3487, %v3469
    %v3502 = vsel %vm81, %v3489, %v3471
    %v3503 = vsel %vm81, %v3491, %v3473
    %v3504 = vld [vmem:[%s86] ss:$8 sm:$0xf]
    %v3506 = vlaneseq
    %v3507 = vshrl.u32 %v3506, 7
    %v3508 = vsub.s32 0, %v3507
    %v3509 = vrot.slane %v3504, %v3508
    %v3510 = vlaneseq
    %v3511 = vshrl.u32 %v3510, 7
    %v3512 = vsub.s32 1, %v3511
    %v3513 = vrot.slane %v3504, %v3512
    %v3514 = vlaneseq
    %v3515 = vshrl.u32 %v3514, 7
    %v3516 = vsub.s32 2, %v3515
    %v3517 = vrot.slane %v3504, %v3516
    %v3518 = vlaneseq
    %v3519 = vshrl.u32 %v3518, 7
    %v3520 = vsub.s32 3, %v3519
    %v3521 = vrot.slane %v3504, %v3520
    %v3526 = vmul.f32 %v3501, %v3509
    %v3527 = vmul.f32 %v3498, %v3513
    %v3528 = vmul.f32 %v3495, %v3517
    %v3529 = vmul.f32 %v3492, %v3521
    %v3530 = vmul.f32 %v3502, %v3509
    %v3531 = vmul.f32 %v3499, %v3513
    %v3532 = vmul.f32 %v3496, %v3517
    %v3533 = vmul.f32 %v3493, %v3521
    %v3534 = vmul.f32 %v3503, %v3509
    %v3535 = vmul.f32 %v3500, %v3513
    %v3536 = vmul.f32 %v3497, %v3517
    %v3537 = vmul.f32 %v3494, %v3521
    %3538 = vst [vmem:[#allocation2 + $0x60] sm:$0xff] %v3526
    %3539 = vst [vmem:[#allocation2 + $0x68] sm:$0xff] %v3527
    %3540 = vst [vmem:[#allocation2 + $0x70] sm:$0xff] %v3528
    %3541 = vst [vmem:[#allocation2 + $0x78] sm:$0xff] %v3529
    %3542 = vst [vmem:[#allocation2 + $0x80] sm:$0xff] %v3530
    %3543 = vst [vmem:[#allocation2 + $0x88] sm:$0xff] %v3531
    %3544 = vst [vmem:[#allocation2 + $0x90] sm:$0xff] %v3532
    %3545 = vst [vmem:[#allocation2 + $0x98] sm:$0xff] %v3533
    %3546 = vst [vmem:[#allocation2 + $0xa0] sm:$0xff] %v3534
    %3547 = vst [vmem:[#allocation2 + $0xa8] sm:$0xff] %v3535
    %3548 = vst [vmem:[#allocation2 + $0xb0] sm:$0xff] %v3536
    %3549 = vst [vmem:[#allocation2 + $0xb8] sm:$0xff] %v3537
    %3550 = vrot.lane.b32.xlu0 %v3374, 15
    %v3551 = vpop.permute.xlu0 %3550
    %3552 = vrot.lane.b32.xlu0 %v3378, 15
    %v3553 = vpop.permute.xlu0 %3552
    %3554 = vrot.lane.b32.xlu0 %v3382, 15
    %v3555 = vpop.permute.xlu0 %3554
    %3556 = vrot.lane.b32.xlu0 %v3375, 15
    %v3557 = vpop.permute.xlu0 %3556
    %3558 = vrot.lane.b32.xlu0 %v3379, 15
    %v3559 = vpop.permute.xlu0 %3558
    %3560 = vrot.lane.b32.xlu0 %v3383, 15
    %v3561 = vpop.permute.xlu0 %3560
    %3562 = vrot.lane.b32.xlu0 %v3376, 15
    %v3563 = vpop.permute.xlu0 %3562
    %3564 = vrot.lane.b32.xlu0 %v3380, 15
    %v3565 = vpop.permute.xlu0 %3564
    %3566 = vrot.lane.b32.xlu0 %v3384, 15
    %v3567 = vpop.permute.xlu0 %3566
    %3568 = vrot.lane.b32.xlu0 %v3377, 15
    %v3569 = vpop.permute.xlu0 %3568
    %3570 = vrot.lane.b32.xlu0 %v3381, 15
    %v3571 = vpop.permute.xlu0 %3570
    %3572 = vrot.lane.b32.xlu0 %v3385, 15
    %v3573 = vpop.permute.xlu0 %3572
    %v3574 = vsel %vm125, %v3563, %v3569
    %v3575 = vsel %vm125, %v3565, %v3571
    %v3576 = vsel %vm125, %v3567, %v3573
    %v3577 = vsel %vm125, %v3557, %v3563
    %v3578 = vsel %vm125, %v3559, %v3565
    %v3579 = vsel %vm125, %v3561, %v3567
    %v3580 = vsel %vm125, %v3551, %v3557
    %v3581 = vsel %vm125, %v3553, %v3559
    %v3582 = vsel %vm125, %v3555, %v3561
    %v3583 = vsel %vm125, %v3569, %v3551
    %v3584 = vsel %vm125, %v3571, %v3553
    %v3585 = vsel %vm125, %v3573, %v3555
    %v3586 = vld [vmem:[%s130] ss:$8 sm:$0xf]
    %v3588 = vlaneseq
    %v3589 = vshrl.u32 %v3588, 7
    %v3590 = vsub.s32 0, %v3589
    %v3591 = vrot.slane %v3586, %v3590
    %v3592 = vlaneseq
    %v3593 = vshrl.u32 %v3592, 7
    %v3594 = vsub.s32 1, %v3593
    %v3595 = vrot.slane %v3586, %v3594
    %v3596 = vlaneseq
    %v3597 = vshrl.u32 %v3596, 7
    %v3598 = vsub.s32 2, %v3597
    %v3599 = vrot.slane %v3586, %v3598
    %v3600 = vlaneseq
    %v3601 = vshrl.u32 %v3600, 7
    %v3602 = vsub.s32 3, %v3601
    %v3603 = vrot.slane %v3586, %v3602
    %v3608 = vmul.f32 %v3583, %v3591
    %v3609 = vmul.f32 %v3580, %v3595
    %v3610 = vmul.f32 %v3577, %v3599
    %v3611 = vmul.f32 %v3574, %v3603
    %v3612 = vmul.f32 %v3584, %v3591
    %v3613 = vmul.f32 %v3581, %v3595
    %v3614 = vmul.f32 %v3578, %v3599
    %v3615 = vmul.f32 %v3575, %v3603
    %v3616 = vmul.f32 %v3585, %v3591
    %v3617 = vmul.f32 %v3582, %v3595
    %v3618 = vmul.f32 %v3579, %v3599
    %v3619 = vmul.f32 %v3576, %v3603
    %3620 = vst [vmem:[#allocation2 + $0xc0] sm:$0xff] %v3608
    %3621 = vst [vmem:[#allocation2 + $0xc8] sm:$0xff] %v3609
    %3622 = vst [vmem:[#allocation2 + $0xd0] sm:$0xff] %v3610
    %3623 = vst [vmem:[#allocation2 + $0xd8] sm:$0xff] %v3611
    %3624 = vst [vmem:[#allocation2 + $0xe0] sm:$0xff] %v3612
    %3625 = vst [vmem:[#allocation2 + $0xe8] sm:$0xff] %v3613
    %3626 = vst [vmem:[#allocation2 + $0xf0] sm:$0xff] %v3614
    %3627 = vst [vmem:[#allocation2 + $0xf8] sm:$0xff] %v3615
    %3628 = vst [vmem:[#allocation2 + $0x100] sm:$0xff] %v3616
    %3629 = vst [vmem:[#allocation2 + $0x108] sm:$0xff] %v3617
    %3630 = vst [vmem:[#allocation2 + $0x110] sm:$0xff] %v3618
    %3631 = vst [vmem:[#allocation2 + $0x118] sm:$0xff] %v3619
    %3632 = vrot.lane.b32.xlu0 %v3374, 1
    %v3633 = vpop.permute.xlu0 %3632
    %3634 = vrot.lane.b32.xlu0 %v3378, 1
    %v3635 = vpop.permute.xlu0 %3634
    %3636 = vrot.lane.b32.xlu0 %v3382, 1
    %v3637 = vpop.permute.xlu0 %3636
    %3638 = vrot.lane.b32.xlu0 %v3375, 1
    %v3639 = vpop.permute.xlu0 %3638
    %3640 = vrot.lane.b32.xlu0 %v3379, 1
    %v3641 = vpop.permute.xlu0 %3640
    %3642 = vrot.lane.b32.xlu0 %v3383, 1
    %v3643 = vpop.permute.xlu0 %3642
    %3644 = vrot.lane.b32.xlu0 %v3376, 1
    %v3645 = vpop.permute.xlu0 %3644
    %3646 = vrot.lane.b32.xlu0 %v3380, 1
    %v3647 = vpop.permute.xlu0 %3646
    %3648 = vrot.lane.b32.xlu0 %v3384, 1
    %v3649 = vpop.permute.xlu0 %3648
    %3650 = vrot.lane.b32.xlu0 %v3377, 1
    %v3651 = vpop.permute.xlu0 %3650
    %3652 = vrot.lane.b32.xlu0 %v3381, 1
    %v3653 = vpop.permute.xlu0 %3652
    %3654 = vrot.lane.b32.xlu0 %v3385, 1
    %v3655 = vpop.permute.xlu0 %3654
    %v3656 = vsel %vm169, %v3645, %v3651
    %v3657 = vsel %vm169, %v3647, %v3653
    %v3658 = vsel %vm169, %v3649, %v3655
    %v3659 = vsel %vm169, %v3639, %v3645
    %v3660 = vsel %vm169, %v3641, %v3647
    %v3661 = vsel %vm169, %v3643, %v3649
    %v3662 = vsel %vm169, %v3633, %v3639
    %v3663 = vsel %vm169, %v3635, %v3641
    %v3664 = vsel %vm169, %v3637, %v3643
    %v3665 = vsel %vm169, %v3651, %v3633
    %v3666 = vsel %vm169, %v3653, %v3635
    %v3667 = vsel %vm169, %v3655, %v3637
    %v3668 = vld [vmem:[%s174] ss:$8 sm:$0xf]
    %v3670 = vlaneseq
    %v3671 = vshrl.u32 %v3670, 7
    %v3672 = vsub.s32 0, %v3671
    %v3673 = vrot.slane %v3668, %v3672
    %v3674 = vlaneseq
    %v3675 = vshrl.u32 %v3674, 7
    %v3676 = vsub.s32 1, %v3675
    %v3677 = vrot.slane %v3668, %v3676
    %v3678 = vlaneseq
    %v3679 = vshrl.u32 %v3678, 7
    %v3680 = vsub.s32 2, %v3679
    %v3681 = vrot.slane %v3668, %v3680
    %v3682 = vlaneseq
    %v3683 = vshrl.u32 %v3682, 7
    %v3684 = vsub.s32 3, %v3683
    %v3685 = vrot.slane %v3668, %v3684
    %v3690 = vmul.f32 %v3665, %v3673
    %v3691 = vmul.f32 %v3662, %v3677
    %v3692 = vmul.f32 %v3659, %v3681
    %v3693 = vmul.f32 %v3656, %v3685
    %v3694 = vmul.f32 %v3666, %v3673
    %v3695 = vmul.f32 %v3663, %v3677
    %v3696 = vmul.f32 %v3660, %v3681
    %v3697 = vmul.f32 %v3657, %v3685
    %v3698 = vmul.f32 %v3667, %v3673
    %v3699 = vmul.f32 %v3664, %v3677
    %v3700 = vmul.f32 %v3661, %v3681
    %v3701 = vmul.f32 %v3658, %v3685
    %3702 = vst [vmem:[#allocation2 + $0x120] sm:$0xff] %v3690
    %3703 = vst [vmem:[#allocation2 + $0x128] sm:$0xff] %v3691
    %3704 = vst [vmem:[#allocation2 + $0x130] sm:$0xff] %v3692
    %3705 = vst [vmem:[#allocation2 + $0x138] sm:$0xff] %v3693
    %3706 = vst [vmem:[#allocation2 + $0x140] sm:$0xff] %v3694
    %3707 = vst [vmem:[#allocation2 + $0x148] sm:$0xff] %v3695
    %3708 = vst [vmem:[#allocation2 + $0x150] sm:$0xff] %v3696
    %3709 = vst [vmem:[#allocation2 + $0x158] sm:$0xff] %v3697
    %3710 = vst [vmem:[#allocation2 + $0x160] sm:$0xff] %v3698
    %3711 = vst [vmem:[#allocation2 + $0x168] sm:$0xff] %v3699
    %3712 = vst [vmem:[#allocation2 + $0x170] sm:$0xff] %v3700
    %3713 = vst [vmem:[#allocation2 + $0x178] sm:$0xff] %v3701
    %3714 = vst [vmem:[#allocation2 + $0x180] sm:$0xff] %v3374
    %3715 = vst [vmem:[#allocation2 + $0x188] sm:$0xff] %v3375
    %3716 = vst [vmem:[#allocation2 + $0x190] sm:$0xff] %v3376
    %3717 = vst [vmem:[#allocation2 + $0x198] sm:$0xff] %v3377
    %3718 = vst [vmem:[#allocation2 + $0x1a0] sm:$0xff] %v3378
    %3719 = vst [vmem:[#allocation2 + $0x1a8] sm:$0xff] %v3379
    %3720 = vst [vmem:[#allocation2 + $0x1b0] sm:$0xff] %v3380
    %3721 = vst [vmem:[#allocation2 + $0x1b8] sm:$0xff] %v3381
    %3722 = vst [vmem:[#allocation2 + $0x1c0] sm:$0xff] %v3382
    %3723 = vst [vmem:[#allocation2 + $0x1c8] sm:$0xff] %v3383
    %3724 = vst [vmem:[#allocation2 + $0x1d0] sm:$0xff] %v3384
    %3725 = vst [vmem:[#allocation2 + $0x1d8] sm:$0xff] %v3385
    %3726 = vrot.lane.b32.xlu0 %v3374, 127
    %v3727 = vpop.permute.xlu0 %3726
    %3728 = vrot.lane.b32.xlu0 %v3378, 127
    %v3729 = vpop.permute.xlu0 %3728
    %3730 = vrot.lane.b32.xlu0 %v3382, 127
    %v3731 = vpop.permute.xlu0 %3730
    %3732 = vrot.lane.b32.xlu0 %v3375, 127
    %v3733 = vpop.permute.xlu0 %3732
    %3734 = vrot.lane.b32.xlu0 %v3379, 127
    %v3735 = vpop.permute.xlu0 %3734
    %3736 = vrot.lane.b32.xlu0 %v3383, 127
    %v3737 = vpop.permute.xlu0 %3736
    %3738 = vrot.lane.b32.xlu0 %v3376, 127
    %v3739 = vpop.permute.xlu0 %3738
    %3740 = vrot.lane.b32.xlu0 %v3380, 127
    %v3741 = vpop.permute.xlu0 %3740
    %3742 = vrot.lane.b32.xlu0 %v3384, 127
    %v3743 = vpop.permute.xlu0 %3742
    %3744 = vrot.lane.b32.xlu0 %v3377, 127
    %v3745 = vpop.permute.xlu0 %3744
    %3746 = vrot.lane.b32.xlu0 %v3381, 127
    %v3747 = vpop.permute.xlu0 %3746
    %3748 = vrot.lane.b32.xlu0 %v3385, 127
    %v3749 = vpop.permute.xlu0 %3748
    %v3750 = vsel %vm217, %v3739, %v3745
    %v3751 = vsel %vm217, %v3741, %v3747
    %v3752 = vsel %vm217, %v3743, %v3749
    %v3753 = vsel %vm217, %v3733, %v3739
    %v3754 = vsel %vm217, %v3735, %v3741
    %v3755 = vsel %vm217, %v3737, %v3743
    %v3756 = vsel %vm217, %v3727, %v3733
    %v3757 = vsel %vm217, %v3729, %v3735
    %v3758 = vsel %vm217, %v3731, %v3737
    %v3759 = vsel %vm217, %v3745, %v3727
    %v3760 = vsel %vm217, %v3747, %v3729
    %v3761 = vsel %vm217, %v3749, %v3731
    %v3762 = vld [vmem:[%s222] ss:$8 sm:$0xf]
    %v3764 = vlaneseq
    %v3765 = vshrl.u32 %v3764, 7
    %v3766 = vsub.s32 0, %v3765
    %v3767 = vrot.slane %v3762, %v3766
    %v3768 = vlaneseq
    %v3769 = vshrl.u32 %v3768, 7
    %v3770 = vsub.s32 1, %v3769
    %v3771 = vrot.slane %v3762, %v3770
    %v3772 = vlaneseq
    %v3773 = vshrl.u32 %v3772, 7
    %v3774 = vsub.s32 2, %v3773
    %v3775 = vrot.slane %v3762, %v3774
    %v3776 = vlaneseq
    %v3777 = vshrl.u32 %v3776, 7
    %v3778 = vsub.s32 3, %v3777
    %v3779 = vrot.slane %v3762, %v3778
    %v3784 = vmul.f32 %v3756, %v3767
    %v3785 = vmul.f32 %v3753, %v3771
    %v3786 = vmul.f32 %v3750, %v3775
    %v3787 = vmul.f32 %v3759, %v3779
    %v3788 = vmul.f32 %v3757, %v3767
    %v3789 = vmul.f32 %v3754, %v3771
    %v3790 = vmul.f32 %v3751, %v3775
    %v3791 = vmul.f32 %v3760, %v3779
    %v3792 = vmul.f32 %v3758, %v3767
    %v3793 = vmul.f32 %v3755, %v3771
    %v3794 = vmul.f32 %v3752, %v3775
    %v3795 = vmul.f32 %v3761, %v3779
    %3796 = vst [vmem:[#allocation2 + $0x1e0] sm:$0xff] %v3784
    %3797 = vst [vmem:[#allocation2 + $0x1e8] sm:$0xff] %v3785
    %3798 = vst [vmem:[#allocation2 + $0x1f0] sm:$0xff] %v3786
    %3799 = vst [vmem:[#allocation2 + $0x1f8] sm:$0xff] %v3787
    %3800 = vst [vmem:[#allocation2 + $0x200] sm:$0xff] %v3788
    %3801 = vst [vmem:[#allocation2 + $0x208] sm:$0xff] %v3789
    %3802 = vst [vmem:[#allocation2 + $0x210] sm:$0xff] %v3790
    %3803 = vst [vmem:[#allocation2 + $0x218] sm:$0xff] %v3791
    %3804 = vst [vmem:[#allocation2 + $0x220] sm:$0xff] %v3792
    %3805 = vst [vmem:[#allocation2 + $0x228] sm:$0xff] %v3793
    %3806 = vst [vmem:[#allocation2 + $0x230] sm:$0xff] %v3794
    %3807 = vst [vmem:[#allocation2 + $0x238] sm:$0xff] %v3795
    %3808 = vrot.lane.b32.xlu0 %v3374, 113
    %v3809 = vpop.permute.xlu0 %3808
    %3810 = vrot.lane.b32.xlu0 %v3378, 113
    %v3811 = vpop.permute.xlu0 %3810
    %3812 = vrot.lane.b32.xlu0 %v3382, 113
    %v3813 = vpop.permute.xlu0 %3812
    %3814 = vrot.lane.b32.xlu0 %v3375, 113
    %v3815 = vpop.permute.xlu0 %3814
    %3816 = vrot.lane.b32.xlu0 %v3379, 113
    %v3817 = vpop.permute.xlu0 %3816
    %3818 = vrot.lane.b32.xlu0 %v3383, 113
    %v3819 = vpop.permute.xlu0 %3818
    %3820 = vrot.lane.b32.xlu0 %v3376, 113
    %v3821 = vpop.permute.xlu0 %3820
    %3822 = vrot.lane.b32.xlu0 %v3380, 113
    %v3823 = vpop.permute.xlu0 %3822
    %3824 = vrot.lane.b32.xlu0 %v3384, 113
    %v3825 = vpop.permute.xlu0 %3824
    %3826 = vrot.lane.b32.xlu0 %v3377, 113
    %v3827 = vpop.permute.xlu0 %3826
    %3828 = vrot.lane.b32.xlu0 %v3381, 113
    %v3829 = vpop.permute.xlu0 %3828
    %3830 = vrot.lane.b32.xlu0 %v3385, 113
    %v3831 = vpop.permute.xlu0 %3830
    %v3832 = vsel %vm261, %v3821, %v3827
    %v3833 = vsel %vm261, %v3823, %v3829
    %v3834 = vsel %vm261, %v3825, %v3831
    %v3835 = vsel %vm261, %v3815, %v3821
    %v3836 = vsel %vm261, %v3817, %v3823
    %v3837 = vsel %vm261, %v3819, %v3825
    %v3838 = vsel %vm261, %v3809, %v3815
    %v3839 = vsel %vm261, %v3811, %v3817
    %v3840 = vsel %vm261, %v3813, %v3819
    %v3841 = vsel %vm261, %v3827, %v3809
    %v3842 = vsel %vm261, %v3829, %v3811
    %v3843 = vsel %vm261, %v3831, %v3813
    %v3844 = vld [vmem:[%s266] ss:$8 sm:$0xf]
    %v3846 = vlaneseq
    %v3847 = vshrl.u32 %v3846, 7
    %v3848 = vsub.s32 0, %v3847
    %v3849 = vrot.slane %v3844, %v3848
    %v3850 = vlaneseq
    %v3851 = vshrl.u32 %v3850, 7
    %v3852 = vsub.s32 1, %v3851
    %v3853 = vrot.slane %v3844, %v3852
    %v3854 = vlaneseq
    %v3855 = vshrl.u32 %v3854, 7
    %v3856 = vsub.s32 2, %v3855
    %v3857 = vrot.slane %v3844, %v3856
    %v3858 = vlaneseq
    %v3859 = vshrl.u32 %v3858, 7
    %v3860 = vsub.s32 3, %v3859
    %v3861 = vrot.slane %v3844, %v3860
    %v3866 = vmul.f32 %v3838, %v3849
    %v3867 = vmul.f32 %v3835, %v3853
    %v3868 = vmul.f32 %v3832, %v3857
    %v3869 = vmul.f32 %v3841, %v3861
    %v3870 = vmul.f32 %v3839, %v3849
    %v3871 = vmul.f32 %v3836, %v3853
    %v3872 = vmul.f32 %v3833, %v3857
    %v3873 = vmul.f32 %v3842, %v3861
    %v3874 = vmul.f32 %v3840, %v3849
    %v3875 = vmul.f32 %v3837, %v3853
    %v3876 = vmul.f32 %v3834, %v3857
    %v3877 = vmul.f32 %v3843, %v3861
    %3878 = vst [vmem:[#allocation2 + $0x240] sm:$0xff] %v3866
    %3879 = vst [vmem:[#allocation2 + $0x248] sm:$0xff] %v3867
    %3880 = vst [vmem:[#allocation2 + $0x250] sm:$0xff] %v3868
    %3881 = vst [vmem:[#allocation2 + $0x258] sm:$0xff] %v3869
    %3882 = vst [vmem:[#allocation2 + $0x260] sm:$0xff] %v3870
    %3883 = vst [vmem:[#allocation2 + $0x268] sm:$0xff] %v3871
    %3884 = vst [vmem:[#allocation2 + $0x270] sm:$0xff] %v3872
    %3885 = vst [vmem:[#allocation2 + $0x278] sm:$0xff] %v3873
    %3886 = vst [vmem:[#allocation2 + $0x280] sm:$0xff] %v3874
    %3887 = vst [vmem:[#allocation2 + $0x288] sm:$0xff] %v3875
    %3888 = vst [vmem:[#allocation2 + $0x290] sm:$0xff] %v3876
    %3889 = vst [vmem:[#allocation2 + $0x298] sm:$0xff] %v3877
    %3890 = vrot.lane.b32.xlu0 %v3374, 112
    %v3891 = vpop.permute.xlu0 %3890
    %3892 = vrot.lane.b32.xlu0 %v3378, 112
    %v3893 = vpop.permute.xlu0 %3892
    %3894 = vrot.lane.b32.xlu0 %v3382, 112
    %v3895 = vpop.permute.xlu0 %3894
    %3896 = vrot.lane.b32.xlu0 %v3375, 112
    %v3897 = vpop.permute.xlu0 %3896
    %3898 = vrot.lane.b32.xlu0 %v3379, 112
    %v3899 = vpop.permute.xlu0 %3898
    %3900 = vrot.lane.b32.xlu0 %v3383, 112
    %v3901 = vpop.permute.xlu0 %3900
    %3902 = vrot.lane.b32.xlu0 %v3376, 112
    %v3903 = vpop.permute.xlu0 %3902
    %3904 = vrot.lane.b32.xlu0 %v3380, 112
    %v3905 = vpop.permute.xlu0 %3904
    %3906 = vrot.lane.b32.xlu0 %v3384, 112
    %v3907 = vpop.permute.xlu0 %3906
    %3908 = vrot.lane.b32.xlu0 %v3377, 112
    %v3909 = vpop.permute.xlu0 %3908
    %3910 = vrot.lane.b32.xlu0 %v3381, 112
    %v3911 = vpop.permute.xlu0 %3910
    %3912 = vrot.lane.b32.xlu0 %v3385, 112
    %v3913 = vpop.permute.xlu0 %3912
    %v3914 = vsel %vm305, %v3903, %v3909
    %v3915 = vsel %vm305, %v3905, %v3911
    %v3916 = vsel %vm305, %v3907, %v3913
    %v3917 = vsel %vm305, %v3897, %v3903
    %v3918 = vsel %vm305, %v3899, %v3905
    %v3919 = vsel %vm305, %v3901, %v3907
    %v3920 = vsel %vm305, %v3891, %v3897
    %v3921 = vsel %vm305, %v3893, %v3899
    %v3922 = vsel %vm305, %v3895, %v3901
    %v3923 = vsel %vm305, %v3909, %v3891
    %v3924 = vsel %vm305, %v3911, %v3893
    %v3925 = vsel %vm305, %v3913, %v3895
    %v3926 = vld [vmem:[%s310] ss:$8 sm:$0xf]
    %v3928 = vlaneseq
    %v3929 = vshrl.u32 %v3928, 7
    %v3930 = vsub.s32 0, %v3929
    %v3931 = vrot.slane %v3926, %v3930
    %v3932 = vlaneseq
    %v3933 = vshrl.u32 %v3932, 7
    %v3934 = vsub.s32 1, %v3933
    %v3935 = vrot.slane %v3926, %v3934
    %v3936 = vlaneseq
    %v3937 = vshrl.u32 %v3936, 7
    %v3938 = vsub.s32 2, %v3937
    %v3939 = vrot.slane %v3926, %v3938
    %v3940 = vlaneseq
    %v3941 = vshrl.u32 %v3940, 7
    %v3942 = vsub.s32 3, %v3941
    %v3943 = vrot.slane %v3926, %v3942
    %v3948 = vmul.f32 %v3920, %v3931
    %v3949 = vmul.f32 %v3917, %v3935
    %v3950 = vmul.f32 %v3914, %v3939
    %v3951 = vmul.f32 %v3923, %v3943
    %v3952 = vmul.f32 %v3921, %v3931
    %v3953 = vmul.f32 %v3918, %v3935
    %v3954 = vmul.f32 %v3915, %v3939
    %v3955 = vmul.f32 %v3924, %v3943
    %v3956 = vmul.f32 %v3922, %v3931
    %v3957 = vmul.f32 %v3919, %v3935
    %v3958 = vmul.f32 %v3916, %v3939
    %v3959 = vmul.f32 %v3925, %v3943
    %3960 = vst [vmem:[#allocation2 + $0x2a0] sm:$0xff] %v3948
    %3961 = vst [vmem:[#allocation2 + $0x2a8] sm:$0xff] %v3949
    %3962 = vst [vmem:[#allocation2 + $0x2b0] sm:$0xff] %v3950
    %3963 = vst [vmem:[#allocation2 + $0x2b8] sm:$0xff] %v3951
    %3964 = vst [vmem:[#allocation2 + $0x2c0] sm:$0xff] %v3952
    %3965 = vst [vmem:[#allocation2 + $0x2c8] sm:$0xff] %v3953
    %3966 = vst [vmem:[#allocation2 + $0x2d0] sm:$0xff] %v3954
    %3967 = vst [vmem:[#allocation2 + $0x2d8] sm:$0xff] %v3955
    %3968 = vst [vmem:[#allocation2 + $0x2e0] sm:$0xff] %v3956
    %3969 = vst [vmem:[#allocation2 + $0x2e8] sm:$0xff] %v3957
    %3970 = vst [vmem:[#allocation2 + $0x2f0] sm:$0xff] %v3958
    %3971 = vst [vmem:[#allocation2 + $0x2f8] sm:$0xff] %v3959
    %3972 = vrot.lane.b32.xlu0 %v3374, 111
    %v3973 = vpop.permute.xlu0 %3972
    %3974 = vrot.lane.b32.xlu0 %v3378, 111
    %v3975 = vpop.permute.xlu0 %3974
    %3976 = vrot.lane.b32.xlu0 %v3382, 111
    %v3977 = vpop.permute.xlu0 %3976
    %3978 = vrot.lane.b32.xlu0 %v3375, 111
    %v3979 = vpop.permute.xlu0 %3978
    %3980 = vrot.lane.b32.xlu0 %v3379, 111
    %v3981 = vpop.permute.xlu0 %3980
    %3982 = vrot.lane.b32.xlu0 %v3383, 111
    %v3983 = vpop.permute.xlu0 %3982
    %3984 = vrot.lane.b32.xlu0 %v3376, 111
    %v3985 = vpop.permute.xlu0 %3984
    %3986 = vrot.lane.b32.xlu0 %v3380, 111
    %v3987 = vpop.permute.xlu0 %3986
    %3988 = vrot.lane.b32.xlu0 %v3384, 111
    %v3989 = vpop.permute.xlu0 %3988
    %3990 = vrot.lane.b32.xlu0 %v3377, 111
    %v3991 = vpop.permute.xlu0 %3990
    %3992 = vrot.lane.b32.xlu0 %v3381, 111
    %v3993 = vpop.permute.xlu0 %3992
    %3994 = vrot.lane.b32.xlu0 %v3385, 111
    %v3995 = vpop.permute.xlu0 %3994
    %v3996 = vsel %vm349, %v3985, %v3991
    %v3997 = vsel %vm349, %v3987, %v3993
    %v3998 = vsel %vm349, %v3989, %v3995
    %v3999 = vsel %vm349, %v3979, %v3985
    %v4000 = vsel %vm349, %v3981, %v3987
    %v4001 = vsel %vm349, %v3983, %v3989
    %v4002 = vsel %vm349, %v3973, %v3979
    %v4003 = vsel %vm349, %v3975, %v3981
    %v4004 = vsel %vm349, %v3977, %v3983
    %v4005 = vsel %vm349, %v3991, %v3973
    %v4006 = vsel %vm349, %v3993, %v3975
    %v4007 = vsel %vm349, %v3995, %v3977
    %v4008 = vld [vmem:[%s354] ss:$8 sm:$0xf]
    %v4010 = vlaneseq
    %v4011 = vshrl.u32 %v4010, 7
    %v4012 = vsub.s32 0, %v4011
    %v4013 = vrot.slane %v4008, %v4012
    %v4014 = vlaneseq
    %v4015 = vshrl.u32 %v4014, 7
    %v4016 = vsub.s32 1, %v4015
    %v4017 = vrot.slane %v4008, %v4016
    %v4018 = vlaneseq
    %v4019 = vshrl.u32 %v4018, 7
    %v4020 = vsub.s32 2, %v4019
    %v4021 = vrot.slane %v4008, %v4020
    %v4022 = vlaneseq
    %v4023 = vshrl.u32 %v4022, 7
    %v4024 = vsub.s32 3, %v4023
    %v4025 = vrot.slane %v4008, %v4024
    %v4030 = vmul.f32 %v4002, %v4013
    %v4031 = vmul.f32 %v3999, %v4017
    %v4032 = vmul.f32 %v3996, %v4021
    %v4033 = vmul.f32 %v4005, %v4025
    %v4034 = vmul.f32 %v4003, %v4013
    %v4035 = vmul.f32 %v4000, %v4017
    %v4036 = vmul.f32 %v3997, %v4021
    %v4037 = vmul.f32 %v4006, %v4025
    %v4038 = vmul.f32 %v4004, %v4013
    %v4039 = vmul.f32 %v4001, %v4017
    %v4040 = vmul.f32 %v3998, %v4021
    %v4041 = vmul.f32 %v4007, %v4025
    %4042 = vst [vmem:[#allocation2 + $0x300] sm:$0xff] %v4030
    %4043 = vst [vmem:[#allocation2 + $0x308] sm:$0xff] %v4031
    %4044 = vst [vmem:[#allocation2 + $0x310] sm:$0xff] %v4032
    %4045 = vst [vmem:[#allocation2 + $0x318] sm:$0xff] %v4033
    %4046 = vst [vmem:[#allocation2 + $0x320] sm:$0xff] %v4034
    %4047 = vst [vmem:[#allocation2 + $0x328] sm:$0xff] %v4035
    %4048 = vst [vmem:[#allocation2 + $0x330] sm:$0xff] %v4036
    %4049 = vst [vmem:[#allocation2 + $0x338] sm:$0xff] %v4037
    %4050 = vst [vmem:[#allocation2 + $0x340] sm:$0xff] %v4038
    %4051 = vst [vmem:[#allocation2 + $0x348] sm:$0xff] %v4039
    %4052 = vst [vmem:[#allocation2 + $0x350] sm:$0xff] %v4040
    %4053 = vst [vmem:[#allocation2 + $0x358] sm:$0xff] %v4041
    %v4054 = vld [vmem:[%s3 + $0x20] sm:$0xff]
    %v4055 = vld [vmem:[%s3 + $0x28] sm:$0xff]
    %v4056 = vld [vmem:[%s3 + $0x30] sm:$0xff]
    %v4057 = vld [vmem:[%s3 + $0x38] sm:$0xff]
    %v4058 = vld [vmem:[#allocation2] sm:$0xff]
    %v4059 = vld [vmem:[#allocation2 + $0x8] sm:$0xff]
    %v4060 = vld [vmem:[#allocation2 + $0x10] sm:$0xff]
    %v4061 = vld [vmem:[#allocation2 + $0x18] sm:$0xff]
    %v4062 = vld [vmem:[#allocation2 + $0x20] sm:$0xff]
    %v4063 = vld [vmem:[#allocation2 + $0x28] sm:$0xff]
    %v4064 = vld [vmem:[#allocation2 + $0x30] sm:$0xff]
    %v4065 = vld [vmem:[#allocation2 + $0x38] sm:$0xff]
    %v4066 = vld [vmem:[#allocation2 + $0x40] sm:$0xff]
    %v4067 = vld [vmem:[#allocation2 + $0x48] sm:$0xff]
    %v4068 = vld [vmem:[#allocation2 + $0x50] sm:$0xff]
    %v4069 = vld [vmem:[#allocation2 + $0x58] sm:$0xff]
    %v4070 = vld [vmem:[#allocation2 + $0x60] sm:$0xff]
    %v4071 = vld [vmem:[#allocation2 + $0x68] sm:$0xff]
    %v4072 = vld [vmem:[#allocation2 + $0x70] sm:$0xff]
    %v4073 = vld [vmem:[#allocation2 + $0x78] sm:$0xff]
    %v4074 = vld [vmem:[#allocation2 + $0x80] sm:$0xff]
    %v4075 = vld [vmem:[#allocation2 + $0x88] sm:$0xff]
    %v4076 = vld [vmem:[#allocation2 + $0x90] sm:$0xff]
    %v4077 = vld [vmem:[#allocation2 + $0x98] sm:$0xff]
    %v4078 = vld [vmem:[#allocation2 + $0xa0] sm:$0xff]
    %v4079 = vld [vmem:[#allocation2 + $0xa8] sm:$0xff]
    %v4080 = vld [vmem:[#allocation2 + $0xb0] sm:$0xff]
    %v4081 = vld [vmem:[#allocation2 + $0xb8] sm:$0xff]
    %v4082 = vld [vmem:[#allocation2 + $0xc0] sm:$0xff]
    %v4083 = vld [vmem:[#allocation2 + $0xc8] sm:$0xff]
    %v4084 = vld [vmem:[#allocation2 + $0xd0] sm:$0xff]
    %v4085 = vld [vmem:[#allocation2 + $0xd8] sm:$0xff]
    %v4086 = vld [vmem:[#allocation2 + $0xe0] sm:$0xff]
    %v4087 = vld [vmem:[#allocation2 + $0xe8] sm:$0xff]
    %v4088 = vld [vmem:[#allocation2 + $0xf0] sm:$0xff]
    %v4089 = vld [vmem:[#allocation2 + $0xf8] sm:$0xff]
    %v4090 = vld [vmem:[#allocation2 + $0x100] sm:$0xff]
    %v4091 = vld [vmem:[#allocation2 + $0x108] sm:$0xff]
    %v4092 = vld [vmem:[#allocation2 + $0x110] sm:$0xff]
    %v4093 = vld [vmem:[#allocation2 + $0x118] sm:$0xff]
    %v4094 = vld [vmem:[#allocation2 + $0x120] sm:$0xff]
    %v4095 = vld [vmem:[#allocation2 + $0x128] sm:$0xff]
    %v4096 = vld [vmem:[#allocation2 + $0x130] sm:$0xff]
    %v4097 = vld [vmem:[#allocation2 + $0x138] sm:$0xff]
    %v4098 = vld [vmem:[#allocation2 + $0x140] sm:$0xff]
    %v4099 = vld [vmem:[#allocation2 + $0x148] sm:$0xff]
    %v4100 = vld [vmem:[#allocation2 + $0x150] sm:$0xff]
    %v4101 = vld [vmem:[#allocation2 + $0x158] sm:$0xff]
    %v4102 = vld [vmem:[#allocation2 + $0x160] sm:$0xff]
    %v4103 = vld [vmem:[#allocation2 + $0x168] sm:$0xff]
    %v4104 = vld [vmem:[#allocation2 + $0x170] sm:$0xff]
    %v4105 = vld [vmem:[#allocation2 + $0x178] sm:$0xff]
    %v4106 = vld [vmem:[#allocation2 + $0x180] sm:$0xff]
    %v4107 = vld [vmem:[#allocation2 + $0x188] sm:$0xff]
    %v4108 = vld [vmem:[#allocation2 + $0x190] sm:$0xff]
    %v4109 = vld [vmem:[#allocation2 + $0x198] sm:$0xff]
    %v4110 = vld [vmem:[#allocation2 + $0x1a0] sm:$0xff]
    %v4111 = vld [vmem:[#allocation2 + $0x1a8] sm:$0xff]
    %v4112 = vld [vmem:[#allocation2 + $0x1b0] sm:$0xff]
    %v4113 = vld [vmem:[#allocation2 + $0x1b8] sm:$0xff]
    %v4114 = vld [vmem:[#allocation2 + $0x1c0] sm:$0xff]
    %v4115 = vld [vmem:[#allocation2 + $0x1c8] sm:$0xff]
    %v4116 = vld [vmem:[#allocation2 + $0x1d0] sm:$0xff]
    %v4117 = vld [vmem:[#allocation2 + $0x1d8] sm:$0xff]
    %v4118 = vld [vmem:[#allocation2 + $0x1e0] sm:$0xff]
    %v4119 = vld [vmem:[#allocation2 + $0x1e8] sm:$0xff]
    %v4120 = vld [vmem:[#allocation2 + $0x1f0] sm:$0xff]
    %v4121 = vld [vmem:[#allocation2 + $0x1f8] sm:$0xff]
    %v4122 = vld [vmem:[#allocation2 + $0x200] sm:$0xff]
    %v4123 = vld [vmem:[#allocation2 + $0x208] sm:$0xff]
    %v4124 = vld [vmem:[#allocation2 + $0x210] sm:$0xff]
    %v4125 = vld [vmem:[#allocation2 + $0x218] sm:$0xff]
    %v4126 = vld [vmem:[#allocation2 + $0x220] sm:$0xff]
    %v4127 = vld [vmem:[#allocation2 + $0x228] sm:$0xff]
    %v4128 = vld [vmem:[#allocation2 + $0x230] sm:$0xff]
    %v4129 = vld [vmem:[#allocation2 + $0x238] sm:$0xff]
    %v4130 = vld [vmem:[#allocation2 + $0x240] sm:$0xff]
    %v4131 = vld [vmem:[#allocation2 + $0x248] sm:$0xff]
    %v4132 = vld [vmem:[#allocation2 + $0x250] sm:$0xff]
    %v4133 = vld [vmem:[#allocation2 + $0x258] sm:$0xff]
    %v4134 = vld [vmem:[#allocation2 + $0x260] sm:$0xff]
    %v4135 = vld [vmem:[#allocation2 + $0x268] sm:$0xff]
    %v4136 = vld [vmem:[#allocation2 + $0x270] sm:$0xff]
    %v4137 = vld [vmem:[#allocation2 + $0x278] sm:$0xff]
    %v4138 = vld [vmem:[#allocation2 + $0x280] sm:$0xff]
    %v4139 = vld [vmem:[#allocation2 + $0x288] sm:$0xff]
    %v4140 = vld [vmem:[#allocation2 + $0x290] sm:$0xff]
    %v4141 = vld [vmem:[#allocation2 + $0x298] sm:$0xff]
    %v4142 = vld [vmem:[#allocation2 + $0x2a0] sm:$0xff]
    %v4143 = vld [vmem:[#allocation2 + $0x2a8] sm:$0xff]
    %v4144 = vld [vmem:[#allocation2 + $0x2b0] sm:$0xff]
    %v4145 = vld [vmem:[#allocation2 + $0x2b8] sm:$0xff]
    %v4146 = vld [vmem:[#allocation2 + $0x2c0] sm:$0xff]
    %v4147 = vld [vmem:[#allocation2 + $0x2c8] sm:$0xff]
    %v4148 = vld [vmem:[#allocation2 + $0x2d0] sm:$0xff]
    %v4149 = vld [vmem:[#allocation2 + $0x2d8] sm:$0xff]
    %v4150 = vld [vmem:[#allocation2 + $0x2e0] sm:$0xff]
    %v4151 = vld [vmem:[#allocation2 + $0x2e8] sm:$0xff]
    %v4152 = vld [vmem:[#allocation2 + $0x2f0] sm:$0xff]
    %v4153 = vld [vmem:[#allocation2 + $0x2f8] sm:$0xff]
    %v4154 = vld [vmem:[#allocation2 + $0x300] sm:$0xff]
    %v4155 = vld [vmem:[#allocation2 + $0x308] sm:$0xff]
    %v4156 = vld [vmem:[#allocation2 + $0x310] sm:$0xff]
    %v4157 = vld [vmem:[#allocation2 + $0x318] sm:$0xff]
    %v4158 = vld [vmem:[#allocation2 + $0x320] sm:$0xff]
    %v4159 = vld [vmem:[#allocation2 + $0x328] sm:$0xff]
    %v4160 = vld [vmem:[#allocation2 + $0x330] sm:$0xff]
    %v4161 = vld [vmem:[#allocation2 + $0x338] sm:$0xff]
    %v4162 = vld [vmem:[#allocation2 + $0x340] sm:$0xff]
    %v4163 = vld [vmem:[#allocation2 + $0x348] sm:$0xff]
    %v4164 = vld [vmem:[#allocation2 + $0x350] sm:$0xff]
    %v4165 = vld [vmem:[#allocation2 + $0x358] sm:$0xff]
    %v4166 = vld [vmem:[%s5 + $0x70] sm:$0xff]
    %v4167 = vld [vmem:[%s5 + $0x78] sm:$0xff]
    %4169 = vset.pattern.permute.xlu0 0
    %4170 = vperm.xlu0 %4169, %v4166
    %v4171 = vpop.permute.xlu0 %4170
    %4174 = vset.pattern.permute.xlu0 0
    %4175 = vperm.xlu0 %4174, %v4167
    %v4176 = vpop.permute.xlu0 %4175
    %v4179 = vsel %vm2841, %v4055, 0
    %v4182 = vsel %vm2841, %v4057, 0
    %4184 = vmatprep.subr.mxu0 %v4119
    %4185 = vmatpush1.msra.mxu0 %v4118
    %4186 = vmatprep.subr.mxu0 %v4115
    %4187 = vmatpush1.msra.mxu0 %v4114
    %4188 = vmatprep.subr.mxu0 %v4111
    %4189 = vmatpush1.msra.mxu0 %v4110
    %4190 = vmatprep.subr.mxu0 %v4107
    %4191 = vmatpush1.msra.mxu0 %v4106
    %4192 = vmatprep.subr.mxu0 %v4103
    %4193 = vmatpush1.msra.mxu0 %v4102
    %4194 = vmatprep.subr.mxu0 %v4099
    %4195 = vmatpush1.msra.mxu0 %v4098
    %4196 = vmatprep.subr.mxu0 %v4095
    %4197 = vmatpush1.msra.mxu0 %v4094
    %4198 = vmatprep.subr.mxu0 %v4091
    %4199 = vmatpush1.msra.mxu0 %v4090
    %4200 = vmatprep.subr.mxu0 %v4087
    %4201 = vmatpush1.msra.mxu0 %v4086
    %4202 = vmatprep.subr.mxu0 %v4083
    %4203 = vmatpush1.msra.mxu0 %v4082
    %4204 = vmatprep.subr.mxu0 %v4079
    %4205 = vmatpush1.msra.mxu0 %v4078
    %4206 = vmatprep.subr.mxu0 %v4075
    %4207 = vmatpush1.msra.mxu0 %v4074
    %4208 = vmatprep.subr.mxu0 %v4071
    %4209 = vmatpush1.msra.mxu0 %v4070
    %4210 = vmatprep.subr.mxu0 %v4067
    %4211 = vmatpush1.msra.mxu0 %v4066
    %4212 = vmatprep.subr.mxu0 %v4063
    %4213 = vmatpush1.msra.mxu0 %v4062
    %4214 = vmatprep.subr.mxu0 %v4059
    %4215 = vmatpush1.msra.mxu0 %v4058
    %4216 = vmatprep.subr.mxu0 0.0
    %4217 = vmatpush2.msra.mxu0 0.0
    %4218 = vmatprep.subr.mxu0 0.0
    %4219 = vmatpush2.msra.mxu0 0.0
    %4220 = vmatprep.subr.mxu0 0.0
    %4221 = vmatpush2.msra.mxu0 0.0
    %4222 = vmatprep.subr.mxu0 0.0
    %4223 = vmatpush2.msra.mxu0 0.0
    %4224 = vmatprep.subr.mxu0 0.0
    %4225 = vmatpush2.msra.mxu0 0.0
    %4226 = vmatprep.subr.mxu0 %v4163
    %4227 = vmatpush2.msra.mxu0 %v4162
    %4228 = vmatprep.subr.mxu0 %v4159
    %4229 = vmatpush2.msra.mxu0 %v4158
    %4230 = vmatprep.subr.mxu0 %v4155
    %4231 = vmatpush2.msra.mxu0 %v4154
    %4232 = vmatprep.subr.mxu0 %v4151
    %4233 = vmatpush2.msra.mxu0 %v4150
    %4234 = vmatprep.subr.mxu0 %v4147
    %4235 = vmatpush2.msra.mxu0 %v4146
    %4236 = vmatprep.subr.mxu0 %v4143
    %4237 = vmatpush2.msra.mxu0 %v4142
    %4238 = vmatprep.subr.mxu0 %v4139
    %4239 = vmatpush2.msra.mxu0 %v4138
    %4240 = vmatprep.subr.mxu0 %v4135
    %4241 = vmatpush2.msra.mxu0 %v4134
    %4242 = vmatprep.subr.mxu0 %v4131
    %4243 = vmatpush2.msra.mxu0 %v4130
    %4244 = vmatprep.subr.mxu0 %v4127
    %4245 = vmatpush2.msra.mxu0 %v4126
    %4246 = vmatprep.subr.mxu0 %v4123
    %4247 = vmatpush2.msra.mxu0 %v4122
    %4248 = vmatprep.mubr.f32.mxu0 %v4179
    %4249 = vmatmul.mubr.f32.gmra.mxu0 %v4054
    %v4250 = vpop.f32.mrf.mxu0
    %v4251 = vadd.f32 %v4171, %v4250
    %v4252 = vpop.f32.mrf.mxu0
    %v4253 = vadd.f32 %v4171, %v4252
    %4254 = vmatprep.mubr.f32.mxu0 %v4182
    %4255 = vmatmul.mubr.f32.gmra.mxu0 %v4056
    %v4256 = vpop.f32.mrf.mxu0
    %v4257 = vadd.f32 %v4176, %v4256
    %v4258 = vpop.f32.mrf.mxu0
    %v4259 = vadd.f32 %v4176, %v4258
    %4260 = vdwg.mxu0
    %4261 = vmatprep.subr.mxu0 %v4121
    %4262 = vmatpush1.msra.mxu0 %v4120
    %4263 = vmatprep.subr.mxu0 %v4117
    %4264 = vmatpush1.msra.mxu0 %v4116
    %4265 = vmatprep.subr.mxu0 %v4113
    %4266 = vmatpush1.msra.mxu0 %v4112
    %4267 = vmatprep.subr.mxu0 %v4109
    %4268 = vmatpush1.msra.mxu0 %v4108
    %4269 = vmatprep.subr.mxu0 %v4105
    %4270 = vmatpush1.msra.mxu0 %v4104
    %4271 = vmatprep.subr.mxu0 %v4101
    %4272 = vmatpush1.msra.mxu0 %v4100
    %4273 = vmatprep.subr.mxu0 %v4097
    %4274 = vmatpush1.msra.mxu0 %v4096
    %4275 = vmatprep.subr.mxu0 %v4093
    %4276 = vmatpush1.msra.mxu0 %v4092
    %4277 = vmatprep.subr.mxu0 %v4089
    %4278 = vmatpush1.msra.mxu0 %v4088
    %4279 = vmatprep.subr.mxu0 %v4085
    %4280 = vmatpush1.msra.mxu0 %v4084
    %4281 = vmatprep.subr.mxu0 %v4081
    %4282 = vmatpush1.msra.mxu0 %v4080
    %4283 = vmatprep.subr.mxu0 %v4077
    %4284 = vmatpush1.msra.mxu0 %v4076
    %4285 = vmatprep.subr.mxu0 %v4073
    %4286 = vmatpush1.msra.mxu0 %v4072
    %4287 = vmatprep.subr.mxu0 %v4069
    %4288 = vmatpush1.msra.mxu0 %v4068
    %4289 = vmatprep.subr.mxu0 %v4065
    %4290 = vmatpush1.msra.mxu0 %v4064
    %4291 = vmatprep.subr.mxu0 %v4061
    %4292 = vmatpush1.msra.mxu0 %v4060
    %4293 = vmatprep.subr.mxu0 0.0
    %4294 = vmatpush2.msra.mxu0 0.0
    %4295 = vmatprep.subr.mxu0 0.0
    %4296 = vmatpush2.msra.mxu0 0.0
    %4297 = vmatprep.subr.mxu0 0.0
    %4298 = vmatpush2.msra.mxu0 0.0
    %4299 = vmatprep.subr.mxu0 0.0
    %4300 = vmatpush2.msra.mxu0 0.0
    %4301 = vmatprep.subr.mxu0 0.0
    %4302 = vmatpush2.msra.mxu0 0.0
    %4303 = vmatprep.subr.mxu0 %v4165
    %4304 = vmatpush2.msra.mxu0 %v4164
    %4305 = vmatprep.subr.mxu0 %v4161
    %4306 = vmatpush2.msra.mxu0 %v4160
    %4307 = vmatprep.subr.mxu0 %v4157
    %4308 = vmatpush2.msra.mxu0 %v4156
    %4309 = vmatprep.subr.mxu0 %v4153
    %4310 = vmatpush2.msra.mxu0 %v4152
    %4311 = vmatprep.subr.mxu0 %v4149
    %4312 = vmatpush2.msra.mxu0 %v4148
    %4313 = vmatprep.subr.mxu0 %v4145
    %4314 = vmatpush2.msra.mxu0 %v4144
    %4315 = vmatprep.subr.mxu0 %v4141
    %4316 = vmatpush2.msra.mxu0 %v4140
    %4317 = vmatprep.subr.mxu0 %v4137
    %4318 = vmatpush2.msra.mxu0 %v4136
    %4319 = vmatprep.subr.mxu0 %v4133
    %4320 = vmatpush2.msra.mxu0 %v4132
    %4321 = vmatprep.subr.mxu0 %v4129
    %4322 = vmatpush2.msra.mxu0 %v4128
    %4323 = vmatprep.subr.mxu0 %v4125
    %4324 = vmatpush2.msra.mxu0 %v4124
    %4325 = vmatprep.mubr.f32.mxu0 %v4179
    %4326 = vmatmul.mubr.f32.gmra.mxu0 %v4054
    %v4327 = vpop.f32.mrf.mxu0
    %v4328 = vadd.f32 %v4171, %v4327
    %v4329 = vpop.f32.mrf.mxu0
    %v4330 = vadd.f32 %v4171, %v4329
    %4331 = vmatprep.mubr.f32.mxu0 %v4182
    %4332 = vmatmul.mubr.f32.gmra.mxu0 %v4056
    %v4333 = vpop.f32.mrf.mxu0
    %v4334 = vadd.f32 %v4176, %v4333
    %v4335 = vpop.f32.mrf.mxu0
    %v4336 = vadd.f32 %v4176, %v4335
    %4337 = vdwg.mxu0
    %v4338 = vmax.f32 %v4251, 0.0
    %v4339 = vmax.f32 %v4253, 0.0
    %v4340 = vmax.f32 %v4328, 0.0
    %v4341 = vmax.f32 %v4330, 0.0
    %v4342 = vmax.f32 %v4257, 0.0
    %v4343 = vmax.f32 %v4259, 0.0
    %v4344 = vmax.f32 %v4334, 0.0
    %v4345 = vmax.f32 %v4336, 0.0
    %v4346 = vld [vmem:[%s4 + $0x40] sm:$0xff]
    %v4347 = vld [vmem:[%s4 + $0x48] sm:$0xff]
    %v4348 = vld [vmem:[%s5 + $0x80] sm:$0xff]
    %v4349 = vld [vmem:[%s5 + $0x88] sm:$0xff]
    %4351 = vset.pattern.permute.xlu0 0
    %4352 = vperm.xlu0 %4351, %v4348
    %v4353 = vpop.permute.xlu0 %4352
    %4356 = vset.pattern.permute.xlu0 0
    %4357 = vperm.xlu0 %4356, %v4349
    %v4358 = vpop.permute.xlu0 %4357
    %v4361 = vsel %vm1686, %v4346, 0
    %v4364 = vsel %vm1686, %v4347, 0
    %4366 = vmatprep.subr.mxu0 0.0
    %4367 = vmatpush1.msra.mxu0 0.0
    %4368 = vmatprep.subr.mxu0 0.0
    %4369 = vmatpush1.msra.mxu0 0.0
    %4370 = vmatprep.subr.mxu0 0.0
    %4371 = vmatpush1.msra.mxu0 0.0
    %4372 = vmatprep.subr.mxu0 0.0
    %4373 = vmatpush1.msra.mxu0 0.0
    %4374 = vmatprep.subr.mxu0 0.0
    %4375 = vmatpush1.msra.mxu0 0.0
    %4376 = vmatprep.subr.mxu0 0.0
    %4377 = vmatpush1.msra.mxu0 0.0
    %4378 = vmatprep.subr.mxu0 0.0
    %4379 = vmatpush1.msra.mxu0 0.0
    %4380 = vmatprep.subr.mxu0 0.0
    %4381 = vmatpush1.msra.mxu0 0.0
    %4382 = vmatprep.subr.mxu0 0.0
    %4383 = vmatpush1.msra.mxu0 0.0
    %4384 = vmatprep.subr.mxu0 0.0
    %4385 = vmatpush1.msra.mxu0 0.0
    %4386 = vmatprep.subr.mxu0 0.0
    %4387 = vmatpush1.msra.mxu0 0.0
    %4388 = vmatprep.subr.mxu0 0.0
    %4389 = vmatpush1.msra.mxu0 0.0
    %4390 = vmatprep.subr.mxu0 0.0
    %4391 = vmatpush1.msra.mxu0 0.0
    %4392 = vmatprep.subr.mxu0 0.0
    %4393 = vmatpush1.msra.mxu0 0.0
    %4394 = vmatprep.subr.mxu0 %v4343
    %4395 = vmatpush1.msra.mxu0 %v4342
    %4396 = vmatprep.subr.mxu0 %v4339
    %4397 = vmatpush1.msra.mxu0 %v4338
    %4398 = vmatprep.subr.mxu0 0.0
    %4399 = vmatpush2.msra.mxu0 0.0
    %4400 = vmatprep.subr.mxu0 0.0
    %4401 = vmatpush2.msra.mxu0 0.0
    %4402 = vmatprep.subr.mxu0 0.0
    %4403 = vmatpush2.msra.mxu0 0.0
    %4404 = vmatprep.subr.mxu0 0.0
    %4405 = vmatpush2.msra.mxu0 0.0
    %4406 = vmatprep.subr.mxu0 0.0
    %4407 = vmatpush2.msra.mxu0 0.0
    %4408 = vmatprep.subr.mxu0 0.0
    %4409 = vmatpush2.msra.mxu0 0.0
    %4410 = vmatprep.subr.mxu0 0.0
    %4411 = vmatpush2.msra.mxu0 0.0
    %4412 = vmatprep.subr.mxu0 0.0
    %4413 = vmatpush2.msra.mxu0 0.0
    %4414 = vmatprep.subr.mxu0 0.0
    %4415 = vmatpush2.msra.mxu0 0.0
    %4416 = vmatprep.subr.mxu0 0.0
    %4417 = vmatpush2.msra.mxu0 0.0
    %4418 = vmatprep.subr.mxu0 0.0
    %4419 = vmatpush2.msra.mxu0 0.0
    %4420 = vmatprep.subr.mxu0 0.0
    %4421 = vmatpush2.msra.mxu0 0.0
    %4422 = vmatprep.subr.mxu0 0.0
    %4423 = vmatpush2.msra.mxu0 0.0
    %4424 = vmatprep.subr.mxu0 0.0
    %4425 = vmatpush2.msra.mxu0 0.0
    %4426 = vmatprep.subr.mxu0 0.0
    %4427 = vmatpush2.msra.mxu0 0.0
    %4428 = vmatprep.subr.mxu0 0.0
    %4429 = vmatpush2.msra.mxu0 0.0
    %4430 = vmatprep.mubr.f32.mxu0 0.0
    %4431 = vmatmul.mubr.f32.gmra.mxu0 %v4361
    %v4432 = vpop.f32.mrf.mxu0
    %v4433 = vadd.f32 %v4353, %v4432
    %v4434 = vpop.f32.mrf.mxu0
    %v4435 = vadd.f32 %v4353, %v4434
    %4436 = vmatprep.mubr.f32.mxu0 0.0
    %4437 = vmatmul.mubr.f32.gmra.mxu0 %v4364
    %v4438 = vpop.f32.mrf.mxu0
    %v4439 = vadd.f32 %v4358, %v4438
    %v4440 = vpop.f32.mrf.mxu0
    %v4441 = vadd.f32 %v4358, %v4440
    %4442 = vdwg.mxu0
    %4443 = vmatprep.subr.mxu0 0.0
    %4444 = vmatpush1.msra.mxu0 0.0
    %4445 = vmatprep.subr.mxu0 0.0
    %4446 = vmatpush1.msra.mxu0 0.0
    %4447 = vmatprep.subr.mxu0 0.0
    %4448 = vmatpush1.msra.mxu0 0.0
    %4449 = vmatprep.subr.mxu0 0.0
    %4450 = vmatpush1.msra.mxu0 0.0
    %4451 = vmatprep.subr.mxu0 0.0
    %4452 = vmatpush1.msra.mxu0 0.0
    %4453 = vmatprep.subr.mxu0 0.0
    %4454 = vmatpush1.msra.mxu0 0.0
    %4455 = vmatprep.subr.mxu0 0.0
    %4456 = vmatpush1.msra.mxu0 0.0
    %4457 = vmatprep.subr.mxu0 0.0
    %4458 = vmatpush1.msra.mxu0 0.0
    %4459 = vmatprep.subr.mxu0 0.0
    %4460 = vmatpush1.msra.mxu0 0.0
    %4461 = vmatprep.subr.mxu0 0.0
    %4462 = vmatpush1.msra.mxu0 0.0
    %4463 = vmatprep.subr.mxu0 0.0
    %4464 = vmatpush1.msra.mxu0 0.0
    %4465 = vmatprep.subr.mxu0 0.0
    %4466 = vmatpush1.msra.mxu0 0.0
    %4467 = vmatprep.subr.mxu0 0.0
    %4468 = vmatpush1.msra.mxu0 0.0
    %4469 = vmatprep.subr.mxu0 0.0
    %4470 = vmatpush1.msra.mxu0 0.0
    %4471 = vmatprep.subr.mxu0 %v4345
    %4472 = vmatpush1.msra.mxu0 %v4344
    %4473 = vmatprep.subr.mxu0 %v4341
    %4474 = vmatpush1.msra.mxu0 %v4340
    %4475 = vmatprep.subr.mxu0 0.0
    %4476 = vmatpush2.msra.mxu0 0.0
    %4477 = vmatprep.subr.mxu0 0.0
    %4478 = vmatpush2.msra.mxu0 0.0
    %4479 = vmatprep.subr.mxu0 0.0
    %4480 = vmatpush2.msra.mxu0 0.0
    %4481 = vmatprep.subr.mxu0 0.0
    %4482 = vmatpush2.msra.mxu0 0.0
    %4483 = vmatprep.subr.mxu0 0.0
    %4484 = vmatpush2.msra.mxu0 0.0
    %4485 = vmatprep.subr.mxu0 0.0
    %4486 = vmatpush2.msra.mxu0 0.0
    %4487 = vmatprep.subr.mxu0 0.0
    %4488 = vmatpush2.msra.mxu0 0.0
    %4489 = vmatprep.subr.mxu0 0.0
    %4490 = vmatpush2.msra.mxu0 0.0
    %4491 = vmatprep.subr.mxu0 0.0
    %4492 = vmatpush2.msra.mxu0 0.0
    %4493 = vmatprep.subr.mxu0 0.0
    %4494 = vmatpush2.msra.mxu0 0.0
    %4495 = vmatprep.subr.mxu0 0.0
    %4496 = vmatpush2.msra.mxu0 0.0
    %4497 = vmatprep.subr.mxu0 0.0
    %4498 = vmatpush2.msra.mxu0 0.0
    %4499 = vmatprep.subr.mxu0 0.0
    %4500 = vmatpush2.msra.mxu0 0.0
    %4501 = vmatprep.subr.mxu0 0.0
    %4502 = vmatpush2.msra.mxu0 0.0
    %4503 = vmatprep.subr.mxu0 0.0
    %4504 = vmatpush2.msra.mxu0 0.0
    %4505 = vmatprep.subr.mxu0 0.0
    %4506 = vmatpush2.msra.mxu0 0.0
    %4507 = vmatprep.mubr.f32.mxu0 0.0
    %4508 = vmatmul.mubr.f32.gmra.mxu0 %v4361
    %v4509 = vpop.f32.mrf.mxu0
    %v4510 = vadd.f32 %v4353, %v4509
    %v4511 = vpop.f32.mrf.mxu0
    %v4512 = vadd.f32 %v4353, %v4511
    %4513 = vmatprep.mubr.f32.mxu0 0.0
    %4514 = vmatmul.mubr.f32.gmra.mxu0 %v4364
    %v4515 = vpop.f32.mrf.mxu0
    %v4516 = vadd.f32 %v4358, %v4515
    %v4517 = vpop.f32.mrf.mxu0
    %v4518 = vadd.f32 %v4358, %v4517
    %4519 = vdwg.mxu0
    %v4520 = vmax.f32 %v4433, 0.0
    %v4521 = vmax.f32 %v4435, 0.0
    %v4522 = vmax.f32 %v4510, 0.0
    %v4523 = vmax.f32 %v4512, 0.0
    %v4524 = vmax.f32 %v4439, 0.0
    %v4525 = vmax.f32 %v4441, 0.0
    %v4526 = vmax.f32 %v4516, 0.0
    %v4527 = vmax.f32 %v4518, 0.0
    %v4528 = vld [vmem:[%s4 + $0x50] sm:$0xff]
    %v4529 = vld [vmem:[%s4 + $0x58] sm:$0xff]
    %v4530 = vld [vmem:[%s5 + $0x90] sm:$0xff]
    %v4531 = vld [vmem:[%s5 + $0x98] sm:$0xff]
    %4533 = vset.pattern.permute.xlu0 0
    %4534 = vperm.xlu0 %4533, %v4530
    %v4535 = vpop.permute.xlu0 %4534
    %4538 = vset.pattern.permute.xlu0 0
    %4539 = vperm.xlu0 %4538, %v4531
    %v4540 = vpop.permute.xlu0 %4539
    %v4543 = vsel %vm1686, %v4528, 0
    %v4546 = vsel %vm1686, %v4529, 0
    %4548 = vmatprep.subr.mxu0 0.0
    %4549 = vmatpush1.msra.mxu0 0.0
    %4550 = vmatprep.subr.mxu0 0.0
    %4551 = vmatpush1.msra.mxu0 0.0
    %4552 = vmatprep.subr.mxu0 0.0
    %4553 = vmatpush1.msra.mxu0 0.0
    %4554 = vmatprep.subr.mxu0 0.0
    %4555 = vmatpush1.msra.mxu0 0.0
    %4556 = vmatprep.subr.mxu0 0.0
    %4557 = vmatpush1.msra.mxu0 0.0
    %4558 = vmatprep.subr.mxu0 0.0
    %4559 = vmatpush1.msra.mxu0 0.0
    %4560 = vmatprep.subr.mxu0 0.0
    %4561 = vmatpush1.msra.mxu0 0.0
    %4562 = vmatprep.subr.mxu0 0.0
    %4563 = vmatpush1.msra.mxu0 0.0
    %4564 = vmatprep.subr.mxu0 0.0
    %4565 = vmatpush1.msra.mxu0 0.0
    %4566 = vmatprep.subr.mxu0 0.0
    %4567 = vmatpush1.msra.mxu0 0.0
    %4568 = vmatprep.subr.mxu0 0.0
    %4569 = vmatpush1.msra.mxu0 0.0
    %4570 = vmatprep.subr.mxu0 0.0
    %4571 = vmatpush1.msra.mxu0 0.0
    %4572 = vmatprep.subr.mxu0 0.0
    %4573 = vmatpush1.msra.mxu0 0.0
    %4574 = vmatprep.subr.mxu0 0.0
    %4575 = vmatpush1.msra.mxu0 0.0
    %4576 = vmatprep.subr.mxu0 %v4525
    %4577 = vmatpush1.msra.mxu0 %v4524
    %4578 = vmatprep.subr.mxu0 %v4521
    %4579 = vmatpush1.msra.mxu0 %v4520
    %4580 = vmatprep.subr.mxu0 0.0
    %4581 = vmatpush2.msra.mxu0 0.0
    %4582 = vmatprep.subr.mxu0 0.0
    %4583 = vmatpush2.msra.mxu0 0.0
    %4584 = vmatprep.subr.mxu0 0.0
    %4585 = vmatpush2.msra.mxu0 0.0
    %4586 = vmatprep.subr.mxu0 0.0
    %4587 = vmatpush2.msra.mxu0 0.0
    %4588 = vmatprep.subr.mxu0 0.0
    %4589 = vmatpush2.msra.mxu0 0.0
    %4590 = vmatprep.subr.mxu0 0.0
    %4591 = vmatpush2.msra.mxu0 0.0
    %4592 = vmatprep.subr.mxu0 0.0
    %4593 = vmatpush2.msra.mxu0 0.0
    %4594 = vmatprep.subr.mxu0 0.0
    %4595 = vmatpush2.msra.mxu0 0.0
    %4596 = vmatprep.subr.mxu0 0.0
    %4597 = vmatpush2.msra.mxu0 0.0
    %4598 = vmatprep.subr.mxu0 0.0
    %4599 = vmatpush2.msra.mxu0 0.0
    %4600 = vmatprep.subr.mxu0 0.0
    %4601 = vmatpush2.msra.mxu0 0.0
    %4602 = vmatprep.subr.mxu0 0.0
    %4603 = vmatpush2.msra.mxu0 0.0
    %4604 = vmatprep.subr.mxu0 0.0
    %4605 = vmatpush2.msra.mxu0 0.0
    %4606 = vmatprep.subr.mxu0 0.0
    %4607 = vmatpush2.msra.mxu0 0.0
    %4608 = vmatprep.subr.mxu0 0.0
    %4609 = vmatpush2.msra.mxu0 0.0
    %4610 = vmatprep.subr.mxu0 0.0
    %4611 = vmatpush2.msra.mxu0 0.0
    %4612 = vmatprep.mubr.f32.mxu0 0.0
    %4613 = vmatmul.mubr.f32.gmra.mxu0 %v4543
    %v4614 = vpop.f32.mrf.mxu0
    %v4615 = vadd.f32 %v4535, %v4614
    %v4616 = vpop.f32.mrf.mxu0
    %v4617 = vadd.f32 %v4535, %v4616
    %4618 = vmatprep.mubr.f32.mxu0 0.0
    %4619 = vmatmul.mubr.f32.gmra.mxu0 %v4546
    %v4620 = vpop.f32.mrf.mxu0
    %v4621 = vadd.f32 %v4540, %v4620
    %v4622 = vpop.f32.mrf.mxu0
    %v4623 = vadd.f32 %v4540, %v4622
    %4624 = vdwg.mxu0
    %4625 = vmatprep.subr.mxu0 0.0
    %4626 = vmatpush1.msra.mxu0 0.0
    %4627 = vmatprep.subr.mxu0 0.0
    %4628 = vmatpush1.msra.mxu0 0.0
    %4629 = vmatprep.subr.mxu0 0.0
    %4630 = vmatpush1.msra.mxu0 0.0
    %4631 = vmatprep.subr.mxu0 0.0
    %4632 = vmatpush1.msra.mxu0 0.0
    %4633 = vmatprep.subr.mxu0 0.0
    %4634 = vmatpush1.msra.mxu0 0.0
    %4635 = vmatprep.subr.mxu0 0.0
    %4636 = vmatpush1.msra.mxu0 0.0
    %4637 = vmatprep.subr.mxu0 0.0
    %4638 = vmatpush1.msra.mxu0 0.0
    %4639 = vmatprep.subr.mxu0 0.0
    %4640 = vmatpush1.msra.mxu0 0.0
    %4641 = vmatprep.subr.mxu0 0.0
    %4642 = vmatpush1.msra.mxu0 0.0
    %4643 = vmatprep.subr.mxu0 0.0
    %4644 = vmatpush1.msra.mxu0 0.0
    %4645 = vmatprep.subr.mxu0 0.0
    %4646 = vmatpush1.msra.mxu0 0.0
    %4647 = vmatprep.subr.mxu0 0.0
    %4648 = vmatpush1.msra.mxu0 0.0
    %4649 = vmatprep.subr.mxu0 0.0
    %4650 = vmatpush1.msra.mxu0 0.0
    %4651 = vmatprep.subr.mxu0 0.0
    %4652 = vmatpush1.msra.mxu0 0.0
    %4653 = vmatprep.subr.mxu0 %v4527
    %4654 = vmatpush1.msra.mxu0 %v4526
    %4655 = vmatprep.subr.mxu0 %v4523
    %4656 = vmatpush1.msra.mxu0 %v4522
    %4657 = vmatprep.subr.mxu0 0.0
    %4658 = vmatpush2.msra.mxu0 0.0
    %4659 = vmatprep.subr.mxu0 0.0
    %4660 = vmatpush2.msra.mxu0 0.0
    %4661 = vmatprep.subr.mxu0 0.0
    %4662 = vmatpush2.msra.mxu0 0.0
    %4663 = vmatprep.subr.mxu0 0.0
    %4664 = vmatpush2.msra.mxu0 0.0
    %4665 = vmatprep.subr.mxu0 0.0
    %4666 = vmatpush2.msra.mxu0 0.0
    %4667 = vmatprep.subr.mxu0 0.0
    %4668 = vmatpush2.msra.mxu0 0.0
    %4669 = vmatprep.subr.mxu0 0.0
    %4670 = vmatpush2.msra.mxu0 0.0
    %4671 = vmatprep.subr.mxu0 0.0
    %4672 = vmatpush2.msra.mxu0 0.0
    %4673 = vmatprep.subr.mxu0 0.0
    %4674 = vmatpush2.msra.mxu0 0.0
    %4675 = vmatprep.subr.mxu0 0.0
    %4676 = vmatpush2.msra.mxu0 0.0
    %4677 = vmatprep.subr.mxu0 0.0
    %4678 = vmatpush2.msra.mxu0 0.0
    %4679 = vmatprep.subr.mxu0 0.0
    %4680 = vmatpush2.msra.mxu0 0.0
    %4681 = vmatprep.subr.mxu0 0.0
    %4682 = vmatpush2.msra.mxu0 0.0
    %4683 = vmatprep.subr.mxu0 0.0
    %4684 = vmatpush2.msra.mxu0 0.0
    %4685 = vmatprep.subr.mxu0 0.0
    %4686 = vmatpush2.msra.mxu0 0.0
    %4687 = vmatprep.subr.mxu0 0.0
    %4688 = vmatpush2.msra.mxu0 0.0
    %4689 = vmatprep.mubr.f32.mxu0 0.0
    %4690 = vmatmul.mubr.f32.gmra.mxu0 %v4543
    %v4691 = vpop.f32.mrf.mxu0
    %v4692 = vadd.f32 %v4535, %v4691
    %v4693 = vpop.f32.mrf.mxu0
    %v4694 = vadd.f32 %v4535, %v4693
    %4695 = vmatprep.mubr.f32.mxu0 0.0
    %4696 = vmatmul.mubr.f32.gmra.mxu0 %v4546
    %v4697 = vpop.f32.mrf.mxu0
    %v4698 = vadd.f32 %v4540, %v4697
    %v4699 = vpop.f32.mrf.mxu0
    %v4700 = vadd.f32 %v4540, %v4699
    %4701 = vdwg.mxu0
    %4702 = vst [vmem:[#allocation3] sm:$0xff] %v4615
    %4703 = vst [vmem:[#allocation3 + $0x8] sm:$0xff] %v4617
    %4704 = vst [vmem:[#allocation3 + $0x10] sm:$0xff] %v4692
    %4705 = vst [vmem:[#allocation3 + $0x18] sm:$0xff] %v4694
    %4706 = vst [vmem:[#allocation3 + $0x20] sm:$0xff] %v4621
    %4707 = vst [vmem:[#allocation3 + $0x28] sm:$0xff] %v4623
    %4708 = vst [vmem:[#allocation3 + $0x30] sm:$0xff] %v4698
    %4709 = vst [vmem:[#allocation3 + $0x38] sm:$0xff] %v4700
    %v4710 = vld [vmem:[#allocation3] sm:$0xff]
    %v4711 = vld [vmem:[#allocation3 + $0x8] sm:$0xff]
    %v4712 = vld [vmem:[#allocation3 + $0x10] sm:$0xff]
    %v4713 = vld [vmem:[#allocation3 + $0x18] sm:$0xff]
    %v4714 = vld [vmem:[#allocation3 + $0x20] sm:$0xff]
    %v4715 = vld [vmem:[#allocation3 + $0x28] sm:$0xff]
    %v4716 = vld [vmem:[#allocation3 + $0x30] sm:$0xff]
    %v4717 = vld [vmem:[#allocation3 + $0x38] sm:$0xff]
    %v4718 = vld [vmem:[#allocation3 + $0x40] sm:$0xff]
    %v4719 = vld [vmem:[#allocation3 + $0x48] sm:$0xff]
    %v4720 = vld [vmem:[#allocation3 + $0x50] sm:$0xff]
    %v4721 = vld [vmem:[#allocation3 + $0x58] sm:$0xff]
    %4722 = vrot.lane.b32.xlu0 %v4710, 17
    %v4723 = vpop.permute.xlu0 %4722
    %4724 = vrot.lane.b32.xlu0 %v4714, 17
    %v4725 = vpop.permute.xlu0 %4724
    %4726 = vrot.lane.b32.xlu0 %v4718, 17
    %v4727 = vpop.permute.xlu0 %4726
    %4728 = vrot.lane.b32.xlu0 %v4711, 17
    %v4729 = vpop.permute.xlu0 %4728
    %4730 = vrot.lane.b32.xlu0 %v4715, 17
    %v4731 = vpop.permute.xlu0 %4730
    %4732 = vrot.lane.b32.xlu0 %v4719, 17
    %v4733 = vpop.permute.xlu0 %4732
    %4734 = vrot.lane.b32.xlu0 %v4712, 17
    %v4735 = vpop.permute.xlu0 %4734
    %4736 = vrot.lane.b32.xlu0 %v4716, 17
    %v4737 = vpop.permute.xlu0 %4736
    %4738 = vrot.lane.b32.xlu0 %v4720, 17
    %v4739 = vpop.permute.xlu0 %4738
    %4740 = vrot.lane.b32.xlu0 %v4713, 17
    %v4741 = vpop.permute.xlu0 %4740
    %4742 = vrot.lane.b32.xlu0 %v4717, 17
    %v4743 = vpop.permute.xlu0 %4742
    %4744 = vrot.lane.b32.xlu0 %v4721, 17
    %v4745 = vpop.permute.xlu0 %4744
    %v4746 = vsel %vm38, %v4735, %v4741
    %v4747 = vsel %vm38, %v4737, %v4743
    %v4748 = vsel %vm38, %v4739, %v4745
    %v4749 = vsel %vm38, %v4729, %v4735
    %v4750 = vsel %vm38, %v4731, %v4737
    %v4751 = vsel %vm38, %v4733, %v4739
    %v4752 = vsel %vm38, %v4723, %v4729
    %v4753 = vsel %vm38, %v4725, %v4731
    %v4754 = vsel %vm38, %v4727, %v4733
    %v4755 = vsel %vm38, %v4741, %v4723
    %v4756 = vsel %vm38, %v4743, %v4725
    %v4757 = vsel %vm38, %v4745, %v4727
    %v4758 = vld [vmem:[%s1] ss:$8 sm:$0xf]
    %v4760 = vlaneseq
    %v4761 = vshrl.u32 %v4760, 7
    %v4762 = vsub.s32 0, %v4761
    %v4763 = vrot.slane %v4758, %v4762
    %v4764 = vlaneseq
    %v4765 = vshrl.u32 %v4764, 7
    %v4766 = vsub.s32 1, %v4765
    %v4767 = vrot.slane %v4758, %v4766
    %v4768 = vlaneseq
    %v4769 = vshrl.u32 %v4768, 7
    %v4770 = vsub.s32 2, %v4769
    %v4771 = vrot.slane %v4758, %v4770
    %v4772 = vlaneseq
    %v4773 = vshrl.u32 %v4772, 7
    %v4774 = vsub.s32 3, %v4773
    %v4775 = vrot.slane %v4758, %v4774
    %v4780 = vmul.f32 %v4755, %v4763
    %v4781 = vmul.f32 %v4752, %v4767
    %v4782 = vmul.f32 %v4749, %v4771
    %v4783 = vmul.f32 %v4746, %v4775
    %v4784 = vmul.f32 %v4756, %v4763
    %v4785 = vmul.f32 %v4753, %v4767
    %v4786 = vmul.f32 %v4750, %v4771
    %v4787 = vmul.f32 %v4747, %v4775
    %v4788 = vmul.f32 %v4757, %v4763
    %v4789 = vmul.f32 %v4754, %v4767
    %v4790 = vmul.f32 %v4751, %v4771
    %v4791 = vmul.f32 %v4748, %v4775
    %4792 = vst [vmem:[#allocation2] sm:$0xff] %v4780
    %4793 = vst [vmem:[#allocation2 + $0x8] sm:$0xff] %v4781
    %4794 = vst [vmem:[#allocation2 + $0x10] sm:$0xff] %v4782
    %4795 = vst [vmem:[#allocation2 + $0x18] sm:$0xff] %v4783
    %4796 = vst [vmem:[#allocation2 + $0x20] sm:$0xff] %v4784
    %4797 = vst [vmem:[#allocation2 + $0x28] sm:$0xff] %v4785
    %4798 = vst [vmem:[#allocation2 + $0x30] sm:$0xff] %v4786
    %4799 = vst [vmem:[#allocation2 + $0x38] sm:$0xff] %v4787
    %4800 = vst [vmem:[#allocation2 + $0x40] sm:$0xff] %v4788
    %4801 = vst [vmem:[#allocation2 + $0x48] sm:$0xff] %v4789
    %4802 = vst [vmem:[#allocation2 + $0x50] sm:$0xff] %v4790
    %4803 = vst [vmem:[#allocation2 + $0x58] sm:$0xff] %v4791
    %4804 = vrot.lane.b32.xlu0 %v4710, 16
    %v4805 = vpop.permute.xlu0 %4804
    %4806 = vrot.lane.b32.xlu0 %v4714, 16
    %v4807 = vpop.permute.xlu0 %4806
    %4808 = vrot.lane.b32.xlu0 %v4718, 16
    %v4809 = vpop.permute.xlu0 %4808
    %4810 = vrot.lane.b32.xlu0 %v4711, 16
    %v4811 = vpop.permute.xlu0 %4810
    %4812 = vrot.lane.b32.xlu0 %v4715, 16
    %v4813 = vpop.permute.xlu0 %4812
    %4814 = vrot.lane.b32.xlu0 %v4719, 16
    %v4815 = vpop.permute.xlu0 %4814
    %4816 = vrot.lane.b32.xlu0 %v4712, 16
    %v4817 = vpop.permute.xlu0 %4816
    %4818 = vrot.lane.b32.xlu0 %v4716, 16
    %v4819 = vpop.permute.xlu0 %4818
    %4820 = vrot.lane.b32.xlu0 %v4720, 16
    %v4821 = vpop.permute.xlu0 %4820
    %4822 = vrot.lane.b32.xlu0 %v4713, 16
    %v4823 = vpop.permute.xlu0 %4822
    %4824 = vrot.lane.b32.xlu0 %v4717, 16
    %v4825 = vpop.permute.xlu0 %4824
    %4826 = vrot.lane.b32.xlu0 %v4721, 16
    %v4827 = vpop.permute.xlu0 %4826
    %v4828 = vsel %vm81, %v4817, %v4823
    %v4829 = vsel %vm81, %v4819, %v4825
    %v4830 = vsel %vm81, %v4821, %v4827
    %v4831 = vsel %vm81, %v4811, %v4817
    %v4832 = vsel %vm81, %v4813, %v4819
    %v4833 = vsel %vm81, %v4815, %v4821
    %v4834 = vsel %vm81, %v4805, %v4811
    %v4835 = vsel %vm81, %v4807, %v4813
    %v4836 = vsel %vm81, %v4809, %v4815
    %v4837 = vsel %vm81, %v4823, %v4805
    %v4838 = vsel %vm81, %v4825, %v4807
    %v4839 = vsel %vm81, %v4827, %v4809
    %v4840 = vld [vmem:[%s86] ss:$8 sm:$0xf]
    %v4842 = vlaneseq
    %v4843 = vshrl.u32 %v4842, 7
    %v4844 = vsub.s32 0, %v4843
    %v4845 = vrot.slane %v4840, %v4844
    %v4846 = vlaneseq
    %v4847 = vshrl.u32 %v4846, 7
    %v4848 = vsub.s32 1, %v4847
    %v4849 = vrot.slane %v4840, %v4848
    %v4850 = vlaneseq
    %v4851 = vshrl.u32 %v4850, 7
    %v4852 = vsub.s32 2, %v4851
    %v4853 = vrot.slane %v4840, %v4852
    %v4854 = vlaneseq
    %v4855 = vshrl.u32 %v4854, 7
    %v4856 = vsub.s32 3, %v4855
    %v4857 = vrot.slane %v4840, %v4856
    %v4862 = vmul.f32 %v4837, %v4845
    %v4863 = vmul.f32 %v4834, %v4849
    %v4864 = vmul.f32 %v4831, %v4853
    %v4865 = vmul.f32 %v4828, %v4857
    %v4866 = vmul.f32 %v4838, %v4845
    %v4867 = vmul.f32 %v4835, %v4849
    %v4868 = vmul.f32 %v4832, %v4853
    %v4869 = vmul.f32 %v4829, %v4857
    %v4870 = vmul.f32 %v4839, %v4845
    %v4871 = vmul.f32 %v4836, %v4849
    %v4872 = vmul.f32 %v4833, %v4853
    %v4873 = vmul.f32 %v4830, %v4857
    %4874 = vst [vmem:[#allocation2 + $0x60] sm:$0xff] %v4862
    %4875 = vst [vmem:[#allocation2 + $0x68] sm:$0xff] %v4863
    %4876 = vst [vmem:[#allocation2 + $0x70] sm:$0xff] %v4864
    %4877 = vst [vmem:[#allocation2 + $0x78] sm:$0xff] %v4865
    %4878 = vst [vmem:[#allocation2 + $0x80] sm:$0xff] %v4866
    %4879 = vst [vmem:[#allocation2 + $0x88] sm:$0xff] %v4867
    %4880 = vst [vmem:[#allocation2 + $0x90] sm:$0xff] %v4868
    %4881 = vst [vmem:[#allocation2 + $0x98] sm:$0xff] %v4869
    %4882 = vst [vmem:[#allocation2 + $0xa0] sm:$0xff] %v4870
    %4883 = vst [vmem:[#allocation2 + $0xa8] sm:$0xff] %v4871
    %4884 = vst [vmem:[#allocation2 + $0xb0] sm:$0xff] %v4872
    %4885 = vst [vmem:[#allocation2 + $0xb8] sm:$0xff] %v4873
    %4886 = vrot.lane.b32.xlu0 %v4710, 15
    %v4887 = vpop.permute.xlu0 %4886
    %4888 = vrot.lane.b32.xlu0 %v4714, 15
    %v4889 = vpop.permute.xlu0 %4888
    %4890 = vrot.lane.b32.xlu0 %v4718, 15
    %v4891 = vpop.permute.xlu0 %4890
    %4892 = vrot.lane.b32.xlu0 %v4711, 15
    %v4893 = vpop.permute.xlu0 %4892
    %4894 = vrot.lane.b32.xlu0 %v4715, 15
    %v4895 = vpop.permute.xlu0 %4894
    %4896 = vrot.lane.b32.xlu0 %v4719, 15
    %v4897 = vpop.permute.xlu0 %4896
    %4898 = vrot.lane.b32.xlu0 %v4712, 15
    %v4899 = vpop.permute.xlu0 %4898
    %4900 = vrot.lane.b32.xlu0 %v4716, 15
    %v4901 = vpop.permute.xlu0 %4900
    %4902 = vrot.lane.b32.xlu0 %v4720, 15
    %v4903 = vpop.permute.xlu0 %4902
    %4904 = vrot.lane.b32.xlu0 %v4713, 15
    %v4905 = vpop.permute.xlu0 %4904
    %4906 = vrot.lane.b32.xlu0 %v4717, 15
    %v4907 = vpop.permute.xlu0 %4906
    %4908 = vrot.lane.b32.xlu0 %v4721, 15
    %v4909 = vpop.permute.xlu0 %4908
    %v4910 = vsel %vm125, %v4899, %v4905
    %v4911 = vsel %vm125, %v4901, %v4907
    %v4912 = vsel %vm125, %v4903, %v4909
    %v4913 = vsel %vm125, %v4893, %v4899
    %v4914 = vsel %vm125, %v4895, %v4901
    %v4915 = vsel %vm125, %v4897, %v4903
    %v4916 = vsel %vm125, %v4887, %v4893
    %v4917 = vsel %vm125, %v4889, %v4895
    %v4918 = vsel %vm125, %v4891, %v4897
    %v4919 = vsel %vm125, %v4905, %v4887
    %v4920 = vsel %vm125, %v4907, %v4889
    %v4921 = vsel %vm125, %v4909, %v4891
    %v4922 = vld [vmem:[%s130] ss:$8 sm:$0xf]
    %v4924 = vlaneseq
    %v4925 = vshrl.u32 %v4924, 7
    %v4926 = vsub.s32 0, %v4925
    %v4927 = vrot.slane %v4922, %v4926
    %v4928 = vlaneseq
    %v4929 = vshrl.u32 %v4928, 7
    %v4930 = vsub.s32 1, %v4929
    %v4931 = vrot.slane %v4922, %v4930
    %v4932 = vlaneseq
    %v4933 = vshrl.u32 %v4932, 7
    %v4934 = vsub.s32 2, %v4933
    %v4935 = vrot.slane %v4922, %v4934
    %v4936 = vlaneseq
    %v4937 = vshrl.u32 %v4936, 7
    %v4938 = vsub.s32 3, %v4937
    %v4939 = vrot.slane %v4922, %v4938
    %v4944 = vmul.f32 %v4919, %v4927
    %v4945 = vmul.f32 %v4916, %v4931
    %v4946 = vmul.f32 %v4913, %v4935
    %v4947 = vmul.f32 %v4910, %v4939
    %v4948 = vmul.f32 %v4920, %v4927
    %v4949 = vmul.f32 %v4917, %v4931
    %v4950 = vmul.f32 %v4914, %v4935
    %v4951 = vmul.f32 %v4911, %v4939
    %v4952 = vmul.f32 %v4921, %v4927
    %v4953 = vmul.f32 %v4918, %v4931
    %v4954 = vmul.f32 %v4915, %v4935
    %v4955 = vmul.f32 %v4912, %v4939
    %4956 = vst [vmem:[#allocation2 + $0xc0] sm:$0xff] %v4944
    %4957 = vst [vmem:[#allocation2 + $0xc8] sm:$0xff] %v4945
    %4958 = vst [vmem:[#allocation2 + $0xd0] sm:$0xff] %v4946
    %4959 = vst [vmem:[#allocation2 + $0xd8] sm:$0xff] %v4947
    %4960 = vst [vmem:[#allocation2 + $0xe0] sm:$0xff] %v4948
    %4961 = vst [vmem:[#allocation2 + $0xe8] sm:$0xff] %v4949
    %4962 = vst [vmem:[#allocation2 + $0xf0] sm:$0xff] %v4950
    %4963 = vst [vmem:[#allocation2 + $0xf8] sm:$0xff] %v4951
    %4964 = vst [vmem:[#allocation2 + $0x100] sm:$0xff] %v4952
    %4965 = vst [vmem:[#allocation2 + $0x108] sm:$0xff] %v4953
    %4966 = vst [vmem:[#allocation2 + $0x110] sm:$0xff] %v4954
    %4967 = vst [vmem:[#allocation2 + $0x118] sm:$0xff] %v4955
    %4968 = vrot.lane.b32.xlu0 %v4710, 1
    %v4969 = vpop.permute.xlu0 %4968
    %4970 = vrot.lane.b32.xlu0 %v4714, 1
    %v4971 = vpop.permute.xlu0 %4970
    %4972 = vrot.lane.b32.xlu0 %v4718, 1
    %v4973 = vpop.permute.xlu0 %4972
    %4974 = vrot.lane.b32.xlu0 %v4711, 1
    %v4975 = vpop.permute.xlu0 %4974
    %4976 = vrot.lane.b32.xlu0 %v4715, 1
    %v4977 = vpop.permute.xlu0 %4976
    %4978 = vrot.lane.b32.xlu0 %v4719, 1
    %v4979 = vpop.permute.xlu0 %4978
    %4980 = vrot.lane.b32.xlu0 %v4712, 1
    %v4981 = vpop.permute.xlu0 %4980
    %4982 = vrot.lane.b32.xlu0 %v4716, 1
    %v4983 = vpop.permute.xlu0 %4982
    %4984 = vrot.lane.b32.xlu0 %v4720, 1
    %v4985 = vpop.permute.xlu0 %4984
    %4986 = vrot.lane.b32.xlu0 %v4713, 1
    %v4987 = vpop.permute.xlu0 %4986
    %4988 = vrot.lane.b32.xlu0 %v4717, 1
    %v4989 = vpop.permute.xlu0 %4988
    %4990 = vrot.lane.b32.xlu0 %v4721, 1
    %v4991 = vpop.permute.xlu0 %4990
    %v4992 = vsel %vm169, %v4981, %v4987
    %v4993 = vsel %vm169, %v4983, %v4989
    %v4994 = vsel %vm169, %v4985, %v4991
    %v4995 = vsel %vm169, %v4975, %v4981
    %v4996 = vsel %vm169, %v4977, %v4983
    %v4997 = vsel %vm169, %v4979, %v4985
    %v4998 = vsel %vm169, %v4969, %v4975
    %v4999 = vsel %vm169, %v4971, %v4977
    %v5000 = vsel %vm169, %v4973, %v4979
    %v5001 = vsel %vm169, %v4987, %v4969
    %v5002 = vsel %vm169, %v4989, %v4971
    %v5003 = vsel %vm169, %v4991, %v4973
    %v5004 = vld [vmem:[%s174] ss:$8 sm:$0xf]
    %v5006 = vlaneseq
    %v5007 = vshrl.u32 %v5006, 7
    %v5008 = vsub.s32 0, %v5007
    %v5009 = vrot.slane %v5004, %v5008
    %v5010 = vlaneseq
    %v5011 = vshrl.u32 %v5010, 7
    %v5012 = vsub.s32 1, %v5011
    %v5013 = vrot.slane %v5004, %v5012
    %v5014 = vlaneseq
    %v5015 = vshrl.u32 %v5014, 7
    %v5016 = vsub.s32 2, %v5015
    %v5017 = vrot.slane %v5004, %v5016
    %v5018 = vlaneseq
    %v5019 = vshrl.u32 %v5018, 7
    %v5020 = vsub.s32 3, %v5019
    %v5021 = vrot.slane %v5004, %v5020
    %v5026 = vmul.f32 %v5001, %v5009
    %v5027 = vmul.f32 %v4998, %v5013
    %v5028 = vmul.f32 %v4995, %v5017
    %v5029 = vmul.f32 %v4992, %v5021
    %v5030 = vmul.f32 %v5002, %v5009
    %v5031 = vmul.f32 %v4999, %v5013
    %v5032 = vmul.f32 %v4996, %v5017
    %v5033 = vmul.f32 %v4993, %v5021
    %v5034 = vmul.f32 %v5003, %v5009
    %v5035 = vmul.f32 %v5000, %v5013
    %v5036 = vmul.f32 %v4997, %v5017
    %v5037 = vmul.f32 %v4994, %v5021
    %5038 = vst [vmem:[#allocation2 + $0x120] sm:$0xff] %v5026
    %5039 = vst [vmem:[#allocation2 + $0x128] sm:$0xff] %v5027
    %5040 = vst [vmem:[#allocation2 + $0x130] sm:$0xff] %v5028
    %5041 = vst [vmem:[#allocation2 + $0x138] sm:$0xff] %v5029
    %5042 = vst [vmem:[#allocation2 + $0x140] sm:$0xff] %v5030
    %5043 = vst [vmem:[#allocation2 + $0x148] sm:$0xff] %v5031
    %5044 = vst [vmem:[#allocation2 + $0x150] sm:$0xff] %v5032
    %5045 = vst [vmem:[#allocation2 + $0x158] sm:$0xff] %v5033
    %5046 = vst [vmem:[#allocation2 + $0x160] sm:$0xff] %v5034
    %5047 = vst [vmem:[#allocation2 + $0x168] sm:$0xff] %v5035
    %5048 = vst [vmem:[#allocation2 + $0x170] sm:$0xff] %v5036
    %5049 = vst [vmem:[#allocation2 + $0x178] sm:$0xff] %v5037
    %5050 = vst [vmem:[#allocation2 + $0x180] sm:$0xff] %v4710
    %5051 = vst [vmem:[#allocation2 + $0x188] sm:$0xff] %v4711
    %5052 = vst [vmem:[#allocation2 + $0x190] sm:$0xff] %v4712
    %5053 = vst [vmem:[#allocation2 + $0x198] sm:$0xff] %v4713
    %5054 = vst [vmem:[#allocation2 + $0x1a0] sm:$0xff] %v4714
    %5055 = vst [vmem:[#allocation2 + $0x1a8] sm:$0xff] %v4715
    %5056 = vst [vmem:[#allocation2 + $0x1b0] sm:$0xff] %v4716
    %5057 = vst [vmem:[#allocation2 + $0x1b8] sm:$0xff] %v4717
    %5058 = vst [vmem:[#allocation2 + $0x1c0] sm:$0xff] %v4718
    %5059 = vst [vmem:[#allocation2 + $0x1c8] sm:$0xff] %v4719
    %5060 = vst [vmem:[#allocation2 + $0x1d0] sm:$0xff] %v4720
    %5061 = vst [vmem:[#allocation2 + $0x1d8] sm:$0xff] %v4721
    %5062 = vrot.lane.b32.xlu0 %v4710, 127
    %v5063 = vpop.permute.xlu0 %5062
    %5064 = vrot.lane.b32.xlu0 %v4714, 127
    %v5065 = vpop.permute.xlu0 %5064
    %5066 = vrot.lane.b32.xlu0 %v4718, 127
    %v5067 = vpop.permute.xlu0 %5066
    %5068 = vrot.lane.b32.xlu0 %v4711, 127
    %v5069 = vpop.permute.xlu0 %5068
    %5070 = vrot.lane.b32.xlu0 %v4715, 127
    %v5071 = vpop.permute.xlu0 %5070
    %5072 = vrot.lane.b32.xlu0 %v4719, 127
    %v5073 = vpop.permute.xlu0 %5072
    %5074 = vrot.lane.b32.xlu0 %v4712, 127
    %v5075 = vpop.permute.xlu0 %5074
    %5076 = vrot.lane.b32.xlu0 %v4716, 127
    %v5077 = vpop.permute.xlu0 %5076
    %5078 = vrot.lane.b32.xlu0 %v4720, 127
    %v5079 = vpop.permute.xlu0 %5078
    %5080 = vrot.lane.b32.xlu0 %v4713, 127
    %v5081 = vpop.permute.xlu0 %5080
    %5082 = vrot.lane.b32.xlu0 %v4717, 127
    %v5083 = vpop.permute.xlu0 %5082
    %5084 = vrot.lane.b32.xlu0 %v4721, 127
    %v5085 = vpop.permute.xlu0 %5084
    %v5086 = vsel %vm217, %v5075, %v5081
    %v5087 = vsel %vm217, %v5077, %v5083
    %v5088 = vsel %vm217, %v5079, %v5085
    %v5089 = vsel %vm217, %v5069, %v5075
    %v5090 = vsel %vm217, %v5071, %v5077
    %v5091 = vsel %vm217, %v5073, %v5079
    %v5092 = vsel %vm217, %v5063, %v5069
    %v5093 = vsel %vm217, %v5065, %v5071
    %v5094 = vsel %vm217, %v5067, %v5073
    %v5095 = vsel %vm217, %v5081, %v5063
    %v5096 = vsel %vm217, %v5083, %v5065
    %v5097 = vsel %vm217, %v5085, %v5067
    %v5098 = vld [vmem:[%s222] ss:$8 sm:$0xf]
    %v5100 = vlaneseq
    %v5101 = vshrl.u32 %v5100, 7
    %v5102 = vsub.s32 0, %v5101
    %v5103 = vrot.slane %v5098, %v5102
    %v5104 = vlaneseq
    %v5105 = vshrl.u32 %v5104, 7
    %v5106 = vsub.s32 1, %v5105
    %v5107 = vrot.slane %v5098, %v5106
    %v5108 = vlaneseq
    %v5109 = vshrl.u32 %v5108, 7
    %v5110 = vsub.s32 2, %v5109
    %v5111 = vrot.slane %v5098, %v5110
    %v5112 = vlaneseq
    %v5113 = vshrl.u32 %v5112, 7
    %v5114 = vsub.s32 3, %v5113
    %v5115 = vrot.slane %v5098, %v5114
    %v5120 = vmul.f32 %v5092, %v5103
    %v5121 = vmul.f32 %v5089, %v5107
    %v5122 = vmul.f32 %v5086, %v5111
    %v5123 = vmul.f32 %v5095, %v5115
    %v5124 = vmul.f32 %v5093, %v5103
    %v5125 = vmul.f32 %v5090, %v5107
    %v5126 = vmul.f32 %v5087, %v5111
    %v5127 = vmul.f32 %v5096, %v5115
    %v5128 = vmul.f32 %v5094, %v5103
    %v5129 = vmul.f32 %v5091, %v5107
    %v5130 = vmul.f32 %v5088, %v5111
    %v5131 = vmul.f32 %v5097, %v5115
    %5132 = vst [vmem:[#allocation2 + $0x1e0] sm:$0xff] %v5120
    %5133 = vst [vmem:[#allocation2 + $0x1e8] sm:$0xff] %v5121
    %5134 = vst [vmem:[#allocation2 + $0x1f0] sm:$0xff] %v5122
    %5135 = vst [vmem:[#allocation2 + $0x1f8] sm:$0xff] %v5123
    %5136 = vst [vmem:[#allocation2 + $0x200] sm:$0xff] %v5124
    %5137 = vst [vmem:[#allocation2 + $0x208] sm:$0xff] %v5125
    %5138 = vst [vmem:[#allocation2 + $0x210] sm:$0xff] %v5126
    %5139 = vst [vmem:[#allocation2 + $0x218] sm:$0xff] %v5127
    %5140 = vst [vmem:[#allocation2 + $0x220] sm:$0xff] %v5128
    %5141 = vst [vmem:[#allocation2 + $0x228] sm:$0xff] %v5129
    %5142 = vst [vmem:[#allocation2 + $0x230] sm:$0xff] %v5130
    %5143 = vst [vmem:[#allocation2 + $0x238] sm:$0xff] %v5131
    %5144 = vrot.lane.b32.xlu0 %v4710, 113
    %v5145 = vpop.permute.xlu0 %5144
    %5146 = vrot.lane.b32.xlu0 %v4714, 113
    %v5147 = vpop.permute.xlu0 %5146
    %5148 = vrot.lane.b32.xlu0 %v4718, 113
    %v5149 = vpop.permute.xlu0 %5148
    %5150 = vrot.lane.b32.xlu0 %v4711, 113
    %v5151 = vpop.permute.xlu0 %5150
    %5152 = vrot.lane.b32.xlu0 %v4715, 113
    %v5153 = vpop.permute.xlu0 %5152
    %5154 = vrot.lane.b32.xlu0 %v4719, 113
    %v5155 = vpop.permute.xlu0 %5154
    %5156 = vrot.lane.b32.xlu0 %v4712, 113
    %v5157 = vpop.permute.xlu0 %5156
    %5158 = vrot.lane.b32.xlu0 %v4716, 113
    %v5159 = vpop.permute.xlu0 %5158
    %5160 = vrot.lane.b32.xlu0 %v4720, 113
    %v5161 = vpop.permute.xlu0 %5160
    %5162 = vrot.lane.b32.xlu0 %v4713, 113
    %v5163 = vpop.permute.xlu0 %5162
    %5164 = vrot.lane.b32.xlu0 %v4717, 113
    %v5165 = vpop.permute.xlu0 %5164
    %5166 = vrot.lane.b32.xlu0 %v4721, 113
    %v5167 = vpop.permute.xlu0 %5166
    %v5168 = vsel %vm261, %v5157, %v5163
    %v5169 = vsel %vm261, %v5159, %v5165
    %v5170 = vsel %vm261, %v5161, %v5167
    %v5171 = vsel %vm261, %v5151, %v5157
    %v5172 = vsel %vm261, %v5153, %v5159
    %v5173 = vsel %vm261, %v5155, %v5161
    %v5174 = vsel %vm261, %v5145, %v5151
    %v5175 = vsel %vm261, %v5147, %v5153
    %v5176 = vsel %vm261, %v5149, %v5155
    %v5177 = vsel %vm261, %v5163, %v5145
    %v5178 = vsel %vm261, %v5165, %v5147
    %v5179 = vsel %vm261, %v5167, %v5149
    %v5180 = vld [vmem:[%s266] ss:$8 sm:$0xf]
    %v5182 = vlaneseq
    %v5183 = vshrl.u32 %v5182, 7
    %v5184 = vsub.s32 0, %v5183
    %v5185 = vrot.slane %v5180, %v5184
    %v5186 = vlaneseq
    %v5187 = vshrl.u32 %v5186, 7
    %v5188 = vsub.s32 1, %v5187
    %v5189 = vrot.slane %v5180, %v5188
    %v5190 = vlaneseq
    %v5191 = vshrl.u32 %v5190, 7
    %v5192 = vsub.s32 2, %v5191
    %v5193 = vrot.slane %v5180, %v5192
    %v5194 = vlaneseq
    %v5195 = vshrl.u32 %v5194, 7
    %v5196 = vsub.s32 3, %v5195
    %v5197 = vrot.slane %v5180, %v5196
    %v5202 = vmul.f32 %v5174, %v5185
    %v5203 = vmul.f32 %v5171, %v5189
    %v5204 = vmul.f32 %v5168, %v5193
    %v5205 = vmul.f32 %v5177, %v5197
    %v5206 = vmul.f32 %v5175, %v5185
    %v5207 = vmul.f32 %v5172, %v5189
    %v5208 = vmul.f32 %v5169, %v5193
    %v5209 = vmul.f32 %v5178, %v5197
    %v5210 = vmul.f32 %v5176, %v5185
    %v5211 = vmul.f32 %v5173, %v5189
    %v5212 = vmul.f32 %v5170, %v5193
    %v5213 = vmul.f32 %v5179, %v5197
    %5214 = vst [vmem:[#allocation2 + $0x240] sm:$0xff] %v5202
    %5215 = vst [vmem:[#allocation2 + $0x248] sm:$0xff] %v5203
    %5216 = vst [vmem:[#allocation2 + $0x250] sm:$0xff] %v5204
    %5217 = vst [vmem:[#allocation2 + $0x258] sm:$0xff] %v5205
    %5218 = vst [vmem:[#allocation2 + $0x260] sm:$0xff] %v5206
    %5219 = vst [vmem:[#allocation2 + $0x268] sm:$0xff] %v5207
    %5220 = vst [vmem:[#allocation2 + $0x270] sm:$0xff] %v5208
    %5221 = vst [vmem:[#allocation2 + $0x278] sm:$0xff] %v5209
    %5222 = vst [vmem:[#allocation2 + $0x280] sm:$0xff] %v5210
    %5223 = vst [vmem:[#allocation2 + $0x288] sm:$0xff] %v5211
    %5224 = vst [vmem:[#allocation2 + $0x290] sm:$0xff] %v5212
    %5225 = vst [vmem:[#allocation2 + $0x298] sm:$0xff] %v5213
    %5226 = vrot.lane.b32.xlu0 %v4710, 112
    %v5227 = vpop.permute.xlu0 %5226
    %5228 = vrot.lane.b32.xlu0 %v4714, 112
    %v5229 = vpop.permute.xlu0 %5228
    %5230 = vrot.lane.b32.xlu0 %v4718, 112
    %v5231 = vpop.permute.xlu0 %5230
    %5232 = vrot.lane.b32.xlu0 %v4711, 112
    %v5233 = vpop.permute.xlu0 %5232
    %5234 = vrot.lane.b32.xlu0 %v4715, 112
    %v5235 = vpop.permute.xlu0 %5234
    %5236 = vrot.lane.b32.xlu0 %v4719, 112
    %v5237 = vpop.permute.xlu0 %5236
    %5238 = vrot.lane.b32.xlu0 %v4712, 112
    %v5239 = vpop.permute.xlu0 %5238
    %5240 = vrot.lane.b32.xlu0 %v4716, 112
    %v5241 = vpop.permute.xlu0 %5240
    %5242 = vrot.lane.b32.xlu0 %v4720, 112
    %v5243 = vpop.permute.xlu0 %5242
    %5244 = vrot.lane.b32.xlu0 %v4713, 112
    %v5245 = vpop.permute.xlu0 %5244
    %5246 = vrot.lane.b32.xlu0 %v4717, 112
    %v5247 = vpop.permute.xlu0 %5246
    %5248 = vrot.lane.b32.xlu0 %v4721, 112
    %v5249 = vpop.permute.xlu0 %5248
    %v5250 = vsel %vm305, %v5239, %v5245
    %v5251 = vsel %vm305, %v5241, %v5247
    %v5252 = vsel %vm305, %v5243, %v5249
    %v5253 = vsel %vm305, %v5233, %v5239
    %v5254 = vsel %vm305, %v5235, %v5241
    %v5255 = vsel %vm305, %v5237, %v5243
    %v5256 = vsel %vm305, %v5227, %v5233
    %v5257 = vsel %vm305, %v5229, %v5235
    %v5258 = vsel %vm305, %v5231, %v5237
    %v5259 = vsel %vm305, %v5245, %v5227
    %v5260 = vsel %vm305, %v5247, %v5229
    %v5261 = vsel %vm305, %v5249, %v5231
    %v5262 = vld [vmem:[%s310] ss:$8 sm:$0xf]
    %v5264 = vlaneseq
    %v5265 = vshrl.u32 %v5264, 7
    %v5266 = vsub.s32 0, %v5265
    %v5267 = vrot.slane %v5262, %v5266
    %v5268 = vlaneseq
    %v5269 = vshrl.u32 %v5268, 7
    %v5270 = vsub.s32 1, %v5269
    %v5271 = vrot.slane %v5262, %v5270
    %v5272 = vlaneseq
    %v5273 = vshrl.u32 %v5272, 7
    %v5274 = vsub.s32 2, %v5273
    %v5275 = vrot.slane %v5262, %v5274
    %v5276 = vlaneseq
    %v5277 = vshrl.u32 %v5276, 7
    %v5278 = vsub.s32 3, %v5277
    %v5279 = vrot.slane %v5262, %v5278
    %v5284 = vmul.f32 %v5256, %v5267
    %v5285 = vmul.f32 %v5253, %v5271
    %v5286 = vmul.f32 %v5250, %v5275
    %v5287 = vmul.f32 %v5259, %v5279
    %v5288 = vmul.f32 %v5257, %v5267
    %v5289 = vmul.f32 %v5254, %v5271
    %v5290 = vmul.f32 %v5251, %v5275
    %v5291 = vmul.f32 %v5260, %v5279
    %v5292 = vmul.f32 %v5258, %v5267
    %v5293 = vmul.f32 %v5255, %v5271
    %v5294 = vmul.f32 %v5252, %v5275
    %v5295 = vmul.f32 %v5261, %v5279
    %5296 = vst [vmem:[#allocation2 + $0x2a0] sm:$0xff] %v5284
    %5297 = vst [vmem:[#allocation2 + $0x2a8] sm:$0xff] %v5285
    %5298 = vst [vmem:[#allocation2 + $0x2b0] sm:$0xff] %v5286
    %5299 = vst [vmem:[#allocation2 + $0x2b8] sm:$0xff] %v5287
    %5300 = vst [vmem:[#allocation2 + $0x2c0] sm:$0xff] %v5288
    %5301 = vst [vmem:[#allocation2 + $0x2c8] sm:$0xff] %v5289
    %5302 = vst [vmem:[#allocation2 + $0x2d0] sm:$0xff] %v5290
    %5303 = vst [vmem:[#allocation2 + $0x2d8] sm:$0xff] %v5291
    %5304 = vst [vmem:[#allocation2 + $0x2e0] sm:$0xff] %v5292
    %5305 = vst [vmem:[#allocation2 + $0x2e8] sm:$0xff] %v5293
    %5306 = vst [vmem:[#allocation2 + $0x2f0] sm:$0xff] %v5294
    %5307 = vst [vmem:[#allocation2 + $0x2f8] sm:$0xff] %v5295
    %5308 = vrot.lane.b32.xlu0 %v4710, 111
    %v5309 = vpop.permute.xlu0 %5308
    %5310 = vrot.lane.b32.xlu0 %v4714, 111
    %v5311 = vpop.permute.xlu0 %5310
    %5312 = vrot.lane.b32.xlu0 %v4718, 111
    %v5313 = vpop.permute.xlu0 %5312
    %5314 = vrot.lane.b32.xlu0 %v4711, 111
    %v5315 = vpop.permute.xlu0 %5314
    %5316 = vrot.lane.b32.xlu0 %v4715, 111
    %v5317 = vpop.permute.xlu0 %5316
    %5318 = vrot.lane.b32.xlu0 %v4719, 111
    %v5319 = vpop.permute.xlu0 %5318
    %5320 = vrot.lane.b32.xlu0 %v4712, 111
    %v5321 = vpop.permute.xlu0 %5320
    %5322 = vrot.lane.b32.xlu0 %v4716, 111
    %v5323 = vpop.permute.xlu0 %5322
    %5324 = vrot.lane.b32.xlu0 %v4720, 111
    %v5325 = vpop.permute.xlu0 %5324
    %5326 = vrot.lane.b32.xlu0 %v4713, 111
    %v5327 = vpop.permute.xlu0 %5326
    %5328 = vrot.lane.b32.xlu0 %v4717, 111
    %v5329 = vpop.permute.xlu0 %5328
    %5330 = vrot.lane.b32.xlu0 %v4721, 111
    %v5331 = vpop.permute.xlu0 %5330
    %v5332 = vsel %vm349, %v5321, %v5327
    %v5333 = vsel %vm349, %v5323, %v5329
    %v5334 = vsel %vm349, %v5325, %v5331
    %v5335 = vsel %vm349, %v5315, %v5321
    %v5336 = vsel %vm349, %v5317, %v5323
    %v5337 = vsel %vm349, %v5319, %v5325
    %v5338 = vsel %vm349, %v5309, %v5315
    %v5339 = vsel %vm349, %v5311, %v5317
    %v5340 = vsel %vm349, %v5313, %v5319
    %v5341 = vsel %vm349, %v5327, %v5309
    %v5342 = vsel %vm349, %v5329, %v5311
    %v5343 = vsel %vm349, %v5331, %v5313
    %v5344 = vld [vmem:[%s354] ss:$8 sm:$0xf]
    %v5346 = vlaneseq
    %v5347 = vshrl.u32 %v5346, 7
    %v5348 = vsub.s32 0, %v5347
    %v5349 = vrot.slane %v5344, %v5348
    %v5350 = vlaneseq
    %v5351 = vshrl.u32 %v5350, 7
    %v5352 = vsub.s32 1, %v5351
    %v5353 = vrot.slane %v5344, %v5352
    %v5354 = vlaneseq
    %v5355 = vshrl.u32 %v5354, 7
    %v5356 = vsub.s32 2, %v5355
    %v5357 = vrot.slane %v5344, %v5356
    %v5358 = vlaneseq
    %v5359 = vshrl.u32 %v5358, 7
    %v5360 = vsub.s32 3, %v5359
    %v5361 = vrot.slane %v5344, %v5360
    %v5366 = vmul.f32 %v5338, %v5349
    %v5367 = vmul.f32 %v5335, %v5353
    %v5368 = vmul.f32 %v5332, %v5357
    %v5369 = vmul.f32 %v5341, %v5361
    %v5370 = vmul.f32 %v5339, %v5349
    %v5371 = vmul.f32 %v5336, %v5353
    %v5372 = vmul.f32 %v5333, %v5357
    %v5373 = vmul.f32 %v5342, %v5361
    %v5374 = vmul.f32 %v5340, %v5349
    %v5375 = vmul.f32 %v5337, %v5353
    %v5376 = vmul.f32 %v5334, %v5357
    %v5377 = vmul.f32 %v5343, %v5361
    %5378 = vst [vmem:[#allocation2 + $0x300] sm:$0xff] %v5366
    %5379 = vst [vmem:[#allocation2 + $0x308] sm:$0xff] %v5367
    %5380 = vst [vmem:[#allocation2 + $0x310] sm:$0xff] %v5368
    %5381 = vst [vmem:[#allocation2 + $0x318] sm:$0xff] %v5369
    %5382 = vst [vmem:[#allocation2 + $0x320] sm:$0xff] %v5370
    %5383 = vst [vmem:[#allocation2 + $0x328] sm:$0xff] %v5371
    %5384 = vst [vmem:[#allocation2 + $0x330] sm:$0xff] %v5372
    %5385 = vst [vmem:[#allocation2 + $0x338] sm:$0xff] %v5373
    %5386 = vst [vmem:[#allocation2 + $0x340] sm:$0xff] %v5374
    %5387 = vst [vmem:[#allocation2 + $0x348] sm:$0xff] %v5375
    %5388 = vst [vmem:[#allocation2 + $0x350] sm:$0xff] %v5376
    %5389 = vst [vmem:[#allocation2 + $0x358] sm:$0xff] %v5377
    %v5390 = vld [vmem:[%s3 + $0x40] sm:$0xff]
    %v5391 = vld [vmem:[%s3 + $0x48] sm:$0xff]
    %v5392 = vld [vmem:[%s3 + $0x50] sm:$0xff]
    %v5393 = vld [vmem:[%s3 + $0x58] sm:$0xff]
    %v5394 = vld [vmem:[#allocation2] sm:$0xff]
    %v5395 = vld [vmem:[#allocation2 + $0x8] sm:$0xff]
    %v5396 = vld [vmem:[#allocation2 + $0x10] sm:$0xff]
    %v5397 = vld [vmem:[#allocation2 + $0x18] sm:$0xff]
    %v5398 = vld [vmem:[#allocation2 + $0x20] sm:$0xff]
    %v5399 = vld [vmem:[#allocation2 + $0x28] sm:$0xff]
    %v5400 = vld [vmem:[#allocation2 + $0x30] sm:$0xff]
    %v5401 = vld [vmem:[#allocation2 + $0x38] sm:$0xff]
    %v5402 = vld [vmem:[#allocation2 + $0x40] sm:$0xff]
    %v5403 = vld [vmem:[#allocation2 + $0x48] sm:$0xff]
    %v5404 = vld [vmem:[#allocation2 + $0x50] sm:$0xff]
    %v5405 = vld [vmem:[#allocation2 + $0x58] sm:$0xff]
    %v5406 = vld [vmem:[#allocation2 + $0x60] sm:$0xff]
    %v5407 = vld [vmem:[#allocation2 + $0x68] sm:$0xff]
    %v5408 = vld [vmem:[#allocation2 + $0x70] sm:$0xff]
    %v5409 = vld [vmem:[#allocation2 + $0x78] sm:$0xff]
    %v5410 = vld [vmem:[#allocation2 + $0x80] sm:$0xff]
    %v5411 = vld [vmem:[#allocation2 + $0x88] sm:$0xff]
    %v5412 = vld [vmem:[#allocation2 + $0x90] sm:$0xff]
    %v5413 = vld [vmem:[#allocation2 + $0x98] sm:$0xff]
    %v5414 = vld [vmem:[#allocation2 + $0xa0] sm:$0xff]
    %v5415 = vld [vmem:[#allocation2 + $0xa8] sm:$0xff]
    %v5416 = vld [vmem:[#allocation2 + $0xb0] sm:$0xff]
    %v5417 = vld [vmem:[#allocation2 + $0xb8] sm:$0xff]
    %v5418 = vld [vmem:[#allocation2 + $0xc0] sm:$0xff]
    %v5419 = vld [vmem:[#allocation2 + $0xc8] sm:$0xff]
    %v5420 = vld [vmem:[#allocation2 + $0xd0] sm:$0xff]
    %v5421 = vld [vmem:[#allocation2 + $0xd8] sm:$0xff]
    %v5422 = vld [vmem:[#allocation2 + $0xe0] sm:$0xff]
    %v5423 = vld [vmem:[#allocation2 + $0xe8] sm:$0xff]
    %v5424 = vld [vmem:[#allocation2 + $0xf0] sm:$0xff]
    %v5425 = vld [vmem:[#allocation2 + $0xf8] sm:$0xff]
    %v5426 = vld [vmem:[#allocation2 + $0x100] sm:$0xff]
    %v5427 = vld [vmem:[#allocation2 + $0x108] sm:$0xff]
    %v5428 = vld [vmem:[#allocation2 + $0x110] sm:$0xff]
    %v5429 = vld [vmem:[#allocation2 + $0x118] sm:$0xff]
    %v5430 = vld [vmem:[#allocation2 + $0x120] sm:$0xff]
    %v5431 = vld [vmem:[#allocation2 + $0x128] sm:$0xff]
    %v5432 = vld [vmem:[#allocation2 + $0x130] sm:$0xff]
    %v5433 = vld [vmem:[#allocation2 + $0x138] sm:$0xff]
    %v5434 = vld [vmem:[#allocation2 + $0x140] sm:$0xff]
    %v5435 = vld [vmem:[#allocation2 + $0x148] sm:$0xff]
    %v5436 = vld [vmem:[#allocation2 + $0x150] sm:$0xff]
    %v5437 = vld [vmem:[#allocation2 + $0x158] sm:$0xff]
    %v5438 = vld [vmem:[#allocation2 + $0x160] sm:$0xff]
    %v5439 = vld [vmem:[#allocation2 + $0x168] sm:$0xff]
    %v5440 = vld [vmem:[#allocation2 + $0x170] sm:$0xff]
    %v5441 = vld [vmem:[#allocation2 + $0x178] sm:$0xff]
    %v5442 = vld [vmem:[#allocation2 + $0x180] sm:$0xff]
    %v5443 = vld [vmem:[#allocation2 + $0x188] sm:$0xff]
    %v5444 = vld [vmem:[#allocation2 + $0x190] sm:$0xff]
    %v5445 = vld [vmem:[#allocation2 + $0x198] sm:$0xff]
    %v5446 = vld [vmem:[#allocation2 + $0x1a0] sm:$0xff]
    %v5447 = vld [vmem:[#allocation2 + $0x1a8] sm:$0xff]
    %v5448 = vld [vmem:[#allocation2 + $0x1b0] sm:$0xff]
    %v5449 = vld [vmem:[#allocation2 + $0x1b8] sm:$0xff]
    %v5450 = vld [vmem:[#allocation2 + $0x1c0] sm:$0xff]
    %v5451 = vld [vmem:[#allocation2 + $0x1c8] sm:$0xff]
    %v5452 = vld [vmem:[#allocation2 + $0x1d0] sm:$0xff]
    %v5453 = vld [vmem:[#allocation2 + $0x1d8] sm:$0xff]
    %v5454 = vld [vmem:[#allocation2 + $0x1e0] sm:$0xff]
    %v5455 = vld [vmem:[#allocation2 + $0x1e8] sm:$0xff]
    %v5456 = vld [vmem:[#allocation2 + $0x1f0] sm:$0xff]
    %v5457 = vld [vmem:[#allocation2 + $0x1f8] sm:$0xff]
    %v5458 = vld [vmem:[#allocation2 + $0x200] sm:$0xff]
    %v5459 = vld [vmem:[#allocation2 + $0x208] sm:$0xff]
    %v5460 = vld [vmem:[#allocation2 + $0x210] sm:$0xff]
    %v5461 = vld [vmem:[#allocation2 + $0x218] sm:$0xff]
    %v5462 = vld [vmem:[#allocation2 + $0x220] sm:$0xff]
    %v5463 = vld [vmem:[#allocation2 + $0x228] sm:$0xff]
    %v5464 = vld [vmem:[#allocation2 + $0x230] sm:$0xff]
    %v5465 = vld [vmem:[#allocation2 + $0x238] sm:$0xff]
    %v5466 = vld [vmem:[#allocation2 + $0x240] sm:$0xff]
    %v5467 = vld [vmem:[#allocation2 + $0x248] sm:$0xff]
    %v5468 = vld [vmem:[#allocation2 + $0x250] sm:$0xff]
    %v5469 = vld [vmem:[#allocation2 + $0x258] sm:$0xff]
    %v5470 = vld [vmem:[#allocation2 + $0x260] sm:$0xff]
    %v5471 = vld [vmem:[#allocation2 + $0x268] sm:$0xff]
    %v5472 = vld [vmem:[#allocation2 + $0x270] sm:$0xff]
    %v5473 = vld [vmem:[#allocation2 + $0x278] sm:$0xff]
    %v5474 = vld [vmem:[#allocation2 + $0x280] sm:$0xff]
    %v5475 = vld [vmem:[#allocation2 + $0x288] sm:$0xff]
    %v5476 = vld [vmem:[#allocation2 + $0x290] sm:$0xff]
    %v5477 = vld [vmem:[#allocation2 + $0x298] sm:$0xff]
    %v5478 = vld [vmem:[#allocation2 + $0x2a0] sm:$0xff]
    %v5479 = vld [vmem:[#allocation2 + $0x2a8] sm:$0xff]
    %v5480 = vld [vmem:[#allocation2 + $0x2b0] sm:$0xff]
    %v5481 = vld [vmem:[#allocation2 + $0x2b8] sm:$0xff]
    %v5482 = vld [vmem:[#allocation2 + $0x2c0] sm:$0xff]
    %v5483 = vld [vmem:[#allocation2 + $0x2c8] sm:$0xff]
    %v5484 = vld [vmem:[#allocation2 + $0x2d0] sm:$0xff]
    %v5485 = vld [vmem:[#allocation2 + $0x2d8] sm:$0xff]
    %v5486 = vld [vmem:[#allocation2 + $0x2e0] sm:$0xff]
    %v5487 = vld [vmem:[#allocation2 + $0x2e8] sm:$0xff]
    %v5488 = vld [vmem:[#allocation2 + $0x2f0] sm:$0xff]
    %v5489 = vld [vmem:[#allocation2 + $0x2f8] sm:$0xff]
    %v5490 = vld [vmem:[#allocation2 + $0x300] sm:$0xff]
    %v5491 = vld [vmem:[#allocation2 + $0x308] sm:$0xff]
    %v5492 = vld [vmem:[#allocation2 + $0x310] sm:$0xff]
    %v5493 = vld [vmem:[#allocation2 + $0x318] sm:$0xff]
    %v5494 = vld [vmem:[#allocation2 + $0x320] sm:$0xff]
    %v5495 = vld [vmem:[#allocation2 + $0x328] sm:$0xff]
    %v5496 = vld [vmem:[#allocation2 + $0x330] sm:$0xff]
    %v5497 = vld [vmem:[#allocation2 + $0x338] sm:$0xff]
    %v5498 = vld [vmem:[#allocation2 + $0x340] sm:$0xff]
    %v5499 = vld [vmem:[#allocation2 + $0x348] sm:$0xff]
    %v5500 = vld [vmem:[#allocation2 + $0x350] sm:$0xff]
    %v5501 = vld [vmem:[#allocation2 + $0x358] sm:$0xff]
    %v5502 = vld [vmem:[%s5 + $0xa0] sm:$0xff]
    %v5503 = vld [vmem:[%s5 + $0xa8] sm:$0xff]
    %5505 = vset.pattern.permute.xlu0 0
    %5506 = vperm.xlu0 %5505, %v5502
    %v5507 = vpop.permute.xlu0 %5506
    %5510 = vset.pattern.permute.xlu0 0
    %5511 = vperm.xlu0 %5510, %v5503
    %v5512 = vpop.permute.xlu0 %5511
    %v5515 = vsel %vm2841, %v5391, 0
    %v5518 = vsel %vm2841, %v5393, 0
    %5520 = vmatprep.subr.mxu0 %v5455
    %5521 = vmatpush1.msra.mxu0 %v5454
    %5522 = vmatprep.subr.mxu0 %v5451
    %5523 = vmatpush1.msra.mxu0 %v5450
    %5524 = vmatprep.subr.mxu0 %v5447
    %5525 = vmatpush1.msra.mxu0 %v5446
    %5526 = vmatprep.subr.mxu0 %v5443
    %5527 = vmatpush1.msra.mxu0 %v5442
    %5528 = vmatprep.subr.mxu0 %v5439
    %5529 = vmatpush1.msra.mxu0 %v5438
    %5530 = vmatprep.subr.mxu0 %v5435
    %5531 = vmatpush1.msra.mxu0 %v5434
    %5532 = vmatprep.subr.mxu0 %v5431
    %5533 = vmatpush1.msra.mxu0 %v5430
    %5534 = vmatprep.subr.mxu0 %v5427
    %5535 = vmatpush1.msra.mxu0 %v5426
    %5536 = vmatprep.subr.mxu0 %v5423
    %5537 = vmatpush1.msra.mxu0 %v5422
    %5538 = vmatprep.subr.mxu0 %v5419
    %5539 = vmatpush1.msra.mxu0 %v5418
    %5540 = vmatprep.subr.mxu0 %v5415
    %5541 = vmatpush1.msra.mxu0 %v5414
    %5542 = vmatprep.subr.mxu0 %v5411
    %5543 = vmatpush1.msra.mxu0 %v5410
    %5544 = vmatprep.subr.mxu0 %v5407
    %5545 = vmatpush1.msra.mxu0 %v5406
    %5546 = vmatprep.subr.mxu0 %v5403
    %5547 = vmatpush1.msra.mxu0 %v5402
    %5548 = vmatprep.subr.mxu0 %v5399
    %5549 = vmatpush1.msra.mxu0 %v5398
    %5550 = vmatprep.subr.mxu0 %v5395
    %5551 = vmatpush1.msra.mxu0 %v5394
    %5552 = vmatprep.subr.mxu0 0.0
    %5553 = vmatpush2.msra.mxu0 0.0
    %5554 = vmatprep.subr.mxu0 0.0
    %5555 = vmatpush2.msra.mxu0 0.0
    %5556 = vmatprep.subr.mxu0 0.0
    %5557 = vmatpush2.msra.mxu0 0.0
    %5558 = vmatprep.subr.mxu0 0.0
    %5559 = vmatpush2.msra.mxu0 0.0
    %5560 = vmatprep.subr.mxu0 0.0
    %5561 = vmatpush2.msra.mxu0 0.0
    %5562 = vmatprep.subr.mxu0 %v5499
    %5563 = vmatpush2.msra.mxu0 %v5498
    %5564 = vmatprep.subr.mxu0 %v5495
    %5565 = vmatpush2.msra.mxu0 %v5494
    %5566 = vmatprep.subr.mxu0 %v5491
    %5567 = vmatpush2.msra.mxu0 %v5490
    %5568 = vmatprep.subr.mxu0 %v5487
    %5569 = vmatpush2.msra.mxu0 %v5486
    %5570 = vmatprep.subr.mxu0 %v5483
    %5571 = vmatpush2.msra.mxu0 %v5482
    %5572 = vmatprep.subr.mxu0 %v5479
    %5573 = vmatpush2.msra.mxu0 %v5478
    %5574 = vmatprep.subr.mxu0 %v5475
    %5575 = vmatpush2.msra.mxu0 %v5474
    %5576 = vmatprep.subr.mxu0 %v5471
    %5577 = vmatpush2.msra.mxu0 %v5470
    %5578 = vmatprep.subr.mxu0 %v5467
    %5579 = vmatpush2.msra.mxu0 %v5466
    %5580 = vmatprep.subr.mxu0 %v5463
    %5581 = vmatpush2.msra.mxu0 %v5462
    %5582 = vmatprep.subr.mxu0 %v5459
    %5583 = vmatpush2.msra.mxu0 %v5458
    %5584 = vmatprep.mubr.f32.mxu0 %v5515
    %5585 = vmatmul.mubr.f32.gmra.mxu0 %v5390
    %v5586 = vpop.f32.mrf.mxu0
    %v5587 = vadd.f32 %v5507, %v5586
    %v5588 = vpop.f32.mrf.mxu0
    %v5589 = vadd.f32 %v5507, %v5588
    %5590 = vmatprep.mubr.f32.mxu0 %v5518
    %5591 = vmatmul.mubr.f32.gmra.mxu0 %v5392
    %v5592 = vpop.f32.mrf.mxu0
    %v5593 = vadd.f32 %v5512, %v5592
    %v5594 = vpop.f32.mrf.mxu0
    %v5595 = vadd.f32 %v5512, %v5594
    %5596 = vdwg.mxu0
    %5597 = vmatprep.subr.mxu0 %v5457
    %5598 = vmatpush1.msra.mxu0 %v5456
    %5599 = vmatprep.subr.mxu0 %v5453
    %5600 = vmatpush1.msra.mxu0 %v5452
    %5601 = vmatprep.subr.mxu0 %v5449
    %5602 = vmatpush1.msra.mxu0 %v5448
    %5603 = vmatprep.subr.mxu0 %v5445
    %5604 = vmatpush1.msra.mxu0 %v5444
    %5605 = vmatprep.subr.mxu0 %v5441
    %5606 = vmatpush1.msra.mxu0 %v5440
    %5607 = vmatprep.subr.mxu0 %v5437
    %5608 = vmatpush1.msra.mxu0 %v5436
    %5609 = vmatprep.subr.mxu0 %v5433
    %5610 = vmatpush1.msra.mxu0 %v5432
    %5611 = vmatprep.subr.mxu0 %v5429
    %5612 = vmatpush1.msra.mxu0 %v5428
    %5613 = vmatprep.subr.mxu0 %v5425
    %5614 = vmatpush1.msra.mxu0 %v5424
    %5615 = vmatprep.subr.mxu0 %v5421
    %5616 = vmatpush1.msra.mxu0 %v5420
    %5617 = vmatprep.subr.mxu0 %v5417
    %5618 = vmatpush1.msra.mxu0 %v5416
    %5619 = vmatprep.subr.mxu0 %v5413
    %5620 = vmatpush1.msra.mxu0 %v5412
    %5621 = vmatprep.subr.mxu0 %v5409
    %5622 = vmatpush1.msra.mxu0 %v5408
    %5623 = vmatprep.subr.mxu0 %v5405
    %5624 = vmatpush1.msra.mxu0 %v5404
    %5625 = vmatprep.subr.mxu0 %v5401
    %5626 = vmatpush1.msra.mxu0 %v5400
    %5627 = vmatprep.subr.mxu0 %v5397
    %5628 = vmatpush1.msra.mxu0 %v5396
    %5629 = vmatprep.subr.mxu0 0.0
    %5630 = vmatpush2.msra.mxu0 0.0
    %5631 = vmatprep.subr.mxu0 0.0
    %5632 = vmatpush2.msra.mxu0 0.0
    %5633 = vmatprep.subr.mxu0 0.0
    %5634 = vmatpush2.msra.mxu0 0.0
    %5635 = vmatprep.subr.mxu0 0.0
    %5636 = vmatpush2.msra.mxu0 0.0
    %5637 = vmatprep.subr.mxu0 0.0
    %5638 = vmatpush2.msra.mxu0 0.0
    %5639 = vmatprep.subr.mxu0 %v5501
    %5640 = vmatpush2.msra.mxu0 %v5500
    %5641 = vmatprep.subr.mxu0 %v5497
    %5642 = vmatpush2.msra.mxu0 %v5496
    %5643 = vmatprep.subr.mxu0 %v5493
    %5644 = vmatpush2.msra.mxu0 %v5492
    %5645 = vmatprep.subr.mxu0 %v5489
    %5646 = vmatpush2.msra.mxu0 %v5488
    %5647 = vmatprep.subr.mxu0 %v5485
    %5648 = vmatpush2.msra.mxu0 %v5484
    %5649 = vmatprep.subr.mxu0 %v5481
    %5650 = vmatpush2.msra.mxu0 %v5480
    %5651 = vmatprep.subr.mxu0 %v5477
    %5652 = vmatpush2.msra.mxu0 %v5476
    %5653 = vmatprep.subr.mxu0 %v5473
    %5654 = vmatpush2.msra.mxu0 %v5472
    %5655 = vmatprep.subr.mxu0 %v5469
    %5656 = vmatpush2.msra.mxu0 %v5468
    %5657 = vmatprep.subr.mxu0 %v5465
    %5658 = vmatpush2.msra.mxu0 %v5464
    %5659 = vmatprep.subr.mxu0 %v5461
    %5660 = vmatpush2.msra.mxu0 %v5460
    %5661 = vmatprep.mubr.f32.mxu0 %v5515
    %5662 = vmatmul.mubr.f32.gmra.mxu0 %v5390
    %v5663 = vpop.f32.mrf.mxu0
    %v5664 = vadd.f32 %v5507, %v5663
    %v5665 = vpop.f32.mrf.mxu0
    %v5666 = vadd.f32 %v5507, %v5665
    %5667 = vmatprep.mubr.f32.mxu0 %v5518
    %5668 = vmatmul.mubr.f32.gmra.mxu0 %v5392
    %v5669 = vpop.f32.mrf.mxu0
    %v5670 = vadd.f32 %v5512, %v5669
    %v5671 = vpop.f32.mrf.mxu0
    %v5672 = vadd.f32 %v5512, %v5671
    %5673 = vdwg.mxu0
    %v5674 = vmax.f32 %v5587, 0.0
    %v5675 = vmax.f32 %v5589, 0.0
    %v5676 = vmax.f32 %v5664, 0.0
    %v5677 = vmax.f32 %v5666, 0.0
    %v5678 = vmax.f32 %v5593, 0.0
    %v5679 = vmax.f32 %v5595, 0.0
    %v5680 = vmax.f32 %v5670, 0.0
    %v5681 = vmax.f32 %v5672, 0.0
    %v5682 = vld [vmem:[%s4 + $0x60] sm:$0xff]
    %v5683 = vld [vmem:[%s4 + $0x68] sm:$0xff]
    %v5684 = vld [vmem:[%s5 + $0xb0] sm:$0xff]
    %v5685 = vld [vmem:[%s5 + $0xb8] sm:$0xff]
    %5687 = vset.pattern.permute.xlu0 0
    %5688 = vperm.xlu0 %5687, %v5684
    %v5689 = vpop.permute.xlu0 %5688
    %5692 = vset.pattern.permute.xlu0 0
    %5693 = vperm.xlu0 %5692, %v5685
    %v5694 = vpop.permute.xlu0 %5693
    %v5697 = vsel %vm1686, %v5682, 0
    %v5700 = vsel %vm1686, %v5683, 0
    %5702 = vmatprep.subr.mxu0 0.0
    %5703 = vmatpush1.msra.mxu0 0.0
    %5704 = vmatprep.subr.mxu0 0.0
    %5705 = vmatpush1.msra.mxu0 0.0
    %5706 = vmatprep.subr.mxu0 0.0
    %5707 = vmatpush1.msra.mxu0 0.0
    %5708 = vmatprep.subr.mxu0 0.0
    %5709 = vmatpush1.msra.mxu0 0.0
    %5710 = vmatprep.subr.mxu0 0.0
    %5711 = vmatpush1.msra.mxu0 0.0
    %5712 = vmatprep.subr.mxu0 0.0
    %5713 = vmatpush1.msra.mxu0 0.0
    %5714 = vmatprep.subr.mxu0 0.0
    %5715 = vmatpush1.msra.mxu0 0.0
    %5716 = vmatprep.subr.mxu0 0.0
    %5717 = vmatpush1.msra.mxu0 0.0
    %5718 = vmatprep.subr.mxu0 0.0
    %5719 = vmatpush1.msra.mxu0 0.0
    %5720 = vmatprep.subr.mxu0 0.0
    %5721 = vmatpush1.msra.mxu0 0.0
    %5722 = vmatprep.subr.mxu0 0.0
    %5723 = vmatpush1.msra.mxu0 0.0
    %5724 = vmatprep.subr.mxu0 0.0
    %5725 = vmatpush1.msra.mxu0 0.0
    %5726 = vmatprep.subr.mxu0 0.0
    %5727 = vmatpush1.msra.mxu0 0.0
    %5728 = vmatprep.subr.mxu0 0.0
    %5729 = vmatpush1.msra.mxu0 0.0
    %5730 = vmatprep.subr.mxu0 %v5679
    %5731 = vmatpush1.msra.mxu0 %v5678
    %5732 = vmatprep.subr.mxu0 %v5675
    %5733 = vmatpush1.msra.mxu0 %v5674
    %5734 = vmatprep.subr.mxu0 0.0
    %5735 = vmatpush2.msra.mxu0 0.0
    %5736 = vmatprep.subr.mxu0 0.0
    %5737 = vmatpush2.msra.mxu0 0.0
    %5738 = vmatprep.subr.mxu0 0.0
    %5739 = vmatpush2.msra.mxu0 0.0
    %5740 = vmatprep.subr.mxu0 0.0
    %5741 = vmatpush2.msra.mxu0 0.0
    %5742 = vmatprep.subr.mxu0 0.0
    %5743 = vmatpush2.msra.mxu0 0.0
    %5744 = vmatprep.subr.mxu0 0.0
    %5745 = vmatpush2.msra.mxu0 0.0
    %5746 = vmatprep.subr.mxu0 0.0
    %5747 = vmatpush2.msra.mxu0 0.0
    %5748 = vmatprep.subr.mxu0 0.0
    %5749 = vmatpush2.msra.mxu0 0.0
    %5750 = vmatprep.subr.mxu0 0.0
    %5751 = vmatpush2.msra.mxu0 0.0
    %5752 = vmatprep.subr.mxu0 0.0
    %5753 = vmatpush2.msra.mxu0 0.0
    %5754 = vmatprep.subr.mxu0 0.0
    %5755 = vmatpush2.msra.mxu0 0.0
    %5756 = vmatprep.subr.mxu0 0.0
    %5757 = vmatpush2.msra.mxu0 0.0
    %5758 = vmatprep.subr.mxu0 0.0
    %5759 = vmatpush2.msra.mxu0 0.0
    %5760 = vmatprep.subr.mxu0 0.0
    %5761 = vmatpush2.msra.mxu0 0.0
    %5762 = vmatprep.subr.mxu0 0.0
    %5763 = vmatpush2.msra.mxu0 0.0
    %5764 = vmatprep.subr.mxu0 0.0
    %5765 = vmatpush2.msra.mxu0 0.0
    %5766 = vmatprep.mubr.f32.mxu0 0.0
    %5767 = vmatmul.mubr.f32.gmra.mxu0 %v5697
    %v5768 = vpop.f32.mrf.mxu0
    %v5769 = vadd.f32 %v5689, %v5768
    %v5770 = vpop.f32.mrf.mxu0
    %v5771 = vadd.f32 %v5689, %v5770
    %5772 = vmatprep.mubr.f32.mxu0 0.0
    %5773 = vmatmul.mubr.f32.gmra.mxu0 %v5700
    %v5774 = vpop.f32.mrf.mxu0
    %v5775 = vadd.f32 %v5694, %v5774
    %v5776 = vpop.f32.mrf.mxu0
    %v5777 = vadd.f32 %v5694, %v5776
    %5778 = vdwg.mxu0
    %5779 = vmatprep.subr.mxu0 0.0
    %5780 = vmatpush1.msra.mxu0 0.0
    %5781 = vmatprep.subr.mxu0 0.0
    %5782 = vmatpush1.msra.mxu0 0.0
    %5783 = vmatprep.subr.mxu0 0.0
    %5784 = vmatpush1.msra.mxu0 0.0
    %5785 = vmatprep.subr.mxu0 0.0
    %5786 = vmatpush1.msra.mxu0 0.0
    %5787 = vmatprep.subr.mxu0 0.0
    %5788 = vmatpush1.msra.mxu0 0.0
    %5789 = vmatprep.subr.mxu0 0.0
    %5790 = vmatpush1.msra.mxu0 0.0
    %5791 = vmatprep.subr.mxu0 0.0
    %5792 = vmatpush1.msra.mxu0 0.0
    %5793 = vmatprep.subr.mxu0 0.0
    %5794 = vmatpush1.msra.mxu0 0.0
    %5795 = vmatprep.subr.mxu0 0.0
    %5796 = vmatpush1.msra.mxu0 0.0
    %5797 = vmatprep.subr.mxu0 0.0
    %5798 = vmatpush1.msra.mxu0 0.0
    %5799 = vmatprep.subr.mxu0 0.0
    %5800 = vmatpush1.msra.mxu0 0.0
    %5801 = vmatprep.subr.mxu0 0.0
    %5802 = vmatpush1.msra.mxu0 0.0
    %5803 = vmatprep.subr.mxu0 0.0
    %5804 = vmatpush1.msra.mxu0 0.0
    %5805 = vmatprep.subr.mxu0 0.0
    %5806 = vmatpush1.msra.mxu0 0.0
    %5807 = vmatprep.subr.mxu0 %v5681
    %5808 = vmatpush1.msra.mxu0 %v5680
    %5809 = vmatprep.subr.mxu0 %v5677
    %5810 = vmatpush1.msra.mxu0 %v5676
    %5811 = vmatprep.subr.mxu0 0.0
    %5812 = vmatpush2.msra.mxu0 0.0
    %5813 = vmatprep.subr.mxu0 0.0
    %5814 = vmatpush2.msra.mxu0 0.0
    %5815 = vmatprep.subr.mxu0 0.0
    %5816 = vmatpush2.msra.mxu0 0.0
    %5817 = vmatprep.subr.mxu0 0.0
    %5818 = vmatpush2.msra.mxu0 0.0
    %5819 = vmatprep.subr.mxu0 0.0
    %5820 = vmatpush2.msra.mxu0 0.0
    %5821 = vmatprep.subr.mxu0 0.0
    %5822 = vmatpush2.msra.mxu0 0.0
    %5823 = vmatprep.subr.mxu0 0.0
    %5824 = vmatpush2.msra.mxu0 0.0
    %5825 = vmatprep.subr.mxu0 0.0
    %5826 = vmatpush2.msra.mxu0 0.0
    %5827 = vmatprep.subr.mxu0 0.0
    %5828 = vmatpush2.msra.mxu0 0.0
    %5829 = vmatprep.subr.mxu0 0.0
    %5830 = vmatpush2.msra.mxu0 0.0
    %5831 = vmatprep.subr.mxu0 0.0
    %5832 = vmatpush2.msra.mxu0 0.0
    %5833 = vmatprep.subr.mxu0 0.0
    %5834 = vmatpush2.msra.mxu0 0.0
    %5835 = vmatprep.subr.mxu0 0.0
    %5836 = vmatpush2.msra.mxu0 0.0
    %5837 = vmatprep.subr.mxu0 0.0
    %5838 = vmatpush2.msra.mxu0 0.0
    %5839 = vmatprep.subr.mxu0 0.0
    %5840 = vmatpush2.msra.mxu0 0.0
    %5841 = vmatprep.subr.mxu0 0.0
    %5842 = vmatpush2.msra.mxu0 0.0
    %5843 = vmatprep.mubr.f32.mxu0 0.0
    %5844 = vmatmul.mubr.f32.gmra.mxu0 %v5697
    %v5845 = vpop.f32.mrf.mxu0
    %v5846 = vadd.f32 %v5689, %v5845
    %v5847 = vpop.f32.mrf.mxu0
    %v5848 = vadd.f32 %v5689, %v5847
    %5849 = vmatprep.mubr.f32.mxu0 0.0
    %5850 = vmatmul.mubr.f32.gmra.mxu0 %v5700
    %v5851 = vpop.f32.mrf.mxu0
    %v5852 = vadd.f32 %v5694, %v5851
    %v5853 = vpop.f32.mrf.mxu0
    %v5854 = vadd.f32 %v5694, %v5853
    %5855 = vdwg.mxu0
    %v5856 = vmax.f32 %v5769, 0.0
    %v5857 = vmax.f32 %v5771, 0.0
    %v5858 = vmax.f32 %v5846, 0.0
    %v5859 = vmax.f32 %v5848, 0.0
    %v5860 = vmax.f32 %v5775, 0.0
    %v5861 = vmax.f32 %v5777, 0.0
    %v5862 = vmax.f32 %v5852, 0.0
    %v5863 = vmax.f32 %v5854, 0.0
    %v5864 = vld [vmem:[%s4 + $0x70] sm:$0xff]
    %v5865 = vld [vmem:[%s4 + $0x78] sm:$0xff]
    %v5866 = vld [vmem:[%s5 + $0xc0] sm:$0xff]
    %v5867 = vld [vmem:[%s5 + $0xc8] sm:$0xff]
    %5869 = vset.pattern.permute.xlu0 0
    %5870 = vperm.xlu0 %5869, %v5866
    %v5871 = vpop.permute.xlu0 %5870
    %5874 = vset.pattern.permute.xlu0 0
    %5875 = vperm.xlu0 %5874, %v5867
    %v5876 = vpop.permute.xlu0 %5875
    %v5879 = vsel %vm1686, %v5864, 0
    %v5882 = vsel %vm1686, %v5865, 0
    %5884 = vmatprep.subr.mxu0 0.0
    %5885 = vmatpush1.msra.mxu0 0.0
    %5886 = vmatprep.subr.mxu0 0.0
    %5887 = vmatpush1.msra.mxu0 0.0
    %5888 = vmatprep.subr.mxu0 0.0
    %5889 = vmatpush1.msra.mxu0 0.0
    %5890 = vmatprep.subr.mxu0 0.0
    %5891 = vmatpush1.msra.mxu0 0.0
    %5892 = vmatprep.subr.mxu0 0.0
    %5893 = vmatpush1.msra.mxu0 0.0
    %5894 = vmatprep.subr.mxu0 0.0
    %5895 = vmatpush1.msra.mxu0 0.0
    %5896 = vmatprep.subr.mxu0 0.0
    %5897 = vmatpush1.msra.mxu0 0.0
    %5898 = vmatprep.subr.mxu0 0.0
    %5899 = vmatpush1.msra.mxu0 0.0
    %5900 = vmatprep.subr.mxu0 0.0
    %5901 = vmatpush1.msra.mxu0 0.0
    %5902 = vmatprep.subr.mxu0 0.0
    %5903 = vmatpush1.msra.mxu0 0.0
    %5904 = vmatprep.subr.mxu0 0.0
    %5905 = vmatpush1.msra.mxu0 0.0
    %5906 = vmatprep.subr.mxu0 0.0
    %5907 = vmatpush1.msra.mxu0 0.0
    %5908 = vmatprep.subr.mxu0 0.0
    %5909 = vmatpush1.msra.mxu0 0.0
    %5910 = vmatprep.subr.mxu0 0.0
    %5911 = vmatpush1.msra.mxu0 0.0
    %5912 = vmatprep.subr.mxu0 %v5861
    %5913 = vmatpush1.msra.mxu0 %v5860
    %5914 = vmatprep.subr.mxu0 %v5857
    %5915 = vmatpush1.msra.mxu0 %v5856
    %5916 = vmatprep.subr.mxu0 0.0
    %5917 = vmatpush2.msra.mxu0 0.0
    %5918 = vmatprep.subr.mxu0 0.0
    %5919 = vmatpush2.msra.mxu0 0.0
    %5920 = vmatprep.subr.mxu0 0.0
    %5921 = vmatpush2.msra.mxu0 0.0
    %5922 = vmatprep.subr.mxu0 0.0
    %5923 = vmatpush2.msra.mxu0 0.0
    %5924 = vmatprep.subr.mxu0 0.0
    %5925 = vmatpush2.msra.mxu0 0.0
    %5926 = vmatprep.subr.mxu0 0.0
    %5927 = vmatpush2.msra.mxu0 0.0
    %5928 = vmatprep.subr.mxu0 0.0
    %5929 = vmatpush2.msra.mxu0 0.0
    %5930 = vmatprep.subr.mxu0 0.0
    %5931 = vmatpush2.msra.mxu0 0.0
    %5932 = vmatprep.subr.mxu0 0.0
    %5933 = vmatpush2.msra.mxu0 0.0
    %5934 = vmatprep.subr.mxu0 0.0
    %5935 = vmatpush2.msra.mxu0 0.0
    %5936 = vmatprep.subr.mxu0 0.0
    %5937 = vmatpush2.msra.mxu0 0.0
    %5938 = vmatprep.subr.mxu0 0.0
    %5939 = vmatpush2.msra.mxu0 0.0
    %5940 = vmatprep.subr.mxu0 0.0
    %5941 = vmatpush2.msra.mxu0 0.0
    %5942 = vmatprep.subr.mxu0 0.0
    %5943 = vmatpush2.msra.mxu0 0.0
    %5944 = vmatprep.subr.mxu0 0.0
    %5945 = vmatpush2.msra.mxu0 0.0
    %5946 = vmatprep.subr.mxu0 0.0
    %5947 = vmatpush2.msra.mxu0 0.0
    %5948 = vmatprep.mubr.f32.mxu0 0.0
    %5949 = vmatmul.mubr.f32.gmra.mxu0 %v5879
    %v5950 = vpop.f32.mrf.mxu0
    %v5951 = vadd.f32 %v5871, %v5950
    %v5952 = vpop.f32.mrf.mxu0
    %v5953 = vadd.f32 %v5871, %v5952
    %5954 = vmatprep.mubr.f32.mxu0 0.0
    %5955 = vmatmul.mubr.f32.gmra.mxu0 %v5882
    %v5956 = vpop.f32.mrf.mxu0
    %v5957 = vadd.f32 %v5876, %v5956
    %v5958 = vpop.f32.mrf.mxu0
    %v5959 = vadd.f32 %v5876, %v5958
    %5960 = vdwg.mxu0
    %5961 = vmatprep.subr.mxu0 0.0
    %5962 = vmatpush1.msra.mxu0 0.0
    %5963 = vmatprep.subr.mxu0 0.0
    %5964 = vmatpush1.msra.mxu0 0.0
    %5965 = vmatprep.subr.mxu0 0.0
    %5966 = vmatpush1.msra.mxu0 0.0
    %5967 = vmatprep.subr.mxu0 0.0
    %5968 = vmatpush1.msra.mxu0 0.0
    %5969 = vmatprep.subr.mxu0 0.0
    %5970 = vmatpush1.msra.mxu0 0.0
    %5971 = vmatprep.subr.mxu0 0.0
    %5972 = vmatpush1.msra.mxu0 0.0
    %5973 = vmatprep.subr.mxu0 0.0
    %5974 = vmatpush1.msra.mxu0 0.0
    %5975 = vmatprep.subr.mxu0 0.0
    %5976 = vmatpush1.msra.mxu0 0.0
    %5977 = vmatprep.subr.mxu0 0.0
    %5978 = vmatpush1.msra.mxu0 0.0
    %5979 = vmatprep.subr.mxu0 0.0
    %5980 = vmatpush1.msra.mxu0 0.0
    %5981 = vmatprep.subr.mxu0 0.0
    %5982 = vmatpush1.msra.mxu0 0.0
    %5983 = vmatprep.subr.mxu0 0.0
    %5984 = vmatpush1.msra.mxu0 0.0
    %5985 = vmatprep.subr.mxu0 0.0
    %5986 = vmatpush1.msra.mxu0 0.0
    %5987 = vmatprep.subr.mxu0 0.0
    %5988 = vmatpush1.msra.mxu0 0.0
    %5989 = vmatprep.subr.mxu0 %v5863
    %5990 = vmatpush1.msra.mxu0 %v5862
    %5991 = vmatprep.subr.mxu0 %v5859
    %5992 = vmatpush1.msra.mxu0 %v5858
    %5993 = vmatprep.subr.mxu0 0.0
    %5994 = vmatpush2.msra.mxu0 0.0
    %5995 = vmatprep.subr.mxu0 0.0
    %5996 = vmatpush2.msra.mxu0 0.0
    %5997 = vmatprep.subr.mxu0 0.0
    %5998 = vmatpush2.msra.mxu0 0.0
    %5999 = vmatprep.subr.mxu0 0.0
    %6000 = vmatpush2.msra.mxu0 0.0
    %6001 = vmatprep.subr.mxu0 0.0
    %6002 = vmatpush2.msra.mxu0 0.0
    %6003 = vmatprep.subr.mxu0 0.0
    %6004 = vmatpush2.msra.mxu0 0.0
    %6005 = vmatprep.subr.mxu0 0.0
    %6006 = vmatpush2.msra.mxu0 0.0
    %6007 = vmatprep.subr.mxu0 0.0
    %6008 = vmatpush2.msra.mxu0 0.0
    %6009 = vmatprep.subr.mxu0 0.0
    %6010 = vmatpush2.msra.mxu0 0.0
    %6011 = vmatprep.subr.mxu0 0.0
    %6012 = vmatpush2.msra.mxu0 0.0
    %6013 = vmatprep.subr.mxu0 0.0
    %6014 = vmatpush2.msra.mxu0 0.0
    %6015 = vmatprep.subr.mxu0 0.0
    %6016 = vmatpush2.msra.mxu0 0.0
    %6017 = vmatprep.subr.mxu0 0.0
    %6018 = vmatpush2.msra.mxu0 0.0
    %6019 = vmatprep.subr.mxu0 0.0
    %6020 = vmatpush2.msra.mxu0 0.0
    %6021 = vmatprep.subr.mxu0 0.0
    %6022 = vmatpush2.msra.mxu0 0.0
    %6023 = vmatprep.subr.mxu0 0.0
    %6024 = vmatpush2.msra.mxu0 0.0
    %6025 = vmatprep.mubr.f32.mxu0 0.0
    %6026 = vmatmul.mubr.f32.gmra.mxu0 %v5879
    %v6027 = vpop.f32.mrf.mxu0
    %v6028 = vadd.f32 %v5871, %v6027
    %v6029 = vpop.f32.mrf.mxu0
    %v6030 = vadd.f32 %v5871, %v6029
    %6031 = vmatprep.mubr.f32.mxu0 0.0
    %6032 = vmatmul.mubr.f32.gmra.mxu0 %v5882
    %v6033 = vpop.f32.mrf.mxu0
    %v6034 = vadd.f32 %v5876, %v6033
    %v6035 = vpop.f32.mrf.mxu0
    %v6036 = vadd.f32 %v5876, %v6035
    %6037 = vdwg.mxu0
    %6038 = vst [vmem:[#allocation3] sm:$0xff] %v5951
    %6039 = vst [vmem:[#allocation3 + $0x8] sm:$0xff] %v5953
    %6040 = vst [vmem:[#allocation3 + $0x10] sm:$0xff] %v6028
    %6041 = vst [vmem:[#allocation3 + $0x18] sm:$0xff] %v6030
    %6042 = vst [vmem:[#allocation3 + $0x20] sm:$0xff] %v5957
    %6043 = vst [vmem:[#allocation3 + $0x28] sm:$0xff] %v5959
    %6044 = vst [vmem:[#allocation3 + $0x30] sm:$0xff] %v6034
    %6045 = vst [vmem:[#allocation3 + $0x38] sm:$0xff] %v6036
    %v6046 = vld [vmem:[#allocation3] sm:$0xff]
    %v6047 = vld [vmem:[#allocation3 + $0x8] sm:$0xff]
    %v6048 = vld [vmem:[#allocation3 + $0x10] sm:$0xff]
    %v6049 = vld [vmem:[#allocation3 + $0x18] sm:$0xff]
    %v6050 = vld [vmem:[#allocation3 + $0x20] sm:$0xff]
    %v6051 = vld [vmem:[#allocation3 + $0x28] sm:$0xff]
    %v6052 = vld [vmem:[#allocation3 + $0x30] sm:$0xff]
    %v6053 = vld [vmem:[#allocation3 + $0x38] sm:$0xff]
    %v6054 = vld [vmem:[#allocation3 + $0x40] sm:$0xff]
    %v6055 = vld [vmem:[#allocation3 + $0x48] sm:$0xff]
    %v6056 = vld [vmem:[#allocation3 + $0x50] sm:$0xff]
    %v6057 = vld [vmem:[#allocation3 + $0x58] sm:$0xff]
    %6058 = vrot.lane.b32.xlu0 %v6046, 17
    %v6059 = vpop.permute.xlu0 %6058
    %6060 = vrot.lane.b32.xlu0 %v6050, 17
    %v6061 = vpop.permute.xlu0 %6060
    %6062 = vrot.lane.b32.xlu0 %v6054, 17
    %v6063 = vpop.permute.xlu0 %6062
    %6064 = vrot.lane.b32.xlu0 %v6047, 17
    %v6065 = vpop.permute.xlu0 %6064
    %6066 = vrot.lane.b32.xlu0 %v6051, 17
    %v6067 = vpop.permute.xlu0 %6066
    %6068 = vrot.lane.b32.xlu0 %v6055, 17
    %v6069 = vpop.permute.xlu0 %6068
    %6070 = vrot.lane.b32.xlu0 %v6048, 17
    %v6071 = vpop.permute.xlu0 %6070
    %6072 = vrot.lane.b32.xlu0 %v6052, 17
    %v6073 = vpop.permute.xlu0 %6072
    %6074 = vrot.lane.b32.xlu0 %v6056, 17
    %v6075 = vpop.permute.xlu0 %6074
    %6076 = vrot.lane.b32.xlu0 %v6049, 17
    %v6077 = vpop.permute.xlu0 %6076
    %6078 = vrot.lane.b32.xlu0 %v6053, 17
    %v6079 = vpop.permute.xlu0 %6078
    %6080 = vrot.lane.b32.xlu0 %v6057, 17
    %v6081 = vpop.permute.xlu0 %6080
    %v6082 = vsel %vm38, %v6071, %v6077
    %v6083 = vsel %vm38, %v6073, %v6079
    %v6084 = vsel %vm38, %v6075, %v6081
    %v6085 = vsel %vm38, %v6065, %v6071
    %v6086 = vsel %vm38, %v6067, %v6073
    %v6087 = vsel %vm38, %v6069, %v6075
    %v6088 = vsel %vm38, %v6059, %v6065
    %v6089 = vsel %vm38, %v6061, %v6067
    %v6090 = vsel %vm38, %v6063, %v6069
    %v6091 = vsel %vm38, %v6077, %v6059
    %v6092 = vsel %vm38, %v6079, %v6061
    %v6093 = vsel %vm38, %v6081, %v6063
    %v6094 = vld [vmem:[%s1] ss:$8 sm:$0xf]
    %v6096 = vlaneseq
    %v6097 = vshrl.u32 %v6096, 7
    %v6098 = vsub.s32 0, %v6097
    %v6099 = vrot.slane %v6094, %v6098
    %v6100 = vlaneseq
    %v6101 = vshrl.u32 %v6100, 7
    %v6102 = vsub.s32 1, %v6101
    %v6103 = vrot.slane %v6094, %v6102
    %v6104 = vlaneseq
    %v6105 = vshrl.u32 %v6104, 7
    %v6106 = vsub.s32 2, %v6105
    %v6107 = vrot.slane %v6094, %v6106
    %v6108 = vlaneseq
    %v6109 = vshrl.u32 %v6108, 7
    %v6110 = vsub.s32 3, %v6109
    %v6111 = vrot.slane %v6094, %v6110
    %v6116 = vmul.f32 %v6091, %v6099
    %v6117 = vmul.f32 %v6088, %v6103
    %v6118 = vmul.f32 %v6085, %v6107
    %v6119 = vmul.f32 %v6082, %v6111
    %v6120 = vmul.f32 %v6092, %v6099
    %v6121 = vmul.f32 %v6089, %v6103
    %v6122 = vmul.f32 %v6086, %v6107
    %v6123 = vmul.f32 %v6083, %v6111
    %v6124 = vmul.f32 %v6093, %v6099
    %v6125 = vmul.f32 %v6090, %v6103
    %v6126 = vmul.f32 %v6087, %v6107
    %v6127 = vmul.f32 %v6084, %v6111
    %6128 = vst [vmem:[#allocation2] sm:$0xff] %v6116
    %6129 = vst [vmem:[#allocation2 + $0x8] sm:$0xff] %v6117
    %6130 = vst [vmem:[#allocation2 + $0x10] sm:$0xff] %v6118
    %6131 = vst [vmem:[#allocation2 + $0x18] sm:$0xff] %v6119
    %6132 = vst [vmem:[#allocation2 + $0x20] sm:$0xff] %v6120
    %6133 = vst [vmem:[#allocation2 + $0x28] sm:$0xff] %v6121
    %6134 = vst [vmem:[#allocation2 + $0x30] sm:$0xff] %v6122
    %6135 = vst [vmem:[#allocation2 + $0x38] sm:$0xff] %v6123
    %6136 = vst [vmem:[#allocation2 + $0x40] sm:$0xff] %v6124
    %6137 = vst [vmem:[#allocation2 + $0x48] sm:$0xff] %v6125
    %6138 = vst [vmem:[#allocation2 + $0x50] sm:$0xff] %v6126
    %6139 = vst [vmem:[#allocation2 + $0x58] sm:$0xff] %v6127
    %6140 = vrot.lane.b32.xlu0 %v6046, 16
    %v6141 = vpop.permute.xlu0 %6140
    %6142 = vrot.lane.b32.xlu0 %v6050, 16
    %v6143 = vpop.permute.xlu0 %6142
    %6144 = vrot.lane.b32.xlu0 %v6054, 16
    %v6145 = vpop.permute.xlu0 %6144
    %6146 = vrot.lane.b32.xlu0 %v6047, 16
    %v6147 = vpop.permute.xlu0 %6146
    %6148 = vrot.lane.b32.xlu0 %v6051, 16
    %v6149 = vpop.permute.xlu0 %6148
    %6150 = vrot.lane.b32.xlu0 %v6055, 16
    %v6151 = vpop.permute.xlu0 %6150
    %6152 = vrot.lane.b32.xlu0 %v6048, 16
    %v6153 = vpop.permute.xlu0 %6152
    %6154 = vrot.lane.b32.xlu0 %v6052, 16
    %v6155 = vpop.permute.xlu0 %6154
    %6156 = vrot.lane.b32.xlu0 %v6056, 16
    %v6157 = vpop.permute.xlu0 %6156
    %6158 = vrot.lane.b32.xlu0 %v6049, 16
    %v6159 = vpop.permute.xlu0 %6158
    %6160 = vrot.lane.b32.xlu0 %v6053, 16
    %v6161 = vpop.permute.xlu0 %6160
    %6162 = vrot.lane.b32.xlu0 %v6057, 16
    %v6163 = vpop.permute.xlu0 %6162
    %v6164 = vsel %vm81, %v6153, %v6159
    %v6165 = vsel %vm81, %v6155, %v6161
    %v6166 = vsel %vm81, %v6157, %v6163
    %v6167 = vsel %vm81, %v6147, %v6153
    %v6168 = vsel %vm81, %v6149, %v6155
    %v6169 = vsel %vm81, %v6151, %v6157
    %v6170 = vsel %vm81, %v6141, %v6147
    %v6171 = vsel %vm81, %v6143, %v6149
    %v6172 = vsel %vm81, %v6145, %v6151
    %v6173 = vsel %vm81, %v6159, %v6141
    %v6174 = vsel %vm81, %v6161, %v6143
    %v6175 = vsel %vm81, %v6163, %v6145
    %v6176 = vld [vmem:[%s86] ss:$8 sm:$0xf]
    %v6178 = vlaneseq
    %v6179 = vshrl.u32 %v6178, 7
    %v6180 = vsub.s32 0, %v6179
    %v6181 = vrot.slane %v6176, %v6180
    %v6182 = vlaneseq
    %v6183 = vshrl.u32 %v6182, 7
    %v6184 = vsub.s32 1, %v6183
    %v6185 = vrot.slane %v6176, %v6184
    %v6186 = vlaneseq
    %v6187 = vshrl.u32 %v6186, 7
    %v6188 = vsub.s32 2, %v6187
    %v6189 = vrot.slane %v6176, %v6188
    %v6190 = vlaneseq
    %v6191 = vshrl.u32 %v6190, 7
    %v6192 = vsub.s32 3, %v6191
    %v6193 = vrot.slane %v6176, %v6192
    %v6198 = vmul.f32 %v6173, %v6181
    %v6199 = vmul.f32 %v6170, %v6185
    %v6200 = vmul.f32 %v6167, %v6189
    %v6201 = vmul.f32 %v6164, %v6193
    %v6202 = vmul.f32 %v6174, %v6181
    %v6203 = vmul.f32 %v6171, %v6185
    %v6204 = vmul.f32 %v6168, %v6189
    %v6205 = vmul.f32 %v6165, %v6193
    %v6206 = vmul.f32 %v6175, %v6181
    %v6207 = vmul.f32 %v6172, %v6185
    %v6208 = vmul.f32 %v6169, %v6189
    %v6209 = vmul.f32 %v6166, %v6193
    %6210 = vst [vmem:[#allocation2 + $0x60] sm:$0xff] %v6198
    %6211 = vst [vmem:[#allocation2 + $0x68] sm:$0xff] %v6199
    %6212 = vst [vmem:[#allocation2 + $0x70] sm:$0xff] %v6200
    %6213 = vst [vmem:[#allocation2 + $0x78] sm:$0xff] %v6201
    %6214 = vst [vmem:[#allocation2 + $0x80] sm:$0xff] %v6202
    %6215 = vst [vmem:[#allocation2 + $0x88] sm:$0xff] %v6203
    %6216 = vst [vmem:[#allocation2 + $0x90] sm:$0xff] %v6204
    %6217 = vst [vmem:[#allocation2 + $0x98] sm:$0xff] %v6205
    %6218 = vst [vmem:[#allocation2 + $0xa0] sm:$0xff] %v6206
    %6219 = vst [vmem:[#allocation2 + $0xa8] sm:$0xff] %v6207
    %6220 = vst [vmem:[#allocation2 + $0xb0] sm:$0xff] %v6208
    %6221 = vst [vmem:[#allocation2 + $0xb8] sm:$0xff] %v6209
    %6222 = vrot.lane.b32.xlu0 %v6046, 15
    %v6223 = vpop.permute.xlu0 %6222
    %6224 = vrot.lane.b32.xlu0 %v6050, 15
    %v6225 = vpop.permute.xlu0 %6224
    %6226 = vrot.lane.b32.xlu0 %v6054, 15
    %v6227 = vpop.permute.xlu0 %6226
    %6228 = vrot.lane.b32.xlu0 %v6047, 15
    %v6229 = vpop.permute.xlu0 %6228
    %6230 = vrot.lane.b32.xlu0 %v6051, 15
    %v6231 = vpop.permute.xlu0 %6230
    %6232 = vrot.lane.b32.xlu0 %v6055, 15
    %v6233 = vpop.permute.xlu0 %6232
    %6234 = vrot.lane.b32.xlu0 %v6048, 15
    %v6235 = vpop.permute.xlu0 %6234
    %6236 = vrot.lane.b32.xlu0 %v6052, 15
    %v6237 = vpop.permute.xlu0 %6236
    %6238 = vrot.lane.b32.xlu0 %v6056, 15
    %v6239 = vpop.permute.xlu0 %6238
    %6240 = vrot.lane.b32.xlu0 %v6049, 15
    %v6241 = vpop.permute.xlu0 %6240
    %6242 = vrot.lane.b32.xlu0 %v6053, 15
    %v6243 = vpop.permute.xlu0 %6242
    %6244 = vrot.lane.b32.xlu0 %v6057, 15
    %v6245 = vpop.permute.xlu0 %6244
    %v6246 = vsel %vm125, %v6235, %v6241
    %v6247 = vsel %vm125, %v6237, %v6243
    %v6248 = vsel %vm125, %v6239, %v6245
    %v6249 = vsel %vm125, %v6229, %v6235
    %v6250 = vsel %vm125, %v6231, %v6237
    %v6251 = vsel %vm125, %v6233, %v6239
    %v6252 = vsel %vm125, %v6223, %v6229
    %v6253 = vsel %vm125, %v6225, %v6231
    %v6254 = vsel %vm125, %v6227, %v6233
    %v6255 = vsel %vm125, %v6241, %v6223
    %v6256 = vsel %vm125, %v6243, %v6225
    %v6257 = vsel %vm125, %v6245, %v6227
    %v6258 = vld [vmem:[%s130] ss:$8 sm:$0xf]
    %v6260 = vlaneseq
    %v6261 = vshrl.u32 %v6260, 7
    %v6262 = vsub.s32 0, %v6261
    %v6263 = vrot.slane %v6258, %v6262
    %v6264 = vlaneseq
    %v6265 = vshrl.u32 %v6264, 7
    %v6266 = vsub.s32 1, %v6265
    %v6267 = vrot.slane %v6258, %v6266
    %v6268 = vlaneseq
    %v6269 = vshrl.u32 %v6268, 7
    %v6270 = vsub.s32 2, %v6269
    %v6271 = vrot.slane %v6258, %v6270
    %v6272 = vlaneseq
    %v6273 = vshrl.u32 %v6272, 7
    %v6274 = vsub.s32 3, %v6273
    %v6275 = vrot.slane %v6258, %v6274
    %v6280 = vmul.f32 %v6255, %v6263
    %v6281 = vmul.f32 %v6252, %v6267
    %v6282 = vmul.f32 %v6249, %v6271
    %v6283 = vmul.f32 %v6246, %v6275
    %v6284 = vmul.f32 %v6256, %v6263
    %v6285 = vmul.f32 %v6253, %v6267
    %v6286 = vmul.f32 %v6250, %v6271
    %v6287 = vmul.f32 %v6247, %v6275
    %v6288 = vmul.f32 %v6257, %v6263
    %v6289 = vmul.f32 %v6254, %v6267
    %v6290 = vmul.f32 %v6251, %v6271
    %v6291 = vmul.f32 %v6248, %v6275
    %6292 = vst [vmem:[#allocation2 + $0xc0] sm:$0xff] %v6280
    %6293 = vst [vmem:[#allocation2 + $0xc8] sm:$0xff] %v6281
    %6294 = vst [vmem:[#allocation2 + $0xd0] sm:$0xff] %v6282
    %6295 = vst [vmem:[#allocation2 + $0xd8] sm:$0xff] %v6283
    %6296 = vst [vmem:[#allocation2 + $0xe0] sm:$0xff] %v6284
    %6297 = vst [vmem:[#allocation2 + $0xe8] sm:$0xff] %v6285
    %6298 = vst [vmem:[#allocation2 + $0xf0] sm:$0xff] %v6286
    %6299 = vst [vmem:[#allocation2 + $0xf8] sm:$0xff] %v6287
    %6300 = vst [vmem:[#allocation2 + $0x100] sm:$0xff] %v6288
    %6301 = vst [vmem:[#allocation2 + $0x108] sm:$0xff] %v6289
    %6302 = vst [vmem:[#allocation2 + $0x110] sm:$0xff] %v6290
    %6303 = vst [vmem:[#allocation2 + $0x118] sm:$0xff] %v6291
    %6304 = vrot.lane.b32.xlu0 %v6046, 1
    %v6305 = vpop.permute.xlu0 %6304
    %6306 = vrot.lane.b32.xlu0 %v6050, 1
    %v6307 = vpop.permute.xlu0 %6306
    %6308 = vrot.lane.b32.xlu0 %v6054, 1
    %v6309 = vpop.permute.xlu0 %6308
    %6310 = vrot.lane.b32.xlu0 %v6047, 1
    %v6311 = vpop.permute.xlu0 %6310
    %6312 = vrot.lane.b32.xlu0 %v6051, 1
    %v6313 = vpop.permute.xlu0 %6312
    %6314 = vrot.lane.b32.xlu0 %v6055, 1
    %v6315 = vpop.permute.xlu0 %6314
    %6316 = vrot.lane.b32.xlu0 %v6048, 1
    %v6317 = vpop.permute.xlu0 %6316
    %6318 = vrot.lane.b32.xlu0 %v6052, 1
    %v6319 = vpop.permute.xlu0 %6318
    %6320 = vrot.lane.b32.xlu0 %v6056, 1
    %v6321 = vpop.permute.xlu0 %6320
    %6322 = vrot.lane.b32.xlu0 %v6049, 1
    %v6323 = vpop.permute.xlu0 %6322
    %6324 = vrot.lane.b32.xlu0 %v6053, 1
    %v6325 = vpop.permute.xlu0 %6324
    %6326 = vrot.lane.b32.xlu0 %v6057, 1
    %v6327 = vpop.permute.xlu0 %6326
    %v6328 = vsel %vm169, %v6317, %v6323
    %v6329 = vsel %vm169, %v6319, %v6325
    %v6330 = vsel %vm169, %v6321, %v6327
    %v6331 = vsel %vm169, %v6311, %v6317
    %v6332 = vsel %vm169, %v6313, %v6319
    %v6333 = vsel %vm169, %v6315, %v6321
    %v6334 = vsel %vm169, %v6305, %v6311
    %v6335 = vsel %vm169, %v6307, %v6313
    %v6336 = vsel %vm169, %v6309, %v6315
    %v6337 = vsel %vm169, %v6323, %v6305
    %v6338 = vsel %vm169, %v6325, %v6307
    %v6339 = vsel %vm169, %v6327, %v6309
    %v6340 = vld [vmem:[%s174] ss:$8 sm:$0xf]
    %v6342 = vlaneseq
    %v6343 = vshrl.u32 %v6342, 7
    %v6344 = vsub.s32 0, %v6343
    %v6345 = vrot.slane %v6340, %v6344
    %v6346 = vlaneseq
    %v6347 = vshrl.u32 %v6346, 7
    %v6348 = vsub.s32 1, %v6347
    %v6349 = vrot.slane %v6340, %v6348
    %v6350 = vlaneseq
    %v6351 = vshrl.u32 %v6350, 7
    %v6352 = vsub.s32 2, %v6351
    %v6353 = vrot.slane %v6340, %v6352
    %v6354 = vlaneseq
    %v6355 = vshrl.u32 %v6354, 7
    %v6356 = vsub.s32 3, %v6355
    %v6357 = vrot.slane %v6340, %v6356
    %v6362 = vmul.f32 %v6337, %v6345
    %v6363 = vmul.f32 %v6334, %v6349
    %v6364 = vmul.f32 %v6331, %v6353
    %v6365 = vmul.f32 %v6328, %v6357
    %v6366 = vmul.f32 %v6338, %v6345
    %v6367 = vmul.f32 %v6335, %v6349
    %v6368 = vmul.f32 %v6332, %v6353
    %v6369 = vmul.f32 %v6329, %v6357
    %v6370 = vmul.f32 %v6339, %v6345
    %v6371 = vmul.f32 %v6336, %v6349
    %v6372 = vmul.f32 %v6333, %v6353
    %v6373 = vmul.f32 %v6330, %v6357
    %6374 = vst [vmem:[#allocation2 + $0x120] sm:$0xff] %v6362
    %6375 = vst [vmem:[#allocation2 + $0x128] sm:$0xff] %v6363
    %6376 = vst [vmem:[#allocation2 + $0x130] sm:$0xff] %v6364
    %6377 = vst [vmem:[#allocation2 + $0x138] sm:$0xff] %v6365
    %6378 = vst [vmem:[#allocation2 + $0x140] sm:$0xff] %v6366
    %6379 = vst [vmem:[#allocation2 + $0x148] sm:$0xff] %v6367
    %6380 = vst [vmem:[#allocation2 + $0x150] sm:$0xff] %v6368
    %6381 = vst [vmem:[#allocation2 + $0x158] sm:$0xff] %v6369
    %6382 = vst [vmem:[#allocation2 + $0x160] sm:$0xff] %v6370
    %6383 = vst [vmem:[#allocation2 + $0x168] sm:$0xff] %v6371
    %6384 = vst [vmem:[#allocation2 + $0x170] sm:$0xff] %v6372
    %6385 = vst [vmem:[#allocation2 + $0x178] sm:$0xff] %v6373
    %6386 = vst [vmem:[#allocation2 + $0x180] sm:$0xff] %v6046
    %6387 = vst [vmem:[#allocation2 + $0x188] sm:$0xff] %v6047
    %6388 = vst [vmem:[#allocation2 + $0x190] sm:$0xff] %v6048
    %6389 = vst [vmem:[#allocation2 + $0x198] sm:$0xff] %v6049
    %6390 = vst [vmem:[#allocation2 + $0x1a0] sm:$0xff] %v6050
    %6391 = vst [vmem:[#allocation2 + $0x1a8] sm:$0xff] %v6051
    %6392 = vst [vmem:[#allocation2 + $0x1b0] sm:$0xff] %v6052
    %6393 = vst [vmem:[#allocation2 + $0x1b8] sm:$0xff] %v6053
    %6394 = vst [vmem:[#allocation2 + $0x1c0] sm:$0xff] %v6054
    %6395 = vst [vmem:[#allocation2 + $0x1c8] sm:$0xff] %v6055
    %6396 = vst [vmem:[#allocation2 + $0x1d0] sm:$0xff] %v6056
    %6397 = vst [vmem:[#allocation2 + $0x1d8] sm:$0xff] %v6057
    %6398 = vrot.lane.b32.xlu0 %v6046, 127
    %v6399 = vpop.permute.xlu0 %6398
    %6400 = vrot.lane.b32.xlu0 %v6050, 127
    %v6401 = vpop.permute.xlu0 %6400
    %6402 = vrot.lane.b32.xlu0 %v6054, 127
    %v6403 = vpop.permute.xlu0 %6402
    %6404 = vrot.lane.b32.xlu0 %v6047, 127
    %v6405 = vpop.permute.xlu0 %6404
    %6406 = vrot.lane.b32.xlu0 %v6051, 127
    %v6407 = vpop.permute.xlu0 %6406
    %6408 = vrot.lane.b32.xlu0 %v6055, 127
    %v6409 = vpop.permute.xlu0 %6408
    %6410 = vrot.lane.b32.xlu0 %v6048, 127
    %v6411 = vpop.permute.xlu0 %6410
    %6412 = vrot.lane.b32.xlu0 %v6052, 127
    %v6413 = vpop.permute.xlu0 %6412
    %6414 = vrot.lane.b32.xlu0 %v6056, 127
    %v6415 = vpop.permute.xlu0 %6414
    %6416 = vrot.lane.b32.xlu0 %v6049, 127
    %v6417 = vpop.permute.xlu0 %6416
    %6418 = vrot.lane.b32.xlu0 %v6053, 127
    %v6419 = vpop.permute.xlu0 %6418
    %6420 = vrot.lane.b32.xlu0 %v6057, 127
    %v6421 = vpop.permute.xlu0 %6420
    %v6422 = vsel %vm217, %v6411, %v6417
    %v6423 = vsel %vm217, %v6413, %v6419
    %v6424 = vsel %vm217, %v6415, %v6421
    %v6425 = vsel %vm217, %v6405, %v6411
    %v6426 = vsel %vm217, %v6407, %v6413
    %v6427 = vsel %vm217, %v6409, %v6415
    %v6428 = vsel %vm217, %v6399, %v6405
    %v6429 = vsel %vm217, %v6401, %v6407
    %v6430 = vsel %vm217, %v6403, %v6409
    %v6431 = vsel %vm217, %v6417, %v6399
    %v6432 = vsel %vm217, %v6419, %v6401
    %v6433 = vsel %vm217, %v6421, %v6403
    %v6434 = vld [vmem:[%s222] ss:$8 sm:$0xf]
    %v6436 = vlaneseq
    %v6437 = vshrl.u32 %v6436, 7
    %v6438 = vsub.s32 0, %v6437
    %v6439 = vrot.slane %v6434, %v6438
    %v6440 = vlaneseq
    %v6441 = vshrl.u32 %v6440, 7
    %v6442 = vsub.s32 1, %v6441
    %v6443 = vrot.slane %v6434, %v6442
    %v6444 = vlaneseq
    %v6445 = vshrl.u32 %v6444, 7
    %v6446 = vsub.s32 2, %v6445
    %v6447 = vrot.slane %v6434, %v6446
    %v6448 = vlaneseq
    %v6449 = vshrl.u32 %v6448, 7
    %v6450 = vsub.s32 3, %v6449
    %v6451 = vrot.slane %v6434, %v6450
    %v6456 = vmul.f32 %v6428, %v6439
    %v6457 = vmul.f32 %v6425, %v6443
    %v6458 = vmul.f32 %v6422, %v6447
    %v6459 = vmul.f32 %v6431, %v6451
    %v6460 = vmul.f32 %v6429, %v6439
    %v6461 = vmul.f32 %v6426, %v6443
    %v6462 = vmul.f32 %v6423, %v6447
    %v6463 = vmul.f32 %v6432, %v6451
    %v6464 = vmul.f32 %v6430, %v6439
    %v6465 = vmul.f32 %v6427, %v6443
    %v6466 = vmul.f32 %v6424, %v6447
    %v6467 = vmul.f32 %v6433, %v6451
    %6468 = vst [vmem:[#allocation2 + $0x1e0] sm:$0xff] %v6456
    %6469 = vst [vmem:[#allocation2 + $0x1e8] sm:$0xff] %v6457
    %6470 = vst [vmem:[#allocation2 + $0x1f0] sm:$0xff] %v6458
    %6471 = vst [vmem:[#allocation2 + $0x1f8] sm:$0xff] %v6459
    %6472 = vst [vmem:[#allocation2 + $0x200] sm:$0xff] %v6460
    %6473 = vst [vmem:[#allocation2 + $0x208] sm:$0xff] %v6461
    %6474 = vst [vmem:[#allocation2 + $0x210] sm:$0xff] %v6462
    %6475 = vst [vmem:[#allocation2 + $0x218] sm:$0xff] %v6463
    %6476 = vst [vmem:[#allocation2 + $0x220] sm:$0xff] %v6464
    %6477 = vst [vmem:[#allocation2 + $0x228] sm:$0xff] %v6465
    %6478 = vst [vmem:[#allocation2 + $0x230] sm:$0xff] %v6466
    %6479 = vst [vmem:[#allocation2 + $0x238] sm:$0xff] %v6467
    %6480 = vrot.lane.b32.xlu0 %v6046, 113
    %v6481 = vpop.permute.xlu0 %6480
    %6482 = vrot.lane.b32.xlu0 %v6050, 113
    %v6483 = vpop.permute.xlu0 %6482
    %6484 = vrot.lane.b32.xlu0 %v6054, 113
    %v6485 = vpop.permute.xlu0 %6484
    %6486 = vrot.lane.b32.xlu0 %v6047, 113
    %v6487 = vpop.permute.xlu0 %6486
    %6488 = vrot.lane.b32.xlu0 %v6051, 113
    %v6489 = vpop.permute.xlu0 %6488
    %6490 = vrot.lane.b32.xlu0 %v6055, 113
    %v6491 = vpop.permute.xlu0 %6490
    %6492 = vrot.lane.b32.xlu0 %v6048, 113
    %v6493 = vpop.permute.xlu0 %6492
    %6494 = vrot.lane.b32.xlu0 %v6052, 113
    %v6495 = vpop.permute.xlu0 %6494
    %6496 = vrot.lane.b32.xlu0 %v6056, 113
    %v6497 = vpop.permute.xlu0 %6496
    %6498 = vrot.lane.b32.xlu0 %v6049, 113
    %v6499 = vpop.permute.xlu0 %6498
    %6500 = vrot.lane.b32.xlu0 %v6053, 113
    %v6501 = vpop.permute.xlu0 %6500
    %6502 = vrot.lane.b32.xlu0 %v6057, 113
    %v6503 = vpop.permute.xlu0 %6502
    %v6504 = vsel %vm261, %v6493, %v6499
    %v6505 = vsel %vm261, %v6495, %v6501
    %v6506 = vsel %vm261, %v6497, %v6503
    %v6507 = vsel %vm261, %v6487, %v6493
    %v6508 = vsel %vm261, %v6489, %v6495
    %v6509 = vsel %vm261, %v6491, %v6497
    %v6510 = vsel %vm261, %v6481, %v6487
    %v6511 = vsel %vm261, %v6483, %v6489
    %v6512 = vsel %vm261, %v6485, %v6491
    %v6513 = vsel %vm261, %v6499, %v6481
    %v6514 = vsel %vm261, %v6501, %v6483
    %v6515 = vsel %vm261, %v6503, %v6485
    %v6516 = vld [vmem:[%s266] ss:$8 sm:$0xf]
    %v6518 = vlaneseq
    %v6519 = vshrl.u32 %v6518, 7
    %v6520 = vsub.s32 0, %v6519
    %v6521 = vrot.slane %v6516, %v6520
    %v6522 = vlaneseq
    %v6523 = vshrl.u32 %v6522, 7
    %v6524 = vsub.s32 1, %v6523
    %v6525 = vrot.slane %v6516, %v6524
    %v6526 = vlaneseq
    %v6527 = vshrl.u32 %v6526, 7
    %v6528 = vsub.s32 2, %v6527
    %v6529 = vrot.slane %v6516, %v6528
    %v6530 = vlaneseq
    %v6531 = vshrl.u32 %v6530, 7
    %v6532 = vsub.s32 3, %v6531
    %v6533 = vrot.slane %v6516, %v6532
    %v6538 = vmul.f32 %v6510, %v6521
    %v6539 = vmul.f32 %v6507, %v6525
    %v6540 = vmul.f32 %v6504, %v6529
    %v6541 = vmul.f32 %v6513, %v6533
    %v6542 = vmul.f32 %v6511, %v6521
    %v6543 = vmul.f32 %v6508, %v6525
    %v6544 = vmul.f32 %v6505, %v6529
    %v6545 = vmul.f32 %v6514, %v6533
    %v6546 = vmul.f32 %v6512, %v6521
    %v6547 = vmul.f32 %v6509, %v6525
    %v6548 = vmul.f32 %v6506, %v6529
    %v6549 = vmul.f32 %v6515, %v6533
    %6550 = vst [vmem:[#allocation2 + $0x240] sm:$0xff] %v6538
    %6551 = vst [vmem:[#allocation2 + $0x248] sm:$0xff] %v6539
    %6552 = vst [vmem:[#allocation2 + $0x250] sm:$0xff] %v6540
    %6553 = vst [vmem:[#allocation2 + $0x258] sm:$0xff] %v6541
    %6554 = vst [vmem:[#allocation2 + $0x260] sm:$0xff] %v6542
    %6555 = vst [vmem:[#allocation2 + $0x268] sm:$0xff] %v6543
    %6556 = vst [vmem:[#allocation2 + $0x270] sm:$0xff] %v6544
    %6557 = vst [vmem:[#allocation2 + $0x278] sm:$0xff] %v6545
    %6558 = vst [vmem:[#allocation2 + $0x280] sm:$0xff] %v6546
    %6559 = vst [vmem:[#allocation2 + $0x288] sm:$0xff] %v6547
    %6560 = vst [vmem:[#allocation2 + $0x290] sm:$0xff] %v6548
    %6561 = vst [vmem:[#allocation2 + $0x298] sm:$0xff] %v6549
    %6562 = vrot.lane.b32.xlu0 %v6046, 112
    %v6563 = vpop.permute.xlu0 %6562
    %6564 = vrot.lane.b32.xlu0 %v6050, 112
    %v6565 = vpop.permute.xlu0 %6564
    %6566 = vrot.lane.b32.xlu0 %v6054, 112
    %v6567 = vpop.permute.xlu0 %6566
    %6568 = vrot.lane.b32.xlu0 %v6047, 112
    %v6569 = vpop.permute.xlu0 %6568
    %6570 = vrot.lane.b32.xlu0 %v6051, 112
    %v6571 = vpop.permute.xlu0 %6570
    %6572 = vrot.lane.b32.xlu0 %v6055, 112
    %v6573 = vpop.permute.xlu0 %6572
    %6574 = vrot.lane.b32.xlu0 %v6048, 112
    %v6575 = vpop.permute.xlu0 %6574
    %6576 = vrot.lane.b32.xlu0 %v6052, 112
    %v6577 = vpop.permute.xlu0 %6576
    %6578 = vrot.lane.b32.xlu0 %v6056, 112
    %v6579 = vpop.permute.xlu0 %6578
    %6580 = vrot.lane.b32.xlu0 %v6049, 112
    %v6581 = vpop.permute.xlu0 %6580
    %6582 = vrot.lane.b32.xlu0 %v6053, 112
    %v6583 = vpop.permute.xlu0 %6582
    %6584 = vrot.lane.b32.xlu0 %v6057, 112
    %v6585 = vpop.permute.xlu0 %6584
    %v6586 = vsel %vm305, %v6575, %v6581
    %v6587 = vsel %vm305, %v6577, %v6583
    %v6588 = vsel %vm305, %v6579, %v6585
    %v6589 = vsel %vm305, %v6569, %v6575
    %v6590 = vsel %vm305, %v6571, %v6577
    %v6591 = vsel %vm305, %v6573, %v6579
    %v6592 = vsel %vm305, %v6563, %v6569
    %v6593 = vsel %vm305, %v6565, %v6571
    %v6594 = vsel %vm305, %v6567, %v6573
    %v6595 = vsel %vm305, %v6581, %v6563
    %v6596 = vsel %vm305, %v6583, %v6565
    %v6597 = vsel %vm305, %v6585, %v6567
    %v6598 = vld [vmem:[%s310] ss:$8 sm:$0xf]
    %v6600 = vlaneseq
    %v6601 = vshrl.u32 %v6600, 7
    %v6602 = vsub.s32 0, %v6601
    %v6603 = vrot.slane %v6598, %v6602
    %v6604 = vlaneseq
    %v6605 = vshrl.u32 %v6604, 7
    %v6606 = vsub.s32 1, %v6605
    %v6607 = vrot.slane %v6598, %v6606
    %v6608 = vlaneseq
    %v6609 = vshrl.u32 %v6608, 7
    %v6610 = vsub.s32 2, %v6609
    %v6611 = vrot.slane %v6598, %v6610
    %v6612 = vlaneseq
    %v6613 = vshrl.u32 %v6612, 7
    %v6614 = vsub.s32 3, %v6613
    %v6615 = vrot.slane %v6598, %v6614
    %v6620 = vmul.f32 %v6592, %v6603
    %v6621 = vmul.f32 %v6589, %v6607
    %v6622 = vmul.f32 %v6586, %v6611
    %v6623 = vmul.f32 %v6595, %v6615
    %v6624 = vmul.f32 %v6593, %v6603
    %v6625 = vmul.f32 %v6590, %v6607
    %v6626 = vmul.f32 %v6587, %v6611
    %v6627 = vmul.f32 %v6596, %v6615
    %v6628 = vmul.f32 %v6594, %v6603
    %v6629 = vmul.f32 %v6591, %v6607
    %v6630 = vmul.f32 %v6588, %v6611
    %v6631 = vmul.f32 %v6597, %v6615
    %6632 = vst [vmem:[#allocation2 + $0x2a0] sm:$0xff] %v6620
    %6633 = vst [vmem:[#allocation2 + $0x2a8] sm:$0xff] %v6621
    %6634 = vst [vmem:[#allocation2 + $0x2b0] sm:$0xff] %v6622
    %6635 = vst [vmem:[#allocation2 + $0x2b8] sm:$0xff] %v6623
    %6636 = vst [vmem:[#allocation2 + $0x2c0] sm:$0xff] %v6624
    %6637 = vst [vmem:[#allocation2 + $0x2c8] sm:$0xff] %v6625
    %6638 = vst [vmem:[#allocation2 + $0x2d0] sm:$0xff] %v6626
    %6639 = vst [vmem:[#allocation2 + $0x2d8] sm:$0xff] %v6627
    %6640 = vst [vmem:[#allocation2 + $0x2e0] sm:$0xff] %v6628
    %6641 = vst [vmem:[#allocation2 + $0x2e8] sm:$0xff] %v6629
    %6642 = vst [vmem:[#allocation2 + $0x2f0] sm:$0xff] %v6630
    %6643 = vst [vmem:[#allocation2 + $0x2f8] sm:$0xff] %v6631
    %6644 = vrot.lane.b32.xlu0 %v6046, 111
    %v6645 = vpop.permute.xlu0 %6644
    %6646 = vrot.lane.b32.xlu0 %v6050, 111
    %v6647 = vpop.permute.xlu0 %6646
    %6648 = vrot.lane.b32.xlu0 %v6054, 111
    %v6649 = vpop.permute.xlu0 %6648
    %6650 = vrot.lane.b32.xlu0 %v6047, 111
    %v6651 = vpop.permute.xlu0 %6650
    %6652 = vrot.lane.b32.xlu0 %v6051, 111
    %v6653 = vpop.permute.xlu0 %6652
    %6654 = vrot.lane.b32.xlu0 %v6055, 111
    %v6655 = vpop.permute.xlu0 %6654
    %6656 = vrot.lane.b32.xlu0 %v6048, 111
    %v6657 = vpop.permute.xlu0 %6656
    %6658 = vrot.lane.b32.xlu0 %v6052, 111
    %v6659 = vpop.permute.xlu0 %6658
    %6660 = vrot.lane.b32.xlu0 %v6056, 111
    %v6661 = vpop.permute.xlu0 %6660
    %6662 = vrot.lane.b32.xlu0 %v6049, 111
    %v6663 = vpop.permute.xlu0 %6662
    %6664 = vrot.lane.b32.xlu0 %v6053, 111
    %v6665 = vpop.permute.xlu0 %6664
    %6666 = vrot.lane.b32.xlu0 %v6057, 111
    %v6667 = vpop.permute.xlu0 %6666
    %v6668 = vsel %vm349, %v6657, %v6663
    %v6669 = vsel %vm349, %v6659, %v6665
    %v6670 = vsel %vm349, %v6661, %v6667
    %v6671 = vsel %vm349, %v6651, %v6657
    %v6672 = vsel %vm349, %v6653, %v6659
    %v6673 = vsel %vm349, %v6655, %v6661
    %v6674 = vsel %vm349, %v6645, %v6651
    %v6675 = vsel %vm349, %v6647, %v6653
    %v6676 = vsel %vm349, %v6649, %v6655
    %v6677 = vsel %vm349, %v6663, %v6645
    %v6678 = vsel %vm349, %v6665, %v6647
    %v6679 = vsel %vm349, %v6667, %v6649
    %v6680 = vld [vmem:[%s354] ss:$8 sm:$0xf]
    %v6682 = vlaneseq
    %v6683 = vshrl.u32 %v6682, 7
    %v6684 = vsub.s32 0, %v6683
    %v6685 = vrot.slane %v6680, %v6684
    %v6686 = vlaneseq
    %v6687 = vshrl.u32 %v6686, 7
    %v6688 = vsub.s32 1, %v6687
    %v6689 = vrot.slane %v6680, %v6688
    %v6690 = vlaneseq
    %v6691 = vshrl.u32 %v6690, 7
    %v6692 = vsub.s32 2, %v6691
    %v6693 = vrot.slane %v6680, %v6692
    %v6694 = vlaneseq
    %v6695 = vshrl.u32 %v6694, 7
    %v6696 = vsub.s32 3, %v6695
    %v6697 = vrot.slane %v6680, %v6696
    %v6702 = vmul.f32 %v6674, %v6685
    %v6703 = vmul.f32 %v6671, %v6689
    %v6704 = vmul.f32 %v6668, %v6693
    %v6705 = vmul.f32 %v6677, %v6697
    %v6706 = vmul.f32 %v6675, %v6685
    %v6707 = vmul.f32 %v6672, %v6689
    %v6708 = vmul.f32 %v6669, %v6693
    %v6709 = vmul.f32 %v6678, %v6697
    %v6710 = vmul.f32 %v6676, %v6685
    %v6711 = vmul.f32 %v6673, %v6689
    %v6712 = vmul.f32 %v6670, %v6693
    %v6713 = vmul.f32 %v6679, %v6697
    %6714 = vst [vmem:[#allocation2 + $0x300] sm:$0xff] %v6702
    %6715 = vst [vmem:[#allocation2 + $0x308] sm:$0xff] %v6703
    %6716 = vst [vmem:[#allocation2 + $0x310] sm:$0xff] %v6704
    %6717 = vst [vmem:[#allocation2 + $0x318] sm:$0xff] %v6705
    %6718 = vst [vmem:[#allocation2 + $0x320] sm:$0xff] %v6706
    %6719 = vst [vmem:[#allocation2 + $0x328] sm:$0xff] %v6707
    %6720 = vst [vmem:[#allocation2 + $0x330] sm:$0xff] %v6708
    %6721 = vst [vmem:[#allocation2 + $0x338] sm:$0xff] %v6709
    %6722 = vst [vmem:[#allocation2 + $0x340] sm:$0xff] %v6710
    %6723 = vst [vmem:[#allocation2 + $0x348] sm:$0xff] %v6711
    %6724 = vst [vmem:[#allocation2 + $0x350] sm:$0xff] %v6712
    %6725 = vst [vmem:[#allocation2 + $0x358] sm:$0xff] %v6713
    %v6726 = vld [vmem:[%s3 + $0x60] sm:$0xff]
    %v6727 = vld [vmem:[%s3 + $0x68] sm:$0xff]
    %v6728 = vld [vmem:[%s3 + $0x70] sm:$0xff]
    %v6729 = vld [vmem:[%s3 + $0x78] sm:$0xff]
    %v6730 = vld [vmem:[#allocation2] sm:$0xff]
    %v6731 = vld [vmem:[#allocation2 + $0x8] sm:$0xff]
    %v6732 = vld [vmem:[#allocation2 + $0x10] sm:$0xff]
    %v6733 = vld [vmem:[#allocation2 + $0x18] sm:$0xff]
    %v6734 = vld [vmem:[#allocation2 + $0x20] sm:$0xff]
    %v6735 = vld [vmem:[#allocation2 + $0x28] sm:$0xff]
    %v6736 = vld [vmem:[#allocation2 + $0x30] sm:$0xff]
    %v6737 = vld [vmem:[#allocation2 + $0x38] sm:$0xff]
    %v6738 = vld [vmem:[#allocation2 + $0x40] sm:$0xff]
    %v6739 = vld [vmem:[#allocation2 + $0x48] sm:$0xff]
    %v6740 = vld [vmem:[#allocation2 + $0x50] sm:$0xff]
    %v6741 = vld [vmem:[#allocation2 + $0x58] sm:$0xff]
    %v6742 = vld [vmem:[#allocation2 + $0x60] sm:$0xff]
    %v6743 = vld [vmem:[#allocation2 + $0x68] sm:$0xff]
    %v6744 = vld [vmem:[#allocation2 + $0x70] sm:$0xff]
    %v6745 = vld [vmem:[#allocation2 + $0x78] sm:$0xff]
    %v6746 = vld [vmem:[#allocation2 + $0x80] sm:$0xff]
    %v6747 = vld [vmem:[#allocation2 + $0x88] sm:$0xff]
    %v6748 = vld [vmem:[#allocation2 + $0x90] sm:$0xff]
    %v6749 = vld [vmem:[#allocation2 + $0x98] sm:$0xff]
    %v6750 = vld [vmem:[#allocation2 + $0xa0] sm:$0xff]
    %v6751 = vld [vmem:[#allocation2 + $0xa8] sm:$0xff]
    %v6752 = vld [vmem:[#allocation2 + $0xb0] sm:$0xff]
    %v6753 = vld [vmem:[#allocation2 + $0xb8] sm:$0xff]
    %v6754 = vld [vmem:[#allocation2 + $0xc0] sm:$0xff]
    %v6755 = vld [vmem:[#allocation2 + $0xc8] sm:$0xff]
    %v6756 = vld [vmem:[#allocation2 + $0xd0] sm:$0xff]
    %v6757 = vld [vmem:[#allocation2 + $0xd8] sm:$0xff]
    %v6758 = vld [vmem:[#allocation2 + $0xe0] sm:$0xff]
    %v6759 = vld [vmem:[#allocation2 + $0xe8] sm:$0xff]
    %v6760 = vld [vmem:[#allocation2 + $0xf0] sm:$0xff]
    %v6761 = vld [vmem:[#allocation2 + $0xf8] sm:$0xff]
    %v6762 = vld [vmem:[#allocation2 + $0x100] sm:$0xff]
    %v6763 = vld [vmem:[#allocation2 + $0x108] sm:$0xff]
    %v6764 = vld [vmem:[#allocation2 + $0x110] sm:$0xff]
    %v6765 = vld [vmem:[#allocation2 + $0x118] sm:$0xff]
    %v6766 = vld [vmem:[#allocation2 + $0x120] sm:$0xff]
    %v6767 = vld [vmem:[#allocation2 + $0x128] sm:$0xff]
    %v6768 = vld [vmem:[#allocation2 + $0x130] sm:$0xff]
    %v6769 = vld [vmem:[#allocation2 + $0x138] sm:$0xff]
    %v6770 = vld [vmem:[#allocation2 + $0x140] sm:$0xff]
    %v6771 = vld [vmem:[#allocation2 + $0x148] sm:$0xff]
    %v6772 = vld [vmem:[#allocation2 + $0x150] sm:$0xff]
    %v6773 = vld [vmem:[#allocation2 + $0x158] sm:$0xff]
    %v6774 = vld [vmem:[#allocation2 + $0x160] sm:$0xff]
    %v6775 = vld [vmem:[#allocation2 + $0x168] sm:$0xff]
    %v6776 = vld [vmem:[#allocation2 + $0x170] sm:$0xff]
    %v6777 = vld [vmem:[#allocation2 + $0x178] sm:$0xff]
    %v6778 = vld [vmem:[#allocation2 + $0x180] sm:$0xff]
    %v6779 = vld [vmem:[#allocation2 + $0x188] sm:$0xff]
    %v6780 = vld [vmem:[#allocation2 + $0x190] sm:$0xff]
    %v6781 = vld [vmem:[#allocation2 + $0x198] sm:$0xff]
    %v6782 = vld [vmem:[#allocation2 + $0x1a0] sm:$0xff]
    %v6783 = vld [vmem:[#allocation2 + $0x1a8] sm:$0xff]
    %v6784 = vld [vmem:[#allocation2 + $0x1b0] sm:$0xff]
    %v6785 = vld [vmem:[#allocation2 + $0x1b8] sm:$0xff]
    %v6786 = vld [vmem:[#allocation2 + $0x1c0] sm:$0xff]
    %v6787 = vld [vmem:[#allocation2 + $0x1c8] sm:$0xff]
    %v6788 = vld [vmem:[#allocation2 + $0x1d0] sm:$0xff]
    %v6789 = vld [vmem:[#allocation2 + $0x1d8] sm:$0xff]
    %v6790 = vld [vmem:[#allocation2 + $0x1e0] sm:$0xff]
    %v6791 = vld [vmem:[#allocation2 + $0x1e8] sm:$0xff]
    %v6792 = vld [vmem:[#allocation2 + $0x1f0] sm:$0xff]
    %v6793 = vld [vmem:[#allocation2 + $0x1f8] sm:$0xff]
    %v6794 = vld [vmem:[#allocation2 + $0x200] sm:$0xff]
    %v6795 = vld [vmem:[#allocation2 + $0x208] sm:$0xff]
    %v6796 = vld [vmem:[#allocation2 + $0x210] sm:$0xff]
    %v6797 = vld [vmem:[#allocation2 + $0x218] sm:$0xff]
    %v6798 = vld [vmem:[#allocation2 + $0x220] sm:$0xff]
    %v6799 = vld [vmem:[#allocation2 + $0x228] sm:$0xff]
    %v6800 = vld [vmem:[#allocation2 + $0x230] sm:$0xff]
    %v6801 = vld [vmem:[#allocation2 + $0x238] sm:$0xff]
    %v6802 = vld [vmem:[#allocation2 + $0x240] sm:$0xff]
    %v6803 = vld [vmem:[#allocation2 + $0x248] sm:$0xff]
    %v6804 = vld [vmem:[#allocation2 + $0x250] sm:$0xff]
    %v6805 = vld [vmem:[#allocation2 + $0x258] sm:$0xff]
    %v6806 = vld [vmem:[#allocation2 + $0x260] sm:$0xff]
    %v6807 = vld [vmem:[#allocation2 + $0x268] sm:$0xff]
    %v6808 = vld [vmem:[#allocation2 + $0x270] sm:$0xff]
    %v6809 = vld [vmem:[#allocation2 + $0x278] sm:$0xff]
    %v6810 = vld [vmem:[#allocation2 + $0x280] sm:$0xff]
    %v6811 = vld [vmem:[#allocation2 + $0x288] sm:$0xff]
    %v6812 = vld [vmem:[#allocation2 + $0x290] sm:$0xff]
    %v6813 = vld [vmem:[#allocation2 + $0x298] sm:$0xff]
    %v6814 = vld [vmem:[#allocation2 + $0x2a0] sm:$0xff]
    %v6815 = vld [vmem:[#allocation2 + $0x2a8] sm:$0xff]
    %v6816 = vld [vmem:[#allocation2 + $0x2b0] sm:$0xff]
    %v6817 = vld [vmem:[#allocation2 + $0x2b8] sm:$0xff]
    %v6818 = vld [vmem:[#allocation2 + $0x2c0] sm:$0xff]
    %v6819 = vld [vmem:[#allocation2 + $0x2c8] sm:$0xff]
    %v6820 = vld [vmem:[#allocation2 + $0x2d0] sm:$0xff]
    %v6821 = vld [vmem:[#allocation2 + $0x2d8] sm:$0xff]
    %v6822 = vld [vmem:[#allocation2 + $0x2e0] sm:$0xff]
    %v6823 = vld [vmem:[#allocation2 + $0x2e8] sm:$0xff]
    %v6824 = vld [vmem:[#allocation2 + $0x2f0] sm:$0xff]
    %v6825 = vld [vmem:[#allocation2 + $0x2f8] sm:$0xff]
    %v6826 = vld [vmem:[#allocation2 + $0x300] sm:$0xff]
    %v6827 = vld [vmem:[#allocation2 + $0x308] sm:$0xff]
    %v6828 = vld [vmem:[#allocation2 + $0x310] sm:$0xff]
    %v6829 = vld [vmem:[#allocation2 + $0x318] sm:$0xff]
    %v6830 = vld [vmem:[#allocation2 + $0x320] sm:$0xff]
    %v6831 = vld [vmem:[#allocation2 + $0x328] sm:$0xff]
    %v6832 = vld [vmem:[#allocation2 + $0x330] sm:$0xff]
    %v6833 = vld [vmem:[#allocation2 + $0x338] sm:$0xff]
    %v6834 = vld [vmem:[#allocation2 + $0x340] sm:$0xff]
    %v6835 = vld [vmem:[#allocation2 + $0x348] sm:$0xff]
    %v6836 = vld [vmem:[#allocation2 + $0x350] sm:$0xff]
    %v6837 = vld [vmem:[#allocation2 + $0x358] sm:$0xff]
    %v6838 = vld [vmem:[%s5 + $0xd0] sm:$0xff]
    %v6839 = vld [vmem:[%s5 + $0xd8] sm:$0xff]
    %6841 = vset.pattern.permute.xlu0 0
    %6842 = vperm.xlu0 %6841, %v6838
    %v6843 = vpop.permute.xlu0 %6842
    %6846 = vset.pattern.permute.xlu0 0
    %6847 = vperm.xlu0 %6846, %v6839
    %v6848 = vpop.permute.xlu0 %6847
    %v6851 = vsel %vm2841, %v6727, 0
    %v6854 = vsel %vm2841, %v6729, 0
    %6856 = vmatprep.subr.mxu0 %v6791
    %6857 = vmatpush1.msra.mxu0 %v6790
    %6858 = vmatprep.subr.mxu0 %v6787
    %6859 = vmatpush1.msra.mxu0 %v6786
    %6860 = vmatprep.subr.mxu0 %v6783
    %6861 = vmatpush1.msra.mxu0 %v6782
    %6862 = vmatprep.subr.mxu0 %v6779
    %6863 = vmatpush1.msra.mxu0 %v6778
    %6864 = vmatprep.subr.mxu0 %v6775
    %6865 = vmatpush1.msra.mxu0 %v6774
    %6866 = vmatprep.subr.mxu0 %v6771
    %6867 = vmatpush1.msra.mxu0 %v6770
    %6868 = vmatprep.subr.mxu0 %v6767
    %6869 = vmatpush1.msra.mxu0 %v6766
    %6870 = vmatprep.subr.mxu0 %v6763
    %6871 = vmatpush1.msra.mxu0 %v6762
    %6872 = vmatprep.subr.mxu0 %v6759
    %6873 = vmatpush1.msra.mxu0 %v6758
    %6874 = vmatprep.subr.mxu0 %v6755
    %6875 = vmatpush1.msra.mxu0 %v6754
    %6876 = vmatprep.subr.mxu0 %v6751
    %6877 = vmatpush1.msra.mxu0 %v6750
    %6878 = vmatprep.subr.mxu0 %v6747
    %6879 = vmatpush1.msra.mxu0 %v6746
    %6880 = vmatprep.subr.mxu0 %v6743
    %6881 = vmatpush1.msra.mxu0 %v6742
    %6882 = vmatprep.subr.mxu0 %v6739
    %6883 = vmatpush1.msra.mxu0 %v6738
    %6884 = vmatprep.subr.mxu0 %v6735
    %6885 = vmatpush1.msra.mxu0 %v6734
    %6886 = vmatprep.subr.mxu0 %v6731
    %6887 = vmatpush1.msra.mxu0 %v6730
    %6888 = vmatprep.subr.mxu0 0.0
    %6889 = vmatpush2.msra.mxu0 0.0
    %6890 = vmatprep.subr.mxu0 0.0
    %6891 = vmatpush2.msra.mxu0 0.0
    %6892 = vmatprep.subr.mxu0 0.0
    %6893 = vmatpush2.msra.mxu0 0.0
    %6894 = vmatprep.subr.mxu0 0.0
    %6895 = vmatpush2.msra.mxu0 0.0
    %6896 = vmatprep.subr.mxu0 0.0
    %6897 = vmatpush2.msra.mxu0 0.0
    %6898 = vmatprep.subr.mxu0 %v6835
    %6899 = vmatpush2.msra.mxu0 %v6834
    %6900 = vmatprep.subr.mxu0 %v6831
    %6901 = vmatpush2.msra.mxu0 %v6830
    %6902 = vmatprep.subr.mxu0 %v6827
    %6903 = vmatpush2.msra.mxu0 %v6826
    %6904 = vmatprep.subr.mxu0 %v6823
    %6905 = vmatpush2.msra.mxu0 %v6822
    %6906 = vmatprep.subr.mxu0 %v6819
    %6907 = vmatpush2.msra.mxu0 %v6818
    %6908 = vmatprep.subr.mxu0 %v6815
    %6909 = vmatpush2.msra.mxu0 %v6814
    %6910 = vmatprep.subr.mxu0 %v6811
    %6911 = vmatpush2.msra.mxu0 %v6810
    %6912 = vmatprep.subr.mxu0 %v6807
    %6913 = vmatpush2.msra.mxu0 %v6806
    %6914 = vmatprep.subr.mxu0 %v6803
    %6915 = vmatpush2.msra.mxu0 %v6802
    %6916 = vmatprep.subr.mxu0 %v6799
    %6917 = vmatpush2.msra.mxu0 %v6798
    %6918 = vmatprep.subr.mxu0 %v6795
    %6919 = vmatpush2.msra.mxu0 %v6794
    %6920 = vmatprep.mubr.f32.mxu0 %v6851
    %6921 = vmatmul.mubr.f32.gmra.mxu0 %v6726
    %v6922 = vpop.f32.mrf.mxu0
    %v6923 = vadd.f32 %v6843, %v6922
    %v6924 = vpop.f32.mrf.mxu0
    %v6925 = vadd.f32 %v6843, %v6924
    %6926 = vmatprep.mubr.f32.mxu0 %v6854
    %6927 = vmatmul.mubr.f32.gmra.mxu0 %v6728
    %v6928 = vpop.f32.mrf.mxu0
    %v6929 = vadd.f32 %v6848, %v6928
    %v6930 = vpop.f32.mrf.mxu0
    %v6931 = vadd.f32 %v6848, %v6930
    %6932 = vdwg.mxu0
    %6933 = vmatprep.subr.mxu0 %v6793
    %6934 = vmatpush1.msra.mxu0 %v6792
    %6935 = vmatprep.subr.mxu0 %v6789
    %6936 = vmatpush1.msra.mxu0 %v6788
    %6937 = vmatprep.subr.mxu0 %v6785
    %6938 = vmatpush1.msra.mxu0 %v6784
    %6939 = vmatprep.subr.mxu0 %v6781
    %6940 = vmatpush1.msra.mxu0 %v6780
    %6941 = vmatprep.subr.mxu0 %v6777
    %6942 = vmatpush1.msra.mxu0 %v6776
    %6943 = vmatprep.subr.mxu0 %v6773
    %6944 = vmatpush1.msra.mxu0 %v6772
    %6945 = vmatprep.subr.mxu0 %v6769
    %6946 = vmatpush1.msra.mxu0 %v6768
    %6947 = vmatprep.subr.mxu0 %v6765
    %6948 = vmatpush1.msra.mxu0 %v6764
    %6949 = vmatprep.subr.mxu0 %v6761
    %6950 = vmatpush1.msra.mxu0 %v6760
    %6951 = vmatprep.subr.mxu0 %v6757
    %6952 = vmatpush1.msra.mxu0 %v6756
    %6953 = vmatprep.subr.mxu0 %v6753
    %6954 = vmatpush1.msra.mxu0 %v6752
    %6955 = vmatprep.subr.mxu0 %v6749
    %6956 = vmatpush1.msra.mxu0 %v6748
    %6957 = vmatprep.subr.mxu0 %v6745
    %6958 = vmatpush1.msra.mxu0 %v6744
    %6959 = vmatprep.subr.mxu0 %v6741
    %6960 = vmatpush1.msra.mxu0 %v6740
    %6961 = vmatprep.subr.mxu0 %v6737
    %6962 = vmatpush1.msra.mxu0 %v6736
    %6963 = vmatprep.subr.mxu0 %v6733
    %6964 = vmatpush1.msra.mxu0 %v6732
    %6965 = vmatprep.subr.mxu0 0.0
    %6966 = vmatpush2.msra.mxu0 0.0
    %6967 = vmatprep.subr.mxu0 0.0
    %6968 = vmatpush2.msra.mxu0 0.0
    %6969 = vmatprep.subr.mxu0 0.0
    %6970 = vmatpush2.msra.mxu0 0.0
    %6971 = vmatprep.subr.mxu0 0.0
    %6972 = vmatpush2.msra.mxu0 0.0
    %6973 = vmatprep.subr.mxu0 0.0
    %6974 = vmatpush2.msra.mxu0 0.0
    %6975 = vmatprep.subr.mxu0 %v6837
    %6976 = vmatpush2.msra.mxu0 %v6836
    %6977 = vmatprep.subr.mxu0 %v6833
    %6978 = vmatpush2.msra.mxu0 %v6832
    %6979 = vmatprep.subr.mxu0 %v6829
    %6980 = vmatpush2.msra.mxu0 %v6828
    %6981 = vmatprep.subr.mxu0 %v6825
    %6982 = vmatpush2.msra.mxu0 %v6824
    %6983 = vmatprep.subr.mxu0 %v6821
    %6984 = vmatpush2.msra.mxu0 %v6820
    %6985 = vmatprep.subr.mxu0 %v6817
    %6986 = vmatpush2.msra.mxu0 %v6816
    %6987 = vmatprep.subr.mxu0 %v6813
    %6988 = vmatpush2.msra.mxu0 %v6812
    %6989 = vmatprep.subr.mxu0 %v6809
    %6990 = vmatpush2.msra.mxu0 %v6808
    %6991 = vmatprep.subr.mxu0 %v6805
    %6992 = vmatpush2.msra.mxu0 %v6804
    %6993 = vmatprep.subr.mxu0 %v6801
    %6994 = vmatpush2.msra.mxu0 %v6800
    %6995 = vmatprep.subr.mxu0 %v6797
    %6996 = vmatpush2.msra.mxu0 %v6796
    %6997 = vmatprep.mubr.f32.mxu0 %v6851
    %6998 = vmatmul.mubr.f32.gmra.mxu0 %v6726
    %v6999 = vpop.f32.mrf.mxu0
    %v7000 = vadd.f32 %v6843, %v6999
    %v7001 = vpop.f32.mrf.mxu0
    %v7002 = vadd.f32 %v6843, %v7001
    %7003 = vmatprep.mubr.f32.mxu0 %v6854
    %7004 = vmatmul.mubr.f32.gmra.mxu0 %v6728
    %v7005 = vpop.f32.mrf.mxu0
    %v7006 = vadd.f32 %v6848, %v7005
    %v7007 = vpop.f32.mrf.mxu0
    %v7008 = vadd.f32 %v6848, %v7007
    %7009 = vdwg.mxu0
    %v7010 = vmax.f32 %v6923, 0.0
    %v7011 = vmax.f32 %v6925, 0.0
    %v7012 = vmax.f32 %v7000, 0.0
    %v7013 = vmax.f32 %v7002, 0.0
    %v7014 = vmax.f32 %v6929, 0.0
    %v7015 = vmax.f32 %v6931, 0.0
    %v7016 = vmax.f32 %v7006, 0.0
    %v7017 = vmax.f32 %v7008, 0.0
    %v7018 = vld [vmem:[%s4 + $0x80] sm:$0xff]
    %v7019 = vld [vmem:[%s4 + $0x88] sm:$0xff]
    %v7020 = vld [vmem:[%s5 + $0xe0] sm:$0xff]
    %v7021 = vld [vmem:[%s5 + $0xe8] sm:$0xff]
    %7023 = vset.pattern.permute.xlu0 0
    %7024 = vperm.xlu0 %7023, %v7020
    %v7025 = vpop.permute.xlu0 %7024
    %7028 = vset.pattern.permute.xlu0 0
    %7029 = vperm.xlu0 %7028, %v7021
    %v7030 = vpop.permute.xlu0 %7029
    %v7033 = vsel %vm1686, %v7018, 0
    %v7036 = vsel %vm1686, %v7019, 0
    %7038 = vmatprep.subr.mxu0 0.0
    %7039 = vmatpush1.msra.mxu0 0.0
    %7040 = vmatprep.subr.mxu0 0.0
    %7041 = vmatpush1.msra.mxu0 0.0
    %7042 = vmatprep.subr.mxu0 0.0
    %7043 = vmatpush1.msra.mxu0 0.0
    %7044 = vmatprep.subr.mxu0 0.0
    %7045 = vmatpush1.msra.mxu0 0.0
    %7046 = vmatprep.subr.mxu0 0.0
    %7047 = vmatpush1.msra.mxu0 0.0
    %7048 = vmatprep.subr.mxu0 0.0
    %7049 = vmatpush1.msra.mxu0 0.0
    %7050 = vmatprep.subr.mxu0 0.0
    %7051 = vmatpush1.msra.mxu0 0.0
    %7052 = vmatprep.subr.mxu0 0.0
    %7053 = vmatpush1.msra.mxu0 0.0
    %7054 = vmatprep.subr.mxu0 0.0
    %7055 = vmatpush1.msra.mxu0 0.0
    %7056 = vmatprep.subr.mxu0 0.0
    %7057 = vmatpush1.msra.mxu0 0.0
    %7058 = vmatprep.subr.mxu0 0.0
    %7059 = vmatpush1.msra.mxu0 0.0
    %7060 = vmatprep.subr.mxu0 0.0
    %7061 = vmatpush1.msra.mxu0 0.0
    %7062 = vmatprep.subr.mxu0 0.0
    %7063 = vmatpush1.msra.mxu0 0.0
    %7064 = vmatprep.subr.mxu0 0.0
    %7065 = vmatpush1.msra.mxu0 0.0
    %7066 = vmatprep.subr.mxu0 %v7015
    %7067 = vmatpush1.msra.mxu0 %v7014
    %7068 = vmatprep.subr.mxu0 %v7011
    %7069 = vmatpush1.msra.mxu0 %v7010
    %7070 = vmatprep.subr.mxu0 0.0
    %7071 = vmatpush2.msra.mxu0 0.0
    %7072 = vmatprep.subr.mxu0 0.0
    %7073 = vmatpush2.msra.mxu0 0.0
    %7074 = vmatprep.subr.mxu0 0.0
    %7075 = vmatpush2.msra.mxu0 0.0
    %7076 = vmatprep.subr.mxu0 0.0
    %7077 = vmatpush2.msra.mxu0 0.0
    %7078 = vmatprep.subr.mxu0 0.0
    %7079 = vmatpush2.msra.mxu0 0.0
    %7080 = vmatprep.subr.mxu0 0.0
    %7081 = vmatpush2.msra.mxu0 0.0
    %7082 = vmatprep.subr.mxu0 0.0
    %7083 = vmatpush2.msra.mxu0 0.0
    %7084 = vmatprep.subr.mxu0 0.0
    %7085 = vmatpush2.msra.mxu0 0.0
    %7086 = vmatprep.subr.mxu0 0.0
    %7087 = vmatpush2.msra.mxu0 0.0
    %7088 = vmatprep.subr.mxu0 0.0
    %7089 = vmatpush2.msra.mxu0 0.0
    %7090 = vmatprep.subr.mxu0 0.0
    %7091 = vmatpush2.msra.mxu0 0.0
    %7092 = vmatprep.subr.mxu0 0.0
    %7093 = vmatpush2.msra.mxu0 0.0
    %7094 = vmatprep.subr.mxu0 0.0
    %7095 = vmatpush2.msra.mxu0 0.0
    %7096 = vmatprep.subr.mxu0 0.0
    %7097 = vmatpush2.msra.mxu0 0.0
    %7098 = vmatprep.subr.mxu0 0.0
    %7099 = vmatpush2.msra.mxu0 0.0
    %7100 = vmatprep.subr.mxu0 0.0
    %7101 = vmatpush2.msra.mxu0 0.0
    %7102 = vmatprep.mubr.f32.mxu0 0.0
    %7103 = vmatmul.mubr.f32.gmra.mxu0 %v7033
    %v7104 = vpop.f32.mrf.mxu0
    %v7105 = vadd.f32 %v7025, %v7104
    %v7106 = vpop.f32.mrf.mxu0
    %v7107 = vadd.f32 %v7025, %v7106
    %7108 = vmatprep.mubr.f32.mxu0 0.0
    %7109 = vmatmul.mubr.f32.gmra.mxu0 %v7036
    %v7110 = vpop.f32.mrf.mxu0
    %v7111 = vadd.f32 %v7030, %v7110
    %v7112 = vpop.f32.mrf.mxu0
    %v7113 = vadd.f32 %v7030, %v7112
    %7114 = vdwg.mxu0
    %7115 = vmatprep.subr.mxu0 0.0
    %7116 = vmatpush1.msra.mxu0 0.0
    %7117 = vmatprep.subr.mxu0 0.0
    %7118 = vmatpush1.msra.mxu0 0.0
    %7119 = vmatprep.subr.mxu0 0.0
    %7120 = vmatpush1.msra.mxu0 0.0
    %7121 = vmatprep.subr.mxu0 0.0
    %7122 = vmatpush1.msra.mxu0 0.0
    %7123 = vmatprep.subr.mxu0 0.0
    %7124 = vmatpush1.msra.mxu0 0.0
    %7125 = vmatprep.subr.mxu0 0.0
    %7126 = vmatpush1.msra.mxu0 0.0
    %7127 = vmatprep.subr.mxu0 0.0
    %7128 = vmatpush1.msra.mxu0 0.0
    %7129 = vmatprep.subr.mxu0 0.0
    %7130 = vmatpush1.msra.mxu0 0.0
    %7131 = vmatprep.subr.mxu0 0.0
    %7132 = vmatpush1.msra.mxu0 0.0
    %7133 = vmatprep.subr.mxu0 0.0
    %7134 = vmatpush1.msra.mxu0 0.0
    %7135 = vmatprep.subr.mxu0 0.0
    %7136 = vmatpush1.msra.mxu0 0.0
    %7137 = vmatprep.subr.mxu0 0.0
    %7138 = vmatpush1.msra.mxu0 0.0
    %7139 = vmatprep.subr.mxu0 0.0
    %7140 = vmatpush1.msra.mxu0 0.0
    %7141 = vmatprep.subr.mxu0 0.0
    %7142 = vmatpush1.msra.mxu0 0.0
    %7143 = vmatprep.subr.mxu0 %v7017
    %7144 = vmatpush1.msra.mxu0 %v7016
    %7145 = vmatprep.subr.mxu0 %v7013
    %7146 = vmatpush1.msra.mxu0 %v7012
    %7147 = vmatprep.subr.mxu0 0.0
    %7148 = vmatpush2.msra.mxu0 0.0
    %7149 = vmatprep.subr.mxu0 0.0
    %7150 = vmatpush2.msra.mxu0 0.0
    %7151 = vmatprep.subr.mxu0 0.0
    %7152 = vmatpush2.msra.mxu0 0.0
    %7153 = vmatprep.subr.mxu0 0.0
    %7154 = vmatpush2.msra.mxu0 0.0
    %7155 = vmatprep.subr.mxu0 0.0
    %7156 = vmatpush2.msra.mxu0 0.0
    %7157 = vmatprep.subr.mxu0 0.0
    %7158 = vmatpush2.msra.mxu0 0.0
    %7159 = vmatprep.subr.mxu0 0.0
    %7160 = vmatpush2.msra.mxu0 0.0
    %7161 = vmatprep.subr.mxu0 0.0
    %7162 = vmatpush2.msra.mxu0 0.0
    %7163 = vmatprep.subr.mxu0 0.0
    %7164 = vmatpush2.msra.mxu0 0.0
    %7165 = vmatprep.subr.mxu0 0.0
    %7166 = vmatpush2.msra.mxu0 0.0
    %7167 = vmatprep.subr.mxu0 0.0
    %7168 = vmatpush2.msra.mxu0 0.0
    %7169 = vmatprep.subr.mxu0 0.0
    %7170 = vmatpush2.msra.mxu0 0.0
    %7171 = vmatprep.subr.mxu0 0.0
    %7172 = vmatpush2.msra.mxu0 0.0
    %7173 = vmatprep.subr.mxu0 0.0
    %7174 = vmatpush2.msra.mxu0 0.0
    %7175 = vmatprep.subr.mxu0 0.0
    %7176 = vmatpush2.msra.mxu0 0.0
    %7177 = vmatprep.subr.mxu0 0.0
    %7178 = vmatpush2.msra.mxu0 0.0
    %7179 = vmatprep.mubr.f32.mxu0 0.0
    %7180 = vmatmul.mubr.f32.gmra.mxu0 %v7033
    %v7181 = vpop.f32.mrf.mxu0
    %v7182 = vadd.f32 %v7025, %v7181
    %v7183 = vpop.f32.mrf.mxu0
    %v7184 = vadd.f32 %v7025, %v7183
    %7185 = vmatprep.mubr.f32.mxu0 0.0
    %7186 = vmatmul.mubr.f32.gmra.mxu0 %v7036
    %v7187 = vpop.f32.mrf.mxu0
    %v7188 = vadd.f32 %v7030, %v7187
    %v7189 = vpop.f32.mrf.mxu0
    %v7190 = vadd.f32 %v7030, %v7189
    %7191 = vdwg.mxu0
    %v7192 = vmax.f32 %v7105, 0.0
    %v7193 = vmax.f32 %v7107, 0.0
    %v7194 = vmax.f32 %v7182, 0.0
    %v7195 = vmax.f32 %v7184, 0.0
    %v7196 = vmax.f32 %v7111, 0.0
    %v7197 = vmax.f32 %v7113, 0.0
    %v7198 = vmax.f32 %v7188, 0.0
    %v7199 = vmax.f32 %v7190, 0.0
    %v7200 = vld [vmem:[%s4 + $0x90] sm:$0xff]
    %v7201 = vld [vmem:[%s4 + $0x98] sm:$0xff]
    %v7202 = vld [vmem:[%s5 + $0xf0] sm:$0xff]
    %v7203 = vld [vmem:[%s5 + $0xf8] sm:$0xff]
    %7205 = vset.pattern.permute.xlu0 0
    %7206 = vperm.xlu0 %7205, %v7202
    %v7207 = vpop.permute.xlu0 %7206
    %7210 = vset.pattern.permute.xlu0 0
    %7211 = vperm.xlu0 %7210, %v7203
    %v7212 = vpop.permute.xlu0 %7211
    %v7215 = vsel %vm1686, %v7200, 0
    %v7218 = vsel %vm1686, %v7201, 0
    %7220 = vmatprep.subr.mxu0 0.0
    %7221 = vmatpush1.msra.mxu0 0.0
    %7222 = vmatprep.subr.mxu0 0.0
    %7223 = vmatpush1.msra.mxu0 0.0
    %7224 = vmatprep.subr.mxu0 0.0
    %7225 = vmatpush1.msra.mxu0 0.0
    %7226 = vmatprep.subr.mxu0 0.0
    %7227 = vmatpush1.msra.mxu0 0.0
    %7228 = vmatprep.subr.mxu0 0.0
    %7229 = vmatpush1.msra.mxu0 0.0
    %7230 = vmatprep.subr.mxu0 0.0
    %7231 = vmatpush1.msra.mxu0 0.0
    %7232 = vmatprep.subr.mxu0 0.0
    %7233 = vmatpush1.msra.mxu0 0.0
    %7234 = vmatprep.subr.mxu0 0.0
    %7235 = vmatpush1.msra.mxu0 0.0
    %7236 = vmatprep.subr.mxu0 0.0
    %7237 = vmatpush1.msra.mxu0 0.0
    %7238 = vmatprep.subr.mxu0 0.0
    %7239 = vmatpush1.msra.mxu0 0.0
    %7240 = vmatprep.subr.mxu0 0.0
    %7241 = vmatpush1.msra.mxu0 0.0
    %7242 = vmatprep.subr.mxu0 0.0
    %7243 = vmatpush1.msra.mxu0 0.0
    %7244 = vmatprep.subr.mxu0 0.0
    %7245 = vmatpush1.msra.mxu0 0.0
    %7246 = vmatprep.subr.mxu0 0.0
    %7247 = vmatpush1.msra.mxu0 0.0
    %7248 = vmatprep.subr.mxu0 %v7197
    %7249 = vmatpush1.msra.mxu0 %v7196
    %7250 = vmatprep.subr.mxu0 %v7193
    %7251 = vmatpush1.msra.mxu0 %v7192
    %7252 = vmatprep.subr.mxu0 0.0
    %7253 = vmatpush2.msra.mxu0 0.0
    %7254 = vmatprep.subr.mxu0 0.0
    %7255 = vmatpush2.msra.mxu0 0.0
    %7256 = vmatprep.subr.mxu0 0.0
    %7257 = vmatpush2.msra.mxu0 0.0
    %7258 = vmatprep.subr.mxu0 0.0
    %7259 = vmatpush2.msra.mxu0 0.0
    %7260 = vmatprep.subr.mxu0 0.0
    %7261 = vmatpush2.msra.mxu0 0.0
    %7262 = vmatprep.subr.mxu0 0.0
    %7263 = vmatpush2.msra.mxu0 0.0
    %7264 = vmatprep.subr.mxu0 0.0
    %7265 = vmatpush2.msra.mxu0 0.0
    %7266 = vmatprep.subr.mxu0 0.0
    %7267 = vmatpush2.msra.mxu0 0.0
    %7268 = vmatprep.subr.mxu0 0.0
    %7269 = vmatpush2.msra.mxu0 0.0
    %7270 = vmatprep.subr.mxu0 0.0
    %7271 = vmatpush2.msra.mxu0 0.0
    %7272 = vmatprep.subr.mxu0 0.0
    %7273 = vmatpush2.msra.mxu0 0.0
    %7274 = vmatprep.subr.mxu0 0.0
    %7275 = vmatpush2.msra.mxu0 0.0
    %7276 = vmatprep.subr.mxu0 0.0
    %7277 = vmatpush2.msra.mxu0 0.0
    %7278 = vmatprep.subr.mxu0 0.0
    %7279 = vmatpush2.msra.mxu0 0.0
    %7280 = vmatprep.subr.mxu0 0.0
    %7281 = vmatpush2.msra.mxu0 0.0
    %7282 = vmatprep.subr.mxu0 0.0
    %7283 = vmatpush2.msra.mxu0 0.0
    %7284 = vmatprep.mubr.f32.mxu0 0.0
    %7285 = vmatmul.mubr.f32.gmra.mxu0 %v7215
    %v7286 = vpop.f32.mrf.mxu0
    %v7287 = vadd.f32 %v7207, %v7286
    %v7288 = vpop.f32.mrf.mxu0
    %v7289 = vadd.f32 %v7207, %v7288
    %7290 = vmatprep.mubr.f32.mxu0 0.0
    %7291 = vmatmul.mubr.f32.gmra.mxu0 %v7218
    %v7292 = vpop.f32.mrf.mxu0
    %v7293 = vadd.f32 %v7212, %v7292
    %v7294 = vpop.f32.mrf.mxu0
    %v7295 = vadd.f32 %v7212, %v7294
    %7296 = vdwg.mxu0
    %7297 = vmatprep.subr.mxu0 0.0
    %7298 = vmatpush1.msra.mxu0 0.0
    %7299 = vmatprep.subr.mxu0 0.0
    %7300 = vmatpush1.msra.mxu0 0.0
    %7301 = vmatprep.subr.mxu0 0.0
    %7302 = vmatpush1.msra.mxu0 0.0
    %7303 = vmatprep.subr.mxu0 0.0
    %7304 = vmatpush1.msra.mxu0 0.0
    %7305 = vmatprep.subr.mxu0 0.0
    %7306 = vmatpush1.msra.mxu0 0.0
    %7307 = vmatprep.subr.mxu0 0.0
    %7308 = vmatpush1.msra.mxu0 0.0
    %7309 = vmatprep.subr.mxu0 0.0
    %7310 = vmatpush1.msra.mxu0 0.0
    %7311 = vmatprep.subr.mxu0 0.0
    %7312 = vmatpush1.msra.mxu0 0.0
    %7313 = vmatprep.subr.mxu0 0.0
    %7314 = vmatpush1.msra.mxu0 0.0
    %7315 = vmatprep.subr.mxu0 0.0
    %7316 = vmatpush1.msra.mxu0 0.0
    %7317 = vmatprep.subr.mxu0 0.0
    %7318 = vmatpush1.msra.mxu0 0.0
    %7319 = vmatprep.subr.mxu0 0.0
    %7320 = vmatpush1.msra.mxu0 0.0
    %7321 = vmatprep.subr.mxu0 0.0
    %7322 = vmatpush1.msra.mxu0 0.0
    %7323 = vmatprep.subr.mxu0 0.0
    %7324 = vmatpush1.msra.mxu0 0.0
    %7325 = vmatprep.subr.mxu0 %v7199
    %7326 = vmatpush1.msra.mxu0 %v7198
    %7327 = vmatprep.subr.mxu0 %v7195
    %7328 = vmatpush1.msra.mxu0 %v7194
    %7329 = vmatprep.subr.mxu0 0.0
    %7330 = vmatpush2.msra.mxu0 0.0
    %7331 = vmatprep.subr.mxu0 0.0
    %7332 = vmatpush2.msra.mxu0 0.0
    %7333 = vmatprep.subr.mxu0 0.0
    %7334 = vmatpush2.msra.mxu0 0.0
    %7335 = vmatprep.subr.mxu0 0.0
    %7336 = vmatpush2.msra.mxu0 0.0
    %7337 = vmatprep.subr.mxu0 0.0
    %7338 = vmatpush2.msra.mxu0 0.0
    %7339 = vmatprep.subr.mxu0 0.0
    %7340 = vmatpush2.msra.mxu0 0.0
    %7341 = vmatprep.subr.mxu0 0.0
    %7342 = vmatpush2.msra.mxu0 0.0
    %7343 = vmatprep.subr.mxu0 0.0
    %7344 = vmatpush2.msra.mxu0 0.0
    %7345 = vmatprep.subr.mxu0 0.0
    %7346 = vmatpush2.msra.mxu0 0.0
    %7347 = vmatprep.subr.mxu0 0.0
    %7348 = vmatpush2.msra.mxu0 0.0
    %7349 = vmatprep.subr.mxu0 0.0
    %7350 = vmatpush2.msra.mxu0 0.0
    %7351 = vmatprep.subr.mxu0 0.0
    %7352 = vmatpush2.msra.mxu0 0.0
    %7353 = vmatprep.subr.mxu0 0.0
    %7354 = vmatpush2.msra.mxu0 0.0
    %7355 = vmatprep.subr.mxu0 0.0
    %7356 = vmatpush2.msra.mxu0 0.0
    %7357 = vmatprep.subr.mxu0 0.0
    %7358 = vmatpush2.msra.mxu0 0.0
    %7359 = vmatprep.subr.mxu0 0.0
    %7360 = vmatpush2.msra.mxu0 0.0
    %7361 = vmatprep.mubr.f32.mxu0 0.0
    %7362 = vmatmul.mubr.f32.gmra.mxu0 %v7215
    %v7363 = vpop.f32.mrf.mxu0
    %v7364 = vadd.f32 %v7207, %v7363
    %v7365 = vpop.f32.mrf.mxu0
    %v7366 = vadd.f32 %v7207, %v7365
    %7367 = vmatprep.mubr.f32.mxu0 0.0
    %7368 = vmatmul.mubr.f32.gmra.mxu0 %v7218
    %v7369 = vpop.f32.mrf.mxu0
    %v7370 = vadd.f32 %v7212, %v7369
    %v7371 = vpop.f32.mrf.mxu0
    %v7372 = vadd.f32 %v7212, %v7371
    %7373 = vdwg.mxu0
    %7374 = vst [vmem:[#allocation3] sm:$0xff] %v7287
    %7375 = vst [vmem:[#allocation3 + $0x8] sm:$0xff] %v7289
    %7376 = vst [vmem:[#allocation3 + $0x10] sm:$0xff] %v7364
    %7377 = vst [vmem:[#allocation3 + $0x18] sm:$0xff] %v7366
    %7378 = vst [vmem:[#allocation3 + $0x20] sm:$0xff] %v7293
    %7379 = vst [vmem:[#allocation3 + $0x28] sm:$0xff] %v7295
    %7380 = vst [vmem:[#allocation3 + $0x30] sm:$0xff] %v7370
    %7381 = vst [vmem:[#allocation3 + $0x38] sm:$0xff] %v7372
    %v7382 = vld [vmem:[#allocation3] sm:$0xff]
    %v7383 = vld [vmem:[#allocation3 + $0x8] sm:$0xff]
    %v7384 = vld [vmem:[#allocation3 + $0x10] sm:$0xff]
    %v7385 = vld [vmem:[#allocation3 + $0x18] sm:$0xff]
    %v7386 = vld [vmem:[#allocation3 + $0x20] sm:$0xff]
    %v7387 = vld [vmem:[#allocation3 + $0x28] sm:$0xff]
    %v7388 = vld [vmem:[#allocation3 + $0x30] sm:$0xff]
    %v7389 = vld [vmem:[#allocation3 + $0x38] sm:$0xff]
    %v7390 = vld [vmem:[#allocation3 + $0x40] sm:$0xff]
    %v7391 = vld [vmem:[#allocation3 + $0x48] sm:$0xff]
    %v7392 = vld [vmem:[#allocation3 + $0x50] sm:$0xff]
    %v7393 = vld [vmem:[#allocation3 + $0x58] sm:$0xff]
    %7394 = vrot.lane.b32.xlu0 %v7382, 17
    %v7395 = vpop.permute.xlu0 %7394
    %7396 = vrot.lane.b32.xlu0 %v7386, 17
    %v7397 = vpop.permute.xlu0 %7396
    %7398 = vrot.lane.b32.xlu0 %v7390, 17
    %v7399 = vpop.permute.xlu0 %7398
    %7400 = vrot.lane.b32.xlu0 %v7383, 17
    %v7401 = vpop.permute.xlu0 %7400
    %7402 = vrot.lane.b32.xlu0 %v7387, 17
    %v7403 = vpop.permute.xlu0 %7402
    %7404 = vrot.lane.b32.xlu0 %v7391, 17
    %v7405 = vpop.permute.xlu0 %7404
    %7406 = vrot.lane.b32.xlu0 %v7384, 17
    %v7407 = vpop.permute.xlu0 %7406
    %7408 = vrot.lane.b32.xlu0 %v7388, 17
    %v7409 = vpop.permute.xlu0 %7408
    %7410 = vrot.lane.b32.xlu0 %v7392, 17
    %v7411 = vpop.permute.xlu0 %7410
    %7412 = vrot.lane.b32.xlu0 %v7385, 17
    %v7413 = vpop.permute.xlu0 %7412
    %7414 = vrot.lane.b32.xlu0 %v7389, 17
    %v7415 = vpop.permute.xlu0 %7414
    %7416 = vrot.lane.b32.xlu0 %v7393, 17
    %v7417 = vpop.permute.xlu0 %7416
    %v7418 = vsel %vm38, %v7407, %v7413
    %v7419 = vsel %vm38, %v7409, %v7415
    %v7420 = vsel %vm38, %v7411, %v7417
    %v7421 = vsel %vm38, %v7401, %v7407
    %v7422 = vsel %vm38, %v7403, %v7409
    %v7423 = vsel %vm38, %v7405, %v7411
    %v7424 = vsel %vm38, %v7395, %v7401
    %v7425 = vsel %vm38, %v7397, %v7403
    %v7426 = vsel %vm38, %v7399, %v7405
    %v7427 = vsel %vm38, %v7413, %v7395
    %v7428 = vsel %vm38, %v7415, %v7397
    %v7429 = vsel %vm38, %v7417, %v7399
    %v7430 = vld [vmem:[%s1] ss:$8 sm:$0xf]
    %v7432 = vlaneseq
    %v7433 = vshrl.u32 %v7432, 7
    %v7434 = vsub.s32 0, %v7433
    %v7435 = vrot.slane %v7430, %v7434
    %v7436 = vlaneseq
    %v7437 = vshrl.u32 %v7436, 7
    %v7438 = vsub.s32 1, %v7437
    %v7439 = vrot.slane %v7430, %v7438
    %v7440 = vlaneseq
    %v7441 = vshrl.u32 %v7440, 7
    %v7442 = vsub.s32 2, %v7441
    %v7443 = vrot.slane %v7430, %v7442
    %v7444 = vlaneseq
    %v7445 = vshrl.u32 %v7444, 7
    %v7446 = vsub.s32 3, %v7445
    %v7447 = vrot.slane %v7430, %v7446
    %v7452 = vmul.f32 %v7427, %v7435
    %v7453 = vmul.f32 %v7424, %v7439
    %v7454 = vmul.f32 %v7421, %v7443
    %v7455 = vmul.f32 %v7418, %v7447
    %v7456 = vmul.f32 %v7428, %v7435
    %v7457 = vmul.f32 %v7425, %v7439
    %v7458 = vmul.f32 %v7422, %v7443
    %v7459 = vmul.f32 %v7419, %v7447
    %v7460 = vmul.f32 %v7429, %v7435
    %v7461 = vmul.f32 %v7426, %v7439
    %v7462 = vmul.f32 %v7423, %v7443
    %v7463 = vmul.f32 %v7420, %v7447
    %7464 = vst [vmem:[#allocation2] sm:$0xff] %v7452
    %7465 = vst [vmem:[#allocation2 + $0x8] sm:$0xff] %v7453
    %7466 = vst [vmem:[#allocation2 + $0x10] sm:$0xff] %v7454
    %7467 = vst [vmem:[#allocation2 + $0x18] sm:$0xff] %v7455
    %7468 = vst [vmem:[#allocation2 + $0x20] sm:$0xff] %v7456
    %7469 = vst [vmem:[#allocation2 + $0x28] sm:$0xff] %v7457
    %7470 = vst [vmem:[#allocation2 + $0x30] sm:$0xff] %v7458
    %7471 = vst [vmem:[#allocation2 + $0x38] sm:$0xff] %v7459
    %7472 = vst [vmem:[#allocation2 + $0x40] sm:$0xff] %v7460
    %7473 = vst [vmem:[#allocation2 + $0x48] sm:$0xff] %v7461
    %7474 = vst [vmem:[#allocation2 + $0x50] sm:$0xff] %v7462
    %7475 = vst [vmem:[#allocation2 + $0x58] sm:$0xff] %v7463
    %7476 = vrot.lane.b32.xlu0 %v7382, 16
    %v7477 = vpop.permute.xlu0 %7476
    %7478 = vrot.lane.b32.xlu0 %v7386, 16
    %v7479 = vpop.permute.xlu0 %7478
    %7480 = vrot.lane.b32.xlu0 %v7390, 16
    %v7481 = vpop.permute.xlu0 %7480
    %7482 = vrot.lane.b32.xlu0 %v7383, 16
    %v7483 = vpop.permute.xlu0 %7482
    %7484 = vrot.lane.b32.xlu0 %v7387, 16
    %v7485 = vpop.permute.xlu0 %7484
    %7486 = vrot.lane.b32.xlu0 %v7391, 16
    %v7487 = vpop.permute.xlu0 %7486
    %7488 = vrot.lane.b32.xlu0 %v7384, 16
    %v7489 = vpop.permute.xlu0 %7488
    %7490 = vrot.lane.b32.xlu0 %v7388, 16
    %v7491 = vpop.permute.xlu0 %7490
    %7492 = vrot.lane.b32.xlu0 %v7392, 16
    %v7493 = vpop.permute.xlu0 %7492
    %7494 = vrot.lane.b32.xlu0 %v7385, 16
    %v7495 = vpop.permute.xlu0 %7494
    %7496 = vrot.lane.b32.xlu0 %v7389, 16
    %v7497 = vpop.permute.xlu0 %7496
    %7498 = vrot.lane.b32.xlu0 %v7393, 16
    %v7499 = vpop.permute.xlu0 %7498
    %v7500 = vsel %vm81, %v7489, %v7495
    %v7501 = vsel %vm81, %v7491, %v7497
    %v7502 = vsel %vm81, %v7493, %v7499
    %v7503 = vsel %vm81, %v7483, %v7489
    %v7504 = vsel %vm81, %v7485, %v7491
    %v7505 = vsel %vm81, %v7487, %v7493
    %v7506 = vsel %vm81, %v7477, %v7483
    %v7507 = vsel %vm81, %v7479, %v7485
    %v7508 = vsel %vm81, %v7481, %v7487
    %v7509 = vsel %vm81, %v7495, %v7477
    %v7510 = vsel %vm81, %v7497, %v7479
    %v7511 = vsel %vm81, %v7499, %v7481
    %v7512 = vld [vmem:[%s86] ss:$8 sm:$0xf]
    %v7514 = vlaneseq
    %v7515 = vshrl.u32 %v7514, 7
    %v7516 = vsub.s32 0, %v7515
    %v7517 = vrot.slane %v7512, %v7516
    %v7518 = vlaneseq
    %v7519 = vshrl.u32 %v7518, 7
    %v7520 = vsub.s32 1, %v7519
    %v7521 = vrot.slane %v7512, %v7520
    %v7522 = vlaneseq
    %v7523 = vshrl.u32 %v7522, 7
    %v7524 = vsub.s32 2, %v7523
    %v7525 = vrot.slane %v7512, %v7524
    %v7526 = vlaneseq
    %v7527 = vshrl.u32 %v7526, 7
    %v7528 = vsub.s32 3, %v7527
    %v7529 = vrot.slane %v7512, %v7528
    %v7534 = vmul.f32 %v7509, %v7517
    %v7535 = vmul.f32 %v7506, %v7521
    %v7536 = vmul.f32 %v7503, %v7525
    %v7537 = vmul.f32 %v7500, %v7529
    %v7538 = vmul.f32 %v7510, %v7517
    %v7539 = vmul.f32 %v7507, %v7521
    %v7540 = vmul.f32 %v7504, %v7525
    %v7541 = vmul.f32 %v7501, %v7529
    %v7542 = vmul.f32 %v7511, %v7517
    %v7543 = vmul.f32 %v7508, %v7521
    %v7544 = vmul.f32 %v7505, %v7525
    %v7545 = vmul.f32 %v7502, %v7529
    %7546 = vst [vmem:[#allocation2 + $0x60] sm:$0xff] %v7534
    %7547 = vst [vmem:[#allocation2 + $0x68] sm:$0xff] %v7535
    %7548 = vst [vmem:[#allocation2 + $0x70] sm:$0xff] %v7536
    %7549 = vst [vmem:[#allocation2 + $0x78] sm:$0xff] %v7537
    %7550 = vst [vmem:[#allocation2 + $0x80] sm:$0xff] %v7538
    %7551 = vst [vmem:[#allocation2 + $0x88] sm:$0xff] %v7539
    %7552 = vst [vmem:[#allocation2 + $0x90] sm:$0xff] %v7540
    %7553 = vst [vmem:[#allocation2 + $0x98] sm:$0xff] %v7541
    %7554 = vst [vmem:[#allocation2 + $0xa0] sm:$0xff] %v7542
    %7555 = vst [vmem:[#allocation2 + $0xa8] sm:$0xff] %v7543
    %7556 = vst [vmem:[#allocation2 + $0xb0] sm:$0xff] %v7544
    %7557 = vst [vmem:[#allocation2 + $0xb8] sm:$0xff] %v7545
    %7558 = vrot.lane.b32.xlu0 %v7382, 15
    %v7559 = vpop.permute.xlu0 %7558
    %7560 = vrot.lane.b32.xlu0 %v7386, 15
    %v7561 = vpop.permute.xlu0 %7560
    %7562 = vrot.lane.b32.xlu0 %v7390, 15
    %v7563 = vpop.permute.xlu0 %7562
    %7564 = vrot.lane.b32.xlu0 %v7383, 15
    %v7565 = vpop.permute.xlu0 %7564
    %7566 = vrot.lane.b32.xlu0 %v7387, 15
    %v7567 = vpop.permute.xlu0 %7566
    %7568 = vrot.lane.b32.xlu0 %v7391, 15
    %v7569 = vpop.permute.xlu0 %7568
    %7570 = vrot.lane.b32.xlu0 %v7384, 15
    %v7571 = vpop.permute.xlu0 %7570
    %7572 = vrot.lane.b32.xlu0 %v7388, 15
    %v7573 = vpop.permute.xlu0 %7572
    %7574 = vrot.lane.b32.xlu0 %v7392, 15
    %v7575 = vpop.permute.xlu0 %7574
    %7576 = vrot.lane.b32.xlu0 %v7385, 15
    %v7577 = vpop.permute.xlu0 %7576
    %7578 = vrot.lane.b32.xlu0 %v7389, 15
    %v7579 = vpop.permute.xlu0 %7578
    %7580 = vrot.lane.b32.xlu0 %v7393, 15
    %v7581 = vpop.permute.xlu0 %7580
    %v7582 = vsel %vm125, %v7571, %v7577
    %v7583 = vsel %vm125, %v7573, %v7579
    %v7584 = vsel %vm125, %v7575, %v7581
    %v7585 = vsel %vm125, %v7565, %v7571
    %v7586 = vsel %vm125, %v7567, %v7573
    %v7587 = vsel %vm125, %v7569, %v7575
    %v7588 = vsel %vm125, %v7559, %v7565
    %v7589 = vsel %vm125, %v7561, %v7567
    %v7590 = vsel %vm125, %v7563, %v7569
    %v7591 = vsel %vm125, %v7577, %v7559
    %v7592 = vsel %vm125, %v7579, %v7561
    %v7593 = vsel %vm125, %v7581, %v7563
    %v7594 = vld [vmem:[%s130] ss:$8 sm:$0xf]
    %v7596 = vlaneseq
    %v7597 = vshrl.u32 %v7596, 7
    %v7598 = vsub.s32 0, %v7597
    %v7599 = vrot.slane %v7594, %v7598
    %v7600 = vlaneseq
    %v7601 = vshrl.u32 %v7600, 7
    %v7602 = vsub.s32 1, %v7601
    %v7603 = vrot.slane %v7594, %v7602
    %v7604 = vlaneseq
    %v7605 = vshrl.u32 %v7604, 7
    %v7606 = vsub.s32 2, %v7605
    %v7607 = vrot.slane %v7594, %v7606
    %v7608 = vlaneseq
    %v7609 = vshrl.u32 %v7608, 7
    %v7610 = vsub.s32 3, %v7609
    %v7611 = vrot.slane %v7594, %v7610
    %v7616 = vmul.f32 %v7591, %v7599
    %v7617 = vmul.f32 %v7588, %v7603
    %v7618 = vmul.f32 %v7585, %v7607
    %v7619 = vmul.f32 %v7582, %v7611
    %v7620 = vmul.f32 %v7592, %v7599
    %v7621 = vmul.f32 %v7589, %v7603
    %v7622 = vmul.f32 %v7586, %v7607
    %v7623 = vmul.f32 %v7583, %v7611
    %v7624 = vmul.f32 %v7593, %v7599
    %v7625 = vmul.f32 %v7590, %v7603
    %v7626 = vmul.f32 %v7587, %v7607
    %v7627 = vmul.f32 %v7584, %v7611
    %7628 = vst [vmem:[#allocation2 + $0xc0] sm:$0xff] %v7616
    %7629 = vst [vmem:[#allocation2 + $0xc8] sm:$0xff] %v7617
    %7630 = vst [vmem:[#allocation2 + $0xd0] sm:$0xff] %v7618
    %7631 = vst [vmem:[#allocation2 + $0xd8] sm:$0xff] %v7619
    %7632 = vst [vmem:[#allocation2 + $0xe0] sm:$0xff] %v7620
    %7633 = vst [vmem:[#allocation2 + $0xe8] sm:$0xff] %v7621
    %7634 = vst [vmem:[#allocation2 + $0xf0] sm:$0xff] %v7622
    %7635 = vst [vmem:[#allocation2 + $0xf8] sm:$0xff] %v7623
    %7636 = vst [vmem:[#allocation2 + $0x100] sm:$0xff] %v7624
    %7637 = vst [vmem:[#allocation2 + $0x108] sm:$0xff] %v7625
    %7638 = vst [vmem:[#allocation2 + $0x110] sm:$0xff] %v7626
    %7639 = vst [vmem:[#allocation2 + $0x118] sm:$0xff] %v7627
    %7640 = vrot.lane.b32.xlu0 %v7382, 1
    %v7641 = vpop.permute.xlu0 %7640
    %7642 = vrot.lane.b32.xlu0 %v7386, 1
    %v7643 = vpop.permute.xlu0 %7642
    %7644 = vrot.lane.b32.xlu0 %v7390, 1
    %v7645 = vpop.permute.xlu0 %7644
    %7646 = vrot.lane.b32.xlu0 %v7383, 1
    %v7647 = vpop.permute.xlu0 %7646
    %7648 = vrot.lane.b32.xlu0 %v7387, 1
    %v7649 = vpop.permute.xlu0 %7648
    %7650 = vrot.lane.b32.xlu0 %v7391, 1
    %v7651 = vpop.permute.xlu0 %7650
    %7652 = vrot.lane.b32.xlu0 %v7384, 1
    %v7653 = vpop.permute.xlu0 %7652
    %7654 = vrot.lane.b32.xlu0 %v7388, 1
    %v7655 = vpop.permute.xlu0 %7654
    %7656 = vrot.lane.b32.xlu0 %v7392, 1
    %v7657 = vpop.permute.xlu0 %7656
    %7658 = vrot.lane.b32.xlu0 %v7385, 1
    %v7659 = vpop.permute.xlu0 %7658
    %7660 = vrot.lane.b32.xlu0 %v7389, 1
    %v7661 = vpop.permute.xlu0 %7660
    %7662 = vrot.lane.b32.xlu0 %v7393, 1
    %v7663 = vpop.permute.xlu0 %7662
    %v7664 = vsel %vm169, %v7653, %v7659
    %v7665 = vsel %vm169, %v7655, %v7661
    %v7666 = vsel %vm169, %v7657, %v7663
    %v7667 = vsel %vm169, %v7647, %v7653
    %v7668 = vsel %vm169, %v7649, %v7655
    %v7669 = vsel %vm169, %v7651, %v7657
    %v7670 = vsel %vm169, %v7641, %v7647
    %v7671 = vsel %vm169, %v7643, %v7649
    %v7672 = vsel %vm169, %v7645, %v7651
    %v7673 = vsel %vm169, %v7659, %v7641
    %v7674 = vsel %vm169, %v7661, %v7643
    %v7675 = vsel %vm169, %v7663, %v7645
    %v7676 = vld [vmem:[%s174] ss:$8 sm:$0xf]
    %v7678 = vlaneseq
    %v7679 = vshrl.u32 %v7678, 7
    %v7680 = vsub.s32 0, %v7679
    %v7681 = vrot.slane %v7676, %v7680
    %v7682 = vlaneseq
    %v7683 = vshrl.u32 %v7682, 7
    %v7684 = vsub.s32 1, %v7683
    %v7685 = vrot.slane %v7676, %v7684
    %v7686 = vlaneseq
    %v7687 = vshrl.u32 %v7686, 7
    %v7688 = vsub.s32 2, %v7687
    %v7689 = vrot.slane %v7676, %v7688
    %v7690 = vlaneseq
    %v7691 = vshrl.u32 %v7690, 7
    %v7692 = vsub.s32 3, %v7691
    %v7693 = vrot.slane %v7676, %v7692
    %v7698 = vmul.f32 %v7673, %v7681
    %v7699 = vmul.f32 %v7670, %v7685
    %v7700 = vmul.f32 %v7667, %v7689
    %v7701 = vmul.f32 %v7664, %v7693
    %v7702 = vmul.f32 %v7674, %v7681
    %v7703 = vmul.f32 %v7671, %v7685
    %v7704 = vmul.f32 %v7668, %v7689
    %v7705 = vmul.f32 %v7665, %v7693
    %v7706 = vmul.f32 %v7675, %v7681
    %v7707 = vmul.f32 %v7672, %v7685
    %v7708 = vmul.f32 %v7669, %v7689
    %v7709 = vmul.f32 %v7666, %v7693
    %7710 = vst [vmem:[#allocation2 + $0x120] sm:$0xff] %v7698
    %7711 = vst [vmem:[#allocation2 + $0x128] sm:$0xff] %v7699
    %7712 = vst [vmem:[#allocation2 + $0x130] sm:$0xff] %v7700
    %7713 = vst [vmem:[#allocation2 + $0x138] sm:$0xff] %v7701
    %7714 = vst [vmem:[#allocation2 + $0x140] sm:$0xff] %v7702
    %7715 = vst [vmem:[#allocation2 + $0x148] sm:$0xff] %v7703
    %7716 = vst [vmem:[#allocation2 + $0x150] sm:$0xff] %v7704
    %7717 = vst [vmem:[#allocation2 + $0x158] sm:$0xff] %v7705
    %7718 = vst [vmem:[#allocation2 + $0x160] sm:$0xff] %v7706
    %7719 = vst [vmem:[#allocation2 + $0x168] sm:$0xff] %v7707
    %7720 = vst [vmem:[#allocation2 + $0x170] sm:$0xff] %v7708
    %7721 = vst [vmem:[#allocation2 + $0x178] sm:$0xff] %v7709
    %7722 = vst [vmem:[#allocation2 + $0x180] sm:$0xff] %v7382
    %7723 = vst [vmem:[#allocation2 + $0x188] sm:$0xff] %v7383
    %7724 = vst [vmem:[#allocation2 + $0x190] sm:$0xff] %v7384
    %7725 = vst [vmem:[#allocation2 + $0x198] sm:$0xff] %v7385
    %7726 = vst [vmem:[#allocation2 + $0x1a0] sm:$0xff] %v7386
    %7727 = vst [vmem:[#allocation2 + $0x1a8] sm:$0xff] %v7387
    %7728 = vst [vmem:[#allocation2 + $0x1b0] sm:$0xff] %v7388
    %7729 = vst [vmem:[#allocation2 + $0x1b8] sm:$0xff] %v7389
    %7730 = vst [vmem:[#allocation2 + $0x1c0] sm:$0xff] %v7390
    %7731 = vst [vmem:[#allocation2 + $0x1c8] sm:$0xff] %v7391
    %7732 = vst [vmem:[#allocation2 + $0x1d0] sm:$0xff] %v7392
    %7733 = vst [vmem:[#allocation2 + $0x1d8] sm:$0xff] %v7393
    %7734 = vrot.lane.b32.xlu0 %v7382, 127
    %v7735 = vpop.permute.xlu0 %7734
    %7736 = vrot.lane.b32.xlu0 %v7386, 127
    %v7737 = vpop.permute.xlu0 %7736
    %7738 = vrot.lane.b32.xlu0 %v7390, 127
    %v7739 = vpop.permute.xlu0 %7738
    %7740 = vrot.lane.b32.xlu0 %v7383, 127
    %v7741 = vpop.permute.xlu0 %7740
    %7742 = vrot.lane.b32.xlu0 %v7387, 127
    %v7743 = vpop.permute.xlu0 %7742
    %7744 = vrot.lane.b32.xlu0 %v7391, 127
    %v7745 = vpop.permute.xlu0 %7744
    %7746 = vrot.lane.b32.xlu0 %v7384, 127
    %v7747 = vpop.permute.xlu0 %7746
    %7748 = vrot.lane.b32.xlu0 %v7388, 127
    %v7749 = vpop.permute.xlu0 %7748
    %7750 = vrot.lane.b32.xlu0 %v7392, 127
    %v7751 = vpop.permute.xlu0 %7750
    %7752 = vrot.lane.b32.xlu0 %v7385, 127
    %v7753 = vpop.permute.xlu0 %7752
    %7754 = vrot.lane.b32.xlu0 %v7389, 127
    %v7755 = vpop.permute.xlu0 %7754
    %7756 = vrot.lane.b32.xlu0 %v7393, 127
    %v7757 = vpop.permute.xlu0 %7756
    %v7758 = vsel %vm217, %v7747, %v7753
    %v7759 = vsel %vm217, %v7749, %v7755
    %v7760 = vsel %vm217, %v7751, %v7757
    %v7761 = vsel %vm217, %v7741, %v7747
    %v7762 = vsel %vm217, %v7743, %v7749
    %v7763 = vsel %vm217, %v7745, %v7751
    %v7764 = vsel %vm217, %v7735, %v7741
    %v7765 = vsel %vm217, %v7737, %v7743
    %v7766 = vsel %vm217, %v7739, %v7745
    %v7767 = vsel %vm217, %v7753, %v7735
    %v7768 = vsel %vm217, %v7755, %v7737
    %v7769 = vsel %vm217, %v7757, %v7739
    %v7770 = vld [vmem:[%s222] ss:$8 sm:$0xf]
    %v7772 = vlaneseq
    %v7773 = vshrl.u32 %v7772, 7
    %v7774 = vsub.s32 0, %v7773
    %v7775 = vrot.slane %v7770, %v7774
    %v7776 = vlaneseq
    %v7777 = vshrl.u32 %v7776, 7
    %v7778 = vsub.s32 1, %v7777
    %v7779 = vrot.slane %v7770, %v7778
    %v7780 = vlaneseq
    %v7781 = vshrl.u32 %v7780, 7
    %v7782 = vsub.s32 2, %v7781
    %v7783 = vrot.slane %v7770, %v7782
    %v7784 = vlaneseq
    %v7785 = vshrl.u32 %v7784, 7
    %v7786 = vsub.s32 3, %v7785
    %v7787 = vrot.slane %v7770, %v7786
    %v7792 = vmul.f32 %v7764, %v7775
    %v7793 = vmul.f32 %v7761, %v7779
    %v7794 = vmul.f32 %v7758, %v7783
    %v7795 = vmul.f32 %v7767, %v7787
    %v7796 = vmul.f32 %v7765, %v7775
    %v7797 = vmul.f32 %v7762, %v7779
    %v7798 = vmul.f32 %v7759, %v7783
    %v7799 = vmul.f32 %v7768, %v7787
    %v7800 = vmul.f32 %v7766, %v7775
    %v7801 = vmul.f32 %v7763, %v7779
    %v7802 = vmul.f32 %v7760, %v7783
    %v7803 = vmul.f32 %v7769, %v7787
    %7804 = vst [vmem:[#allocation2 + $0x1e0] sm:$0xff] %v7792
    %7805 = vst [vmem:[#allocation2 + $0x1e8] sm:$0xff] %v7793
    %7806 = vst [vmem:[#allocation2 + $0x1f0] sm:$0xff] %v7794
    %7807 = vst [vmem:[#allocation2 + $0x1f8] sm:$0xff] %v7795
    %7808 = vst [vmem:[#allocation2 + $0x200] sm:$0xff] %v7796
    %7809 = vst [vmem:[#allocation2 + $0x208] sm:$0xff] %v7797
    %7810 = vst [vmem:[#allocation2 + $0x210] sm:$0xff] %v7798
    %7811 = vst [vmem:[#allocation2 + $0x218] sm:$0xff] %v7799
    %7812 = vst [vmem:[#allocation2 + $0x220] sm:$0xff] %v7800
    %7813 = vst [vmem:[#allocation2 + $0x228] sm:$0xff] %v7801
    %7814 = vst [vmem:[#allocation2 + $0x230] sm:$0xff] %v7802
    %7815 = vst [vmem:[#allocation2 + $0x238] sm:$0xff] %v7803
    %7816 = vrot.lane.b32.xlu0 %v7382, 113
    %v7817 = vpop.permute.xlu0 %7816
    %7818 = vrot.lane.b32.xlu0 %v7386, 113
    %v7819 = vpop.permute.xlu0 %7818
    %7820 = vrot.lane.b32.xlu0 %v7390, 113
    %v7821 = vpop.permute.xlu0 %7820
    %7822 = vrot.lane.b32.xlu0 %v7383, 113
    %v7823 = vpop.permute.xlu0 %7822
    %7824 = vrot.lane.b32.xlu0 %v7387, 113
    %v7825 = vpop.permute.xlu0 %7824
    %7826 = vrot.lane.b32.xlu0 %v7391, 113
    %v7827 = vpop.permute.xlu0 %7826
    %7828 = vrot.lane.b32.xlu0 %v7384, 113
    %v7829 = vpop.permute.xlu0 %7828
    %7830 = vrot.lane.b32.xlu0 %v7388, 113
    %v7831 = vpop.permute.xlu0 %7830
    %7832 = vrot.lane.b32.xlu0 %v7392, 113
    %v7833 = vpop.permute.xlu0 %7832
    %7834 = vrot.lane.b32.xlu0 %v7385, 113
    %v7835 = vpop.permute.xlu0 %7834
    %7836 = vrot.lane.b32.xlu0 %v7389, 113
    %v7837 = vpop.permute.xlu0 %7836
    %7838 = vrot.lane.b32.xlu0 %v7393, 113
    %v7839 = vpop.permute.xlu0 %7838
    %v7840 = vsel %vm261, %v7829, %v7835
    %v7841 = vsel %vm261, %v7831, %v7837
    %v7842 = vsel %vm261, %v7833, %v7839
    %v7843 = vsel %vm261, %v7823, %v7829
    %v7844 = vsel %vm261, %v7825, %v7831
    %v7845 = vsel %vm261, %v7827, %v7833
    %v7846 = vsel %vm261, %v7817, %v7823
    %v7847 = vsel %vm261, %v7819, %v7825
    %v7848 = vsel %vm261, %v7821, %v7827
    %v7849 = vsel %vm261, %v7835, %v7817
    %v7850 = vsel %vm261, %v7837, %v7819
    %v7851 = vsel %vm261, %v7839, %v7821
    %v7852 = vld [vmem:[%s266] ss:$8 sm:$0xf]
    %v7854 = vlaneseq
    %v7855 = vshrl.u32 %v7854, 7
    %v7856 = vsub.s32 0, %v7855
    %v7857 = vrot.slane %v7852, %v7856
    %v7858 = vlaneseq
    %v7859 = vshrl.u32 %v7858, 7
    %v7860 = vsub.s32 1, %v7859
    %v7861 = vrot.slane %v7852, %v7860
    %v7862 = vlaneseq
    %v7863 = vshrl.u32 %v7862, 7
    %v7864 = vsub.s32 2, %v7863
    %v7865 = vrot.slane %v7852, %v7864
    %v7866 = vlaneseq
    %v7867 = vshrl.u32 %v7866, 7
    %v7868 = vsub.s32 3, %v7867
    %v7869 = vrot.slane %v7852, %v7868
    %v7874 = vmul.f32 %v7846, %v7857
    %v7875 = vmul.f32 %v7843, %v7861
    %v7876 = vmul.f32 %v7840, %v7865
    %v7877 = vmul.f32 %v7849, %v7869
    %v7878 = vmul.f32 %v7847, %v7857
    %v7879 = vmul.f32 %v7844, %v7861
    %v7880 = vmul.f32 %v7841, %v7865
    %v7881 = vmul.f32 %v7850, %v7869
    %v7882 = vmul.f32 %v7848, %v7857
    %v7883 = vmul.f32 %v7845, %v7861
    %v7884 = vmul.f32 %v7842, %v7865
    %v7885 = vmul.f32 %v7851, %v7869
    %7886 = vst [vmem:[#allocation2 + $0x240] sm:$0xff] %v7874
    %7887 = vst [vmem:[#allocation2 + $0x248] sm:$0xff] %v7875
    %7888 = vst [vmem:[#allocation2 + $0x250] sm:$0xff] %v7876
    %7889 = vst [vmem:[#allocation2 + $0x258] sm:$0xff] %v7877
    %7890 = vst [vmem:[#allocation2 + $0x260] sm:$0xff] %v7878
    %7891 = vst [vmem:[#allocation2 + $0x268] sm:$0xff] %v7879
    %7892 = vst [vmem:[#allocation2 + $0x270] sm:$0xff] %v7880
    %7893 = vst [vmem:[#allocation2 + $0x278] sm:$0xff] %v7881
    %7894 = vst [vmem:[#allocation2 + $0x280] sm:$0xff] %v7882
    %7895 = vst [vmem:[#allocation2 + $0x288] sm:$0xff] %v7883
    %7896 = vst [vmem:[#allocation2 + $0x290] sm:$0xff] %v7884
    %7897 = vst [vmem:[#allocation2 + $0x298] sm:$0xff] %v7885
    %7898 = vrot.lane.b32.xlu0 %v7382, 112
    %v7899 = vpop.permute.xlu0 %7898
    %7900 = vrot.lane.b32.xlu0 %v7386, 112
    %v7901 = vpop.permute.xlu0 %7900
    %7902 = vrot.lane.b32.xlu0 %v7390, 112
    %v7903 = vpop.permute.xlu0 %7902
    %7904 = vrot.lane.b32.xlu0 %v7383, 112
    %v7905 = vpop.permute.xlu0 %7904
    %7906 = vrot.lane.b32.xlu0 %v7387, 112
    %v7907 = vpop.permute.xlu0 %7906
    %7908 = vrot.lane.b32.xlu0 %v7391, 112
    %v7909 = vpop.permute.xlu0 %7908
    %7910 = vrot.lane.b32.xlu0 %v7384, 112
    %v7911 = vpop.permute.xlu0 %7910
    %7912 = vrot.lane.b32.xlu0 %v7388, 112
    %v7913 = vpop.permute.xlu0 %7912
    %7914 = vrot.lane.b32.xlu0 %v7392, 112
    %v7915 = vpop.permute.xlu0 %7914
    %7916 = vrot.lane.b32.xlu0 %v7385, 112
    %v7917 = vpop.permute.xlu0 %7916
    %7918 = vrot.lane.b32.xlu0 %v7389, 112
    %v7919 = vpop.permute.xlu0 %7918
    %7920 = vrot.lane.b32.xlu0 %v7393, 112
    %v7921 = vpop.permute.xlu0 %7920
    %v7922 = vsel %vm305, %v7911, %v7917
    %v7923 = vsel %vm305, %v7913, %v7919
    %v7924 = vsel %vm305, %v7915, %v7921
    %v7925 = vsel %vm305, %v7905, %v7911
    %v7926 = vsel %vm305, %v7907, %v7913
    %v7927 = vsel %vm305, %v7909, %v7915
    %v7928 = vsel %vm305, %v7899, %v7905
    %v7929 = vsel %vm305, %v7901, %v7907
    %v7930 = vsel %vm305, %v7903, %v7909
    %v7931 = vsel %vm305, %v7917, %v7899
    %v7932 = vsel %vm305, %v7919, %v7901
    %v7933 = vsel %vm305, %v7921, %v7903
    %v7934 = vld [vmem:[%s310] ss:$8 sm:$0xf]
    %v7936 = vlaneseq
    %v7937 = vshrl.u32 %v7936, 7
    %v7938 = vsub.s32 0, %v7937
    %v7939 = vrot.slane %v7934, %v7938
    %v7940 = vlaneseq
    %v7941 = vshrl.u32 %v7940, 7
    %v7942 = vsub.s32 1, %v7941
    %v7943 = vrot.slane %v7934, %v7942
    %v7944 = vlaneseq
    %v7945 = vshrl.u32 %v7944, 7
    %v7946 = vsub.s32 2, %v7945
    %v7947 = vrot.slane %v7934, %v7946
    %v7948 = vlaneseq
    %v7949 = vshrl.u32 %v7948, 7
    %v7950 = vsub.s32 3, %v7949
    %v7951 = vrot.slane %v7934, %v7950
    %v7956 = vmul.f32 %v7928, %v7939
    %v7957 = vmul.f32 %v7925, %v7943
    %v7958 = vmul.f32 %v7922, %v7947
    %v7959 = vmul.f32 %v7931, %v7951
    %v7960 = vmul.f32 %v7929, %v7939
    %v7961 = vmul.f32 %v7926, %v7943
    %v7962 = vmul.f32 %v7923, %v7947
    %v7963 = vmul.f32 %v7932, %v7951
    %v7964 = vmul.f32 %v7930, %v7939
    %v7965 = vmul.f32 %v7927, %v7943
    %v7966 = vmul.f32 %v7924, %v7947
    %v7967 = vmul.f32 %v7933, %v7951
    %7968 = vst [vmem:[#allocation2 + $0x2a0] sm:$0xff] %v7956
    %7969 = vst [vmem:[#allocation2 + $0x2a8] sm:$0xff] %v7957
    %7970 = vst [vmem:[#allocation2 + $0x2b0] sm:$0xff] %v7958
    %7971 = vst [vmem:[#allocation2 + $0x2b8] sm:$0xff] %v7959
    %7972 = vst [vmem:[#allocation2 + $0x2c0] sm:$0xff] %v7960
    %7973 = vst [vmem:[#allocation2 + $0x2c8] sm:$0xff] %v7961
    %7974 = vst [vmem:[#allocation2 + $0x2d0] sm:$0xff] %v7962
    %7975 = vst [vmem:[#allocation2 + $0x2d8] sm:$0xff] %v7963
    %7976 = vst [vmem:[#allocation2 + $0x2e0] sm:$0xff] %v7964
    %7977 = vst [vmem:[#allocation2 + $0x2e8] sm:$0xff] %v7965
    %7978 = vst [vmem:[#allocation2 + $0x2f0] sm:$0xff] %v7966
    %7979 = vst [vmem:[#allocation2 + $0x2f8] sm:$0xff] %v7967
    %7980 = vrot.lane.b32.xlu0 %v7382, 111
    %v7981 = vpop.permute.xlu0 %7980
    %7982 = vrot.lane.b32.xlu0 %v7386, 111
    %v7983 = vpop.permute.xlu0 %7982
    %7984 = vrot.lane.b32.xlu0 %v7390, 111
    %v7985 = vpop.permute.xlu0 %7984
    %7986 = vrot.lane.b32.xlu0 %v7383, 111
    %v7987 = vpop.permute.xlu0 %7986
    %7988 = vrot.lane.b32.xlu0 %v7387, 111
    %v7989 = vpop.permute.xlu0 %7988
    %7990 = vrot.lane.b32.xlu0 %v7391, 111
    %v7991 = vpop.permute.xlu0 %7990
    %7992 = vrot.lane.b32.xlu0 %v7384, 111
    %v7993 = vpop.permute.xlu0 %7992
    %7994 = vrot.lane.b32.xlu0 %v7388, 111
    %v7995 = vpop.permute.xlu0 %7994
    %7996 = vrot.lane.b32.xlu0 %v7392, 111
    %v7997 = vpop.permute.xlu0 %7996
    %7998 = vrot.lane.b32.xlu0 %v7385, 111
    %v7999 = vpop.permute.xlu0 %7998
    %8000 = vrot.lane.b32.xlu0 %v7389, 111
    %v8001 = vpop.permute.xlu0 %8000
    %8002 = vrot.lane.b32.xlu0 %v7393, 111
    %v8003 = vpop.permute.xlu0 %8002
    %v8004 = vsel %vm349, %v7993, %v7999
    %v8005 = vsel %vm349, %v7995, %v8001
    %v8006 = vsel %vm349, %v7997, %v8003
    %v8007 = vsel %vm349, %v7987, %v7993
    %v8008 = vsel %vm349, %v7989, %v7995
    %v8009 = vsel %vm349, %v7991, %v7997
    %v8010 = vsel %vm349, %v7981, %v7987
    %v8011 = vsel %vm349, %v7983, %v7989
    %v8012 = vsel %vm349, %v7985, %v7991
    %v8013 = vsel %vm349, %v7999, %v7981
    %v8014 = vsel %vm349, %v8001, %v7983
    %v8015 = vsel %vm349, %v8003, %v7985
    %v8016 = vld [vmem:[%s354] ss:$8 sm:$0xf]
    %v8018 = vlaneseq
    %v8019 = vshrl.u32 %v8018, 7
    %v8020 = vsub.s32 0, %v8019
    %v8021 = vrot.slane %v8016, %v8020
    %v8022 = vlaneseq
    %v8023 = vshrl.u32 %v8022, 7
    %v8024 = vsub.s32 1, %v8023
    %v8025 = vrot.slane %v8016, %v8024
    %v8026 = vlaneseq
    %v8027 = vshrl.u32 %v8026, 7
    %v8028 = vsub.s32 2, %v8027
    %v8029 = vrot.slane %v8016, %v8028
    %v8030 = vlaneseq
    %v8031 = vshrl.u32 %v8030, 7
    %v8032 = vsub.s32 3, %v8031
    %v8033 = vrot.slane %v8016, %v8032
    %v8038 = vmul.f32 %v8010, %v8021
    %v8039 = vmul.f32 %v8007, %v8025
    %v8040 = vmul.f32 %v8004, %v8029
    %v8041 = vmul.f32 %v8013, %v8033
    %v8042 = vmul.f32 %v8011, %v8021
    %v8043 = vmul.f32 %v8008, %v8025
    %v8044 = vmul.f32 %v8005, %v8029
    %v8045 = vmul.f32 %v8014, %v8033
    %v8046 = vmul.f32 %v8012, %v8021
    %v8047 = vmul.f32 %v8009, %v8025
    %v8048 = vmul.f32 %v8006, %v8029
    %v8049 = vmul.f32 %v8015, %v8033
    %8050 = vst [vmem:[#allocation2 + $0x300] sm:$0xff] %v8038
    %8051 = vst [vmem:[#allocation2 + $0x308] sm:$0xff] %v8039
    %8052 = vst [vmem:[#allocation2 + $0x310] sm:$0xff] %v8040
    %8053 = vst [vmem:[#allocation2 + $0x318] sm:$0xff] %v8041
    %8054 = vst [vmem:[#allocation2 + $0x320] sm:$0xff] %v8042
    %8055 = vst [vmem:[#allocation2 + $0x328] sm:$0xff] %v8043
    %8056 = vst [vmem:[#allocation2 + $0x330] sm:$0xff] %v8044
    %8057 = vst [vmem:[#allocation2 + $0x338] sm:$0xff] %v8045
    %8058 = vst [vmem:[#allocation2 + $0x340] sm:$0xff] %v8046
    %8059 = vst [vmem:[#allocation2 + $0x348] sm:$0xff] %v8047
    %8060 = vst [vmem:[#allocation2 + $0x350] sm:$0xff] %v8048
    %8061 = vst [vmem:[#allocation2 + $0x358] sm:$0xff] %v8049
    %v8062 = vld [vmem:[%s3 + $0x80] sm:$0xff]
    %v8063 = vld [vmem:[%s3 + $0x88] sm:$0xff]
    %v8064 = vld [vmem:[%s3 + $0x90] sm:$0xff]
    %v8065 = vld [vmem:[%s3 + $0x98] sm:$0xff]
    %v8066 = vld [vmem:[#allocation2] sm:$0xff]
    %v8067 = vld [vmem:[#allocation2 + $0x8] sm:$0xff]
    %v8068 = vld [vmem:[#allocation2 + $0x10] sm:$0xff]
    %v8069 = vld [vmem:[#allocation2 + $0x18] sm:$0xff]
    %v8070 = vld [vmem:[#allocation2 + $0x20] sm:$0xff]
    %v8071 = vld [vmem:[#allocation2 + $0x28] sm:$0xff]
    %v8072 = vld [vmem:[#allocation2 + $0x30] sm:$0xff]
    %v8073 = vld [vmem:[#allocation2 + $0x38] sm:$0xff]
    %v8074 = vld [vmem:[#allocation2 + $0x40] sm:$0xff]
    %v8075 = vld [vmem:[#allocation2 + $0x48] sm:$0xff]
    %v8076 = vld [vmem:[#allocation2 + $0x50] sm:$0xff]
    %v8077 = vld [vmem:[#allocation2 + $0x58] sm:$0xff]
    %v8078 = vld [vmem:[#allocation2 + $0x60] sm:$0xff]
    %v8079 = vld [vmem:[#allocation2 + $0x68] sm:$0xff]
    %v8080 = vld [vmem:[#allocation2 + $0x70] sm:$0xff]
    %v8081 = vld [vmem:[#allocation2 + $0x78] sm:$0xff]
    %v8082 = vld [vmem:[#allocation2 + $0x80] sm:$0xff]
    %v8083 = vld [vmem:[#allocation2 + $0x88] sm:$0xff]
    %v8084 = vld [vmem:[#allocation2 + $0x90] sm:$0xff]
    %v8085 = vld [vmem:[#allocation2 + $0x98] sm:$0xff]
    %v8086 = vld [vmem:[#allocation2 + $0xa0] sm:$0xff]
    %v8087 = vld [vmem:[#allocation2 + $0xa8] sm:$0xff]
    %v8088 = vld [vmem:[#allocation2 + $0xb0] sm:$0xff]
    %v8089 = vld [vmem:[#allocation2 + $0xb8] sm:$0xff]
    %v8090 = vld [vmem:[#allocation2 + $0xc0] sm:$0xff]
    %v8091 = vld [vmem:[#allocation2 + $0xc8] sm:$0xff]
    %v8092 = vld [vmem:[#allocation2 + $0xd0] sm:$0xff]
    %v8093 = vld [vmem:[#allocation2 + $0xd8] sm:$0xff]
    %v8094 = vld [vmem:[#allocation2 + $0xe0] sm:$0xff]
    %v8095 = vld [vmem:[#allocation2 + $0xe8] sm:$0xff]
    %v8096 = vld [vmem:[#allocation2 + $0xf0] sm:$0xff]
    %v8097 = vld [vmem:[#allocation2 + $0xf8] sm:$0xff]
    %v8098 = vld [vmem:[#allocation2 + $0x100] sm:$0xff]
    %v8099 = vld [vmem:[#allocation2 + $0x108] sm:$0xff]
    %v8100 = vld [vmem:[#allocation2 + $0x110] sm:$0xff]
    %v8101 = vld [vmem:[#allocation2 + $0x118] sm:$0xff]
    %v8102 = vld [vmem:[#allocation2 + $0x120] sm:$0xff]
    %v8103 = vld [vmem:[#allocation2 + $0x128] sm:$0xff]
    %v8104 = vld [vmem:[#allocation2 + $0x130] sm:$0xff]
    %v8105 = vld [vmem:[#allocation2 + $0x138] sm:$0xff]
    %v8106 = vld [vmem:[#allocation2 + $0x140] sm:$0xff]
    %v8107 = vld [vmem:[#allocation2 + $0x148] sm:$0xff]
    %v8108 = vld [vmem:[#allocation2 + $0x150] sm:$0xff]
    %v8109 = vld [vmem:[#allocation2 + $0x158] sm:$0xff]
    %v8110 = vld [vmem:[#allocation2 + $0x160] sm:$0xff]
    %v8111 = vld [vmem:[#allocation2 + $0x168] sm:$0xff]
    %v8112 = vld [vmem:[#allocation2 + $0x170] sm:$0xff]
    %v8113 = vld [vmem:[#allocation2 + $0x178] sm:$0xff]
    %v8114 = vld [vmem:[#allocation2 + $0x180] sm:$0xff]
    %v8115 = vld [vmem:[#allocation2 + $0x188] sm:$0xff]
    %v8116 = vld [vmem:[#allocation2 + $0x190] sm:$0xff]
    %v8117 = vld [vmem:[#allocation2 + $0x198] sm:$0xff]
    %v8118 = vld [vmem:[#allocation2 + $0x1a0] sm:$0xff]
    %v8119 = vld [vmem:[#allocation2 + $0x1a8] sm:$0xff]
    %v8120 = vld [vmem:[#allocation2 + $0x1b0] sm:$0xff]
    %v8121 = vld [vmem:[#allocation2 + $0x1b8] sm:$0xff]
    %v8122 = vld [vmem:[#allocation2 + $0x1c0] sm:$0xff]
    %v8123 = vld [vmem:[#allocation2 + $0x1c8] sm:$0xff]
    %v8124 = vld [vmem:[#allocation2 + $0x1d0] sm:$0xff]
    %v8125 = vld [vmem:[#allocation2 + $0x1d8] sm:$0xff]
    %v8126 = vld [vmem:[#allocation2 + $0x1e0] sm:$0xff]
    %v8127 = vld [vmem:[#allocation2 + $0x1e8] sm:$0xff]
    %v8128 = vld [vmem:[#allocation2 + $0x1f0] sm:$0xff]
    %v8129 = vld [vmem:[#allocation2 + $0x1f8] sm:$0xff]
    %v8130 = vld [vmem:[#allocation2 + $0x200] sm:$0xff]
    %v8131 = vld [vmem:[#allocation2 + $0x208] sm:$0xff]
    %v8132 = vld [vmem:[#allocation2 + $0x210] sm:$0xff]
    %v8133 = vld [vmem:[#allocation2 + $0x218] sm:$0xff]
    %v8134 = vld [vmem:[#allocation2 + $0x220] sm:$0xff]
    %v8135 = vld [vmem:[#allocation2 + $0x228] sm:$0xff]
    %v8136 = vld [vmem:[#allocation2 + $0x230] sm:$0xff]
    %v8137 = vld [vmem:[#allocation2 + $0x238] sm:$0xff]
    %v8138 = vld [vmem:[#allocation2 + $0x240] sm:$0xff]
    %v8139 = vld [vmem:[#allocation2 + $0x248] sm:$0xff]
    %v8140 = vld [vmem:[#allocation2 + $0x250] sm:$0xff]
    %v8141 = vld [vmem:[#allocation2 + $0x258] sm:$0xff]
    %v8142 = vld [vmem:[#allocation2 + $0x260] sm:$0xff]
    %v8143 = vld [vmem:[#allocation2 + $0x268] sm:$0xff]
    %v8144 = vld [vmem:[#allocation2 + $0x270] sm:$0xff]
    %v8145 = vld [vmem:[#allocation2 + $0x278] sm:$0xff]
    %v8146 = vld [vmem:[#allocation2 + $0x280] sm:$0xff]
    %v8147 = vld [vmem:[#allocation2 + $0x288] sm:$0xff]
    %v8148 = vld [vmem:[#allocation2 + $0x290] sm:$0xff]
    %v8149 = vld [vmem:[#allocation2 + $0x298] sm:$0xff]
    %v8150 = vld [vmem:[#allocation2 + $0x2a0] sm:$0xff]
    %v8151 = vld [vmem:[#allocation2 + $0x2a8] sm:$0xff]
    %v8152 = vld [vmem:[#allocation2 + $0x2b0] sm:$0xff]
    %v8153 = vld [vmem:[#allocation2 + $0x2b8] sm:$0xff]
    %v8154 = vld [vmem:[#allocation2 + $0x2c0] sm:$0xff]
    %v8155 = vld [vmem:[#allocation2 + $0x2c8] sm:$0xff]
    %v8156 = vld [vmem:[#allocation2 + $0x2d0] sm:$0xff]
    %v8157 = vld [vmem:[#allocation2 + $0x2d8] sm:$0xff]
    %v8158 = vld [vmem:[#allocation2 + $0x2e0] sm:$0xff]
    %v8159 = vld [vmem:[#allocation2 + $0x2e8] sm:$0xff]
    %v8160 = vld [vmem:[#allocation2 + $0x2f0] sm:$0xff]
    %v8161 = vld [vmem:[#allocation2 + $0x2f8] sm:$0xff]
    %v8162 = vld [vmem:[#allocation2 + $0x300] sm:$0xff]
    %v8163 = vld [vmem:[#allocation2 + $0x308] sm:$0xff]
    %v8164 = vld [vmem:[#allocation2 + $0x310] sm:$0xff]
    %v8165 = vld [vmem:[#allocation2 + $0x318] sm:$0xff]
    %v8166 = vld [vmem:[#allocation2 + $0x320] sm:$0xff]
    %v8167 = vld [vmem:[#allocation2 + $0x328] sm:$0xff]
    %v8168 = vld [vmem:[#allocation2 + $0x330] sm:$0xff]
    %v8169 = vld [vmem:[#allocation2 + $0x338] sm:$0xff]
    %v8170 = vld [vmem:[#allocation2 + $0x340] sm:$0xff]
    %v8171 = vld [vmem:[#allocation2 + $0x348] sm:$0xff]
    %v8172 = vld [vmem:[#allocation2 + $0x350] sm:$0xff]
    %v8173 = vld [vmem:[#allocation2 + $0x358] sm:$0xff]
    %v8174 = vld [vmem:[%s5 + $0x100] sm:$0xff]
    %v8175 = vld [vmem:[%s5 + $0x108] sm:$0xff]
    %8177 = vset.pattern.permute.xlu0 0
    %8178 = vperm.xlu0 %8177, %v8174
    %v8179 = vpop.permute.xlu0 %8178
    %8182 = vset.pattern.permute.xlu0 0
    %8183 = vperm.xlu0 %8182, %v8175
    %v8184 = vpop.permute.xlu0 %8183
    %v8187 = vsel %vm2841, %v8063, 0
    %v8190 = vsel %vm2841, %v8065, 0
    %8192 = vmatprep.subr.mxu0 %v8127
    %8193 = vmatpush1.msra.mxu0 %v8126
    %8194 = vmatprep.subr.mxu0 %v8123
    %8195 = vmatpush1.msra.mxu0 %v8122
    %8196 = vmatprep.subr.mxu0 %v8119
    %8197 = vmatpush1.msra.mxu0 %v8118
    %8198 = vmatprep.subr.mxu0 %v8115
    %8199 = vmatpush1.msra.mxu0 %v8114
    %8200 = vmatprep.subr.mxu0 %v8111
    %8201 = vmatpush1.msra.mxu0 %v8110
    %8202 = vmatprep.subr.mxu0 %v8107
    %8203 = vmatpush1.msra.mxu0 %v8106
    %8204 = vmatprep.subr.mxu0 %v8103
    %8205 = vmatpush1.msra.mxu0 %v8102
    %8206 = vmatprep.subr.mxu0 %v8099
    %8207 = vmatpush1.msra.mxu0 %v8098
    %8208 = vmatprep.subr.mxu0 %v8095
    %8209 = vmatpush1.msra.mxu0 %v8094
    %8210 = vmatprep.subr.mxu0 %v8091
    %8211 = vmatpush1.msra.mxu0 %v8090
    %8212 = vmatprep.subr.mxu0 %v8087
    %8213 = vmatpush1.msra.mxu0 %v8086
    %8214 = vmatprep.subr.mxu0 %v8083
    %8215 = vmatpush1.msra.mxu0 %v8082
    %8216 = vmatprep.subr.mxu0 %v8079
    %8217 = vmatpush1.msra.mxu0 %v8078
    %8218 = vmatprep.subr.mxu0 %v8075
    %8219 = vmatpush1.msra.mxu0 %v8074
    %8220 = vmatprep.subr.mxu0 %v8071
    %8221 = vmatpush1.msra.mxu0 %v8070
    %8222 = vmatprep.subr.mxu0 %v8067
    %8223 = vmatpush1.msra.mxu0 %v8066
    %8224 = vmatprep.subr.mxu0 0.0
    %8225 = vmatpush2.msra.mxu0 0.0
    %8226 = vmatprep.subr.mxu0 0.0
    %8227 = vmatpush2.msra.mxu0 0.0
    %8228 = vmatprep.subr.mxu0 0.0
    %8229 = vmatpush2.msra.mxu0 0.0
    %8230 = vmatprep.subr.mxu0 0.0
    %8231 = vmatpush2.msra.mxu0 0.0
    %8232 = vmatprep.subr.mxu0 0.0
    %8233 = vmatpush2.msra.mxu0 0.0
    %8234 = vmatprep.subr.mxu0 %v8171
    %8235 = vmatpush2.msra.mxu0 %v8170
    %8236 = vmatprep.subr.mxu0 %v8167
    %8237 = vmatpush2.msra.mxu0 %v8166
    %8238 = vmatprep.subr.mxu0 %v8163
    %8239 = vmatpush2.msra.mxu0 %v8162
    %8240 = vmatprep.subr.mxu0 %v8159
    %8241 = vmatpush2.msra.mxu0 %v8158
    %8242 = vmatprep.subr.mxu0 %v8155
    %8243 = vmatpush2.msra.mxu0 %v8154
    %8244 = vmatprep.subr.mxu0 %v8151
    %8245 = vmatpush2.msra.mxu0 %v8150
    %8246 = vmatprep.subr.mxu0 %v8147
    %8247 = vmatpush2.msra.mxu0 %v8146
    %8248 = vmatprep.subr.mxu0 %v8143
    %8249 = vmatpush2.msra.mxu0 %v8142
    %8250 = vmatprep.subr.mxu0 %v8139
    %8251 = vmatpush2.msra.mxu0 %v8138
    %8252 = vmatprep.subr.mxu0 %v8135
    %8253 = vmatpush2.msra.mxu0 %v8134
    %8254 = vmatprep.subr.mxu0 %v8131
    %8255 = vmatpush2.msra.mxu0 %v8130
    %8256 = vmatprep.mubr.f32.mxu0 %v8187
    %8257 = vmatmul.mubr.f32.gmra.mxu0 %v8062
    %v8258 = vpop.f32.mrf.mxu0
    %v8259 = vadd.f32 %v8179, %v8258
    %v8260 = vpop.f32.mrf.mxu0
    %v8261 = vadd.f32 %v8179, %v8260
    %8262 = vmatprep.mubr.f32.mxu0 %v8190
    %8263 = vmatmul.mubr.f32.gmra.mxu0 %v8064
    %v8264 = vpop.f32.mrf.mxu0
    %v8265 = vadd.f32 %v8184, %v8264
    %v8266 = vpop.f32.mrf.mxu0
    %v8267 = vadd.f32 %v8184, %v8266
    %8268 = vdwg.mxu0
    %8269 = vmatprep.subr.mxu0 %v8129
    %8270 = vmatpush1.msra.mxu0 %v8128
    %8271 = vmatprep.subr.mxu0 %v8125
    %8272 = vmatpush1.msra.mxu0 %v8124
    %8273 = vmatprep.subr.mxu0 %v8121
    %8274 = vmatpush1.msra.mxu0 %v8120
    %8275 = vmatprep.subr.mxu0 %v8117
    %8276 = vmatpush1.msra.mxu0 %v8116
    %8277 = vmatprep.subr.mxu0 %v8113
    %8278 = vmatpush1.msra.mxu0 %v8112
    %8279 = vmatprep.subr.mxu0 %v8109
    %8280 = vmatpush1.msra.mxu0 %v8108
    %8281 = vmatprep.subr.mxu0 %v8105
    %8282 = vmatpush1.msra.mxu0 %v8104
    %8283 = vmatprep.subr.mxu0 %v8101
    %8284 = vmatpush1.msra.mxu0 %v8100
    %8285 = vmatprep.subr.mxu0 %v8097
    %8286 = vmatpush1.msra.mxu0 %v8096
    %8287 = vmatprep.subr.mxu0 %v8093
    %8288 = vmatpush1.msra.mxu0 %v8092
    %8289 = vmatprep.subr.mxu0 %v8089
    %8290 = vmatpush1.msra.mxu0 %v8088
    %8291 = vmatprep.subr.mxu0 %v8085
    %8292 = vmatpush1.msra.mxu0 %v8084
    %8293 = vmatprep.subr.mxu0 %v8081
    %8294 = vmatpush1.msra.mxu0 %v8080
    %8295 = vmatprep.subr.mxu0 %v8077
    %8296 = vmatpush1.msra.mxu0 %v8076
    %8297 = vmatprep.subr.mxu0 %v8073
    %8298 = vmatpush1.msra.mxu0 %v8072
    %8299 = vmatprep.subr.mxu0 %v8069
    %8300 = vmatpush1.msra.mxu0 %v8068
    %8301 = vmatprep.subr.mxu0 0.0
    %8302 = vmatpush2.msra.mxu0 0.0
    %8303 = vmatprep.subr.mxu0 0.0
    %8304 = vmatpush2.msra.mxu0 0.0
    %8305 = vmatprep.subr.mxu0 0.0
    %8306 = vmatpush2.msra.mxu0 0.0
    %8307 = vmatprep.subr.mxu0 0.0
    %8308 = vmatpush2.msra.mxu0 0.0
    %8309 = vmatprep.subr.mxu0 0.0
    %8310 = vmatpush2.msra.mxu0 0.0
    %8311 = vmatprep.subr.mxu0 %v8173
    %8312 = vmatpush2.msra.mxu0 %v8172
    %8313 = vmatprep.subr.mxu0 %v8169
    %8314 = vmatpush2.msra.mxu0 %v8168
    %8315 = vmatprep.subr.mxu0 %v8165
    %8316 = vmatpush2.msra.mxu0 %v8164
    %8317 = vmatprep.subr.mxu0 %v8161
    %8318 = vmatpush2.msra.mxu0 %v8160
    %8319 = vmatprep.subr.mxu0 %v8157
    %8320 = vmatpush2.msra.mxu0 %v8156
    %8321 = vmatprep.subr.mxu0 %v8153
    %8322 = vmatpush2.msra.mxu0 %v8152
    %8323 = vmatprep.subr.mxu0 %v8149
    %8324 = vmatpush2.msra.mxu0 %v8148
    %8325 = vmatprep.subr.mxu0 %v8145
    %8326 = vmatpush2.msra.mxu0 %v8144
    %8327 = vmatprep.subr.mxu0 %v8141
    %8328 = vmatpush2.msra.mxu0 %v8140
    %8329 = vmatprep.subr.mxu0 %v8137
    %8330 = vmatpush2.msra.mxu0 %v8136
    %8331 = vmatprep.subr.mxu0 %v8133
    %8332 = vmatpush2.msra.mxu0 %v8132
    %8333 = vmatprep.mubr.f32.mxu0 %v8187
    %8334 = vmatmul.mubr.f32.gmra.mxu0 %v8062
    %v8335 = vpop.f32.mrf.mxu0
    %v8336 = vadd.f32 %v8179, %v8335
    %v8337 = vpop.f32.mrf.mxu0
    %v8338 = vadd.f32 %v8179, %v8337
    %8339 = vmatprep.mubr.f32.mxu0 %v8190
    %8340 = vmatmul.mubr.f32.gmra.mxu0 %v8064
    %v8341 = vpop.f32.mrf.mxu0
    %v8342 = vadd.f32 %v8184, %v8341
    %v8343 = vpop.f32.mrf.mxu0
    %v8344 = vadd.f32 %v8184, %v8343
    %8345 = vdwg.mxu0
    %v8346 = vmax.f32 %v8259, 0.0
    %v8347 = vmax.f32 %v8261, 0.0
    %v8348 = vmax.f32 %v8336, 0.0
    %v8349 = vmax.f32 %v8338, 0.0
    %v8350 = vmax.f32 %v8265, 0.0
    %v8351 = vmax.f32 %v8267, 0.0
    %v8352 = vmax.f32 %v8342, 0.0
    %v8353 = vmax.f32 %v8344, 0.0
    %v8354 = vld [vmem:[%s4 + $0xa0] sm:$0xff]
    %v8355 = vld [vmem:[%s4 + $0xa8] sm:$0xff]
    %v8356 = vld [vmem:[%s5 + $0x110] sm:$0xff]
    %v8357 = vld [vmem:[%s5 + $0x118] sm:$0xff]
    %8359 = vset.pattern.permute.xlu0 0
    %8360 = vperm.xlu0 %8359, %v8356
    %v8361 = vpop.permute.xlu0 %8360
    %8364 = vset.pattern.permute.xlu0 0
    %8365 = vperm.xlu0 %8364, %v8357
    %v8366 = vpop.permute.xlu0 %8365
    %v8369 = vsel %vm1686, %v8354, 0
    %v8372 = vsel %vm1686, %v8355, 0
    %8374 = vmatprep.subr.mxu0 0.0
    %8375 = vmatpush1.msra.mxu0 0.0
    %8376 = vmatprep.subr.mxu0 0.0
    %8377 = vmatpush1.msra.mxu0 0.0
    %8378 = vmatprep.subr.mxu0 0.0
    %8379 = vmatpush1.msra.mxu0 0.0
    %8380 = vmatprep.subr.mxu0 0.0
    %8381 = vmatpush1.msra.mxu0 0.0
    %8382 = vmatprep.subr.mxu0 0.0
    %8383 = vmatpush1.msra.mxu0 0.0
    %8384 = vmatprep.subr.mxu0 0.0
    %8385 = vmatpush1.msra.mxu0 0.0
    %8386 = vmatprep.subr.mxu0 0.0
    %8387 = vmatpush1.msra.mxu0 0.0
    %8388 = vmatprep.subr.mxu0 0.0
    %8389 = vmatpush1.msra.mxu0 0.0
    %8390 = vmatprep.subr.mxu0 0.0
    %8391 = vmatpush1.msra.mxu0 0.0
    %8392 = vmatprep.subr.mxu0 0.0
    %8393 = vmatpush1.msra.mxu0 0.0
    %8394 = vmatprep.subr.mxu0 0.0
    %8395 = vmatpush1.msra.mxu0 0.0
    %8396 = vmatprep.subr.mxu0 0.0
    %8397 = vmatpush1.msra.mxu0 0.0
    %8398 = vmatprep.subr.mxu0 0.0
    %8399 = vmatpush1.msra.mxu0 0.0
    %8400 = vmatprep.subr.mxu0 0.0
    %8401 = vmatpush1.msra.mxu0 0.0
    %8402 = vmatprep.subr.mxu0 %v8351
    %8403 = vmatpush1.msra.mxu0 %v8350
    %8404 = vmatprep.subr.mxu0 %v8347
    %8405 = vmatpush1.msra.mxu0 %v8346
    %8406 = vmatprep.subr.mxu0 0.0
    %8407 = vmatpush2.msra.mxu0 0.0
    %8408 = vmatprep.subr.mxu0 0.0
    %8409 = vmatpush2.msra.mxu0 0.0
    %8410 = vmatprep.subr.mxu0 0.0
    %8411 = vmatpush2.msra.mxu0 0.0
    %8412 = vmatprep.subr.mxu0 0.0
    %8413 = vmatpush2.msra.mxu0 0.0
    %8414 = vmatprep.subr.mxu0 0.0
    %8415 = vmatpush2.msra.mxu0 0.0
    %8416 = vmatprep.subr.mxu0 0.0
    %8417 = vmatpush2.msra.mxu0 0.0
    %8418 = vmatprep.subr.mxu0 0.0
    %8419 = vmatpush2.msra.mxu0 0.0
    %8420 = vmatprep.subr.mxu0 0.0
    %8421 = vmatpush2.msra.mxu0 0.0
    %8422 = vmatprep.subr.mxu0 0.0
    %8423 = vmatpush2.msra.mxu0 0.0
    %8424 = vmatprep.subr.mxu0 0.0
    %8425 = vmatpush2.msra.mxu0 0.0
    %8426 = vmatprep.subr.mxu0 0.0
    %8427 = vmatpush2.msra.mxu0 0.0
    %8428 = vmatprep.subr.mxu0 0.0
    %8429 = vmatpush2.msra.mxu0 0.0
    %8430 = vmatprep.subr.mxu0 0.0
    %8431 = vmatpush2.msra.mxu0 0.0
    %8432 = vmatprep.subr.mxu0 0.0
    %8433 = vmatpush2.msra.mxu0 0.0
    %8434 = vmatprep.subr.mxu0 0.0
    %8435 = vmatpush2.msra.mxu0 0.0
    %8436 = vmatprep.subr.mxu0 0.0
    %8437 = vmatpush2.msra.mxu0 0.0
    %8438 = vmatprep.mubr.f32.mxu0 0.0
    %8439 = vmatmul.mubr.f32.gmra.mxu0 %v8369
    %v8440 = vpop.f32.mrf.mxu0
    %v8441 = vadd.f32 %v8361, %v8440
    %v8442 = vpop.f32.mrf.mxu0
    %v8443 = vadd.f32 %v8361, %v8442
    %8444 = vmatprep.mubr.f32.mxu0 0.0
    %8445 = vmatmul.mubr.f32.gmra.mxu0 %v8372
    %v8446 = vpop.f32.mrf.mxu0
    %v8447 = vadd.f32 %v8366, %v8446
    %v8448 = vpop.f32.mrf.mxu0
    %v8449 = vadd.f32 %v8366, %v8448
    %8450 = vdwg.mxu0
    %8451 = vmatprep.subr.mxu0 0.0
    %8452 = vmatpush1.msra.mxu0 0.0
    %8453 = vmatprep.subr.mxu0 0.0
    %8454 = vmatpush1.msra.mxu0 0.0
    %8455 = vmatprep.subr.mxu0 0.0
    %8456 = vmatpush1.msra.mxu0 0.0
    %8457 = vmatprep.subr.mxu0 0.0
    %8458 = vmatpush1.msra.mxu0 0.0
    %8459 = vmatprep.subr.mxu0 0.0
    %8460 = vmatpush1.msra.mxu0 0.0
    %8461 = vmatprep.subr.mxu0 0.0
    %8462 = vmatpush1.msra.mxu0 0.0
    %8463 = vmatprep.subr.mxu0 0.0
    %8464 = vmatpush1.msra.mxu0 0.0
    %8465 = vmatprep.subr.mxu0 0.0
    %8466 = vmatpush1.msra.mxu0 0.0
    %8467 = vmatprep.subr.mxu0 0.0
    %8468 = vmatpush1.msra.mxu0 0.0
    %8469 = vmatprep.subr.mxu0 0.0
    %8470 = vmatpush1.msra.mxu0 0.0
    %8471 = vmatprep.subr.mxu0 0.0
    %8472 = vmatpush1.msra.mxu0 0.0
    %8473 = vmatprep.subr.mxu0 0.0
    %8474 = vmatpush1.msra.mxu0 0.0
    %8475 = vmatprep.subr.mxu0 0.0
    %8476 = vmatpush1.msra.mxu0 0.0
    %8477 = vmatprep.subr.mxu0 0.0
    %8478 = vmatpush1.msra.mxu0 0.0
    %8479 = vmatprep.subr.mxu0 %v8353
    %8480 = vmatpush1.msra.mxu0 %v8352
    %8481 = vmatprep.subr.mxu0 %v8349
    %8482 = vmatpush1.msra.mxu0 %v8348
    %8483 = vmatprep.subr.mxu0 0.0
    %8484 = vmatpush2.msra.mxu0 0.0
    %8485 = vmatprep.subr.mxu0 0.0
    %8486 = vmatpush2.msra.mxu0 0.0
    %8487 = vmatprep.subr.mxu0 0.0
    %8488 = vmatpush2.msra.mxu0 0.0
    %8489 = vmatprep.subr.mxu0 0.0
    %8490 = vmatpush2.msra.mxu0 0.0
    %8491 = vmatprep.subr.mxu0 0.0
    %8492 = vmatpush2.msra.mxu0 0.0
    %8493 = vmatprep.subr.mxu0 0.0
    %8494 = vmatpush2.msra.mxu0 0.0
    %8495 = vmatprep.subr.mxu0 0.0
    %8496 = vmatpush2.msra.mxu0 0.0
    %8497 = vmatprep.subr.mxu0 0.0
    %8498 = vmatpush2.msra.mxu0 0.0
    %8499 = vmatprep.subr.mxu0 0.0
    %8500 = vmatpush2.msra.mxu0 0.0
    %8501 = vmatprep.subr.mxu0 0.0
    %8502 = vmatpush2.msra.mxu0 0.0
    %8503 = vmatprep.subr.mxu0 0.0
    %8504 = vmatpush2.msra.mxu0 0.0
    %8505 = vmatprep.subr.mxu0 0.0
    %8506 = vmatpush2.msra.mxu0 0.0
    %8507 = vmatprep.subr.mxu0 0.0
    %8508 = vmatpush2.msra.mxu0 0.0
    %8509 = vmatprep.subr.mxu0 0.0
    %8510 = vmatpush2.msra.mxu0 0.0
    %8511 = vmatprep.subr.mxu0 0.0
    %8512 = vmatpush2.msra.mxu0 0.0
    %8513 = vmatprep.subr.mxu0 0.0
    %8514 = vmatpush2.msra.mxu0 0.0
    %8515 = vmatprep.mubr.f32.mxu0 0.0
    %8516 = vmatmul.mubr.f32.gmra.mxu0 %v8369
    %v8517 = vpop.f32.mrf.mxu0
    %v8518 = vadd.f32 %v8361, %v8517
    %v8519 = vpop.f32.mrf.mxu0
    %v8520 = vadd.f32 %v8361, %v8519
    %8521 = vmatprep.mubr.f32.mxu0 0.0
    %8522 = vmatmul.mubr.f32.gmra.mxu0 %v8372
    %v8523 = vpop.f32.mrf.mxu0
    %v8524 = vadd.f32 %v8366, %v8523
    %v8525 = vpop.f32.mrf.mxu0
    %v8526 = vadd.f32 %v8366, %v8525
    %8527 = vdwg.mxu0
    %v8528 = vmax.f32 %v8441, 0.0
    %v8529 = vmax.f32 %v8443, 0.0
    %v8530 = vmax.f32 %v8518, 0.0
    %v8531 = vmax.f32 %v8520, 0.0
    %v8532 = vmax.f32 %v8447, 0.0
    %v8533 = vmax.f32 %v8449, 0.0
    %v8534 = vmax.f32 %v8524, 0.0
    %v8535 = vmax.f32 %v8526, 0.0
    %v8536 = vld [vmem:[%s4 + $0xb0] sm:$0xff]
    %v8537 = vld [vmem:[%s4 + $0xb8] sm:$0xff]
    %v8538 = vld [vmem:[%s5 + $0x120] sm:$0xff]
    %v8539 = vld [vmem:[%s5 + $0x128] sm:$0xff]
    %8541 = vset.pattern.permute.xlu0 0
    %8542 = vperm.xlu0 %8541, %v8538
    %v8543 = vpop.permute.xlu0 %8542
    %8546 = vset.pattern.permute.xlu0 0
    %8547 = vperm.xlu0 %8546, %v8539
    %v8548 = vpop.permute.xlu0 %8547
    %v8551 = vsel %vm1686, %v8536, 0
    %v8554 = vsel %vm1686, %v8537, 0
    %8556 = vmatprep.subr.mxu0 0.0
    %8557 = vmatpush1.msra.mxu0 0.0
    %8558 = vmatprep.subr.mxu0 0.0
    %8559 = vmatpush1.msra.mxu0 0.0
    %8560 = vmatprep.subr.mxu0 0.0
    %8561 = vmatpush1.msra.mxu0 0.0
    %8562 = vmatprep.subr.mxu0 0.0
    %8563 = vmatpush1.msra.mxu0 0.0
    %8564 = vmatprep.subr.mxu0 0.0
    %8565 = vmatpush1.msra.mxu0 0.0
    %8566 = vmatprep.subr.mxu0 0.0
    %8567 = vmatpush1.msra.mxu0 0.0
    %8568 = vmatprep.subr.mxu0 0.0
    %8569 = vmatpush1.msra.mxu0 0.0
    %8570 = vmatprep.subr.mxu0 0.0
    %8571 = vmatpush1.msra.mxu0 0.0
    %8572 = vmatprep.subr.mxu0 0.0
    %8573 = vmatpush1.msra.mxu0 0.0
    %8574 = vmatprep.subr.mxu0 0.0
    %8575 = vmatpush1.msra.mxu0 0.0
    %8576 = vmatprep.subr.mxu0 0.0
    %8577 = vmatpush1.msra.mxu0 0.0
    %8578 = vmatprep.subr.mxu0 0.0
    %8579 = vmatpush1.msra.mxu0 0.0
    %8580 = vmatprep.subr.mxu0 0.0
    %8581 = vmatpush1.msra.mxu0 0.0
    %8582 = vmatprep.subr.mxu0 0.0
    %8583 = vmatpush1.msra.mxu0 0.0
    %8584 = vmatprep.subr.mxu0 %v8533
    %8585 = vmatpush1.msra.mxu0 %v8532
    %8586 = vmatprep.subr.mxu0 %v8529
    %8587 = vmatpush1.msra.mxu0 %v8528
    %8588 = vmatprep.subr.mxu0 0.0
    %8589 = vmatpush2.msra.mxu0 0.0
    %8590 = vmatprep.subr.mxu0 0.0
    %8591 = vmatpush2.msra.mxu0 0.0
    %8592 = vmatprep.subr.mxu0 0.0
    %8593 = vmatpush2.msra.mxu0 0.0
    %8594 = vmatprep.subr.mxu0 0.0
    %8595 = vmatpush2.msra.mxu0 0.0
    %8596 = vmatprep.subr.mxu0 0.0
    %8597 = vmatpush2.msra.mxu0 0.0
    %8598 = vmatprep.subr.mxu0 0.0
    %8599 = vmatpush2.msra.mxu0 0.0
    %8600 = vmatprep.subr.mxu0 0.0
    %8601 = vmatpush2.msra.mxu0 0.0
    %8602 = vmatprep.subr.mxu0 0.0
    %8603 = vmatpush2.msra.mxu0 0.0
    %8604 = vmatprep.subr.mxu0 0.0
    %8605 = vmatpush2.msra.mxu0 0.0
    %8606 = vmatprep.subr.mxu0 0.0
    %8607 = vmatpush2.msra.mxu0 0.0
    %8608 = vmatprep.subr.mxu0 0.0
    %8609 = vmatpush2.msra.mxu0 0.0
    %8610 = vmatprep.subr.mxu0 0.0
    %8611 = vmatpush2.msra.mxu0 0.0
    %8612 = vmatprep.subr.mxu0 0.0
    %8613 = vmatpush2.msra.mxu0 0.0
    %8614 = vmatprep.subr.mxu0 0.0
    %8615 = vmatpush2.msra.mxu0 0.0
    %8616 = vmatprep.subr.mxu0 0.0
    %8617 = vmatpush2.msra.mxu0 0.0
    %8618 = vmatprep.subr.mxu0 0.0
    %8619 = vmatpush2.msra.mxu0 0.0
    %8620 = vmatprep.mubr.f32.mxu0 0.0
    %8621 = vmatmul.mubr.f32.gmra.mxu0 %v8551
    %v8622 = vpop.f32.mrf.mxu0
    %v8623 = vadd.f32 %v8543, %v8622
    %v8624 = vpop.f32.mrf.mxu0
    %v8625 = vadd.f32 %v8543, %v8624
    %8626 = vmatprep.mubr.f32.mxu0 0.0
    %8627 = vmatmul.mubr.f32.gmra.mxu0 %v8554
    %v8628 = vpop.f32.mrf.mxu0
    %v8629 = vadd.f32 %v8548, %v8628
    %v8630 = vpop.f32.mrf.mxu0
    %v8631 = vadd.f32 %v8548, %v8630
    %8632 = vdwg.mxu0
    %8633 = vmatprep.subr.mxu0 0.0
    %8634 = vmatpush1.msra.mxu0 0.0
    %8635 = vmatprep.subr.mxu0 0.0
    %8636 = vmatpush1.msra.mxu0 0.0
    %8637 = vmatprep.subr.mxu0 0.0
    %8638 = vmatpush1.msra.mxu0 0.0
    %8639 = vmatprep.subr.mxu0 0.0
    %8640 = vmatpush1.msra.mxu0 0.0
    %8641 = vmatprep.subr.mxu0 0.0
    %8642 = vmatpush1.msra.mxu0 0.0
    %8643 = vmatprep.subr.mxu0 0.0
    %8644 = vmatpush1.msra.mxu0 0.0
    %8645 = vmatprep.subr.mxu0 0.0
    %8646 = vmatpush1.msra.mxu0 0.0
    %8647 = vmatprep.subr.mxu0 0.0
    %8648 = vmatpush1.msra.mxu0 0.0
    %8649 = vmatprep.subr.mxu0 0.0
    %8650 = vmatpush1.msra.mxu0 0.0
    %8651 = vmatprep.subr.mxu0 0.0
    %8652 = vmatpush1.msra.mxu0 0.0
    %8653 = vmatprep.subr.mxu0 0.0
    %8654 = vmatpush1.msra.mxu0 0.0
    %8655 = vmatprep.subr.mxu0 0.0
    %8656 = vmatpush1.msra.mxu0 0.0
    %8657 = vmatprep.subr.mxu0 0.0
    %8658 = vmatpush1.msra.mxu0 0.0
    %8659 = vmatprep.subr.mxu0 0.0
    %8660 = vmatpush1.msra.mxu0 0.0
    %8661 = vmatprep.subr.mxu0 %v8535
    %8662 = vmatpush1.msra.mxu0 %v8534
    %8663 = vmatprep.subr.mxu0 %v8531
    %8664 = vmatpush1.msra.mxu0 %v8530
    %8665 = vmatprep.subr.mxu0 0.0
    %8666 = vmatpush2.msra.mxu0 0.0
    %8667 = vmatprep.subr.mxu0 0.0
    %8668 = vmatpush2.msra.mxu0 0.0
    %8669 = vmatprep.subr.mxu0 0.0
    %8670 = vmatpush2.msra.mxu0 0.0
    %8671 = vmatprep.subr.mxu0 0.0
    %8672 = vmatpush2.msra.mxu0 0.0
    %8673 = vmatprep.subr.mxu0 0.0
    %8674 = vmatpush2.msra.mxu0 0.0
    %8675 = vmatprep.subr.mxu0 0.0
    %8676 = vmatpush2.msra.mxu0 0.0
    %8677 = vmatprep.subr.mxu0 0.0
    %8678 = vmatpush2.msra.mxu0 0.0
    %8679 = vmatprep.subr.mxu0 0.0
    %8680 = vmatpush2.msra.mxu0 0.0
    %8681 = vmatprep.subr.mxu0 0.0
    %8682 = vmatpush2.msra.mxu0 0.0
    %8683 = vmatprep.subr.mxu0 0.0
    %8684 = vmatpush2.msra.mxu0 0.0
    %8685 = vmatprep.subr.mxu0 0.0
    %8686 = vmatpush2.msra.mxu0 0.0
    %8687 = vmatprep.subr.mxu0 0.0
    %8688 = vmatpush2.msra.mxu0 0.0
    %8689 = vmatprep.subr.mxu0 0.0
    %8690 = vmatpush2.msra.mxu0 0.0
    %8691 = vmatprep.subr.mxu0 0.0
    %8692 = vmatpush2.msra.mxu0 0.0
    %8693 = vmatprep.subr.mxu0 0.0
    %8694 = vmatpush2.msra.mxu0 0.0
    %8695 = vmatprep.subr.mxu0 0.0
    %8696 = vmatpush2.msra.mxu0 0.0
    %8697 = vmatprep.mubr.f32.mxu0 0.0
    %8698 = vmatmul.mubr.f32.gmra.mxu0 %v8551
    %v8699 = vpop.f32.mrf.mxu0
    %v8700 = vadd.f32 %v8543, %v8699
    %v8701 = vpop.f32.mrf.mxu0
    %v8702 = vadd.f32 %v8543, %v8701
    %8703 = vmatprep.mubr.f32.mxu0 0.0
    %8704 = vmatmul.mubr.f32.gmra.mxu0 %v8554
    %v8705 = vpop.f32.mrf.mxu0
    %v8706 = vadd.f32 %v8548, %v8705
    %v8707 = vpop.f32.mrf.mxu0
    %v8708 = vadd.f32 %v8548, %v8707
    %8709 = vdwg.mxu0
    %8710 = vst [vmem:[#allocation4] sm:$0xff] %v8623
    %8711 = vst [vmem:[#allocation4 + $0x8] sm:$0xff] %v8625
    %8712 = vst [vmem:[#allocation4 + $0x10] sm:$0xff] %v8700
    %8713 = vst [vmem:[#allocation4 + $0x18] sm:$0xff] %v8702
    %8714 = vst [vmem:[#allocation4 + $0x20] sm:$0xff] %v8629
    %8715 = vst [vmem:[#allocation4 + $0x28] sm:$0xff] %v8631
    %8716 = vst [vmem:[#allocation4 + $0x30] sm:$0xff] %v8706
    %8717 = vst [vmem:[#allocation4 + $0x38] sm:$0xff] %v8708
    // Predicated region
    $region26: #{tpu_custom_call.1} parent=1 // pred_check
      _
    $region27: #{tpu_custom_call.1} parent=1 // pred_check_branch
      %8719 = sbr.rel (0) target = $region29
    $region28: #{tpu_custom_call.1} parent=1 // pred_region
      %s8721 = ssub.s32 1024, 1024
      %8722 = vsyncadd [#allocation5], %s8721
      %s8723 = sshll.u32 [#allocation4], 4
      %s8724 = int_to_ptr.vmem [resolvable:$true] %s8723
      %8729 = dma.vmem_to_hbm [thread:$0]  %s8724, 1024, %s6, [#allocation5], 512, 512, 32
    $region29: #{tpu_custom_call.1} parent=1 // pred_fallthru
      _
    // Predicated region
    $region30: #{tpu_custom_call.1} parent=1 // pred_check
      _
    $region31: #{tpu_custom_call.1} parent=1 // pred_check_branch
      %8731 = sbr.rel (0) target = $region33
    $region32: #{tpu_custom_call.1} parent=1 // pred_region
      %8732 = dma.done [#allocation5], 1024
    $region33: #{tpu_custom_call.1} parent=1 // pred_fallthru
      _
    %8733 = vsyncpa [#allocation5], 1

</llo_original>
